<compile_context>
chip_gen: v5e
topology: v5e:2x2
jax: 0.10.0
libtpu: 0.0.40
codegen_flags: <defaults>
</compile_context>

<pallas_src>
import functools

import jax
import jax.numpy as jnp
from jax.experimental import pallas as pl
from jax.experimental.pallas import tpu as pltpu

K_SIZE = 4
STRIDE = 2
PAD = 1
BN_EPS = 1e-5
LANE = 128
SUBLANE = 8


def _round_up(x, m):
    return ((x + m - 1) // m) * m


def _pick_tile(total, candidates):
    for c in candidates:
        if total % c == 0:
            return c
    return total


# --------------------------------------------------------------------------------------
# Pallas kernel: tiled (G,M,K)@(G,K,N) with f32 accumulator, fused BN-shift + activation
# --------------------------------------------------------------------------------------
def _bmm_shift_act_kernel(x_ref, w_ref, shift_ref, o_ref, acc_ref, *, act):
    k = pl.program_id(3)

    @pl.when(k == 0)
    def _():
        acc_ref[...] = jnp.zeros_like(acc_ref)

    acc_ref[...] += jnp.dot(x_ref[0], w_ref[0], preferred_element_type=jnp.float32)

    @pl.when(k == pl.num_programs(3) - 1)
    def _():
        y = acc_ref[...] + shift_ref[0]          # folded BatchNorm shift (+ conv bias)
        if act == "relu":
            y = jnp.maximum(y, 0.0)
        elif act == "sigmoid":
            # exp -> EUP slot, approximate reciprocal -> EUP; clamp keeps exact [0, 1].
            y = jnp.clip(pl.reciprocal(1.0 + jnp.exp(-y), approx=True), 0.0, 1.0)
        o_ref[0] = y.astype(o_ref.dtype)


def fused_bmm_shift_act(x, w, shift, act):
    """out[g] = act(x[g] @ w[g] + shift), tiled & pipelined. Returns (G, M, N) unpadded."""
    g, m, k = x.shape
    _, _, n = w.shape

    m_pad = _round_up(max(m, SUBLANE), SUBLANE)
    k_pad = _round_up(k, LANE)
    n_pad = _round_up(n, LANE)

    tm = _pick_tile(m_pad, (512, 256, 128, 64, 32, 16, 8))
    tk = _pick_tile(k_pad, (1024, 512, 256, 128))
    tn = _pick_tile(n_pad, (256, 128))

    x_p = jnp.pad(x, ((0, 0), (0, m_pad - m), (0, k_pad - k))).astype(jnp.bfloat16)
    w_p = jnp.pad(w, ((0, 0), (0, k_pad - k), (0, n_pad - n))).astype(jnp.bfloat16)
    shift_p = jnp.pad(shift, (0, n_pad - n)).reshape(1, 1, n_pad).astype(jnp.float32)

    grid = (g, m_pad // tm, n_pad // tn, k_pad // tk)

    out = pl.pallas_call(
        functools.partial(_bmm_shift_act_kernel, act=act),
        out_shape=jax.ShapeDtypeStruct((g, m_pad, n_pad), jnp.float32),
        grid=grid,
        in_specs=[
            pl.BlockSpec((1, tm, tk), lambda gi, i, j, kk: (gi, i, kk)),
            pl.BlockSpec((1, tk, tn), lambda gi, i, j, kk: (gi, kk, j)),
            pl.BlockSpec((1, 1, tn), lambda gi, i, j, kk: (0, 0, j)),
        ],
        out_specs=pl.BlockSpec((1, tm, tn), lambda gi, i, j, kk: (gi, i, j)),
        scratch_shapes=[pltpu.VMEM((tm, tn), jnp.float32)],
        compiler_params=pltpu.CompilerParams(
            dimension_semantics=("parallel", "parallel", "parallel", "arbitrary"),
            vmem_limit_bytes=32 * 1024 * 1024,
        ),
        cost_estimate=pl.CostEstimate(
            flops=2 * g * m_pad * n_pad * k_pad,
            transcendentals=(g * m_pad * n_pad) if act == "sigmoid" else 0,
            bytes_accessed=(x_p.size * 2 + w_p.size * 2 + shift_p.size * 4
                            + g * m_pad * n_pad * 4),
        ),
    )(x_p, w_p, shift_p)
    return out[:, :m, :n]


# --------------------------------------------------------------------------------------
# Glue: im2col (encoder), sub-pixel decomposition (decoder), BN folding
# --------------------------------------------------------------------------------------
def _fold_bn(bias, bn):
    gamma, beta, mean, var = bn
    inv_std = 1.0 / jnp.sqrt(var + BN_EPS)
    scale = gamma * inv_std                      # folded into the weight matrix (trace time)
    shift = beta + (bias - mean) * scale         # applied in-kernel
    return scale, shift


def _im2col(x_nhwc, k, stride, pad):
    n, h, w, c = x_nhwc.shape
    xp = jnp.pad(x_nhwc, ((0, 0), (pad, pad), (pad, pad), (0, 0)))
    ho = (h + 2 * pad - k) // stride + 1
    wo = (w + 2 * pad - k) // stride + 1
    cols = []
    for ki in range(k):
        for kj in range(k):
            cols.append(xp[:, ki:ki + stride * ho:stride, kj:kj + stride * wo:stride, :])
    patches = jnp.stack(cols, axis=-2)           # (N, Ho, Wo, k*k, C) -- tap-major, ch-minor
    return patches.reshape(n * ho * wo, k * k * c), ho, wo


def conv_bn_act(x_nhwc, weight_oihw, bias, bn, act):
    # weight_oihw: (Cout, Cin, kH, kW)  (PyTorch Conv2d layout)
    n = x_nhwc.shape[0]
    cout = weight_oihw.shape[0]
    patches, ho, wo = _im2col(x_nhwc, K_SIZE, STRIDE, PAD)
    w_mat = jnp.transpose(weight_oihw, (2, 3, 1, 0)).reshape(-1, cout)   # (kH*kW*Cin, Cout)
    scale, shift = _fold_bn(bias, bn)
    w_folded = w_mat * scale[None, :]
    y = fused_bmm_shift_act(patches[None], w_folded[None], shift, act)   # (1, M, Cout)
    return y[0].reshape(n, ho, wo, cout)


def convT_bn_act(x_nhwc, weight_iohw, bias, bn, act):
    # weight_iohw: (Cin, Cout, kH, kW)  (PyTorch ConvTranspose2d layout)
    # Sub-pixel decomposition of ConvTranspose(k=4, s=2, p=1): output phase (py, px) is a
    # stride-1 2x2 conv over the input using kernel taps (3 - py - 2*dy, 3 - px - 2*dx).
    # No zero dilation -> no structural-zero FLOPs.
    n, h, w_sp, cin = x_nhwc.shape
    cout = weight_iohw.shape[1]
    scale, shift = _fold_bn(bias, bn)

    xp = jnp.pad(x_nhwc, ((0, 0), (1, 1), (1, 1), (0, 0)))

    phase_patches = []
    phase_weights = []
    for py in range(2):
        for px in range(2):
            taps = []
            wtaps = []
            for dy in range(2):
                for dx in range(2):
                    taps.append(xp[:, py + dy: py + dy + h, px + dx: px + dx + w_sp, :])
                    wtaps.append(weight_iohw[:, :, 3 - py - 2 * dy, 3 - px - 2 * dx])
            p = jnp.stack(taps, axis=-2).reshape(n * h * w_sp, 4 * cin)  # (M, 4*Cin)
            wm = jnp.concatenate(wtaps, axis=0)                          # (4*Cin, Cout)
            phase_patches.append(p)
            phase_weights.append(wm)

    patches = jnp.stack(phase_patches, axis=0)                           # (4, M, 4*Cin)
    w_all = jnp.stack(phase_weights, axis=0) * scale[None, None, :]      # (4, 4*Cin, Cout)

    y = fused_bmm_shift_act(patches, w_all, shift, act)                  # (4, M, Cout)
    y = y.reshape(2, 2, n, h, w_sp, cout)                                # (py, px, n, h, w, c)
    y = jnp.transpose(y, (2, 3, 0, 4, 1, 5)).reshape(n, 2 * h, 2 * w_sp, cout)
    return y


# --------------------------------------------------------------------------------------
# Deterministic parameter construction (fresh-module, eval-mode semantics)
# --------------------------------------------------------------------------------------
def init_params(key):
    enc_ch = [(3, 64), (64, 128), (128, 256), (256, 512)]
    dec_ch = [(512, 256), (256, 128), (128, 64), (64, 3)]
    params = {"encoder": [], "decoder": []}

    def bn_default(c):
        return (jnp.ones((c,), jnp.float32), jnp.zeros((c,), jnp.float32),
                jnp.zeros((c,), jnp.float32), jnp.ones((c,), jnp.float32))

    for cin, cout in enc_ch:
        key, kw, kb = jax.random.split(key, 3)
        w = 0.05 * jax.random.normal(kw, (cout, cin, K_SIZE, K_SIZE), jnp.float32)
        b = 0.01 * jax.random.normal(kb, (cout,), jnp.float32)
        params["encoder"].append((w, b, bn_default(cout)))

    for cin, cout in dec_ch:
        key, kw, kb = jax.random.split(key, 3)
        w = 0.05 * jax.random.normal(kw, (cin, cout, K_SIZE, K_SIZE), jnp.float32)
        b = 0.01 * jax.random.normal(kb, (cout,), jnp.float32)
        params["decoder"].append((w, b, bn_default(cout)))

    return params


# --------------------------------------------------------------------------------------
# Forward pass (NCHW in / NCHW out, matching the PyTorch module)
# --------------------------------------------------------------------------------------
def autoencoder_forward(x_nchw, params):
    h = jnp.transpose(x_nchw, (0, 2, 3, 1))                              # -> NHWC
    for (w, b, bn) in params["encoder"]:
        h = conv_bn_act(h, w, b, bn, act="relu")
    encoded = h
    n_dec = len(params["decoder"])
    for idx, (w, b, bn) in enumerate(params["decoder"]):
        act = "sigmoid" if idx == n_dec - 1 else "relu"
        h = convT_bn_act(h, w, b, bn, act=act)
    decoded = h
    return (jnp.transpose(encoded, (0, 3, 1, 2)),                        # (N, 512, H/16, W/16)
            jnp.transpose(decoded, (0, 3, 1, 2)))                        # (N, 3, H, W)


if __name__ == "__main__":
    key = jax.random.PRNGKey(0)
    key, kx = jax.random.split(key)
    x = jax.random.uniform(kx, (2, 3, 16, 16), jnp.float32)              # NCHW, like PyTorch

    params = init_params(key)

    fwd = jax.jit(lambda xx: autoencoder_forward(xx, params))
    encoded, decoded = fwd(x)
    jax.block_until_ready(encoded)
    jax.block_until_ready(decoded)

    assert encoded.shape == (2, 512, 1, 1), encoded.shape
    assert decoded.shape == (2, 3, 16, 16), decoded.shape
    assert bool(jnp.all(jnp.isfinite(encoded))) and bool(jnp.all(jnp.isfinite(decoded)))
    assert bool(jnp.all(decoded >= 0.0)) and bool(jnp.all(decoded <= 1.0))  # sigmoid output

    print("KERNEL_OK")
</pallas_src>

<mosaic_0001>
module attributes {stable_mosaic.version = 11 : i64} {
  func.func @_bmm_shift_act_kernel(%arg0: i32, %arg1: i32, %arg2: i32, %arg3: i32, %arg4: memref<1x128x128xbf16, #tpu.memory_space<vmem>>, %arg5: memref<1x128x128xbf16, #tpu.memory_space<vmem>>, %arg6: memref<1x1x128xf32, #tpu.memory_space<vmem>>, %arg7: memref<1x128x128xf32, #tpu.memory_space<vmem>>, %arg8: memref<128x128xf32, #tpu.memory_space<vmem>>) attributes {dimension_semantics = [#tpu.dimension_semantics<parallel>, #tpu.dimension_semantics<parallel>, #tpu.dimension_semantics<parallel>, #tpu.dimension_semantics<arbitrary>], iteration_bounds = array<i64: 1, 1, 1, 1>, scalar_prefetch = 0 : i64, scratch_operands = 1 : i64, tpu.core_type = #tpu.core_type<tc>, window_params = [{transform_indices = @transform_0, window_bounds = array<i64: 1, 128, 128>}, {transform_indices = @transform_1, window_bounds = array<i64: 1, 128, 128>}, {transform_indices = @transform_2, window_bounds = array<i64: 1, 1, 128>}, {transform_indices = @transform_3, window_bounds = array<i64: 1, 128, 128>}]} {
    %c0_i32 = arith.constant 0 : i32
    %0 = arith.cmpi eq, %arg3, %c0_i32 : i32
    %1 = arith.extui %0 : i1 to i32
    %c0_i32_0 = arith.constant 0 : i32
    %2 = arith.cmpi ne, %1, %c0_i32_0 : i32
    scf.if %2 {
      %cst_12 = arith.constant 0.000000e+00 : f32
      %14 = vector.broadcast %cst_12 : f32 to vector<128x128xf32>
      %c0_13 = arith.constant 0 : index
      %c0_14 = arith.constant 0 : index
      %15 = vector.load %arg8[%c0_13, %c0_14] : memref<128x128xf32, #tpu.memory_space<vmem>>, vector<128x128xf32>
      tpu.vector_store %arg8[%c0_13, %c0_14], %14 {strides = array<i32>} : memref<128x128xf32, #tpu.memory_space<vmem>>, vector<128x128xf32>,
    } else {
    }
    %c0 = arith.constant 0 : index
    %c0_1 = arith.constant 0 : index
    %3 = vector.load %arg8[%c0, %c0_1] : memref<128x128xf32, #tpu.memory_space<vmem>>, vector<128x128xf32>
    %c0_2 = arith.constant 0 : index
    %c0_3 = arith.constant 0 : index
    %c0_4 = arith.constant 0 : index
    %4 = vector.load %arg4[%c0_2, %c0_3, %c0_4] : memref<1x128x128xbf16, #tpu.memory_space<vmem>>, vector<1x128x128xbf16>
    %5 = vector.shape_cast %4 : vector<1x128x128xbf16> to vector<128x128xbf16>
    %c0_5 = arith.constant 0 : index
    %c0_6 = arith.constant 0 : index
    %c0_7 = arith.constant 0 : index
    %6 = vector.load %arg5[%c0_5, %c0_6, %c0_7] : memref<1x128x128xbf16, #tpu.memory_space<vmem>>, vector<1x128x128xbf16>
    %7 = vector.shape_cast %6 : vector<1x128x128xbf16> to vector<128x128xbf16>
    %cst = arith.constant dense<0.000000e+00> : vector<128x128xf32>
    %8 = tpu.matmul %5, %7, %cst {dimension_numbers = #tpu.dot_dimension_numbers<[1], [0], [0], [1], [0, 0, 1, 1], [], []>} : vector<128x128xbf16>, vector<128x128xbf16>, vector<128x128xf32> -> vector<128x128xf32>
    %9 = arith.addf %3, %8 : vector<128x128xf32>
    %c0_8 = arith.constant 0 : index
    %c0_9 = arith.constant 0 : index
    %10 = vector.load %arg8[%c0_8, %c0_9] : memref<128x128xf32, #tpu.memory_space<vmem>>, vector<128x128xf32>
    tpu.vector_store %arg8[%c0_8, %c0_9], %9 {strides = array<i32>} : memref<128x128xf32, #tpu.memory_space<vmem>>, vector<128x128xf32>,
    %c0_i32_10 = arith.constant 0 : i32
    %11 = arith.cmpi eq, %arg3, %c0_i32_10 : i32
    %12 = arith.extui %11 : i1 to i32
    %c0_i32_11 = arith.constant 0 : i32
    %13 = arith.cmpi ne, %12, %c0_i32_11 : i32
    scf.if %13 {
      %c0_12 = arith.constant 0 : index
      %c0_13 = arith.constant 0 : index
      %14 = vector.load %arg8[%c0_12, %c0_13] : memref<128x128xf32, #tpu.memory_space<vmem>>, vector<128x128xf32>
      %c0_14 = arith.constant 0 : index
      %c0_15 = arith.constant 0 : index
      %c0_16 = arith.constant 0 : index
      %15 = vector.load %arg6[%c0_14, %c0_15, %c0_16] : memref<1x1x128xf32, #tpu.memory_space<vmem>>, vector<1x1x128xf32>
      %16 = vector.shape_cast %15 : vector<1x1x128xf32> to vector<1x128xf32>
      %17 = vector.broadcast %16 : vector<1x128xf32> to vector<128x128xf32>
      %18 = arith.addf %14, %17 : vector<128x128xf32>
      %cst_17 = arith.constant 0.000000e+00 : f32
      %19 = vector.broadcast %cst_17 : f32 to vector<128x128xf32>
      %20 = arith.maximumf %18, %19 : vector<128x128xf32>
      %c0_18 = arith.constant 0 : index
      %c0_19 = arith.constant 0 : index
      %c0_20 = arith.constant 0 : index
      %21 = vector.load %arg7[%c0_18, %c0_19, %c0_20] : memref<1x128x128xf32, #tpu.memory_space<vmem>>, vector<1x128x128xf32>
      %22 = vector.shape_cast %21 : vector<1x128x128xf32> to vector<128x128xf32>
      %23 = vector.shape_cast %20 : vector<128x128xf32> to vector<1x128x128xf32>
      tpu.vector_store %arg7[%c0_18, %c0_19, %c0_20], %23 {strides = array<i32>} : memref<1x128x128xf32, #tpu.memory_space<vmem>>, vector<1x128x128xf32>,
    } else {
    }
    return
  }
  func.func @transform_0(%arg0: i32, %arg1: i32, %arg2: i32, %arg3: i32) -> (i32, i32, i32) {
    %c0_i32 = arith.constant 0 : i32
    return %arg0, %arg1, %arg3 : i32, i32, i32
  }
  func.func @transform_1(%arg0: i32, %arg1: i32, %arg2: i32, %arg3: i32) -> (i32, i32, i32) {
    %c0_i32 = arith.constant 0 : i32
    return %arg0, %arg3, %arg2 : i32, i32, i32
  }
  func.func @transform_2(%arg0: i32, %arg1: i32, %arg2: i32, %arg3: i32) -> (i32, i32, i32) {
    %c0_i32 = arith.constant 0 : i32
    %c0_i32_0 = arith.constant 0 : i32
    %c0_i32_1 = arith.constant 0 : i32
    return %c0_i32, %c0_i32_0, %arg2 : i32, i32, i32
  }
  func.func @transform_3(%arg0: i32, %arg1: i32, %arg2: i32, %arg3: i32) -> (i32, i32, i32) {
    %c0_i32 = arith.constant 0 : i32
    return %arg0, %arg1, %arg2 : i32, i32, i32
  }
}

module attributes {stable_mosaic.version = 11 : i64} {
  func.func @_bmm_shift_act_kernel(%arg0: i32, %arg1: i32, %arg2: i32, %arg3: i32, %arg4: memref<1x32x1024xbf16, #tpu.memory_space<vmem>>, %arg5: memref<1x1024x128xbf16, #tpu.memory_space<vmem>>, %arg6: memref<1x1x128xf32, #tpu.memory_space<vmem>>, %arg7: memref<1x32x128xf32, #tpu.memory_space<vmem>>, %arg8: memref<32x128xf32, #tpu.memory_space<vmem>>) attributes {dimension_semantics = [#tpu.dimension_semantics<parallel>, #tpu.dimension_semantics<parallel>, #tpu.dimension_semantics<parallel>, #tpu.dimension_semantics<arbitrary>], iteration_bounds = array<i64: 1, 1, 1, 1>, scalar_prefetch = 0 : i64, scratch_operands = 1 : i64, tpu.core_type = #tpu.core_type<tc>, window_params = [{transform_indices = @transform_0, window_bounds = array<i64: 1, 32, 1024>}, {transform_indices = @transform_1, window_bounds = array<i64: 1, 1024, 128>}, {transform_indices = @transform_2, window_bounds = array<i64: 1, 1, 128>}, {transform_indices = @transform_3, window_bounds = array<i64: 1, 32, 128>}]} {
    %c0_i32 = arith.constant 0 : i32
    %0 = arith.cmpi eq, %arg3, %c0_i32 : i32
    %1 = arith.extui %0 : i1 to i32
    %c0_i32_0 = arith.constant 0 : i32
    %2 = arith.cmpi ne, %1, %c0_i32_0 : i32
    scf.if %2 {
      %cst_12 = arith.constant 0.000000e+00 : f32
      %14 = vector.broadcast %cst_12 : f32 to vector<32x128xf32>
      %c0_13 = arith.constant 0 : index
      %c0_14 = arith.constant 0 : index
      %15 = vector.load %arg8[%c0_13, %c0_14] : memref<32x128xf32, #tpu.memory_space<vmem>>, vector<32x128xf32>
      tpu.vector_store %arg8[%c0_13, %c0_14], %14 {strides = array<i32>} : memref<32x128xf32, #tpu.memory_space<vmem>>, vector<32x128xf32>,
    } else {
    }
    %c0 = arith.constant 0 : index
    %c0_1 = arith.constant 0 : index
    %3 = vector.load %arg8[%c0, %c0_1] : memref<32x128xf32, #tpu.memory_space<vmem>>, vector<32x128xf32>
    %c0_2 = arith.constant 0 : index
    %c0_3 = arith.constant 0 : index
    %c0_4 = arith.constant 0 : index
    %4 = vector.load %arg4[%c0_2, %c0_3, %c0_4] : memref<1x32x1024xbf16, #tpu.memory_space<vmem>>, vector<1x32x1024xbf16>
    %5 = vector.shape_cast %4 : vector<1x32x1024xbf16> to vector<32x1024xbf16>
    %c0_5 = arith.constant 0 : index
    %c0_6 = arith.constant 0 : index
    %c0_7 = arith.constant 0 : index
    %6 = vector.load %arg5[%c0_5, %c0_6, %c0_7] : memref<1x1024x128xbf16, #tpu.memory_space<vmem>>, vector<1x1024x128xbf16>
    %7 = vector.shape_cast %6 : vector<1x1024x128xbf16> to vector<1024x128xbf16>
    %cst = arith.constant dense<0.000000e+00> : vector<32x128xf32>
    %8 = tpu.matmul %5, %7, %cst {dimension_numbers = #tpu.dot_dimension_numbers<[1], [0], [0], [1], [0, 0, 1, 1], [], []>} : vector<32x1024xbf16>, vector<1024x128xbf16>, vector<32x128xf32> -> vector<32x128xf32>
    %9 = arith.addf %3, %8 : vector<32x128xf32>
    %c0_8 = arith.constant 0 : index
    %c0_9 = arith.constant 0 : index
    %10 = vector.load %arg8[%c0_8, %c0_9] : memref<32x128xf32, #tpu.memory_space<vmem>>, vector<32x128xf32>
    tpu.vector_store %arg8[%c0_8, %c0_9], %9 {strides = array<i32>} : memref<32x128xf32, #tpu.memory_space<vmem>>, vector<32x128xf32>,
    %c0_i32_10 = arith.constant 0 : i32
    %11 = arith.cmpi eq, %arg3, %c0_i32_10 : i32
    %12 = arith.extui %11 : i1 to i32
    %c0_i32_11 = arith.constant 0 : i32
    %13 = arith.cmpi ne, %12, %c0_i32_11 : i32
    scf.if %13 {
      %c0_12 = arith.constant 0 : index
      %c0_13 = arith.constant 0 : index
      %14 = vector.load %arg8[%c0_12, %c0_13] : memref<32x128xf32, #tpu.memory_space<vmem>>, vector<32x128xf32>
      %c0_14 = arith.constant 0 : index
      %c0_15 = arith.constant 0 : index
      %c0_16 = arith.constant 0 : index
      %15 = vector.load %arg6[%c0_14, %c0_15, %c0_16] : memref<1x1x128xf32, #tpu.memory_space<vmem>>, vector<1x1x128xf32>
      %16 = vector.shape_cast %15 : vector<1x1x128xf32> to vector<1x128xf32>
      %17 = vector.broadcast %16 : vector<1x128xf32> to vector<32x128xf32>
      %18 = arith.addf %14, %17 : vector<32x128xf32>
      %cst_17 = arith.constant 0.000000e+00 : f32
      %19 = vector.broadcast %cst_17 : f32 to vector<32x128xf32>
      %20 = arith.maximumf %18, %19 : vector<32x128xf32>
      %c0_18 = arith.constant 0 : index
      %c0_19 = arith.constant 0 : index
      %c0_20 = arith.constant 0 : index
      %21 = vector.load %arg7[%c0_18, %c0_19, %c0_20] : memref<1x32x128xf32, #tpu.memory_space<vmem>>, vector<1x32x128xf32>
      %22 = vector.shape_cast %21 : vector<1x32x128xf32> to vector<32x128xf32>
      %23 = vector.shape_cast %20 : vector<32x128xf32> to vector<1x32x128xf32>
      tpu.vector_store %arg7[%c0_18, %c0_19, %c0_20], %23 {strides = array<i32>} : memref<1x32x128xf32, #tpu.memory_space<vmem>>, vector<1x32x128xf32>,
    } else {
    }
    return
  }
  func.func @transform_0(%arg0: i32, %arg1: i32, %arg2: i32, %arg3: i32) -> (i32, i32, i32) {
    %c0_i32 = arith.constant 0 : i32
    return %arg0, %arg1, %arg3 : i32, i32, i32
  }
  func.func @transform_1(%arg0: i32, %arg1: i32, %arg2: i32, %arg3: i32) -> (i32, i32, i32) {
    %c0_i32 = arith.constant 0 : i32
    return %arg0, %arg3, %arg2 : i32, i32, i32
  }
  func.func @transform_2(%arg0: i32, %arg1: i32, %arg2: i32, %arg3: i32) -> (i32, i32, i32) {
    %c0_i32 = arith.constant 0 : i32
    %c0_i32_0 = arith.constant 0 : i32
    %c0_i32_1 = arith.constant 0 : i32
    return %c0_i32, %c0_i32_0, %arg2 : i32, i32, i32
  }
  func.func @transform_3(%arg0: i32, %arg1: i32, %arg2: i32, %arg3: i32) -> (i32, i32, i32) {
    %c0_i32 = arith.constant 0 : i32
    return %arg0, %arg1, %arg2 : i32, i32, i32
  }
}

module attributes {stable_mosaic.version = 11 : i64} {
  func.func @_bmm_shift_act_kernel(%arg0: i32, %arg1: i32, %arg2: i32, %arg3: i32, %arg4: memref<1x8x1024xbf16, #tpu.memory_space<vmem>>, %arg5: memref<1x1024x256xbf16, #tpu.memory_space<vmem>>, %arg6: memref<1x1x256xf32, #tpu.memory_space<vmem>>, %arg7: memref<1x8x256xf32, #tpu.memory_space<vmem>>, %arg8: memref<8x256xf32, #tpu.memory_space<vmem>>) attributes {dimension_semantics = [#tpu.dimension_semantics<parallel>, #tpu.dimension_semantics<parallel>, #tpu.dimension_semantics<parallel>, #tpu.dimension_semantics<arbitrary>], iteration_bounds = array<i64: 1, 1, 1, 2>, scalar_prefetch = 0 : i64, scratch_operands = 1 : i64, tpu.core_type = #tpu.core_type<tc>, window_params = [{transform_indices = @transform_0, window_bounds = array<i64: 1, 8, 1024>}, {transform_indices = @transform_1, window_bounds = array<i64: 1, 1024, 256>}, {transform_indices = @transform_2, window_bounds = array<i64: 1, 1, 256>}, {transform_indices = @transform_3, window_bounds = array<i64: 1, 8, 256>}]} {
    %c0_i32 = arith.constant 0 : i32
    %0 = arith.cmpi eq, %arg3, %c0_i32 : i32
    %1 = arith.extui %0 : i1 to i32
    %c0_i32_0 = arith.constant 0 : i32
    %2 = arith.cmpi ne, %1, %c0_i32_0 : i32
    scf.if %2 {
      %cst_11 = arith.constant 0.000000e+00 : f32
      %14 = vector.broadcast %cst_11 : f32 to vector<8x256xf32>
      %c0_12 = arith.constant 0 : index
      %c0_13 = arith.constant 0 : index
      %15 = vector.load %arg8[%c0_12, %c0_13] : memref<8x256xf32, #tpu.memory_space<vmem>>, vector<8x256xf32>
      tpu.vector_store %arg8[%c0_12, %c0_13], %14 {strides = array<i32>} : memref<8x256xf32, #tpu.memory_space<vmem>>, vector<8x256xf32>,
    } else {
    }
    %c0 = arith.constant 0 : index
    %c0_1 = arith.constant 0 : index
    %3 = vector.load %arg8[%c0, %c0_1] : memref<8x256xf32, #tpu.memory_space<vmem>>, vector<8x256xf32>
    %c0_2 = arith.constant 0 : index
    %c0_3 = arith.constant 0 : index
    %c0_4 = arith.constant 0 : index
    %4 = vector.load %arg4[%c0_2, %c0_3, %c0_4] : memref<1x8x1024xbf16, #tpu.memory_space<vmem>>, vector<1x8x1024xbf16>
    %5 = vector.shape_cast %4 : vector<1x8x1024xbf16> to vector<8x1024xbf16>
    %c0_5 = arith.constant 0 : index
    %c0_6 = arith.constant 0 : index
    %c0_7 = arith.constant 0 : index
    %6 = vector.load %arg5[%c0_5, %c0_6, %c0_7] : memref<1x1024x256xbf16, #tpu.memory_space<vmem>>, vector<1x1024x256xbf16>
    %7 = vector.shape_cast %6 : vector<1x1024x256xbf16> to vector<1024x256xbf16>
    %cst = arith.constant dense<0.000000e+00> : vector<8x256xf32>
    %8 = tpu.matmul %5, %7, %cst {dimension_numbers = #tpu.dot_dimension_numbers<[1], [0], [0], [1], [0, 0, 1, 1], [], []>} : vector<8x1024xbf16>, vector<1024x256xbf16>, vector<8x256xf32> -> vector<8x256xf32>
    %9 = arith.addf %3, %8 : vector<8x256xf32>
    %c0_8 = arith.constant 0 : index
    %c0_9 = arith.constant 0 : index
    %10 = vector.load %arg8[%c0_8, %c0_9] : memref<8x256xf32, #tpu.memory_space<vmem>>, vector<8x256xf32>
    tpu.vector_store %arg8[%c0_8, %c0_9], %9 {strides = array<i32>} : memref<8x256xf32, #tpu.memory_space<vmem>>, vector<8x256xf32>,
    %c1_i32 = arith.constant 1 : i32
    %11 = arith.cmpi eq, %arg3, %c1_i32 : i32
    %12 = arith.extui %11 : i1 to i32
    %c0_i32_10 = arith.constant 0 : i32
    %13 = arith.cmpi ne, %12, %c0_i32_10 : i32
    scf.if %13 {
      %c0_11 = arith.constant 0 : index
      %c0_12 = arith.constant 0 : index
      %14 = vector.load %arg8[%c0_11, %c0_12] : memref<8x256xf32, #tpu.memory_space<vmem>>, vector<8x256xf32>
      %c0_13 = arith.constant 0 : index
      %c0_14 = arith.constant 0 : index
      %c0_15 = arith.constant 0 : index
      %15 = vector.load %arg6[%c0_13, %c0_14, %c0_15] : memref<1x1x256xf32, #tpu.memory_space<vmem>>, vector<1x1x256xf32>
      %16 = vector.shape_cast %15 : vector<1x1x256xf32> to vector<1x256xf32>
      %17 = vector.broadcast %16 : vector<1x256xf32> to vector<8x256xf32>
      %18 = arith.addf %14, %17 : vector<8x256xf32>
      %cst_16 = arith.constant 0.000000e+00 : f32
      %19 = vector.broadcast %cst_16 : f32 to vector<8x256xf32>
      %20 = arith.maximumf %18, %19 : vector<8x256xf32>
      %c0_17 = arith.constant 0 : index
      %c0_18 = arith.constant 0 : index
      %c0_19 = arith.constant 0 : index
      %21 = vector.load %arg7[%c0_17, %c0_18, %c0_19] : memref<1x8x256xf32, #tpu.memory_space<vmem>>, vector<1x8x256xf32>
      %22 = vector.shape_cast %21 : vector<1x8x256xf32> to vector<8x256xf32>
      %23 = vector.shape_cast %20 : vector<8x256xf32> to vector<1x8x256xf32>
      tpu.vector_store %arg7[%c0_17, %c0_18, %c0_19], %23 {strides = array<i32>} : memref<1x8x256xf32, #tpu.memory_space<vmem>>, vector<1x8x256xf32>,
    } else {
    }
    return
  }
  func.func @transform_0(%arg0: i32, %arg1: i32, %arg2: i32, %arg3: i32) -> (i32, i32, i32) {
    %c0_i32 = arith.constant 0 : i32
    return %arg0, %arg1, %arg3 : i32, i32, i32
  }
  func.func @transform_1(%arg0: i32, %arg1: i32, %arg2: i32, %arg3: i32) -> (i32, i32, i32) {
    %c0_i32 = arith.constant 0 : i32
    return %arg0, %arg3, %arg2 : i32, i32, i32
  }
  func.func @transform_2(%arg0: i32, %arg1: i32, %arg2: i32, %arg3: i32) -> (i32, i32, i32) {
    %c0_i32 = arith.constant 0 : i32
    %c0_i32_0 = arith.constant 0 : i32
    %c0_i32_1 = arith.constant 0 : i32
    return %c0_i32, %c0_i32_0, %arg2 : i32, i32, i32
  }
  func.func @transform_3(%arg0: i32, %arg1: i32, %arg2: i32, %arg3: i32) -> (i32, i32, i32) {
    %c0_i32 = arith.constant 0 : i32
    return %arg0, %arg1, %arg2 : i32, i32, i32
  }
}

module attributes {stable_mosaic.version = 11 : i64} {
  func.func @_bmm_shift_act_kernel(%arg0: i32, %arg1: i32, %arg2: i32, %arg3: i32, %arg4: memref<1x8x1024xbf16, #tpu.memory_space<vmem>>, %arg5: memref<1x1024x256xbf16, #tpu.memory_space<vmem>>, %arg6: memref<1x1x256xf32, #tpu.memory_space<vmem>>, %arg7: memref<1x8x256xf32, #tpu.memory_space<vmem>>, %arg8: memref<8x256xf32, #tpu.memory_space<vmem>>) attributes {dimension_semantics = [#tpu.dimension_semantics<parallel>, #tpu.dimension_semantics<parallel>, #tpu.dimension_semantics<parallel>, #tpu.dimension_semantics<arbitrary>], iteration_bounds = array<i64: 1, 1, 2, 4>, scalar_prefetch = 0 : i64, scratch_operands = 1 : i64, tpu.core_type = #tpu.core_type<tc>, window_params = [{transform_indices = @transform_0, window_bounds = array<i64: 1, 8, 1024>}, {transform_indices = @transform_1, window_bounds = array<i64: 1, 1024, 256>}, {transform_indices = @transform_2, window_bounds = array<i64: 1, 1, 256>}, {transform_indices = @transform_3, window_bounds = array<i64: 1, 8, 256>}]} {
    %c0_i32 = arith.constant 0 : i32
    %0 = arith.cmpi eq, %arg3, %c0_i32 : i32
    %1 = arith.extui %0 : i1 to i32
    %c0_i32_0 = arith.constant 0 : i32
    %2 = arith.cmpi ne, %1, %c0_i32_0 : i32
    scf.if %2 {
      %cst_11 = arith.constant 0.000000e+00 : f32
      %14 = vector.broadcast %cst_11 : f32 to vector<8x256xf32>
      %c0_12 = arith.constant 0 : index
      %c0_13 = arith.constant 0 : index
      %15 = vector.load %arg8[%c0_12, %c0_13] : memref<8x256xf32, #tpu.memory_space<vmem>>, vector<8x256xf32>
      tpu.vector_store %arg8[%c0_12, %c0_13], %14 {strides = array<i32>} : memref<8x256xf32, #tpu.memory_space<vmem>>, vector<8x256xf32>,
    } else {
    }
    %c0 = arith.constant 0 : index
    %c0_1 = arith.constant 0 : index
    %3 = vector.load %arg8[%c0, %c0_1] : memref<8x256xf32, #tpu.memory_space<vmem>>, vector<8x256xf32>
    %c0_2 = arith.constant 0 : index
    %c0_3 = arith.constant 0 : index
    %c0_4 = arith.constant 0 : index
    %4 = vector.load %arg4[%c0_2, %c0_3, %c0_4] : memref<1x8x1024xbf16, #tpu.memory_space<vmem>>, vector<1x8x1024xbf16>
    %5 = vector.shape_cast %4 : vector<1x8x1024xbf16> to vector<8x1024xbf16>
    %c0_5 = arith.constant 0 : index
    %c0_6 = arith.constant 0 : index
    %c0_7 = arith.constant 0 : index
    %6 = vector.load %arg5[%c0_5, %c0_6, %c0_7] : memref<1x1024x256xbf16, #tpu.memory_space<vmem>>, vector<1x1024x256xbf16>
    %7 = vector.shape_cast %6 : vector<1x1024x256xbf16> to vector<1024x256xbf16>
    %cst = arith.constant dense<0.000000e+00> : vector<8x256xf32>
    %8 = tpu.matmul %5, %7, %cst {dimension_numbers = #tpu.dot_dimension_numbers<[1], [0], [0], [1], [0, 0, 1, 1], [], []>} : vector<8x1024xbf16>, vector<1024x256xbf16>, vector<8x256xf32> -> vector<8x256xf32>
    %9 = arith.addf %3, %8 : vector<8x256xf32>
    %c0_8 = arith.constant 0 : index
    %c0_9 = arith.constant 0 : index
    %10 = vector.load %arg8[%c0_8, %c0_9] : memref<8x256xf32, #tpu.memory_space<vmem>>, vector<8x256xf32>
    tpu.vector_store %arg8[%c0_8, %c0_9], %9 {strides = array<i32>} : memref<8x256xf32, #tpu.memory_space<vmem>>, vector<8x256xf32>,
    %c3_i32 = arith.constant 3 : i32
    %11 = arith.cmpi eq, %arg3, %c3_i32 : i32
    %12 = arith.extui %11 : i1 to i32
    %c0_i32_10 = arith.constant 0 : i32
    %13 = arith.cmpi ne, %12, %c0_i32_10 : i32
    scf.if %13 {
      %c0_11 = arith.constant 0 : index
      %c0_12 = arith.constant 0 : index
      %14 = vector.load %arg8[%c0_11, %c0_12] : memref<8x256xf32, #tpu.memory_space<vmem>>, vector<8x256xf32>
      %c0_13 = arith.constant 0 : index
      %c0_14 = arith.constant 0 : index
      %c0_15 = arith.constant 0 : index
      %15 = vector.load %arg6[%c0_13, %c0_14, %c0_15] : memref<1x1x256xf32, #tpu.memory_space<vmem>>, vector<1x1x256xf32>
      %16 = vector.shape_cast %15 : vector<1x1x256xf32> to vector<1x256xf32>
      %17 = vector.broadcast %16 : vector<1x256xf32> to vector<8x256xf32>
      %18 = arith.addf %14, %17 : vector<8x256xf32>
      %cst_16 = arith.constant 0.000000e+00 : f32
      %19 = vector.broadcast %cst_16 : f32 to vector<8x256xf32>
      %20 = arith.maximumf %18, %19 : vector<8x256xf32>
      %c0_17 = arith.constant 0 : index
      %c0_18 = arith.constant 0 : index
      %c0_19 = arith.constant 0 : index
      %21 = vector.load %arg7[%c0_17, %c0_18, %c0_19] : memref<1x8x256xf32, #tpu.memory_space<vmem>>, vector<1x8x256xf32>
      %22 = vector.shape_cast %21 : vector<1x8x256xf32> to vector<8x256xf32>
      %23 = vector.shape_cast %20 : vector<8x256xf32> to vector<1x8x256xf32>
      tpu.vector_store %arg7[%c0_17, %c0_18, %c0_19], %23 {strides = array<i32>} : memref<1x8x256xf32, #tpu.memory_space<vmem>>, vector<1x8x256xf32>,
    } else {
    }
    return
  }
  func.func @transform_0(%arg0: i32, %arg1: i32, %arg2: i32, %arg3: i32) -> (i32, i32, i32) {
    %c0_i32 = arith.constant 0 : i32
    return %arg0, %arg1, %arg3 : i32, i32, i32
  }
  func.func @transform_1(%arg0: i32, %arg1: i32, %arg2: i32, %arg3: i32) -> (i32, i32, i32) {
    %c0_i32 = arith.constant 0 : i32
    return %arg0, %arg3, %arg2 : i32, i32, i32
  }
  func.func @transform_2(%arg0: i32, %arg1: i32, %arg2: i32, %arg3: i32) -> (i32, i32, i32) {
    %c0_i32 = arith.constant 0 : i32
    %c0_i32_0 = arith.constant 0 : i32
    %c0_i32_1 = arith.constant 0 : i32
    return %c0_i32, %c0_i32_0, %arg2 : i32, i32, i32
  }
  func.func @transform_3(%arg0: i32, %arg1: i32, %arg2: i32, %arg3: i32) -> (i32, i32, i32) {
    %c0_i32 = arith.constant 0 : i32
    return %arg0, %arg1, %arg2 : i32, i32, i32
  }
}

module attributes {stable_mosaic.version = 11 : i64} {
  func.func @_bmm_shift_act_kernel(%arg0: i32, %arg1: i32, %arg2: i32, %arg3: i32, %arg4: memref<1x8x1024xbf16, #tpu.memory_space<vmem>>, %arg5: memref<1x1024x256xbf16, #tpu.memory_space<vmem>>, %arg6: memref<1x1x256xf32, #tpu.memory_space<vmem>>, %arg7: memref<1x8x256xf32, #tpu.memory_space<vmem>>, %arg8: memref<8x256xf32, #tpu.memory_space<vmem>>) attributes {dimension_semantics = [#tpu.dimension_semantics<parallel>, #tpu.dimension_semantics<parallel>, #tpu.dimension_semantics<parallel>, #tpu.dimension_semantics<arbitrary>], iteration_bounds = array<i64: 4, 1, 1, 2>, scalar_prefetch = 0 : i64, scratch_operands = 1 : i64, tpu.core_type = #tpu.core_type<tc>, window_params = [{transform_indices = @transform_0, window_bounds = array<i64: 1, 8, 1024>}, {transform_indices = @transform_1, window_bounds = array<i64: 1, 1024, 256>}, {transform_indices = @transform_2, window_bounds = array<i64: 1, 1, 256>}, {transform_indices = @transform_3, window_bounds = array<i64: 1, 8, 256>}]} {
    %c0_i32 = arith.constant 0 : i32
    %0 = arith.cmpi eq, %arg3, %c0_i32 : i32
    %1 = arith.extui %0 : i1 to i32
    %c0_i32_0 = arith.constant 0 : i32
    %2 = arith.cmpi ne, %1, %c0_i32_0 : i32
    scf.if %2 {
      %cst_11 = arith.constant 0.000000e+00 : f32
      %14 = vector.broadcast %cst_11 : f32 to vector<8x256xf32>
      %c0_12 = arith.constant 0 : index
      %c0_13 = arith.constant 0 : index
      %15 = vector.load %arg8[%c0_12, %c0_13] : memref<8x256xf32, #tpu.memory_space<vmem>>, vector<8x256xf32>
      tpu.vector_store %arg8[%c0_12, %c0_13], %14 {strides = array<i32>} : memref<8x256xf32, #tpu.memory_space<vmem>>, vector<8x256xf32>,
    } else {
    }
    %c0 = arith.constant 0 : index
    %c0_1 = arith.constant 0 : index
    %3 = vector.load %arg8[%c0, %c0_1] : memref<8x256xf32, #tpu.memory_space<vmem>>, vector<8x256xf32>
    %c0_2 = arith.constant 0 : index
    %c0_3 = arith.constant 0 : index
    %c0_4 = arith.constant 0 : index
    %4 = vector.load %arg4[%c0_2, %c0_3, %c0_4] : memref<1x8x1024xbf16, #tpu.memory_space<vmem>>, vector<1x8x1024xbf16>
    %5 = vector.shape_cast %4 : vector<1x8x1024xbf16> to vector<8x1024xbf16>
    %c0_5 = arith.constant 0 : index
    %c0_6 = arith.constant 0 : index
    %c0_7 = arith.constant 0 : index
    %6 = vector.load %arg5[%c0_5, %c0_6, %c0_7] : memref<1x1024x256xbf16, #tpu.memory_space<vmem>>, vector<1x1024x256xbf16>
    %7 = vector.shape_cast %6 : vector<1x1024x256xbf16> to vector<1024x256xbf16>
    %cst = arith.constant dense<0.000000e+00> : vector<8x256xf32>
    %8 = tpu.matmul %5, %7, %cst {dimension_numbers = #tpu.dot_dimension_numbers<[1], [0], [0], [1], [0, 0, 1, 1], [], []>} : vector<8x1024xbf16>, vector<1024x256xbf16>, vector<8x256xf32> -> vector<8x256xf32>
    %9 = arith.addf %3, %8 : vector<8x256xf32>
    %c0_8 = arith.constant 0 : index
    %c0_9 = arith.constant 0 : index
    %10 = vector.load %arg8[%c0_8, %c0_9] : memref<8x256xf32, #tpu.memory_space<vmem>>, vector<8x256xf32>
    tpu.vector_store %arg8[%c0_8, %c0_9], %9 {strides = array<i32>} : memref<8x256xf32, #tpu.memory_space<vmem>>, vector<8x256xf32>,
    %c1_i32 = arith.constant 1 : i32
    %11 = arith.cmpi eq, %arg3, %c1_i32 : i32
    %12 = arith.extui %11 : i1 to i32
    %c0_i32_10 = arith.constant 0 : i32
    %13 = arith.cmpi ne, %12, %c0_i32_10 : i32
    scf.if %13 {
      %c0_11 = arith.constant 0 : index
      %c0_12 = arith.constant 0 : index
      %14 = vector.load %arg8[%c0_11, %c0_12] : memref<8x256xf32, #tpu.memory_space<vmem>>, vector<8x256xf32>
      %c0_13 = arith.constant 0 : index
      %c0_14 = arith.constant 0 : index
      %c0_15 = arith.constant 0 : index
      %15 = vector.load %arg6[%c0_13, %c0_14, %c0_15] : memref<1x1x256xf32, #tpu.memory_space<vmem>>, vector<1x1x256xf32>
      %16 = vector.shape_cast %15 : vector<1x1x256xf32> to vector<1x256xf32>
      %17 = vector.broadcast %16 : vector<1x256xf32> to vector<8x256xf32>
      %18 = arith.addf %14, %17 : vector<8x256xf32>
      %cst_16 = arith.constant 0.000000e+00 : f32
      %19 = vector.broadcast %cst_16 : f32 to vector<8x256xf32>
      %20 = arith.maximumf %18, %19 : vector<8x256xf32>
      %c0_17 = arith.constant 0 : index
      %c0_18 = arith.constant 0 : index
      %c0_19 = arith.constant 0 : index
      %21 = vector.load %arg7[%c0_17, %c0_18, %c0_19] : memref<1x8x256xf32, #tpu.memory_space<vmem>>, vector<1x8x256xf32>
      %22 = vector.shape_cast %21 : vector<1x8x256xf32> to vector<8x256xf32>
      %23 = vector.shape_cast %20 : vector<8x256xf32> to vector<1x8x256xf32>
      tpu.vector_store %arg7[%c0_17, %c0_18, %c0_19], %23 {strides = array<i32>} : memref<1x8x256xf32, #tpu.memory_space<vmem>>, vector<1x8x256xf32>,
    } else {
    }
    return
  }
  func.func @transform_0(%arg0: i32, %arg1: i32, %arg2: i32, %arg3: i32) -> (i32, i32, i32) {
    %c0_i32 = arith.constant 0 : i32
    return %arg0, %arg1, %arg3 : i32, i32, i32
  }
  func.func @transform_1(%arg0: i32, %arg1: i32, %arg2: i32, %arg3: i32) -> (i32, i32, i32) {
    %c0_i32 = arith.constant 0 : i32
    return %arg0, %arg3, %arg2 : i32, i32, i32
  }
  func.func @transform_2(%arg0: i32, %arg1: i32, %arg2: i32, %arg3: i32) -> (i32, i32, i32) {
    %c0_i32 = arith.constant 0 : i32
    %c0_i32_0 = arith.constant 0 : i32
    %c0_i32_1 = arith.constant 0 : i32
    return %c0_i32, %c0_i32_0, %arg2 : i32, i32, i32
  }
  func.func @transform_3(%arg0: i32, %arg1: i32, %arg2: i32, %arg3: i32) -> (i32, i32, i32) {
    %c0_i32 = arith.constant 0 : i32
    return %arg0, %arg1, %arg2 : i32, i32, i32
  }
}

module attributes {stable_mosaic.version = 11 : i64} {
  func.func @_bmm_shift_act_kernel(%arg0: i32, %arg1: i32, %arg2: i32, %arg3: i32, %arg4: memref<1x8x1024xbf16, #tpu.memory_space<vmem>>, %arg5: memref<1x1024x128xbf16, #tpu.memory_space<vmem>>, %arg6: memref<1x1x128xf32, #tpu.memory_space<vmem>>, %arg7: memref<1x8x128xf32, #tpu.memory_space<vmem>>, %arg8: memref<8x128xf32, #tpu.memory_space<vmem>>) attributes {dimension_semantics = [#tpu.dimension_semantics<parallel>, #tpu.dimension_semantics<parallel>, #tpu.dimension_semantics<parallel>, #tpu.dimension_semantics<arbitrary>], iteration_bounds = array<i64: 4, 1, 1, 1>, scalar_prefetch = 0 : i64, scratch_operands = 1 : i64, tpu.core_type = #tpu.core_type<tc>, window_params = [{transform_indices = @transform_0, window_bounds = array<i64: 1, 8, 1024>}, {transform_indices = @transform_1, window_bounds = array<i64: 1, 1024, 128>}, {transform_indices = @transform_2, window_bounds = array<i64: 1, 1, 128>}, {transform_indices = @transform_3, window_bounds = array<i64: 1, 8, 128>}]} {
    %c0_i32 = arith.constant 0 : i32
    %0 = arith.cmpi eq, %arg3, %c0_i32 : i32
    %1 = arith.extui %0 : i1 to i32
    %c0_i32_0 = arith.constant 0 : i32
    %2 = arith.cmpi ne, %1, %c0_i32_0 : i32
    scf.if %2 {
      %cst_12 = arith.constant 0.000000e+00 : f32
      %14 = vector.broadcast %cst_12 : f32 to vector<8x128xf32>
      %c0_13 = arith.constant 0 : index
      %c0_14 = arith.constant 0 : index
      %15 = vector.load %arg8[%c0_13, %c0_14] : memref<8x128xf32, #tpu.memory_space<vmem>>, vector<8x128xf32>
      tpu.vector_store %arg8[%c0_13, %c0_14], %14 {strides = array<i32>} : memref<8x128xf32, #tpu.memory_space<vmem>>, vector<8x128xf32>,
    } else {
    }
    %c0 = arith.constant 0 : index
    %c0_1 = arith.constant 0 : index
    %3 = vector.load %arg8[%c0, %c0_1] : memref<8x128xf32, #tpu.memory_space<vmem>>, vector<8x128xf32>
    %c0_2 = arith.constant 0 : index
    %c0_3 = arith.constant 0 : index
    %c0_4 = arith.constant 0 : index
    %4 = vector.load %arg4[%c0_2, %c0_3, %c0_4] : memref<1x8x1024xbf16, #tpu.memory_space<vmem>>, vector<1x8x1024xbf16>
    %5 = vector.shape_cast %4 : vector<1x8x1024xbf16> to vector<8x1024xbf16>
    %c0_5 = arith.constant 0 : index
    %c0_6 = arith.constant 0 : index
    %c0_7 = arith.constant 0 : index
    %6 = vector.load %arg5[%c0_5, %c0_6, %c0_7] : memref<1x1024x128xbf16, #tpu.memory_space<vmem>>, vector<1x1024x128xbf16>
    %7 = vector.shape_cast %6 : vector<1x1024x128xbf16> to vector<1024x128xbf16>
    %cst = arith.constant dense<0.000000e+00> : vector<8x128xf32>
    %8 = tpu.matmul %5, %7, %cst {dimension_numbers = #tpu.dot_dimension_numbers<[1], [0], [0], [1], [0, 0, 1, 1], [], []>} : vector<8x1024xbf16>, vector<1024x128xbf16>, vector<8x128xf32> -> vector<8x128xf32>
    %9 = arith.addf %3, %8 : vector<8x128xf32>
    %c0_8 = arith.constant 0 : index
    %c0_9 = arith.constant 0 : index
    %10 = vector.load %arg8[%c0_8, %c0_9] : memref<8x128xf32, #tpu.memory_space<vmem>>, vector<8x128xf32>
    tpu.vector_store %arg8[%c0_8, %c0_9], %9 {strides = array<i32>} : memref<8x128xf32, #tpu.memory_space<vmem>>, vector<8x128xf32>,
    %c0_i32_10 = arith.constant 0 : i32
    %11 = arith.cmpi eq, %arg3, %c0_i32_10 : i32
    %12 = arith.extui %11 : i1 to i32
    %c0_i32_11 = arith.constant 0 : i32
    %13 = arith.cmpi ne, %12, %c0_i32_11 : i32
    scf.if %13 {
      %c0_12 = arith.constant 0 : index
      %c0_13 = arith.constant 0 : index
      %14 = vector.load %arg8[%c0_12, %c0_13] : memref<8x128xf32, #tpu.memory_space<vmem>>, vector<8x128xf32>
      %c0_14 = arith.constant 0 : index
      %c0_15 = arith.constant 0 : index
      %c0_16 = arith.constant 0 : index
      %15 = vector.load %arg6[%c0_14, %c0_15, %c0_16] : memref<1x1x128xf32, #tpu.memory_space<vmem>>, vector<1x1x128xf32>
      %16 = vector.shape_cast %15 : vector<1x1x128xf32> to vector<1x128xf32>
      %17 = vector.broadcast %16 : vector<1x128xf32> to vector<8x128xf32>
      %18 = arith.addf %14, %17 : vector<8x128xf32>
      %cst_17 = arith.constant 0.000000e+00 : f32
      %19 = vector.broadcast %cst_17 : f32 to vector<8x128xf32>
      %20 = arith.maximumf %18, %19 : vector<8x128xf32>
      %c0_18 = arith.constant 0 : index
      %c0_19 = arith.constant 0 : index
      %c0_20 = arith.constant 0 : index
      %21 = vector.load %arg7[%c0_18, %c0_19, %c0_20] : memref<1x8x128xf32, #tpu.memory_space<vmem>>, vector<1x8x128xf32>
      %22 = vector.shape_cast %21 : vector<1x8x128xf32> to vector<8x128xf32>
      %23 = vector.shape_cast %20 : vector<8x128xf32> to vector<1x8x128xf32>
      tpu.vector_store %arg7[%c0_18, %c0_19, %c0_20], %23 {strides = array<i32>} : memref<1x8x128xf32, #tpu.memory_space<vmem>>, vector<1x8x128xf32>,
    } else {
    }
    return
  }
  func.func @transform_0(%arg0: i32, %arg1: i32, %arg2: i32, %arg3: i32) -> (i32, i32, i32) {
    %c0_i32 = arith.constant 0 : i32
    return %arg0, %arg1, %arg3 : i32, i32, i32
  }
  func.func @transform_1(%arg0: i32, %arg1: i32, %arg2: i32, %arg3: i32) -> (i32, i32, i32) {
    %c0_i32 = arith.constant 0 : i32
    return %arg0, %arg3, %arg2 : i32, i32, i32
  }
  func.func @transform_2(%arg0: i32, %arg1: i32, %arg2: i32, %arg3: i32) -> (i32, i32, i32) {
    %c0_i32 = arith.constant 0 : i32
    %c0_i32_0 = arith.constant 0 : i32
    %c0_i32_1 = arith.constant 0 : i32
    return %c0_i32, %c0_i32_0, %arg2 : i32, i32, i32
  }
  func.func @transform_3(%arg0: i32, %arg1: i32, %arg2: i32, %arg3: i32) -> (i32, i32, i32) {
    %c0_i32 = arith.constant 0 : i32
    return %arg0, %arg1, %arg2 : i32, i32, i32
  }
}

module attributes {stable_mosaic.version = 11 : i64} {
  func.func @_bmm_shift_act_kernel(%arg0: i32, %arg1: i32, %arg2: i32, %arg3: i32, %arg4: memref<1x32x512xbf16, #tpu.memory_space<vmem>>, %arg5: memref<1x512x128xbf16, #tpu.memory_space<vmem>>, %arg6: memref<1x1x128xf32, #tpu.memory_space<vmem>>, %arg7: memref<1x32x128xf32, #tpu.memory_space<vmem>>, %arg8: memref<32x128xf32, #tpu.memory_space<vmem>>) attributes {dimension_semantics = [#tpu.dimension_semantics<parallel>, #tpu.dimension_semantics<parallel>, #tpu.dimension_semantics<parallel>, #tpu.dimension_semantics<arbitrary>], iteration_bounds = array<i64: 4, 1, 1, 1>, scalar_prefetch = 0 : i64, scratch_operands = 1 : i64, tpu.core_type = #tpu.core_type<tc>, window_params = [{transform_indices = @transform_0, window_bounds = array<i64: 1, 32, 512>}, {transform_indices = @transform_1, window_bounds = array<i64: 1, 512, 128>}, {transform_indices = @transform_2, window_bounds = array<i64: 1, 1, 128>}, {transform_indices = @transform_3, window_bounds = array<i64: 1, 32, 128>}]} {
    %c0_i32 = arith.constant 0 : i32
    %0 = arith.cmpi eq, %arg3, %c0_i32 : i32
    %1 = arith.extui %0 : i1 to i32
    %c0_i32_0 = arith.constant 0 : i32
    %2 = arith.cmpi ne, %1, %c0_i32_0 : i32
    scf.if %2 {
      %cst_12 = arith.constant 0.000000e+00 : f32
      %14 = vector.broadcast %cst_12 : f32 to vector<32x128xf32>
      %c0_13 = arith.constant 0 : index
      %c0_14 = arith.constant 0 : index
      %15 = vector.load %arg8[%c0_13, %c0_14] : memref<32x128xf32, #tpu.memory_space<vmem>>, vector<32x128xf32>
      tpu.vector_store %arg8[%c0_13, %c0_14], %14 {strides = array<i32>} : memref<32x128xf32, #tpu.memory_space<vmem>>, vector<32x128xf32>,
    } else {
    }
    %c0 = arith.constant 0 : index
    %c0_1 = arith.constant 0 : index
    %3 = vector.load %arg8[%c0, %c0_1] : memref<32x128xf32, #tpu.memory_space<vmem>>, vector<32x128xf32>
    %c0_2 = arith.constant 0 : index
    %c0_3 = arith.constant 0 : index
    %c0_4 = arith.constant 0 : index
    %4 = vector.load %arg4[%c0_2, %c0_3, %c0_4] : memref<1x32x512xbf16, #tpu.memory_space<vmem>>, vector<1x32x512xbf16>
    %5 = vector.shape_cast %4 : vector<1x32x512xbf16> to vector<32x512xbf16>
    %c0_5 = arith.constant 0 : index
    %c0_6 = arith.constant 0 : index
    %c0_7 = arith.constant 0 : index
    %6 = vector.load %arg5[%c0_5, %c0_6, %c0_7] : memref<1x512x128xbf16, #tpu.memory_space<vmem>>, vector<1x512x128xbf16>
    %7 = vector.shape_cast %6 : vector<1x512x128xbf16> to vector<512x128xbf16>
    %cst = arith.constant dense<0.000000e+00> : vector<32x128xf32>
    %8 = tpu.matmul %5, %7, %cst {dimension_numbers = #tpu.dot_dimension_numbers<[1], [0], [0], [1], [0, 0, 1, 1], [], []>} : vector<32x512xbf16>, vector<512x128xbf16>, vector<32x128xf32> -> vector<32x128xf32>
    %9 = arith.addf %3, %8 : vector<32x128xf32>
    %c0_8 = arith.constant 0 : index
    %c0_9 = arith.constant 0 : index
    %10 = vector.load %arg8[%c0_8, %c0_9] : memref<32x128xf32, #tpu.memory_space<vmem>>, vector<32x128xf32>
    tpu.vector_store %arg8[%c0_8, %c0_9], %9 {strides = array<i32>} : memref<32x128xf32, #tpu.memory_space<vmem>>, vector<32x128xf32>,
    %c0_i32_10 = arith.constant 0 : i32
    %11 = arith.cmpi eq, %arg3, %c0_i32_10 : i32
    %12 = arith.extui %11 : i1 to i32
    %c0_i32_11 = arith.constant 0 : i32
    %13 = arith.cmpi ne, %12, %c0_i32_11 : i32
    scf.if %13 {
      %c0_12 = arith.constant 0 : index
      %c0_13 = arith.constant 0 : index
      %14 = vector.load %arg8[%c0_12, %c0_13] : memref<32x128xf32, #tpu.memory_space<vmem>>, vector<32x128xf32>
      %c0_14 = arith.constant 0 : index
      %c0_15 = arith.constant 0 : index
      %c0_16 = arith.constant 0 : index
      %15 = vector.load %arg6[%c0_14, %c0_15, %c0_16] : memref<1x1x128xf32, #tpu.memory_space<vmem>>, vector<1x1x128xf32>
      %16 = vector.shape_cast %15 : vector<1x1x128xf32> to vector<1x128xf32>
      %17 = vector.broadcast %16 : vector<1x128xf32> to vector<32x128xf32>
      %18 = arith.addf %14, %17 : vector<32x128xf32>
      %cst_17 = arith.constant 0.000000e+00 : f32
      %19 = vector.broadcast %cst_17 : f32 to vector<32x128xf32>
      %20 = arith.maximumf %18, %19 : vector<32x128xf32>
      %c0_18 = arith.constant 0 : index
      %c0_19 = arith.constant 0 : index
      %c0_20 = arith.constant 0 : index
      %21 = vector.load %arg7[%c0_18, %c0_19, %c0_20] : memref<1x32x128xf32, #tpu.memory_space<vmem>>, vector<1x32x128xf32>
      %22 = vector.shape_cast %21 : vector<1x32x128xf32> to vector<32x128xf32>
      %23 = vector.shape_cast %20 : vector<32x128xf32> to vector<1x32x128xf32>
      tpu.vector_store %arg7[%c0_18, %c0_19, %c0_20], %23 {strides = array<i32>} : memref<1x32x128xf32, #tpu.memory_space<vmem>>, vector<1x32x128xf32>,
    } else {
    }
    return
  }
  func.func @transform_0(%arg0: i32, %arg1: i32, %arg2: i32, %arg3: i32) -> (i32, i32, i32) {
    %c0_i32 = arith.constant 0 : i32
    return %arg0, %arg1, %arg3 : i32, i32, i32
  }
  func.func @transform_1(%arg0: i32, %arg1: i32, %arg2: i32, %arg3: i32) -> (i32, i32, i32) {
    %c0_i32 = arith.constant 0 : i32
    return %arg0, %arg3, %arg2 : i32, i32, i32
  }
  func.func @transform_2(%arg0: i32, %arg1: i32, %arg2: i32, %arg3: i32) -> (i32, i32, i32) {
    %c0_i32 = arith.constant 0 : i32
    %c0_i32_0 = arith.constant 0 : i32
    %c0_i32_1 = arith.constant 0 : i32
    return %c0_i32, %c0_i32_0, %arg2 : i32, i32, i32
  }
  func.func @transform_3(%arg0: i32, %arg1: i32, %arg2: i32, %arg3: i32) -> (i32, i32, i32) {
    %c0_i32 = arith.constant 0 : i32
    return %arg0, %arg1, %arg2 : i32, i32, i32
  }
}

module attributes {stable_mosaic.version = 11 : i64} {
  func.func @_bmm_shift_act_kernel(%arg0: i32, %arg1: i32, %arg2: i32, %arg3: i32, %arg4: memref<1x128x256xbf16, #tpu.memory_space<vmem>>, %arg5: memref<1x256x128xbf16, #tpu.memory_space<vmem>>, %arg6: memref<1x1x128xf32, #tpu.memory_space<vmem>>, %arg7: memref<1x128x128xf32, #tpu.memory_space<vmem>>, %arg8: memref<128x128xf32, #tpu.memory_space<vmem>>) attributes {dimension_semantics = [#tpu.dimension_semantics<parallel>, #tpu.dimension_semantics<parallel>, #tpu.dimension_semantics<parallel>, #tpu.dimension_semantics<arbitrary>], iteration_bounds = array<i64: 4, 1, 1, 1>, scalar_prefetch = 0 : i64, scratch_operands = 1 : i64, tpu.core_type = #tpu.core_type<tc>, window_params = [{transform_indices = @transform_0, window_bounds = array<i64: 1, 128, 256>}, {transform_indices = @transform_1, window_bounds = array<i64: 1, 256, 128>}, {transform_indices = @transform_2, window_bounds = array<i64: 1, 1, 128>}, {transform_indices = @transform_3, window_bounds = array<i64: 1, 128, 128>}]} {
    %c0_i32 = arith.constant 0 : i32
    %0 = arith.cmpi eq, %arg3, %c0_i32 : i32
    %1 = arith.extui %0 : i1 to i32
    %c0_i32_0 = arith.constant 0 : i32
    %2 = arith.cmpi ne, %1, %c0_i32_0 : i32
    scf.if %2 {
      %cst_12 = arith.constant 0.000000e+00 : f32
      %14 = vector.broadcast %cst_12 : f32 to vector<128x128xf32>
      %c0_13 = arith.constant 0 : index
      %c0_14 = arith.constant 0 : index
      %15 = vector.load %arg8[%c0_13, %c0_14] : memref<128x128xf32, #tpu.memory_space<vmem>>, vector<128x128xf32>
      tpu.vector_store %arg8[%c0_13, %c0_14], %14 {strides = array<i32>} : memref<128x128xf32, #tpu.memory_space<vmem>>, vector<128x128xf32>,
    } else {
    }
    %c0 = arith.constant 0 : index
    %c0_1 = arith.constant 0 : index
    %3 = vector.load %arg8[%c0, %c0_1] : memref<128x128xf32, #tpu.memory_space<vmem>>, vector<128x128xf32>
    %c0_2 = arith.constant 0 : index
    %c0_3 = arith.constant 0 : index
    %c0_4 = arith.constant 0 : index
    %4 = vector.load %arg4[%c0_2, %c0_3, %c0_4] : memref<1x128x256xbf16, #tpu.memory_space<vmem>>, vector<1x128x256xbf16>
    %5 = vector.shape_cast %4 : vector<1x128x256xbf16> to vector<128x256xbf16>
    %c0_5 = arith.constant 0 : index
    %c0_6 = arith.constant 0 : index
    %c0_7 = arith.constant 0 : index
    %6 = vector.load %arg5[%c0_5, %c0_6, %c0_7] : memref<1x256x128xbf16, #tpu.memory_space<vmem>>, vector<1x256x128xbf16>
    %7 = vector.shape_cast %6 : vector<1x256x128xbf16> to vector<256x128xbf16>
    %cst = arith.constant dense<0.000000e+00> : vector<128x128xf32>
    %8 = tpu.matmul %5, %7, %cst {dimension_numbers = #tpu.dot_dimension_numbers<[1], [0], [0], [1], [0, 0, 1, 1], [], []>} : vector<128x256xbf16>, vector<256x128xbf16>, vector<128x128xf32> -> vector<128x128xf32>
    %9 = arith.addf %3, %8 : vector<128x128xf32>
    %c0_8 = arith.constant 0 : index
    %c0_9 = arith.constant 0 : index
    %10 = vector.load %arg8[%c0_8, %c0_9] : memref<128x128xf32, #tpu.memory_space<vmem>>, vector<128x128xf32>
    tpu.vector_store %arg8[%c0_8, %c0_9], %9 {strides = array<i32>} : memref<128x128xf32, #tpu.memory_space<vmem>>, vector<128x128xf32>,
    %c0_i32_10 = arith.constant 0 : i32
    %11 = arith.cmpi eq, %arg3, %c0_i32_10 : i32
    %12 = arith.extui %11 : i1 to i32
    %c0_i32_11 = arith.constant 0 : i32
    %13 = arith.cmpi ne, %12, %c0_i32_11 : i32
    scf.if %13 {
      %c0_12 = arith.constant 0 : index
      %c0_13 = arith.constant 0 : index
      %14 = vector.load %arg8[%c0_12, %c0_13] : memref<128x128xf32, #tpu.memory_space<vmem>>, vector<128x128xf32>
      %c0_14 = arith.constant 0 : index
      %c0_15 = arith.constant 0 : index
      %c0_16 = arith.constant 0 : index
      %15 = vector.load %arg6[%c0_14, %c0_15, %c0_16] : memref<1x1x128xf32, #tpu.memory_space<vmem>>, vector<1x1x128xf32>
      %16 = vector.shape_cast %15 : vector<1x1x128xf32> to vector<1x128xf32>
      %17 = vector.broadcast %16 : vector<1x128xf32> to vector<128x128xf32>
      %18 = arith.addf %14, %17 : vector<128x128xf32>
      %cst_17 = arith.constant 0.000000e+00 : f32
      %19 = vector.broadcast %cst_17 : f32 to vector<128x128xf32>
      %20 = arith.subf %19, %18 : vector<128x128xf32>
      %21 = math.exp %20 : vector<128x128xf32>
      %cst_18 = arith.constant 1.000000e+00 : f32
      %22 = vector.broadcast %cst_18 : f32 to vector<128x128xf32>
      %23 = arith.addf %22, %21 : vector<128x128xf32>
      %24 = tpu.reciprocal %23 {approx = true} : vector<128x128xf32> -> vector<128x128xf32>
      %cst_19 = arith.constant 0.000000e+00 : f32
      %cst_20 = arith.constant 1.000000e+00 : f32
      %25 = vector.broadcast %cst_19 : f32 to vector<128x128xf32>
      %26 = arith.maximumf %25, %24 : vector<128x128xf32>
      %27 = vector.broadcast %cst_20 : f32 to vector<128x128xf32>
      %28 = arith.minimumf %27, %26 : vector<128x128xf32>
      %c0_21 = arith.constant 0 : index
      %c0_22 = arith.constant 0 : index
      %c0_23 = arith.constant 0 : index
      %29 = vector.load %arg7[%c0_21, %c0_22, %c0_23] : memref<1x128x128xf32, #tpu.memory_space<vmem>>, vector<1x128x128xf32>
      %30 = vector.shape_cast %29 : vector<1x128x128xf32> to vector<128x128xf32>
      %31 = vector.shape_cast %28 : vector<128x128xf32> to vector<1x128x128xf32>
      tpu.vector_store %arg7[%c0_21, %c0_22, %c0_23], %31 {strides = array<i32>} : memref<1x128x128xf32, #tpu.memory_space<vmem>>, vector<1x128x128xf32>,
    } else {
    }
    return
  }
  func.func @transform_0(%arg0: i32, %arg1: i32, %arg2: i32, %arg3: i32) -> (i32, i32, i32) {
    %c0_i32 = arith.constant 0 : i32
    return %arg0, %arg1, %arg3 : i32, i32, i32
  }
  func.func @transform_1(%arg0: i32, %arg1: i32, %arg2: i32, %arg3: i32) -> (i32, i32, i32) {
    %c0_i32 = arith.constant 0 : i32
    return %arg0, %arg3, %arg2 : i32, i32, i32
  }
  func.func @transform_2(%arg0: i32, %arg1: i32, %arg2: i32, %arg3: i32) -> (i32, i32, i32) {
    %c0_i32 = arith.constant 0 : i32
    %c0_i32_0 = arith.constant 0 : i32
    %c0_i32_1 = arith.constant 0 : i32
    return %c0_i32, %c0_i32_0, %arg2 : i32, i32, i32
  }
  func.func @transform_3(%arg0: i32, %arg1: i32, %arg2: i32, %arg3: i32) -> (i32, i32, i32) {
    %c0_i32 = arith.constant 0 : i32
    return %arg0, %arg1, %arg2 : i32, i32, i32
  }
}

</mosaic_0001>

<llo_original>
// kernel: _lambda_.8
$region0: #{_lambda_.8}
  #allocation0 [shape = 'u32[]', space=smem, size = 0x4, offset = 0x4, fixed_abs, tag = 'smem constant byte address 0x4 - core index']
  #allocation1 [shape = 'u32[72,128]{1,0:T(1,128)}', space=vmem, size = 0x9000, scoped, tag = 'internal scratch']
  #allocation2 [shape = 'f32[128,128]{1,0:T(8,128)}', space=vmem, size = 0x10000, scoped, tag = 'scratch operand']
  %s0 = inlined_call_operand.vmem [shape: bf16[1,128,128], index: 0, kind: input, shape index: {}]
  %s1 = inlined_call_operand.hbm [shape: bf16[1,128,128], index: 1, kind: input, shape index: {}]
  %s2 = inlined_call_operand.hbm [shape: f32[1,1,128], index: 2, kind: input, shape index: {}]
  %s3 = inlined_call_operand.vmem [shape: f32[1,128,128], index: 3, kind: output, shape index: {}]
  %s4 = sld [smem:[#allocation0]]
  $region38: #{_lambda_.8} parent=0
    _
  %s6 = ssub.s32 1, %s4
  %s7 = scalar_select 0, %s6, %s4
  $region1: #{_lambda_.8} parent=0
    #allocation3 [shape = 'u8[32768]{0}', space=vmem, size = 0x8000, scoped, tag = 'input window, operand 1, single buffered']
    #allocation4 [shape = 's32[1]{0}', space=sflag, size = 0x4, scoped, tag = 'scoped memory for _lambda_.8']
    #allocation5 [shape = 'u8[512]{0}', space=vmem, size = 0x400, scoped, tag = 'input window, operand 2, single buffered']
    #allocation6 [shape = 's32[1]{0}', space=sflag, size = 0x4, scoped, tag = 'scoped memory for _lambda_.8']
    %8 = vsyncpa [#allocation4], 0
    %9 = vsyncpa [#allocation6], 0
    // Predicated region
    $region2: #{_lambda_.8} parent=1 // pred_check
      _
    $region3: #{_lambda_.8} parent=1 // pred_check_branch
      %11 = sbr.rel (0) target = $region5
    $region4: #{_lambda_.8} parent=1 // pred_region
      _
    $region5: #{_lambda_.8} parent=1 // pred_fallthru
      _
    // Predicated region
    $region6: #{_lambda_.8} parent=1 // pred_check
      _
    $region7: #{_lambda_.8} parent=1 // pred_check_branch
      %13 = sbr.rel (0) target = $region9
    $region8: #{_lambda_.8} parent=1 // pred_region
      %15 = vsyncadd [#allocation4], 0
      %s16 = sshll.u32 %s1, 4
      %s17 = int_to_ptr.hbm [resolvable:$true] %s16
      %s18 = sshll.u32 [#allocation3], 4
      %s19 = int_to_ptr.vmem [resolvable:$true] %s18
      %24 = dma.hbm_to_vmem [thread:$0]  %s17, 1024, %s19, [#allocation4], 64, 64, 4
    $region9: #{_lambda_.8} parent=1 // pred_fallthru
      _
    // Predicated region
    $region10: #{_lambda_.8} parent=1 // pred_check
      _
    $region11: #{_lambda_.8} parent=1 // pred_check_branch
      %26 = sbr.rel (0) target = $region13
    $region12: #{_lambda_.8} parent=1 // pred_region
      %28 = vsyncadd [#allocation6], 0
      %s30 = sshll.u32 %s2, 4
      %s31 = int_to_ptr.hbm [resolvable:$true] %s30
      %s32 = sshll.u32 [#allocation5], 4
      %s33 = int_to_ptr.vmem [resolvable:$true] %s32
      %35 = dma.hbm_to_vmem [thread:$0]  %s31, 16, %s33, [#allocation6]
    $region13: #{_lambda_.8} parent=1 // pred_fallthru
      _
    // Predicated region
    $region14: #{_lambda_.8} parent=1 // pred_check
      _
    $region15: #{_lambda_.8} parent=1 // pred_check_branch
      %37 = sbr.rel (0) target = $region17
    $region16: #{_lambda_.8} parent=1 // pred_region
      %39 = dma.done [#allocation4], 1024
    $region17: #{_lambda_.8} parent=1 // pred_fallthru
      _
    // Predicated region
    $region18: #{_lambda_.8} parent=1 // pred_check
      _
    $region19: #{_lambda_.8} parent=1 // pred_check_branch
      %41 = sbr.rel (0) target = $region21
    $region20: #{_lambda_.8} parent=1 // pred_region
      %43 = dma.done [#allocation6], 16
    $region21: #{_lambda_.8} parent=1 // pred_fallthru
      _
    %p44 = scmp.eq.s32.totalorder 0, 0
    // Predicated region
    $region22: #{_lambda_.8} parent=1 // pred_check
      %p45 = pneg %p44
    $region23: #{_lambda_.8} parent=1 // pred_check_branch
      %47 = sbr.rel (%p45) target = $region25
    $region24: #{_lambda_.8} parent=1 // pred_region
      %48 = vst [vmem:[#allocation2] sm:$0xff] 0.0
      %49 = vst [vmem:[#allocation2 + $0x8] sm:$0xff] 0.0
      %50 = vst [vmem:[#allocation2 + $0x10] sm:$0xff] 0.0
      %51 = vst [vmem:[#allocation2 + $0x18] sm:$0xff] 0.0
      %52 = vst [vmem:[#allocation2 + $0x20] sm:$0xff] 0.0
      %53 = vst [vmem:[#allocation2 + $0x28] sm:$0xff] 0.0
      %54 = vst [vmem:[#allocation2 + $0x30] sm:$0xff] 0.0
      %55 = vst [vmem:[#allocation2 + $0x38] sm:$0xff] 0.0
      %56 = vst [vmem:[#allocation2 + $0x40] sm:$0xff] 0.0
      %57 = vst [vmem:[#allocation2 + $0x48] sm:$0xff] 0.0
      %58 = vst [vmem:[#allocation2 + $0x50] sm:$0xff] 0.0
      %59 = vst [vmem:[#allocation2 + $0x58] sm:$0xff] 0.0
      %60 = vst [vmem:[#allocation2 + $0x60] sm:$0xff] 0.0
      %61 = vst [vmem:[#allocation2 + $0x68] sm:$0xff] 0.0
      %62 = vst [vmem:[#allocation2 + $0x70] sm:$0xff] 0.0
      %63 = vst [vmem:[#allocation2 + $0x78] sm:$0xff] 0.0
    $region25: #{_lambda_.8} parent=1 // pred_fallthru
      _
    %v64 = vld [vmem:[#allocation2] sm:$0xff]
    %v65 = vld [vmem:[#allocation2 + $0x8] sm:$0xff]
    %v66 = vld [vmem:[#allocation2 + $0x10] sm:$0xff]
    %v67 = vld [vmem:[#allocation2 + $0x18] sm:$0xff]
    %v68 = vld [vmem:[#allocation2 + $0x20] sm:$0xff]
    %v69 = vld [vmem:[#allocation2 + $0x28] sm:$0xff]
    %v70 = vld [vmem:[#allocation2 + $0x30] sm:$0xff]
    %v71 = vld [vmem:[#allocation2 + $0x38] sm:$0xff]
    %v72 = vld [vmem:[#allocation2 + $0x40] sm:$0xff]
    %v73 = vld [vmem:[#allocation2 + $0x48] sm:$0xff]
    %v74 = vld [vmem:[#allocation2 + $0x50] sm:$0xff]
    %v75 = vld [vmem:[#allocation2 + $0x58] sm:$0xff]
    %v76 = vld [vmem:[#allocation2 + $0x60] sm:$0xff]
    %v77 = vld [vmem:[#allocation2 + $0x68] sm:$0xff]
    %v78 = vld [vmem:[#allocation2 + $0x70] sm:$0xff]
    %v79 = vld [vmem:[#allocation2 + $0x78] sm:$0xff]
    %v80 = vld [vmem:[%s0] sm:$0xf]
    %v81 = vld [vmem:[%s0 + $0x4] sm:$0xf]
    %v82 = vld [vmem:[%s0 + $0x8] sm:$0xf]
    %v83 = vld [vmem:[%s0 + $0xc] sm:$0xf]
    %v84 = vld [vmem:[%s0 + $0x10] sm:$0xf]
    %v85 = vld [vmem:[%s0 + $0x14] sm:$0xf]
    %v86 = vld [vmem:[%s0 + $0x18] sm:$0xf]
    %v87 = vld [vmem:[%s0 + $0x1c] sm:$0xf]
    %v88 = vld [vmem:[%s0 + $0x20] sm:$0xf]
    %v89 = vld [vmem:[%s0 + $0x24] sm:$0xf]
    %v90 = vld [vmem:[%s0 + $0x28] sm:$0xf]
    %v91 = vld [vmem:[%s0 + $0x2c] sm:$0xf]
    %v92 = vld [vmem:[%s0 + $0x30] sm:$0xf]
    %v93 = vld [vmem:[%s0 + $0x34] sm:$0xf]
    %v94 = vld [vmem:[%s0 + $0x38] sm:$0xf]
    %v95 = vld [vmem:[%s0 + $0x3c] sm:$0xf]
    %v96 = vld [vmem:[#allocation3] sm:$0xf]
    %v97 = vld [vmem:[#allocation3 + $0x4] sm:$0xf]
    %v98 = vld [vmem:[#allocation3 + $0x8] sm:$0xf]
    %v99 = vld [vmem:[#allocation3 + $0xc] sm:$0xf]
    %v100 = vld [vmem:[#allocation3 + $0x10] sm:$0xf]
    %v101 = vld [vmem:[#allocation3 + $0x14] sm:$0xf]
    %v102 = vld [vmem:[#allocation3 + $0x18] sm:$0xf]
    %v103 = vld [vmem:[#allocation3 + $0x1c] sm:$0xf]
    %v104 = vld [vmem:[#allocation3 + $0x20] sm:$0xf]
    %v105 = vld [vmem:[#allocation3 + $0x24] sm:$0xf]
    %v106 = vld [vmem:[#allocation3 + $0x28] sm:$0xf]
    %v107 = vld [vmem:[#allocation3 + $0x2c] sm:$0xf]
    %v108 = vld [vmem:[#allocation3 + $0x30] sm:$0xf]
    %v109 = vld [vmem:[#allocation3 + $0x34] sm:$0xf]
    %v110 = vld [vmem:[#allocation3 + $0x38] sm:$0xf]
    %v111 = vld [vmem:[#allocation3 + $0x3c] sm:$0xf]
    %v128 = vunpack.c.l.b16 %v80
    %v129 = vunpack.c.l.b16 %v81
    %v130 = vunpack.c.l.b16 %v82
    %v131 = vunpack.c.l.b16 %v83
    %v132 = vunpack.c.l.b16 %v84
    %v133 = vunpack.c.l.b16 %v85
    %v134 = vunpack.c.l.b16 %v86
    %v135 = vunpack.c.l.b16 %v87
    %v136 = vunpack.c.l.b16 %v88
    %v137 = vunpack.c.l.b16 %v89
    %v138 = vunpack.c.l.b16 %v90
    %v139 = vunpack.c.l.b16 %v91
    %v140 = vunpack.c.l.b16 %v92
    %v141 = vunpack.c.l.b16 %v93
    %v142 = vunpack.c.l.b16 %v94
    %v143 = vunpack.c.l.b16 %v95
    %v144 = vpack.c.b16 %v129, %v128
    %v145 = vpack.c.b16 %v131, %v130
    %v146 = vpack.c.b16 %v133, %v132
    %v147 = vpack.c.b16 %v135, %v134
    %v148 = vpack.c.b16 %v137, %v136
    %v149 = vpack.c.b16 %v139, %v138
    %v150 = vpack.c.b16 %v141, %v140
    %v151 = vpack.c.b16 %v143, %v142
    %v176 = vunpack.c.l.b16 %v96
    %v177 = vunpack.c.l.b16 %v97
    %v178 = vunpack.c.l.b16 %v98
    %v179 = vunpack.c.l.b16 %v99
    %v180 = vunpack.c.l.b16 %v100
    %v181 = vunpack.c.l.b16 %v101
    %v182 = vunpack.c.l.b16 %v102
    %v183 = vunpack.c.l.b16 %v103
    %v184 = vunpack.c.l.b16 %v104
    %v185 = vunpack.c.l.b16 %v105
    %v186 = vunpack.c.l.b16 %v106
    %v187 = vunpack.c.l.b16 %v107
    %v188 = vunpack.c.l.b16 %v108
    %v189 = vunpack.c.l.b16 %v109
    %v190 = vunpack.c.l.b16 %v110
    %v191 = vunpack.c.l.b16 %v111
    %v192 = vpack.c.b16 %v177, %v176
    %v193 = vpack.c.b16 %v179, %v178
    %v194 = vpack.c.b16 %v181, %v180
    %v195 = vpack.c.b16 %v183, %v182
    %v196 = vpack.c.b16 %v185, %v184
    %v197 = vpack.c.b16 %v187, %v186
    %v198 = vpack.c.b16 %v189, %v188
    %v199 = vpack.c.b16 %v191, %v190
    %208 = vmatpush.bf16.msra.mxu0 %v199
    %209 = vmatpush.bf16.msra.mxu0 %v198
    %210 = vmatpush.bf16.msra.mxu0 %v197
    %211 = vmatpush.bf16.msra.mxu0 %v196
    %212 = vmatpush.bf16.msra.mxu0 %v195
    %213 = vmatpush.bf16.msra.mxu0 %v194
    %214 = vmatpush.bf16.msra.mxu0 %v193
    %215 = vmatpush.bf16.msra.mxu0 %v192
    %216 = vmatmul.bf16.gmra.mxu0 %v144
    %v217 = vpop.f32.mrf.mxu0
    %v218 = vadd.f32 0.0, %v217
    %v219 = vpop.f32.mrf.mxu0
    %v220 = vadd.f32 0.0, %v219
    %221 = vmatmul.bf16.gmra.mxu0 %v145
    %v222 = vpop.f32.mrf.mxu0
    %v223 = vadd.f32 0.0, %v222
    %v224 = vpop.f32.mrf.mxu0
    %v225 = vadd.f32 0.0, %v224
    %226 = vmatmul.bf16.gmra.mxu0 %v146
    %v227 = vpop.f32.mrf.mxu0
    %v228 = vadd.f32 0.0, %v227
    %v229 = vpop.f32.mrf.mxu0
    %v230 = vadd.f32 0.0, %v229
    %231 = vmatmul.bf16.gmra.mxu0 %v147
    %v232 = vpop.f32.mrf.mxu0
    %v233 = vadd.f32 0.0, %v232
    %v234 = vpop.f32.mrf.mxu0
    %v235 = vadd.f32 0.0, %v234
    %236 = vmatmul.bf16.gmra.mxu0 %v148
    %v237 = vpop.f32.mrf.mxu0
    %v238 = vadd.f32 0.0, %v237
    %v239 = vpop.f32.mrf.mxu0
    %v240 = vadd.f32 0.0, %v239
    %241 = vmatmul.bf16.gmra.mxu0 %v149
    %v242 = vpop.f32.mrf.mxu0
    %v243 = vadd.f32 0.0, %v242
    %v244 = vpop.f32.mrf.mxu0
    %v245 = vadd.f32 0.0, %v244
    %246 = vmatmul.bf16.gmra.mxu0 %v150
    %v247 = vpop.f32.mrf.mxu0
    %v248 = vadd.f32 0.0, %v247
    %v249 = vpop.f32.mrf.mxu0
    %v250 = vadd.f32 0.0, %v249
    %251 = vmatmul.bf16.gmra.mxu0 %v151
    %v252 = vpop.f32.mrf.mxu0
    %v253 = vadd.f32 0.0, %v252
    %v254 = vpop.f32.mrf.mxu0
    %v255 = vadd.f32 0.0, %v254
    %256 = vdwg.mxu0
    %v257 = vadd.f32 %v64, %v218
    %v258 = vadd.f32 %v65, %v220
    %v259 = vadd.f32 %v66, %v223
    %v260 = vadd.f32 %v67, %v225
    %v261 = vadd.f32 %v68, %v228
    %v262 = vadd.f32 %v69, %v230
    %v263 = vadd.f32 %v70, %v233
    %v264 = vadd.f32 %v71, %v235
    %v265 = vadd.f32 %v72, %v238
    %v266 = vadd.f32 %v73, %v240
    %v267 = vadd.f32 %v74, %v243
    %v268 = vadd.f32 %v75, %v245
    %v269 = vadd.f32 %v76, %v248
    %v270 = vadd.f32 %v77, %v250
    %v271 = vadd.f32 %v78, %v253
    %v272 = vadd.f32 %v79, %v255
    %273 = vst [vmem:[#allocation2] sm:$0xff] %v257
    %274 = vst [vmem:[#allocation2 + $0x8] sm:$0xff] %v258
    %275 = vst [vmem:[#allocation2 + $0x10] sm:$0xff] %v259
    %276 = vst [vmem:[#allocation2 + $0x18] sm:$0xff] %v260
    %277 = vst [vmem:[#allocation2 + $0x20] sm:$0xff] %v261
    %278 = vst [vmem:[#allocation2 + $0x28] sm:$0xff] %v262
    %279 = vst [vmem:[#allocation2 + $0x30] sm:$0xff] %v263
    %280 = vst [vmem:[#allocation2 + $0x38] sm:$0xff] %v264
    %281 = vst [vmem:[#allocation2 + $0x40] sm:$0xff] %v265
    %282 = vst [vmem:[#allocation2 + $0x48] sm:$0xff] %v266
    %283 = vst [vmem:[#allocation2 + $0x50] sm:$0xff] %v267
    %284 = vst [vmem:[#allocation2 + $0x58] sm:$0xff] %v268
    %285 = vst [vmem:[#allocation2 + $0x60] sm:$0xff] %v269
    %286 = vst [vmem:[#allocation2 + $0x68] sm:$0xff] %v270
    %287 = vst [vmem:[#allocation2 + $0x70] sm:$0xff] %v271
    %288 = vst [vmem:[#allocation2 + $0x78] sm:$0xff] %v272
    // Predicated region
    $region26: #{_lambda_.8} parent=1 // pred_check
      %p289 = pneg %p44
    $region27: #{_lambda_.8} parent=1 // pred_check_branch
      %291 = sbr.rel (%p289) target = $region29
    $region28: #{_lambda_.8} parent=1 // pred_region
      %v292 = vld [vmem:[#allocation2] sm:$0xff]
      %v293 = vld [vmem:[#allocation2 + $0x8] sm:$0xff]
      %v294 = vld [vmem:[#allocation2 + $0x10] sm:$0xff]
      %v295 = vld [vmem:[#allocation2 + $0x18] sm:$0xff]
      %v296 = vld [vmem:[#allocation2 + $0x20] sm:$0xff]
      %v297 = vld [vmem:[#allocation2 + $0x28] sm:$0xff]
      %v298 = vld [vmem:[#allocation2 + $0x30] sm:$0xff]
      %v299 = vld [vmem:[#allocation2 + $0x38] sm:$0xff]
      %v300 = vld [vmem:[#allocation2 + $0x40] sm:$0xff]
      %v301 = vld [vmem:[#allocation2 + $0x48] sm:$0xff]
      %v302 = vld [vmem:[#allocation2 + $0x50] sm:$0xff]
      %v303 = vld [vmem:[#allocation2 + $0x58] sm:$0xff]
      %v304 = vld [vmem:[#allocation2 + $0x60] sm:$0xff]
      %v305 = vld [vmem:[#allocation2 + $0x68] sm:$0xff]
      %v306 = vld [vmem:[#allocation2 + $0x70] sm:$0xff]
      %v307 = vld [vmem:[#allocation2 + $0x78] sm:$0xff]
      %v308 = vld [vmem:[#allocation5] sm:$0x1]
      %v310 = vperm.slane %v308, 0
      %v312 = vadd.f32 %v292, %v310
      %v313 = vadd.f32 %v293, %v310
      %v314 = vadd.f32 %v294, %v310
      %v315 = vadd.f32 %v295, %v310
      %v316 = vadd.f32 %v296, %v310
      %v317 = vadd.f32 %v297, %v310
      %v318 = vadd.f32 %v298, %v310
      %v319 = vadd.f32 %v299, %v310
      %v320 = vadd.f32 %v300, %v310
      %v321 = vadd.f32 %v301, %v310
      %v322 = vadd.f32 %v302, %v310
      %v323 = vadd.f32 %v303, %v310
      %v324 = vadd.f32 %v304, %v310
      %v325 = vadd.f32 %v305, %v310
      %v326 = vadd.f32 %v306, %v310
      %v327 = vadd.f32 %v307, %v310
      %v328 = vmax.f32 %v312, 0.0
      %v329 = vmax.f32 %v313, 0.0
      %v330 = vmax.f32 %v314, 0.0
      %v331 = vmax.f32 %v315, 0.0
      %v332 = vmax.f32 %v316, 0.0
      %v333 = vmax.f32 %v317, 0.0
      %v334 = vmax.f32 %v318, 0.0
      %v335 = vmax.f32 %v319, 0.0
      %v336 = vmax.f32 %v320, 0.0
      %v337 = vmax.f32 %v321, 0.0
      %v338 = vmax.f32 %v322, 0.0
      %v339 = vmax.f32 %v323, 0.0
      %v340 = vmax.f32 %v324, 0.0
      %v341 = vmax.f32 %v325, 0.0
      %v342 = vmax.f32 %v326, 0.0
      %v343 = vmax.f32 %v327, 0.0
      %344 = vst [vmem:[%s3] sm:$0xff] %v328
      %345 = vst [vmem:[%s3 + $0x8] sm:$0xff] %v329
      %346 = vst [vmem:[%s3 + $0x10] sm:$0xff] %v330
      %347 = vst [vmem:[%s3 + $0x18] sm:$0xff] %v331
      %348 = vst [vmem:[%s3 + $0x20] sm:$0xff] %v332
      %349 = vst [vmem:[%s3 + $0x28] sm:$0xff] %v333
      %350 = vst [vmem:[%s3 + $0x30] sm:$0xff] %v334
      %351 = vst [vmem:[%s3 + $0x38] sm:$0xff] %v335
      %352 = vst [vmem:[%s3 + $0x40] sm:$0xff] %v336
      %353 = vst [vmem:[%s3 + $0x48] sm:$0xff] %v337
      %354 = vst [vmem:[%s3 + $0x50] sm:$0xff] %v338
      %355 = vst [vmem:[%s3 + $0x58] sm:$0xff] %v339
      %356 = vst [vmem:[%s3 + $0x60] sm:$0xff] %v340
      %357 = vst [vmem:[%s3 + $0x68] sm:$0xff] %v341
      %358 = vst [vmem:[%s3 + $0x70] sm:$0xff] %v342
      %359 = vst [vmem:[%s3 + $0x78] sm:$0xff] %v343
    $region29: #{_lambda_.8} parent=1 // pred_fallthru
      _
    // Predicated region
    $region30: #{_lambda_.8} parent=1 // pred_check
      _
    $region31: #{_lambda_.8} parent=1 // pred_check_branch
      %361 = sbr.rel (0) target = $region33
    $region32: #{_lambda_.8} parent=1 // pred_region
      _
    $region33: #{_lambda_.8} parent=1 // pred_fallthru
      _
    // Predicated region
    $region34: #{_lambda_.8} parent=1 // pred_check
      _
    $region35: #{_lambda_.8} parent=1 // pred_check_branch
      %363 = sbr.rel (0) target = $region37
    $region36: #{_lambda_.8} parent=1 // pred_region
      _
    $region37: #{_lambda_.8} parent=1 // pred_fallthru
      _
    %364 = vsyncpa [#allocation4], 1
    %365 = vsyncpa [#allocation6], 1

// kernel: _lambda_.9
$region0: #{_lambda_.9}
  #allocation0 [shape = 'u32[]', space=smem, size = 0x4, offset = 0x4, fixed_abs, tag = 'smem constant byte address 0x4 - core index']
  #allocation1 [shape = 'u32[72,128]{1,0:T(1,128)}', space=vmem, size = 0x9000, scoped, tag = 'internal scratch']
  #allocation2 [shape = 'f32[32,128]{1,0:T(8,128)}', space=vmem, size = 0x4000, scoped, tag = 'scratch operand']
  %s0 = inlined_call_operand.vmem [shape: bf16[1,32,1024], index: 0, kind: input, shape index: {}]
  %s1 = inlined_call_operand.hbm [shape: bf16[1,1024,128], index: 1, kind: input, shape index: {}]
  %s2 = inlined_call_operand.hbm [shape: f32[1,1,128], index: 2, kind: input, shape index: {}]
  %s3 = inlined_call_operand.vmem [shape: f32[1,32,128], index: 3, kind: output, shape index: {}]
  %s4 = sld [smem:[#allocation0]]
  $region38: #{_lambda_.9} parent=0
    _
  %s6 = ssub.s32 1, %s4
  %s7 = scalar_select 0, %s6, %s4
  $region1: #{_lambda_.9} parent=0
    #allocation3 [shape = 'u8[262144]{0}', space=vmem, size = 0x40000, scoped, tag = 'input window, operand 1, single buffered']
    #allocation4 [shape = 's32[1]{0}', space=sflag, size = 0x4, scoped, tag = 'scoped memory for _lambda_.9']
    #allocation5 [shape = 'u8[512]{0}', space=vmem, size = 0x400, scoped, tag = 'input window, operand 2, single buffered']
    #allocation6 [shape = 's32[1]{0}', space=sflag, size = 0x4, scoped, tag = 'scoped memory for _lambda_.9']
    %8 = vsyncpa [#allocation4], 0
    %9 = vsyncpa [#allocation6], 0
    // Predicated region
    $region2: #{_lambda_.9} parent=1 // pred_check
      _
    $region3: #{_lambda_.9} parent=1 // pred_check_branch
      %11 = sbr.rel (0) target = $region5
    $region4: #{_lambda_.9} parent=1 // pred_region
      _
    $region5: #{_lambda_.9} parent=1 // pred_fallthru
      _
    // Predicated region
    $region6: #{_lambda_.9} parent=1 // pred_check
      _
    $region7: #{_lambda_.9} parent=1 // pred_check_branch
      %13 = sbr.rel (0) target = $region9
    $region8: #{_lambda_.9} parent=1 // pred_region
      %15 = vsyncadd [#allocation4], 0
      %s16 = sshll.u32 %s1, 4
      %s17 = int_to_ptr.hbm [resolvable:$true] %s16
      %s18 = sshll.u32 [#allocation3], 4
      %s19 = int_to_ptr.vmem [resolvable:$true] %s18
      %24 = dma.hbm_to_vmem [thread:$0]  %s17, 8192, %s19, [#allocation4], 64, 64, 4
    $region9: #{_lambda_.9} parent=1 // pred_fallthru
      _
    // Predicated region
    $region10: #{_lambda_.9} parent=1 // pred_check
      _
    $region11: #{_lambda_.9} parent=1 // pred_check_branch
      %26 = sbr.rel (0) target = $region13
    $region12: #{_lambda_.9} parent=1 // pred_region
      %28 = vsyncadd [#allocation6], 0
      %s30 = sshll.u32 %s2, 4
      %s31 = int_to_ptr.hbm [resolvable:$true] %s30
      %s32 = sshll.u32 [#allocation5], 4
      %s33 = int_to_ptr.vmem [resolvable:$true] %s32
      %35 = dma.hbm_to_vmem [thread:$0]  %s31, 16, %s33, [#allocation6]
    $region13: #{_lambda_.9} parent=1 // pred_fallthru
      _
    // Predicated region
    $region14: #{_lambda_.9} parent=1 // pred_check
      _
    $region15: #{_lambda_.9} parent=1 // pred_check_branch
      %37 = sbr.rel (0) target = $region17
    $region16: #{_lambda_.9} parent=1 // pred_region
      %39 = dma.done [#allocation4], 8192
    $region17: #{_lambda_.9} parent=1 // pred_fallthru
      _
    // Predicated region
    $region18: #{_lambda_.9} parent=1 // pred_check
      _
    $region19: #{_lambda_.9} parent=1 // pred_check_branch
      %41 = sbr.rel (0) target = $region21
    $region20: #{_lambda_.9} parent=1 // pred_region
      %43 = dma.done [#allocation6], 16
    $region21: #{_lambda_.9} parent=1 // pred_fallthru
      _
    %p44 = scmp.eq.s32.totalorder 0, 0
    // Predicated region
    $region22: #{_lambda_.9} parent=1 // pred_check
      %p45 = pneg %p44
    $region23: #{_lambda_.9} parent=1 // pred_check_branch
      %47 = sbr.rel (%p45) target = $region25
    $region24: #{_lambda_.9} parent=1 // pred_region
      %48 = vst [vmem:[#allocation2] sm:$0xff] 0.0
      %49 = vst [vmem:[#allocation2 + $0x8] sm:$0xff] 0.0
      %50 = vst [vmem:[#allocation2 + $0x10] sm:$0xff] 0.0
      %51 = vst [vmem:[#allocation2 + $0x18] sm:$0xff] 0.0
    $region25: #{_lambda_.9} parent=1 // pred_fallthru
      _
    %v52 = vld [vmem:[#allocation2] sm:$0xff]
    %v53 = vld [vmem:[#allocation2 + $0x8] sm:$0xff]
    %v54 = vld [vmem:[#allocation2 + $0x10] sm:$0xff]
    %v55 = vld [vmem:[#allocation2 + $0x18] sm:$0xff]
    %v56 = vld [vmem:[%s0] sm:$0xff]
    %v57 = vld [vmem:[%s0 + $0x8] sm:$0xff]
    %v58 = vld [vmem:[%s0 + $0x10] sm:$0xff]
    %v59 = vld [vmem:[%s0 + $0x18] sm:$0xff]
    %v60 = vld [vmem:[%s0 + $0x20] sm:$0xff]
    %v61 = vld [vmem:[%s0 + $0x28] sm:$0xff]
    %v62 = vld [vmem:[%s0 + $0x30] sm:$0xff]
    %v63 = vld [vmem:[%s0 + $0x38] sm:$0xff]
    %v64 = vld [vmem:[%s0 + $0x40] sm:$0xff]
    %v65 = vld [vmem:[%s0 + $0x48] sm:$0xff]
    %v66 = vld [vmem:[%s0 + $0x50] sm:$0xff]
    %v67 = vld [vmem:[%s0 + $0x58] sm:$0xff]
    %v68 = vld [vmem:[%s0 + $0x60] sm:$0xff]
    %v69 = vld [vmem:[%s0 + $0x68] sm:$0xff]
    %v70 = vld [vmem:[%s0 + $0x70] sm:$0xff]
    %v71 = vld [vmem:[%s0 + $0x78] sm:$0xff]
    %v72 = vld [vmem:[#allocation3] sm:$0xf]
    %v73 = vld [vmem:[#allocation3 + $0x4] sm:$0xf]
    %v74 = vld [vmem:[#allocation3 + $0x8] sm:$0xf]
    %v75 = vld [vmem:[#allocation3 + $0xc] sm:$0xf]
    %v76 = vld [vmem:[#allocation3 + $0x10] sm:$0xf]
    %v77 = vld [vmem:[#allocation3 + $0x14] sm:$0xf]
    %v78 = vld [vmem:[#allocation3 + $0x18] sm:$0xf]
    %v79 = vld [vmem:[#allocation3 + $0x1c] sm:$0xf]
    %v80 = vld [vmem:[#allocation3 + $0x20] sm:$0xf]
    %v81 = vld [vmem:[#allocation3 + $0x24] sm:$0xf]
    %v82 = vld [vmem:[#allocation3 + $0x28] sm:$0xf]
    %v83 = vld [vmem:[#allocation3 + $0x2c] sm:$0xf]
    %v84 = vld [vmem:[#allocation3 + $0x30] sm:$0xf]
    %v85 = vld [vmem:[#allocation3 + $0x34] sm:$0xf]
    %v86 = vld [vmem:[#allocation3 + $0x38] sm:$0xf]
    %v87 = vld [vmem:[#allocation3 + $0x3c] sm:$0xf]
    %v88 = vld [vmem:[#allocation3 + $0x40] sm:$0xf]
    %v89 = vld [vmem:[#allocation3 + $0x44] sm:$0xf]
    %v90 = vld [vmem:[#allocation3 + $0x48] sm:$0xf]
    %v91 = vld [vmem:[#allocation3 + $0x4c] sm:$0xf]
    %v92 = vld [vmem:[#allocation3 + $0x50] sm:$0xf]
    %v93 = vld [vmem:[#allocation3 + $0x54] sm:$0xf]
    %v94 = vld [vmem:[#allocation3 + $0x58] sm:$0xf]
    %v95 = vld [vmem:[#allocation3 + $0x5c] sm:$0xf]
    %v96 = vld [vmem:[#allocation3 + $0x60] sm:$0xf]
    %v97 = vld [vmem:[#allocation3 + $0x64] sm:$0xf]
    %v98 = vld [vmem:[#allocation3 + $0x68] sm:$0xf]
    %v99 = vld [vmem:[#allocation3 + $0x6c] sm:$0xf]
    %v100 = vld [vmem:[#allocation3 + $0x70] sm:$0xf]
    %v101 = vld [vmem:[#allocation3 + $0x74] sm:$0xf]
    %v102 = vld [vmem:[#allocation3 + $0x78] sm:$0xf]
    %v103 = vld [vmem:[#allocation3 + $0x7c] sm:$0xf]
    %v104 = vld [vmem:[#allocation3 + $0x80] sm:$0xf]
    %v105 = vld [vmem:[#allocation3 + $0x84] sm:$0xf]
    %v106 = vld [vmem:[#allocation3 + $0x88] sm:$0xf]
    %v107 = vld [vmem:[#allocation3 + $0x8c] sm:$0xf]
    %v108 = vld [vmem:[#allocation3 + $0x90] sm:$0xf]
    %v109 = vld [vmem:[#allocation3 + $0x94] sm:$0xf]
    %v110 = vld [vmem:[#allocation3 + $0x98] sm:$0xf]
    %v111 = vld [vmem:[#allocation3 + $0x9c] sm:$0xf]
    %v112 = vld [vmem:[#allocation3 + $0xa0] sm:$0xf]
    %v113 = vld [vmem:[#allocation3 + $0xa4] sm:$0xf]
    %v114 = vld [vmem:[#allocation3 + $0xa8] sm:$0xf]
    %v115 = vld [vmem:[#allocation3 + $0xac] sm:$0xf]
    %v116 = vld [vmem:[#allocation3 + $0xb0] sm:$0xf]
    %v117 = vld [vmem:[#allocation3 + $0xb4] sm:$0xf]
    %v118 = vld [vmem:[#allocation3 + $0xb8] sm:$0xf]
    %v119 = vld [vmem:[#allocation3 + $0xbc] sm:$0xf]
    %v120 = vld [vmem:[#allocation3 + $0xc0] sm:$0xf]
    %v121 = vld [vmem:[#allocation3 + $0xc4] sm:$0xf]
    %v122 = vld [vmem:[#allocation3 + $0xc8] sm:$0xf]
    %v123 = vld [vmem:[#allocation3 + $0xcc] sm:$0xf]
    %v124 = vld [vmem:[#allocation3 + $0xd0] sm:$0xf]
    %v125 = vld [vmem:[#allocation3 + $0xd4] sm:$0xf]
    %v126 = vld [vmem:[#allocation3 + $0xd8] sm:$0xf]
    %v127 = vld [vmem:[#allocation3 + $0xdc] sm:$0xf]
    %v128 = vld [vmem:[#allocation3 + $0xe0] sm:$0xf]
    %v129 = vld [vmem:[#allocation3 + $0xe4] sm:$0xf]
    %v130 = vld [vmem:[#allocation3 + $0xe8] sm:$0xf]
    %v131 = vld [vmem:[#allocation3 + $0xec] sm:$0xf]
    %v132 = vld [vmem:[#allocation3 + $0xf0] sm:$0xf]
    %v133 = vld [vmem:[#allocation3 + $0xf4] sm:$0xf]
    %v134 = vld [vmem:[#allocation3 + $0xf8] sm:$0xf]
    %v135 = vld [vmem:[#allocation3 + $0xfc] sm:$0xf]
    %v136 = vld [vmem:[#allocation3 + $0x100] sm:$0xf]
    %v137 = vld [vmem:[#allocation3 + $0x104] sm:$0xf]
    %v138 = vld [vmem:[#allocation3 + $0x108] sm:$0xf]
    %v139 = vld [vmem:[#allocation3 + $0x10c] sm:$0xf]
    %v140 = vld [vmem:[#allocation3 + $0x110] sm:$0xf]
    %v141 = vld [vmem:[#allocation3 + $0x114] sm:$0xf]
    %v142 = vld [vmem:[#allocation3 + $0x118] sm:$0xf]
    %v143 = vld [vmem:[#allocation3 + $0x11c] sm:$0xf]
    %v144 = vld [vmem:[#allocation3 + $0x120] sm:$0xf]
    %v145 = vld [vmem:[#allocation3 + $0x124] sm:$0xf]
    %v146 = vld [vmem:[#allocation3 + $0x128] sm:$0xf]
    %v147 = vld [vmem:[#allocation3 + $0x12c] sm:$0xf]
    %v148 = vld [vmem:[#allocation3 + $0x130] sm:$0xf]
    %v149 = vld [vmem:[#allocation3 + $0x134] sm:$0xf]
    %v150 = vld [vmem:[#allocation3 + $0x138] sm:$0xf]
    %v151 = vld [vmem:[#allocation3 + $0x13c] sm:$0xf]
    %v152 = vld [vmem:[#allocation3 + $0x140] sm:$0xf]
    %v153 = vld [vmem:[#allocation3 + $0x144] sm:$0xf]
    %v154 = vld [vmem:[#allocation3 + $0x148] sm:$0xf]
    %v155 = vld [vmem:[#allocation3 + $0x14c] sm:$0xf]
    %v156 = vld [vmem:[#allocation3 + $0x150] sm:$0xf]
    %v157 = vld [vmem:[#allocation3 + $0x154] sm:$0xf]
    %v158 = vld [vmem:[#allocation3 + $0x158] sm:$0xf]
    %v159 = vld [vmem:[#allocation3 + $0x15c] sm:$0xf]
    %v160 = vld [vmem:[#allocation3 + $0x160] sm:$0xf]
    %v161 = vld [vmem:[#allocation3 + $0x164] sm:$0xf]
    %v162 = vld [vmem:[#allocation3 + $0x168] sm:$0xf]
    %v163 = vld [vmem:[#allocation3 + $0x16c] sm:$0xf]
    %v164 = vld [vmem:[#allocation3 + $0x170] sm:$0xf]
    %v165 = vld [vmem:[#allocation3 + $0x174] sm:$0xf]
    %v166 = vld [vmem:[#allocation3 + $0x178] sm:$0xf]
    %v167 = vld [vmem:[#allocation3 + $0x17c] sm:$0xf]
    %v168 = vld [vmem:[#allocation3 + $0x180] sm:$0xf]
    %v169 = vld [vmem:[#allocation3 + $0x184] sm:$0xf]
    %v170 = vld [vmem:[#allocation3 + $0x188] sm:$0xf]
    %v171 = vld [vmem:[#allocation3 + $0x18c] sm:$0xf]
    %v172 = vld [vmem:[#allocation3 + $0x190] sm:$0xf]
    %v173 = vld [vmem:[#allocation3 + $0x194] sm:$0xf]
    %v174 = vld [vmem:[#allocation3 + $0x198] sm:$0xf]
    %v175 = vld [vmem:[#allocation3 + $0x19c] sm:$0xf]
    %v176 = vld [vmem:[#allocation3 + $0x1a0] sm:$0xf]
    %v177 = vld [vmem:[#allocation3 + $0x1a4] sm:$0xf]
    %v178 = vld [vmem:[#allocation3 + $0x1a8] sm:$0xf]
    %v179 = vld [vmem:[#allocation3 + $0x1ac] sm:$0xf]
    %v180 = vld [vmem:[#allocation3 + $0x1b0] sm:$0xf]
    %v181 = vld [vmem:[#allocation3 + $0x1b4] sm:$0xf]
    %v182 = vld [vmem:[#allocation3 + $0x1b8] sm:$0xf]
    %v183 = vld [vmem:[#allocation3 + $0x1bc] sm:$0xf]
    %v184 = vld [vmem:[#allocation3 + $0x1c0] sm:$0xf]
    %v185 = vld [vmem:[#allocation3 + $0x1c4] sm:$0xf]
    %v186 = vld [vmem:[#allocation3 + $0x1c8] sm:$0xf]
    %v187 = vld [vmem:[#allocation3 + $0x1cc] sm:$0xf]
    %v188 = vld [vmem:[#allocation3 + $0x1d0] sm:$0xf]
    %v189 = vld [vmem:[#allocation3 + $0x1d4] sm:$0xf]
    %v190 = vld [vmem:[#allocation3 + $0x1d8] sm:$0xf]
    %v191 = vld [vmem:[#allocation3 + $0x1dc] sm:$0xf]
    %v192 = vld [vmem:[#allocation3 + $0x1e0] sm:$0xf]
    %v193 = vld [vmem:[#allocation3 + $0x1e4] sm:$0xf]
    %v194 = vld [vmem:[#allocation3 + $0x1e8] sm:$0xf]
    %v195 = vld [vmem:[#allocation3 + $0x1ec] sm:$0xf]
    %v196 = vld [vmem:[#allocation3 + $0x1f0] sm:$0xf]
    %v197 = vld [vmem:[#allocation3 + $0x1f4] sm:$0xf]
    %v198 = vld [vmem:[#allocation3 + $0x1f8] sm:$0xf]
    %v199 = vld [vmem:[#allocation3 + $0x1fc] sm:$0xf]
    %v216 = vunpack.c.l.b16 %v56
    %v217 = vunpack.c.h.b16 %v56
    %v218 = vunpack.c.l.b16 %v57
    %v219 = vunpack.c.h.b16 %v57
    %v220 = vunpack.c.l.b16 %v58
    %v221 = vunpack.c.h.b16 %v58
    %v222 = vunpack.c.l.b16 %v59
    %v223 = vunpack.c.h.b16 %v59
    %v224 = vunpack.c.l.b16 %v60
    %v225 = vunpack.c.h.b16 %v60
    %v226 = vunpack.c.l.b16 %v61
    %v227 = vunpack.c.h.b16 %v61
    %v228 = vunpack.c.l.b16 %v62
    %v229 = vunpack.c.h.b16 %v62
    %v230 = vunpack.c.l.b16 %v63
    %v231 = vunpack.c.h.b16 %v63
    %v232 = vunpack.c.l.b16 %v64
    %v233 = vunpack.c.h.b16 %v64
    %v234 = vunpack.c.l.b16 %v65
    %v235 = vunpack.c.h.b16 %v65
    %v236 = vunpack.c.l.b16 %v66
    %v237 = vunpack.c.h.b16 %v66
    %v238 = vunpack.c.l.b16 %v67
    %v239 = vunpack.c.h.b16 %v67
    %v240 = vunpack.c.l.b16 %v68
    %v241 = vunpack.c.h.b16 %v68
    %v242 = vunpack.c.l.b16 %v69
    %v243 = vunpack.c.h.b16 %v69
    %v244 = vunpack.c.l.b16 %v70
    %v245 = vunpack.c.h.b16 %v70
    %v246 = vunpack.c.l.b16 %v71
    %v247 = vunpack.c.h.b16 %v71
    %v248 = vpack.c.b16 %v224, %v216
    %v249 = vpack.c.b16 %v225, %v217
    %v250 = vpack.c.b16 %v226, %v218
    %v251 = vpack.c.b16 %v227, %v219
    %v252 = vpack.c.b16 %v228, %v220
    %v253 = vpack.c.b16 %v229, %v221
    %v254 = vpack.c.b16 %v230, %v222
    %v255 = vpack.c.b16 %v231, %v223
    %v256 = vpack.c.b16 %v240, %v232
    %v257 = vpack.c.b16 %v241, %v233
    %v258 = vpack.c.b16 %v242, %v234
    %v259 = vpack.c.b16 %v243, %v235
    %v260 = vpack.c.b16 %v244, %v236
    %v261 = vpack.c.b16 %v245, %v237
    %v262 = vpack.c.b16 %v246, %v238
    %v263 = vpack.c.b16 %v247, %v239
    %v408 = vunpack.c.l.b16 %v72
    %v409 = vunpack.c.l.b16 %v73
    %v410 = vunpack.c.l.b16 %v74
    %v411 = vunpack.c.l.b16 %v75
    %v412 = vunpack.c.l.b16 %v76
    %v413 = vunpack.c.l.b16 %v77
    %v414 = vunpack.c.l.b16 %v78
    %v415 = vunpack.c.l.b16 %v79
    %v416 = vunpack.c.l.b16 %v80
    %v417 = vunpack.c.l.b16 %v81
    %v418 = vunpack.c.l.b16 %v82
    %v419 = vunpack.c.l.b16 %v83
    %v420 = vunpack.c.l.b16 %v84
    %v421 = vunpack.c.l.b16 %v85
    %v422 = vunpack.c.l.b16 %v86
    %v423 = vunpack.c.l.b16 %v87
    %v424 = vunpack.c.l.b16 %v88
    %v425 = vunpack.c.l.b16 %v89
    %v426 = vunpack.c.l.b16 %v90
    %v427 = vunpack.c.l.b16 %v91
    %v428 = vunpack.c.l.b16 %v92
    %v429 = vunpack.c.l.b16 %v93
    %v430 = vunpack.c.l.b16 %v94
    %v431 = vunpack.c.l.b16 %v95
    %v432 = vunpack.c.l.b16 %v96
    %v433 = vunpack.c.l.b16 %v97
    %v434 = vunpack.c.l.b16 %v98
    %v435 = vunpack.c.l.b16 %v99
    %v436 = vunpack.c.l.b16 %v100
    %v437 = vunpack.c.l.b16 %v101
    %v438 = vunpack.c.l.b16 %v102
    %v439 = vunpack.c.l.b16 %v103
    %v440 = vunpack.c.l.b16 %v104
    %v441 = vunpack.c.l.b16 %v105
    %v442 = vunpack.c.l.b16 %v106
    %v443 = vunpack.c.l.b16 %v107
    %v444 = vunpack.c.l.b16 %v108
    %v445 = vunpack.c.l.b16 %v109
    %v446 = vunpack.c.l.b16 %v110
    %v447 = vunpack.c.l.b16 %v111
    %v448 = vunpack.c.l.b16 %v112
    %v449 = vunpack.c.l.b16 %v113
    %v450 = vunpack.c.l.b16 %v114
    %v451 = vunpack.c.l.b16 %v115
    %v452 = vunpack.c.l.b16 %v116
    %v453 = vunpack.c.l.b16 %v117
    %v454 = vunpack.c.l.b16 %v118
    %v455 = vunpack.c.l.b16 %v119
    %v456 = vunpack.c.l.b16 %v120
    %v457 = vunpack.c.l.b16 %v121
    %v458 = vunpack.c.l.b16 %v122
    %v459 = vunpack.c.l.b16 %v123
    %v460 = vunpack.c.l.b16 %v124
    %v461 = vunpack.c.l.b16 %v125
    %v462 = vunpack.c.l.b16 %v126
    %v463 = vunpack.c.l.b16 %v127
    %v464 = vunpack.c.l.b16 %v128
    %v465 = vunpack.c.l.b16 %v129
    %v466 = vunpack.c.l.b16 %v130
    %v467 = vunpack.c.l.b16 %v131
    %v468 = vunpack.c.l.b16 %v132
    %v469 = vunpack.c.l.b16 %v133
    %v470 = vunpack.c.l.b16 %v134
    %v471 = vunpack.c.l.b16 %v135
    %v472 = vunpack.c.l.b16 %v136
    %v473 = vunpack.c.l.b16 %v137
    %v474 = vunpack.c.l.b16 %v138
    %v475 = vunpack.c.l.b16 %v139
    %v476 = vunpack.c.l.b16 %v140
    %v477 = vunpack.c.l.b16 %v141
    %v478 = vunpack.c.l.b16 %v142
    %v479 = vunpack.c.l.b16 %v143
    %v480 = vunpack.c.l.b16 %v144
    %v481 = vunpack.c.l.b16 %v145
    %v482 = vunpack.c.l.b16 %v146
    %v483 = vunpack.c.l.b16 %v147
    %v484 = vunpack.c.l.b16 %v148
    %v485 = vunpack.c.l.b16 %v149
    %v486 = vunpack.c.l.b16 %v150
    %v487 = vunpack.c.l.b16 %v151
    %v488 = vunpack.c.l.b16 %v152
    %v489 = vunpack.c.l.b16 %v153
    %v490 = vunpack.c.l.b16 %v154
    %v491 = vunpack.c.l.b16 %v155
    %v492 = vunpack.c.l.b16 %v156
    %v493 = vunpack.c.l.b16 %v157
    %v494 = vunpack.c.l.b16 %v158
    %v495 = vunpack.c.l.b16 %v159
    %v496 = vunpack.c.l.b16 %v160
    %v497 = vunpack.c.l.b16 %v161
    %v498 = vunpack.c.l.b16 %v162
    %v499 = vunpack.c.l.b16 %v163
    %v500 = vunpack.c.l.b16 %v164
    %v501 = vunpack.c.l.b16 %v165
    %v502 = vunpack.c.l.b16 %v166
    %v503 = vunpack.c.l.b16 %v167
    %v504 = vunpack.c.l.b16 %v168
    %v505 = vunpack.c.l.b16 %v169
    %v506 = vunpack.c.l.b16 %v170
    %v507 = vunpack.c.l.b16 %v171
    %v508 = vunpack.c.l.b16 %v172
    %v509 = vunpack.c.l.b16 %v173
    %v510 = vunpack.c.l.b16 %v174
    %v511 = vunpack.c.l.b16 %v175
    %v512 = vunpack.c.l.b16 %v176
    %v513 = vunpack.c.l.b16 %v177
    %v514 = vunpack.c.l.b16 %v178
    %v515 = vunpack.c.l.b16 %v179
    %v516 = vunpack.c.l.b16 %v180
    %v517 = vunpack.c.l.b16 %v181
    %v518 = vunpack.c.l.b16 %v182
    %v519 = vunpack.c.l.b16 %v183
    %v520 = vunpack.c.l.b16 %v184
    %v521 = vunpack.c.l.b16 %v185
    %v522 = vunpack.c.l.b16 %v186
    %v523 = vunpack.c.l.b16 %v187
    %v524 = vunpack.c.l.b16 %v188
    %v525 = vunpack.c.l.b16 %v189
    %v526 = vunpack.c.l.b16 %v190
    %v527 = vunpack.c.l.b16 %v191
    %v528 = vunpack.c.l.b16 %v192
    %v529 = vunpack.c.l.b16 %v193
    %v530 = vunpack.c.l.b16 %v194
    %v531 = vunpack.c.l.b16 %v195
    %v532 = vunpack.c.l.b16 %v196
    %v533 = vunpack.c.l.b16 %v197
    %v534 = vunpack.c.l.b16 %v198
    %v535 = vunpack.c.l.b16 %v199
    %v536 = vpack.c.b16 %v409, %v408
    %v537 = vpack.c.b16 %v411, %v410
    %v538 = vpack.c.b16 %v413, %v412
    %v539 = vpack.c.b16 %v415, %v414
    %v540 = vpack.c.b16 %v417, %v416
    %v541 = vpack.c.b16 %v419, %v418
    %v542 = vpack.c.b16 %v421, %v420
    %v543 = vpack.c.b16 %v423, %v422
    %v544 = vpack.c.b16 %v425, %v424
    %v545 = vpack.c.b16 %v427, %v426
    %v546 = vpack.c.b16 %v429, %v428
    %v547 = vpack.c.b16 %v431, %v430
    %v548 = vpack.c.b16 %v433, %v432
    %v549 = vpack.c.b16 %v435, %v434
    %v550 = vpack.c.b16 %v437, %v436
    %v551 = vpack.c.b16 %v439, %v438
    %v552 = vpack.c.b16 %v441, %v440
    %v553 = vpack.c.b16 %v443, %v442
    %v554 = vpack.c.b16 %v445, %v444
    %v555 = vpack.c.b16 %v447, %v446
    %v556 = vpack.c.b16 %v449, %v448
    %v557 = vpack.c.b16 %v451, %v450
    %v558 = vpack.c.b16 %v453, %v452
    %v559 = vpack.c.b16 %v455, %v454
    %v560 = vpack.c.b16 %v457, %v456
    %v561 = vpack.c.b16 %v459, %v458
    %v562 = vpack.c.b16 %v461, %v460
    %v563 = vpack.c.b16 %v463, %v462
    %v564 = vpack.c.b16 %v465, %v464
    %v565 = vpack.c.b16 %v467, %v466
    %v566 = vpack.c.b16 %v469, %v468
    %v567 = vpack.c.b16 %v471, %v470
    %v568 = vpack.c.b16 %v473, %v472
    %v569 = vpack.c.b16 %v475, %v474
    %v570 = vpack.c.b16 %v477, %v476
    %v571 = vpack.c.b16 %v479, %v478
    %v572 = vpack.c.b16 %v481, %v480
    %v573 = vpack.c.b16 %v483, %v482
    %v574 = vpack.c.b16 %v485, %v484
    %v575 = vpack.c.b16 %v487, %v486
    %v576 = vpack.c.b16 %v489, %v488
    %v577 = vpack.c.b16 %v491, %v490
    %v578 = vpack.c.b16 %v493, %v492
    %v579 = vpack.c.b16 %v495, %v494
    %v580 = vpack.c.b16 %v497, %v496
    %v581 = vpack.c.b16 %v499, %v498
    %v582 = vpack.c.b16 %v501, %v500
    %v583 = vpack.c.b16 %v503, %v502
    %v584 = vpack.c.b16 %v505, %v504
    %v585 = vpack.c.b16 %v507, %v506
    %v586 = vpack.c.b16 %v509, %v508
    %v587 = vpack.c.b16 %v511, %v510
    %v588 = vpack.c.b16 %v513, %v512
    %v589 = vpack.c.b16 %v515, %v514
    %v590 = vpack.c.b16 %v517, %v516
    %v591 = vpack.c.b16 %v519, %v518
    %v592 = vpack.c.b16 %v521, %v520
    %v593 = vpack.c.b16 %v523, %v522
    %v594 = vpack.c.b16 %v525, %v524
    %v595 = vpack.c.b16 %v527, %v526
    %v596 = vpack.c.b16 %v529, %v528
    %v597 = vpack.c.b16 %v531, %v530
    %v598 = vpack.c.b16 %v533, %v532
    %v599 = vpack.c.b16 %v535, %v534
    %664 = vmatpush.bf16.msra.mxu0 %v543
    %665 = vmatpush.bf16.msra.mxu0 %v542
    %666 = vmatpush.bf16.msra.mxu0 %v541
    %667 = vmatpush.bf16.msra.mxu0 %v540
    %668 = vmatpush.bf16.msra.mxu0 %v539
    %669 = vmatpush.bf16.msra.mxu0 %v538
    %670 = vmatpush.bf16.msra.mxu0 %v537
    %671 = vmatpush.bf16.msra.mxu0 %v536
    %672 = vmatmul.bf16.gmra.mxu0 %v248
    %v673 = vpop.f32.mrf.mxu0
    %v674 = vadd.f32 0.0, %v673
    %v675 = vpop.f32.mrf.mxu0
    %v676 = vadd.f32 0.0, %v675
    %677 = vmatmul.bf16.gmra.mxu0 %v256
    %v678 = vpop.f32.mrf.mxu0
    %v679 = vadd.f32 0.0, %v678
    %v680 = vpop.f32.mrf.mxu0
    %v681 = vadd.f32 0.0, %v680
    %682 = vdwg.mxu0
    %683 = vmatpush.bf16.msra.mxu0 %v551
    %684 = vmatpush.bf16.msra.mxu0 %v550
    %685 = vmatpush.bf16.msra.mxu0 %v549
    %686 = vmatpush.bf16.msra.mxu0 %v548
    %687 = vmatpush.bf16.msra.mxu0 %v547
    %688 = vmatpush.bf16.msra.mxu0 %v546
    %689 = vmatpush.bf16.msra.mxu0 %v545
    %690 = vmatpush.bf16.msra.mxu0 %v544
    %691 = vmatmul.bf16.gmra.mxu0 %v249
    %v692 = vpop.f32.mrf.mxu0
    %v693 = vadd.f32 %v674, %v692
    %v694 = vpop.f32.mrf.mxu0
    %v695 = vadd.f32 %v676, %v694
    %696 = vmatmul.bf16.gmra.mxu0 %v257
    %v697 = vpop.f32.mrf.mxu0
    %v698 = vadd.f32 %v679, %v697
    %v699 = vpop.f32.mrf.mxu0
    %v700 = vadd.f32 %v681, %v699
    %701 = vdwg.mxu0
    %702 = vmatpush.bf16.msra.mxu0 %v559
    %703 = vmatpush.bf16.msra.mxu0 %v558
    %704 = vmatpush.bf16.msra.mxu0 %v557
    %705 = vmatpush.bf16.msra.mxu0 %v556
    %706 = vmatpush.bf16.msra.mxu0 %v555
    %707 = vmatpush.bf16.msra.mxu0 %v554
    %708 = vmatpush.bf16.msra.mxu0 %v553
    %709 = vmatpush.bf16.msra.mxu0 %v552
    %710 = vmatmul.bf16.gmra.mxu0 %v250
    %v711 = vpop.f32.mrf.mxu0
    %v712 = vadd.f32 %v693, %v711
    %v713 = vpop.f32.mrf.mxu0
    %v714 = vadd.f32 %v695, %v713
    %715 = vmatmul.bf16.gmra.mxu0 %v258
    %v716 = vpop.f32.mrf.mxu0
    %v717 = vadd.f32 %v698, %v716
    %v718 = vpop.f32.mrf.mxu0
    %v719 = vadd.f32 %v700, %v718
    %720 = vdwg.mxu0
    %721 = vmatpush.bf16.msra.mxu0 %v567
    %722 = vmatpush.bf16.msra.mxu0 %v566
    %723 = vmatpush.bf16.msra.mxu0 %v565
    %724 = vmatpush.bf16.msra.mxu0 %v564
    %725 = vmatpush.bf16.msra.mxu0 %v563
    %726 = vmatpush.bf16.msra.mxu0 %v562
    %727 = vmatpush.bf16.msra.mxu0 %v561
    %728 = vmatpush.bf16.msra.mxu0 %v560
    %729 = vmatmul.bf16.gmra.mxu0 %v251
    %v730 = vpop.f32.mrf.mxu0
    %v731 = vadd.f32 %v712, %v730
    %v732 = vpop.f32.mrf.mxu0
    %v733 = vadd.f32 %v714, %v732
    %734 = vmatmul.bf16.gmra.mxu0 %v259
    %v735 = vpop.f32.mrf.mxu0
    %v736 = vadd.f32 %v717, %v735
    %v737 = vpop.f32.mrf.mxu0
    %v738 = vadd.f32 %v719, %v737
    %739 = vdwg.mxu0
    %740 = vmatpush.bf16.msra.mxu0 %v575
    %741 = vmatpush.bf16.msra.mxu0 %v574
    %742 = vmatpush.bf16.msra.mxu0 %v573
    %743 = vmatpush.bf16.msra.mxu0 %v572
    %744 = vmatpush.bf16.msra.mxu0 %v571
    %745 = vmatpush.bf16.msra.mxu0 %v570
    %746 = vmatpush.bf16.msra.mxu0 %v569
    %747 = vmatpush.bf16.msra.mxu0 %v568
    %748 = vmatmul.bf16.gmra.mxu0 %v252
    %v749 = vpop.f32.mrf.mxu0
    %v750 = vadd.f32 %v731, %v749
    %v751 = vpop.f32.mrf.mxu0
    %v752 = vadd.f32 %v733, %v751
    %753 = vmatmul.bf16.gmra.mxu0 %v260
    %v754 = vpop.f32.mrf.mxu0
    %v755 = vadd.f32 %v736, %v754
    %v756 = vpop.f32.mrf.mxu0
    %v757 = vadd.f32 %v738, %v756
    %758 = vdwg.mxu0
    %759 = vmatpush.bf16.msra.mxu0 %v583
    %760 = vmatpush.bf16.msra.mxu0 %v582
    %761 = vmatpush.bf16.msra.mxu0 %v581
    %762 = vmatpush.bf16.msra.mxu0 %v580
    %763 = vmatpush.bf16.msra.mxu0 %v579
    %764 = vmatpush.bf16.msra.mxu0 %v578
    %765 = vmatpush.bf16.msra.mxu0 %v577
    %766 = vmatpush.bf16.msra.mxu0 %v576
    %767 = vmatmul.bf16.gmra.mxu0 %v253
    %v768 = vpop.f32.mrf.mxu0
    %v769 = vadd.f32 %v750, %v768
    %v770 = vpop.f32.mrf.mxu0
    %v771 = vadd.f32 %v752, %v770
    %772 = vmatmul.bf16.gmra.mxu0 %v261
    %v773 = vpop.f32.mrf.mxu0
    %v774 = vadd.f32 %v755, %v773
    %v775 = vpop.f32.mrf.mxu0
    %v776 = vadd.f32 %v757, %v775
    %777 = vdwg.mxu0
    %778 = vmatpush.bf16.msra.mxu0 %v591
    %779 = vmatpush.bf16.msra.mxu0 %v590
    %780 = vmatpush.bf16.msra.mxu0 %v589
    %781 = vmatpush.bf16.msra.mxu0 %v588
    %782 = vmatpush.bf16.msra.mxu0 %v587
    %783 = vmatpush.bf16.msra.mxu0 %v586
    %784 = vmatpush.bf16.msra.mxu0 %v585
    %785 = vmatpush.bf16.msra.mxu0 %v584
    %786 = vmatmul.bf16.gmra.mxu0 %v254
    %v787 = vpop.f32.mrf.mxu0
    %v788 = vadd.f32 %v769, %v787
    %v789 = vpop.f32.mrf.mxu0
    %v790 = vadd.f32 %v771, %v789
    %791 = vmatmul.bf16.gmra.mxu0 %v262
    %v792 = vpop.f32.mrf.mxu0
    %v793 = vadd.f32 %v774, %v792
    %v794 = vpop.f32.mrf.mxu0
    %v795 = vadd.f32 %v776, %v794
    %796 = vdwg.mxu0
    %797 = vmatpush.bf16.msra.mxu0 %v599
    %798 = vmatpush.bf16.msra.mxu0 %v598
    %799 = vmatpush.bf16.msra.mxu0 %v597
    %800 = vmatpush.bf16.msra.mxu0 %v596
    %801 = vmatpush.bf16.msra.mxu0 %v595
    %802 = vmatpush.bf16.msra.mxu0 %v594
    %803 = vmatpush.bf16.msra.mxu0 %v593
    %804 = vmatpush.bf16.msra.mxu0 %v592
    %805 = vmatmul.bf16.gmra.mxu0 %v255
    %v806 = vpop.f32.mrf.mxu0
    %v807 = vadd.f32 %v788, %v806
    %v808 = vpop.f32.mrf.mxu0
    %v809 = vadd.f32 %v790, %v808
    %810 = vmatmul.bf16.gmra.mxu0 %v263
    %v811 = vpop.f32.mrf.mxu0
    %v812 = vadd.f32 %v793, %v811
    %v813 = vpop.f32.mrf.mxu0
    %v814 = vadd.f32 %v795, %v813
    %815 = vdwg.mxu0
    %v816 = vadd.f32 %v52, %v807
    %v817 = vadd.f32 %v53, %v809
    %v818 = vadd.f32 %v54, %v812
    %v819 = vadd.f32 %v55, %v814
    %820 = vst [vmem:[#allocation2] sm:$0xff] %v816
    %821 = vst [vmem:[#allocation2 + $0x8] sm:$0xff] %v817
    %822 = vst [vmem:[#allocation2 + $0x10] sm:$0xff] %v818
    %823 = vst [vmem:[#allocation2 + $0x18] sm:$0xff] %v819
    // Predicated region
    $region26: #{_lambda_.9} parent=1 // pred_check
      %p824 = pneg %p44
    $region27: #{_lambda_.9} parent=1 // pred_check_branch
      %826 = sbr.rel (%p824) target = $region29
    $region28: #{_lambda_.9} parent=1 // pred_region
      %v827 = vld [vmem:[#allocation2] sm:$0xff]
      %v828 = vld [vmem:[#allocation2 + $0x8] sm:$0xff]
      %v829 = vld [vmem:[#allocation2 + $0x10] sm:$0xff]
      %v830 = vld [vmem:[#allocation2 + $0x18] sm:$0xff]
      %v831 = vld [vmem:[#allocation5] sm:$0x1]
      %v833 = vperm.slane %v831, 0
      %v835 = vadd.f32 %v827, %v833
      %v836 = vadd.f32 %v828, %v833
      %v837 = vadd.f32 %v829, %v833
      %v838 = vadd.f32 %v830, %v833
      %v839 = vmax.f32 %v835, 0.0
      %v840 = vmax.f32 %v836, 0.0
      %v841 = vmax.f32 %v837, 0.0
      %v842 = vmax.f32 %v838, 0.0
      %843 = vst [vmem:[%s3] sm:$0xff] %v839
      %844 = vst [vmem:[%s3 + $0x8] sm:$0xff] %v840
      %845 = vst [vmem:[%s3 + $0x10] sm:$0xff] %v841
      %846 = vst [vmem:[%s3 + $0x18] sm:$0xff] %v842
    $region29: #{_lambda_.9} parent=1 // pred_fallthru
      _
    // Predicated region
    $region30: #{_lambda_.9} parent=1 // pred_check
      _
    $region31: #{_lambda_.9} parent=1 // pred_check_branch
      %848 = sbr.rel (0) target = $region33
    $region32: #{_lambda_.9} parent=1 // pred_region
      _
    $region33: #{_lambda_.9} parent=1 // pred_fallthru
      _
    // Predicated region
    $region34: #{_lambda_.9} parent=1 // pred_check
      _
    $region35: #{_lambda_.9} parent=1 // pred_check_branch
      %850 = sbr.rel (0) target = $region37
    $region36: #{_lambda_.9} parent=1 // pred_region
      _
    $region37: #{_lambda_.9} parent=1 // pred_fallthru
      _
    %851 = vsyncpa [#allocation4], 1
    %852 = vsyncpa [#allocation6], 1

// kernel: _lambda_.11
$region0: #{_lambda_.11}
  #allocation0 [shape = 'u32[]', space=smem, size = 0x4, offset = 0x4, fixed_abs, tag = 'smem constant byte address 0x4 - core index']
  #allocation1 [shape = 'u32[72,128]{1,0:T(1,128)}', space=vmem, size = 0x9000, scoped, tag = 'internal scratch']
  #allocation2 [shape = 'f32[8,256]{1,0:T(8,128)}', space=vmem, size = 0x2000, scoped, tag = 'scratch operand']
  %s0 = inlined_call_operand.vmem [shape: bf16[1,8,4096], index: 0, kind: input, shape index: {}]
  %s1 = inlined_call_operand.vmem [shape: bf16[1,4096,512], index: 1, kind: input, shape index: {}]
  %s2 = inlined_call_operand.vmem [shape: f32[1,1,512], index: 2, kind: input, shape index: {}]
  %s3 = inlined_call_operand.vmem [shape: f32[1,8,512], index: 3, kind: output, shape index: {}]
  %s4 = sld [smem:[#allocation0]]
  $region91: #{_lambda_.11} parent=0
    _
  %s6 = ssub.s32 1, %s4
  %s7 = scalar_select 0, %s6, %s4
  $region1: #{_lambda_.11} parent=0
    #allocation3 [shape = 'u8[1048576]{0}', space=vmem, size = 0x100000, scoped, tag = 'input window, operand 1']
    loop: start=0, step=1, limit=10
    $region2: #{_lambda_.11} parent=1 // loop_pre_header
      _
    $region3: #{_lambda_.11} parent=1 // loop_header
      %s9 = sphi 0, %s13
      %p10 = scmp.ge.s32.totalorder %s9, 10
      %s16 = sphi 0, %s42
      %s17 = sphi 0, %s38
      %s18 = sphi 0, %s34
      %s19 = sphi 0, %s30
      %s20 = sphi 0, %s16
      %s21 = sphi 0, %s17
      %s22 = sphi 0, %s18
      %s23 = sphi 0, %s19
      %s24 = sphi 0, %s20
      %s25 = sphi 0, %s21
      %s26 = sphi 0, %s22
      %s27 = sphi 0, %s23
      %s49 = sphi 0, %s51
      %s52 = sphi 0, %s49
      %s53 = sphi 0, %s52
      %s69 = sphi 0, %s53
      %s79 = sphi 0, %s81
      %s82 = sphi 0, %s79
      %s83 = sphi 0, %s82
      %s99 = sphi 0, %s83
      %s105 = sphi 0, %s107
      %s108 = sphi 0, %s105
      %s109 = sphi 0, %s108
      %s125 = sphi 0, %s109
      %s135 = sphi 0, %s137
      %s138 = sphi 0, %s135
      %s139 = sphi 0, %s138
      %s155 = sphi 0, %s139
    $region4: #{_lambda_.11} parent=1 // loop_header_branch
      %12 = sbr.rel (%p10) target = $region8
    $region5: #{_lambda_.11} parent=1 // loop_body
      %s14 = ssub.s32 %s9, 1
      %s15 = ssub.s32 %s9, 2
      %s28 = sadd.s32 1, %s19
      %p29 = scmp.ge.s32.totalorder %s28, 4
      %s30 = scalar_select %p29, 0, %s28
      %s31 = sadd.s32 1, %s18
      %s32 = scalar_select %p29, %s31, %s18
      %p33 = scmp.ge.s32.totalorder %s32, 2
      %s34 = scalar_select %p33, 0, %s32
      %s35 = sadd.s32 1, %s17
      %s36 = scalar_select %p33, %s35, %s17
      %p37 = scmp.ge.s32.totalorder %s36, 1
      %s38 = scalar_select %p37, 0, %s36
      %s39 = sadd.s32 1, %s16
      %s40 = scalar_select %p37, %s39, %s16
      %p41 = scmp.ge.s32.totalorder %s40, 1
      %s42 = scalar_select %p41, 0, %s40
      %s43 = ssub.s32 %s16, %s42
      %s44 = ssub.s32 %s17, %s38
      %s45 = sor.u32 %s43, %s44
      %s46 = ssub.s32 %s19, %s30
      %s47 = sor.u32 %s45, %s46
      %p48 = scmp.eq.s32.totalorder %s47, 0
      %s50 = sadd.s32 %s49, 1
      %s51 = scalar_select %p48, %s49, %s50
      %p54 = pneg %p48
      %p55 = scmp.eq.s32.totalorder %s9, 7
      %p56 = por %p54, %p55
      %p57 = scmp.ne.s32.totalorder %s49, %s52
      %p58 = scmp.eq.s32.totalorder %s9, 0
      %p59 = por %p57, %p58
      %p60 = scmp.ne.s32.totalorder %s49, %s52
      %p61 = scmp.eq.s32.totalorder %s14, 7
      %p62 = por %p60, %p61
      %p63 = scmp.ne.s32.totalorder %s52, %s53
      %p64 = scmp.eq.s32.totalorder %s14, 0
      %p65 = por %p63, %p64
      %p66 = scmp.ne.s32.totalorder %s52, %s53
      %p67 = scmp.eq.s32.totalorder %s15, 7
      %p68 = por %p66, %p67
      %p70 = scmp.ne.s32.totalorder %s53, %s69
      %p71 = scmp.eq.s32.totalorder %s15, 0
      %p72 = por %p70, %p71
      %s73 = ssub.s32 %s16, %s42
      %s74 = ssub.s32 %s19, %s30
      %s75 = sor.u32 %s73, %s74
      %s76 = ssub.s32 %s18, %s34
      %s77 = sor.u32 %s75, %s76
      %p78 = scmp.eq.s32.totalorder %s77, 0
      %s80 = sadd.s32 %s79, 1
      %s81 = scalar_select %p78, %s79, %s80
      %p84 = pneg %p78
      %p85 = scmp.eq.s32.totalorder %s9, 7
      %p86 = por %p84, %p85
      %p87 = scmp.ne.s32.totalorder %s79, %s82
      %p88 = scmp.eq.s32.totalorder %s9, 0
      %p89 = por %p87, %p88
      %p90 = scmp.ne.s32.totalorder %s79, %s82
      %p91 = scmp.eq.s32.totalorder %s14, 7
      %p92 = por %p90, %p91
      %p93 = scmp.ne.s32.totalorder %s82, %s83
      %p94 = scmp.eq.s32.totalorder %s14, 0
      %p95 = por %p93, %p94
      %p96 = scmp.ne.s32.totalorder %s82, %s83
      %p97 = scmp.eq.s32.totalorder %s15, 7
      %p98 = por %p96, %p97
      %p100 = scmp.ne.s32.totalorder %s83, %s99
      %p101 = scmp.eq.s32.totalorder %s15, 0
      %p102 = por %p100, %p101
      %s103 = ssub.s32 %s18, %s34
      %p104 = scmp.eq.s32.totalorder %s103, 0
      %s106 = sadd.s32 %s105, 1
      %s107 = scalar_select %p104, %s105, %s106
      %p110 = pneg %p104
      %p111 = scmp.eq.s32.totalorder %s9, 7
      %p112 = por %p110, %p111
      %p113 = scmp.ne.s32.totalorder %s105, %s108
      %p114 = scmp.eq.s32.totalorder %s9, 0
      %p115 = por %p113, %p114
      %p116 = scmp.ne.s32.totalorder %s105, %s108
      %p117 = scmp.eq.s32.totalorder %s14, 7
      %p118 = por %p116, %p117
      %p119 = scmp.ne.s32.totalorder %s108, %s109
      %p120 = scmp.eq.s32.totalorder %s14, 0
      %p121 = por %p119, %p120
      %p122 = scmp.ne.s32.totalorder %s108, %s109
      %p123 = scmp.eq.s32.totalorder %s15, 7
      %p124 = por %p122, %p123
      %p126 = scmp.ne.s32.totalorder %s109, %s125
      %p127 = scmp.eq.s32.totalorder %s15, 0
      %p128 = por %p126, %p127
      %s129 = ssub.s32 %s16, %s42
      %s130 = ssub.s32 %s17, %s38
      %s131 = sor.u32 %s129, %s130
      %s132 = ssub.s32 %s18, %s34
      %s133 = sor.u32 %s131, %s132
      %p134 = scmp.eq.s32.totalorder %s133, 0
      %s136 = sadd.s32 %s135, 1
      %s137 = scalar_select %p134, %s135, %s136
      %p140 = pneg %p134
      %p141 = scmp.eq.s32.totalorder %s9, 7
      %p142 = por %p140, %p141
      %p143 = scmp.ne.s32.totalorder %s135, %s138
      %p144 = scmp.eq.s32.totalorder %s9, 0
      %p145 = por %p143, %p144
      %p146 = scmp.ne.s32.totalorder %s135, %s138
      %p147 = scmp.eq.s32.totalorder %s14, 7
      %p148 = por %p146, %p147
      %p149 = scmp.ne.s32.totalorder %s138, %s139
      %p150 = scmp.eq.s32.totalorder %s14, 0
      %p151 = por %p149, %p150
      %p152 = scmp.ne.s32.totalorder %s138, %s139
      %p153 = scmp.eq.s32.totalorder %s15, 7
      %p154 = por %p152, %p153
      %p156 = scmp.ne.s32.totalorder %s139, %s155
      %p157 = scmp.eq.s32.totalorder %s15, 0
      %p158 = por %p156, %p157
      %p159 = scmp.le.s32.totalorder 1, %s9
      %p160 = scmp.lt.s32.totalorder %s9, 9
      %p161 = pnand %p159, %p160
      %p162 = pneg %p161
      // Predicated region
      $region9: #{_lambda_.11} parent=5 // pred_check
        _
      $region10: #{_lambda_.11} parent=5 // pred_check_branch
        %164 = sbr.rel (%p161) target = $region12
      $region11: #{_lambda_.11} parent=5 // pred_region
        %s165 = ssub.s32 %s9, 1
      $region12: #{_lambda_.11} parent=5 // pred_fallthru
        _
      %p166 = scmp.lt.s32.totalorder %s9, 8
      // Predicated region
      $region13: #{_lambda_.11} parent=5 // pred_check
        %p167 = pneg %p166
      $region14: #{_lambda_.11} parent=5 // pred_check_branch
        %169 = sbr.rel (%p167) target = $region16
      $region15: #{_lambda_.11} parent=5 // pred_region
        // Predicated region
        $region17: #{_lambda_.11} parent=15 // pred_check
          %p170 = pneg %p59
        $region18: #{_lambda_.11} parent=15 // pred_check_branch
          %172 = sbr.rel (%p170) target = $region20
        $region19: #{_lambda_.11} parent=15 // pred_region
          %s173 = smul.u32 8, %s19
          %p174 = scmp.lt.s32.totalorder %s16, 0
          %s175 = scalar_select %p174, %s16, 0
          %p176 = scmp.lt.s32.totalorder %s17, 0
          %s177 = scalar_select %p176, %s17, 0
          %p178 = scmp.lt.s32.totalorder %s173, 31
          %s179 = scalar_select %p178, %s173, 31
          %s180 = smul.addr %s177, 32
          %s181 = sadd.s32 %s179, %s180
          %s182 = smul.addr %s175, 32
          %s183 = sadd.s32 %s181, %s182
          %s184 = smul.addr %s183, 4
          %s185 = scalar_lea.vmem %s0, %s184
          %s186 = smul.u32 8, %s19
        $region20: #{_lambda_.11} parent=15 // pred_fallthru
          _
        // Predicated region
        $region21: #{_lambda_.11} parent=15 // pred_check
          %p187 = pneg %p89
        $region22: #{_lambda_.11} parent=15 // pred_check_branch
          %189 = sbr.rel (%p187) target = $region24
        $region23: #{_lambda_.11} parent=15 // pred_region
          %s190 = sand.u32 %s79, 1
          %s191 = sand.u32 %s79, 1
          %s192 = smul.addr %s191, 1024
          %s193 = scalar_lea.vmem [#allocation3], %s192
          %s194 = smul.u32 128, %s19
          %s195 = smul.u32 2, %s18
          %s196 = smul.addr %s194, 4
          %s197 = sadd.s32 %s195, %s196
          %s198 = smul.addr %s16, 2048
          %s199 = sadd.s32 %s197, %s198
          %s200 = smul.addr %s199, 4
          %s201 = scalar_lea.vmem %s1, %s200
          // Predicated region
          $region25: #{_lambda_.11} parent=23 // pred_check
            _
          $region26: #{_lambda_.11} parent=23 // pred_check_branch
            %203 = sbr.rel (0) target = $region28
          $region27: #{_lambda_.11} parent=23 // pred_region
            // Predicated region
            $region29: #{_lambda_.11} parent=27 // pred_check
              _
            $region30: #{_lambda_.11} parent=27 // pred_check_branch
              %205 = sbr.rel (0) target = $region32
            $region31: #{_lambda_.11} parent=27 // pred_region
              // Predicated region
              $region44: #{_lambda_.11} parent=31 // pred_check
                _
              $region45: #{_lambda_.11} parent=31 // pred_check_branch
                %475 = sbr.rel (0) target = $region47
              $region46: #{_lambda_.11} parent=31 // pred_region
                loop: start=0, step=1, limit=1
                $region48: #{_lambda_.11} parent=46 // loop_pre_header
                  _
                $region49: #{_lambda_.11} parent=46 // loop_header
                  %s477 = sphi 0, %s481
                  %p478 = scmp.ge.s32.totalorder %s477, 1
                  %s482 = sphi %s201, %s201
                  %s483 = sphi %s193, %s193
                $region50: #{_lambda_.11} parent=46 // loop_header_branch
                  %480 = sbr.rel (%p478) target = $region54
                $region51: #{_lambda_.11} parent=46 // loop_body
                  %v484 = vld [vmem:[%s482] sm:$0xff]
                  %485 = vst [vmem:[%s483] sm:$0xff] %v484
                  %v486 = vld [vmem:[%s482 + $0x10] sm:$0xff]
                  %487 = vst [vmem:[%s483 + $0x8] sm:$0xff] %v486
                  %v488 = vld [vmem:[%s482 + $0x20] sm:$0xff]
                  %489 = vst [vmem:[%s483 + $0x10] sm:$0xff] %v488
                  %v490 = vld [vmem:[%s482 + $0x30] sm:$0xff]
                  %491 = vst [vmem:[%s483 + $0x18] sm:$0xff] %v490
                  %v492 = vld [vmem:[%s482 + $0x40] sm:$0xff]
                  %493 = vst [vmem:[%s483 + $0x20] sm:$0xff] %v492
                  %v494 = vld [vmem:[%s482 + $0x50] sm:$0xff]
                  %495 = vst [vmem:[%s483 + $0x28] sm:$0xff] %v494
                  %v496 = vld [vmem:[%s482 + $0x60] sm:$0xff]
                  %497 = vst [vmem:[%s483 + $0x30] sm:$0xff] %v496
                  %v498 = vld [vmem:[%s482 + $0x70] sm:$0xff]
                  %499 = vst [vmem:[%s483 + $0x38] sm:$0xff] %v498
                  %v500 = vld [vmem:[%s482 + $0x80] sm:$0xff]
                  %501 = vst [vmem:[%s483 + $0x40] sm:$0xff] %v500
                  %v502 = vld [vmem:[%s482 + $0x90] sm:$0xff]
                  %503 = vst [vmem:[%s483 + $0x48] sm:$0xff] %v502
                  %v504 = vld [vmem:[%s482 + $0xa0] sm:$0xff]
                  %505 = vst [vmem:[%s483 + $0x50] sm:$0xff] %v504
                  %v506 = vld [vmem:[%s482 + $0xb0] sm:$0xff]
                  %507 = vst [vmem:[%s483 + $0x58] sm:$0xff] %v506
                  %v508 = vld [vmem:[%s482 + $0xc0] sm:$0xff]
                  %509 = vst [vmem:[%s483 + $0x60] sm:$0xff] %v508
                  %v510 = vld [vmem:[%s482 + $0xd0] sm:$0xff]
                  %511 = vst [vmem:[%s483 + $0x68] sm:$0xff] %v510
                  %v512 = vld [vmem:[%s482 + $0xe0] sm:$0xff]
                  %513 = vst [vmem:[%s483 + $0x70] sm:$0xff] %v512
                  %v514 = vld [vmem:[%s482 + $0xf0] sm:$0xff]
                  %515 = vst [vmem:[%s483 + $0x78] sm:$0xff] %v514
                  %v516 = vld [vmem:[%s482 + $0x100] sm:$0xff]
                  %517 = vst [vmem:[%s483 + $0x80] sm:$0xff] %v516
                  %v518 = vld [vmem:[%s482 + $0x110] sm:$0xff]
                  %519 = vst [vmem:[%s483 + $0x88] sm:$0xff] %v518
                  %v520 = vld [vmem:[%s482 + $0x120] sm:$0xff]
                  %521 = vst [vmem:[%s483 + $0x90] sm:$0xff] %v520
                  %v522 = vld [vmem:[%s482 + $0x130] sm:$0xff]
                  %523 = vst [vmem:[%s483 + $0x98] sm:$0xff] %v522
                  %v524 = vld [vmem:[%s482 + $0x140] sm:$0xff]
                  %525 = vst [vmem:[%s483 + $0xa0] sm:$0xff] %v524
                  %v526 = vld [vmem:[%s482 + $0x150] sm:$0xff]
                  %527 = vst [vmem:[%s483 + $0xa8] sm:$0xff] %v526
                  %v528 = vld [vmem:[%s482 + $0x160] sm:$0xff]
                  %529 = vst [vmem:[%s483 + $0xb0] sm:$0xff] %v528
                  %v530 = vld [vmem:[%s482 + $0x170] sm:$0xff]
                  %531 = vst [vmem:[%s483 + $0xb8] sm:$0xff] %v530
                  %v532 = vld [vmem:[%s482 + $0x180] sm:$0xff]
                  %533 = vst [vmem:[%s483 + $0xc0] sm:$0xff] %v532
                  %v534 = vld [vmem:[%s482 + $0x190] sm:$0xff]
                  %535 = vst [vmem:[%s483 + $0xc8] sm:$0xff] %v534
                  %v536 = vld [vmem:[%s482 + $0x1a0] sm:$0xff]
                  %537 = vst [vmem:[%s483 + $0xd0] sm:$0xff] %v536
                  %v538 = vld [vmem:[%s482 + $0x1b0] sm:$0xff]
                  %539 = vst [vmem:[%s483 + $0xd8] sm:$0xff] %v538
                  %v540 = vld [vmem:[%s482 + $0x1c0] sm:$0xff]
                  %541 = vst [vmem:[%s483 + $0xe0] sm:$0xff] %v540
                  %v542 = vld [vmem:[%s482 + $0x1d0] sm:$0xff]
                  %543 = vst [vmem:[%s483 + $0xe8] sm:$0xff] %v542
                  %v544 = vld [vmem:[%s482 + $0x1e0] sm:$0xff]
                  %545 = vst [vmem:[%s483 + $0xf0] sm:$0xff] %v544
                  %v546 = vld [vmem:[%s482 + $0x1f0] sm:$0xff]
                  %547 = vst [vmem:[%s483 + $0xf8] sm:$0xff] %v546
                  %v548 = vld [vmem:[%s482 + $0x200] sm:$0xff]
                  %549 = vst [vmem:[%s483 + $0x100] sm:$0xff] %v548
                  %v550 = vld [vmem:[%s482 + $0x210] sm:$0xff]
                  %551 = vst [vmem:[%s483 + $0x108] sm:$0xff] %v550
                  %v552 = vld [vmem:[%s482 + $0x220] sm:$0xff]
                  %553 = vst [vmem:[%s483 + $0x110] sm:$0xff] %v552
                  %v554 = vld [vmem:[%s482 + $0x230] sm:$0xff]
                  %555 = vst [vmem:[%s483 + $0x118] sm:$0xff] %v554
                  %v556 = vld [vmem:[%s482 + $0x240] sm:$0xff]
                  %557 = vst [vmem:[%s483 + $0x120] sm:$0xff] %v556
                  %v558 = vld [vmem:[%s482 + $0x250] sm:$0xff]
                  %559 = vst [vmem:[%s483 + $0x128] sm:$0xff] %v558
                  %v560 = vld [vmem:[%s482 + $0x260] sm:$0xff]
                  %561 = vst [vmem:[%s483 + $0x130] sm:$0xff] %v560
                  %v562 = vld [vmem:[%s482 + $0x270] sm:$0xff]
                  %563 = vst [vmem:[%s483 + $0x138] sm:$0xff] %v562
                  %v564 = vld [vmem:[%s482 + $0x280] sm:$0xff]
                  %565 = vst [vmem:[%s483 + $0x140] sm:$0xff] %v564
                  %v566 = vld [vmem:[%s482 + $0x290] sm:$0xff]
                  %567 = vst [vmem:[%s483 + $0x148] sm:$0xff] %v566
                  %v568 = vld [vmem:[%s482 + $0x2a0] sm:$0xff]
                  %569 = vst [vmem:[%s483 + $0x150] sm:$0xff] %v568
                  %v570 = vld [vmem:[%s482 + $0x2b0] sm:$0xff]
                  %571 = vst [vmem:[%s483 + $0x158] sm:$0xff] %v570
                  %v572 = vld [vmem:[%s482 + $0x2c0] sm:$0xff]
                  %573 = vst [vmem:[%s483 + $0x160] sm:$0xff] %v572
                  %v574 = vld [vmem:[%s482 + $0x2d0] sm:$0xff]
                  %575 = vst [vmem:[%s483 + $0x168] sm:$0xff] %v574
                  %v576 = vld [vmem:[%s482 + $0x2e0] sm:$0xff]
                  %577 = vst [vmem:[%s483 + $0x170] sm:$0xff] %v576
                  %v578 = vld [vmem:[%s482 + $0x2f0] sm:$0xff]
                  %579 = vst [vmem:[%s483 + $0x178] sm:$0xff] %v578
                  %v580 = vld [vmem:[%s482 + $0x300] sm:$0xff]
                  %581 = vst [vmem:[%s483 + $0x180] sm:$0xff] %v580
                  %v582 = vld [vmem:[%s482 + $0x310] sm:$0xff]
                  %583 = vst [vmem:[%s483 + $0x188] sm:$0xff] %v582
                  %v584 = vld [vmem:[%s482 + $0x320] sm:$0xff]
                  %585 = vst [vmem:[%s483 + $0x190] sm:$0xff] %v584
                  %v586 = vld [vmem:[%s482 + $0x330] sm:$0xff]
                  %587 = vst [vmem:[%s483 + $0x198] sm:$0xff] %v586
                  %v588 = vld [vmem:[%s482 + $0x340] sm:$0xff]
                  %589 = vst [vmem:[%s483 + $0x1a0] sm:$0xff] %v588
                  %v590 = vld [vmem:[%s482 + $0x350] sm:$0xff]
                  %591 = vst [vmem:[%s483 + $0x1a8] sm:$0xff] %v590
                  %v592 = vld [vmem:[%s482 + $0x360] sm:$0xff]
                  %593 = vst [vmem:[%s483 + $0x1b0] sm:$0xff] %v592
                  %v594 = vld [vmem:[%s482 + $0x370] sm:$0xff]
                  %595 = vst [vmem:[%s483 + $0x1b8] sm:$0xff] %v594
                  %v596 = vld [vmem:[%s482 + $0x380] sm:$0xff]
                  %597 = vst [vmem:[%s483 + $0x1c0] sm:$0xff] %v596
                  %v598 = vld [vmem:[%s482 + $0x390] sm:$0xff]
                  %599 = vst [vmem:[%s483 + $0x1c8] sm:$0xff] %v598
                  %v600 = vld [vmem:[%s482 + $0x3a0] sm:$0xff]
                  %601 = vst [vmem:[%s483 + $0x1d0] sm:$0xff] %v600
                  %v602 = vld [vmem:[%s482 + $0x3b0] sm:$0xff]
                  %603 = vst [vmem:[%s483 + $0x1d8] sm:$0xff] %v602
                  %v604 = vld [vmem:[%s482 + $0x3c0] sm:$0xff]
                  %605 = vst [vmem:[%s483 + $0x1e0] sm:$0xff] %v604
                  %v606 = vld [vmem:[%s482 + $0x3d0] sm:$0xff]
                  %607 = vst [vmem:[%s483 + $0x1e8] sm:$0xff] %v606
                  %v608 = vld [vmem:[%s482 + $0x3e0] sm:$0xff]
                  %609 = vst [vmem:[%s483 + $0x1f0] sm:$0xff] %v608
                  %v610 = vld [vmem:[%s482 + $0x3f0] sm:$0xff]
                  %611 = vst [vmem:[%s483 + $0x1f8] sm:$0xff] %v610
                  %v612 = vld [vmem:[%s482 + $0x400] sm:$0xff]
                  %613 = vst [vmem:[%s483 + $0x200] sm:$0xff] %v612
                  %v614 = vld [vmem:[%s482 + $0x410] sm:$0xff]
                  %615 = vst [vmem:[%s483 + $0x208] sm:$0xff] %v614
                  %v616 = vld [vmem:[%s482 + $0x420] sm:$0xff]
                  %617 = vst [vmem:[%s483 + $0x210] sm:$0xff] %v616
                  %v618 = vld [vmem:[%s482 + $0x430] sm:$0xff]
                  %619 = vst [vmem:[%s483 + $0x218] sm:$0xff] %v618
                  %v620 = vld [vmem:[%s482 + $0x440] sm:$0xff]
                  %621 = vst [vmem:[%s483 + $0x220] sm:$0xff] %v620
                  %v622 = vld [vmem:[%s482 + $0x450] sm:$0xff]
                  %623 = vst [vmem:[%s483 + $0x228] sm:$0xff] %v622
                  %v624 = vld [vmem:[%s482 + $0x460] sm:$0xff]
                  %625 = vst [vmem:[%s483 + $0x230] sm:$0xff] %v624
                  %v626 = vld [vmem:[%s482 + $0x470] sm:$0xff]
                  %627 = vst [vmem:[%s483 + $0x238] sm:$0xff] %v626
                  %v628 = vld [vmem:[%s482 + $0x480] sm:$0xff]
                  %629 = vst [vmem:[%s483 + $0x240] sm:$0xff] %v628
                  %v630 = vld [vmem:[%s482 + $0x490] sm:$0xff]
                  %631 = vst [vmem:[%s483 + $0x248] sm:$0xff] %v630
                  %v632 = vld [vmem:[%s482 + $0x4a0] sm:$0xff]
                  %633 = vst [vmem:[%s483 + $0x250] sm:$0xff] %v632
                  %v634 = vld [vmem:[%s482 + $0x4b0] sm:$0xff]
                  %635 = vst [vmem:[%s483 + $0x258] sm:$0xff] %v634
                  %v636 = vld [vmem:[%s482 + $0x4c0] sm:$0xff]
                  %637 = vst [vmem:[%s483 + $0x260] sm:$0xff] %v636
                  %v638 = vld [vmem:[%s482 + $0x4d0] sm:$0xff]
                  %639 = vst [vmem:[%s483 + $0x268] sm:$0xff] %v638
                  %v640 = vld [vmem:[%s482 + $0x4e0] sm:$0xff]
                  %641 = vst [vmem:[%s483 + $0x270] sm:$0xff] %v640
                  %v642 = vld [vmem:[%s482 + $0x4f0] sm:$0xff]
                  %643 = vst [vmem:[%s483 + $0x278] sm:$0xff] %v642
                  %v644 = vld [vmem:[%s482 + $0x500] sm:$0xff]
                  %645 = vst [vmem:[%s483 + $0x280] sm:$0xff] %v644
                  %v646 = vld [vmem:[%s482 + $0x510] sm:$0xff]
                  %647 = vst [vmem:[%s483 + $0x288] sm:$0xff] %v646
                  %v648 = vld [vmem:[%s482 + $0x520] sm:$0xff]
                  %649 = vst [vmem:[%s483 + $0x290] sm:$0xff] %v648
                  %v650 = vld [vmem:[%s482 + $0x530] sm:$0xff]
                  %651 = vst [vmem:[%s483 + $0x298] sm:$0xff] %v650
                  %v652 = vld [vmem:[%s482 + $0x540] sm:$0xff]
                  %653 = vst [vmem:[%s483 + $0x2a0] sm:$0xff] %v652
                  %v654 = vld [vmem:[%s482 + $0x550] sm:$0xff]
                  %655 = vst [vmem:[%s483 + $0x2a8] sm:$0xff] %v654
                  %v656 = vld [vmem:[%s482 + $0x560] sm:$0xff]
                  %657 = vst [vmem:[%s483 + $0x2b0] sm:$0xff] %v656
                  %v658 = vld [vmem:[%s482 + $0x570] sm:$0xff]
                  %659 = vst [vmem:[%s483 + $0x2b8] sm:$0xff] %v658
                  %v660 = vld [vmem:[%s482 + $0x580] sm:$0xff]
                  %661 = vst [vmem:[%s483 + $0x2c0] sm:$0xff] %v660
                  %v662 = vld [vmem:[%s482 + $0x590] sm:$0xff]
                  %663 = vst [vmem:[%s483 + $0x2c8] sm:$0xff] %v662
                  %v664 = vld [vmem:[%s482 + $0x5a0] sm:$0xff]
                  %665 = vst [vmem:[%s483 + $0x2d0] sm:$0xff] %v664
                  %v666 = vld [vmem:[%s482 + $0x5b0] sm:$0xff]
                  %667 = vst [vmem:[%s483 + $0x2d8] sm:$0xff] %v666
                  %v668 = vld [vmem:[%s482 + $0x5c0] sm:$0xff]
                  %669 = vst [vmem:[%s483 + $0x2e0] sm:$0xff] %v668
                  %v670 = vld [vmem:[%s482 + $0x5d0] sm:$0xff]
                  %671 = vst [vmem:[%s483 + $0x2e8] sm:$0xff] %v670
                  %v672 = vld [vmem:[%s482 + $0x5e0] sm:$0xff]
                  %673 = vst [vmem:[%s483 + $0x2f0] sm:$0xff] %v672
                  %v674 = vld [vmem:[%s482 + $0x5f0] sm:$0xff]
                  %675 = vst [vmem:[%s483 + $0x2f8] sm:$0xff] %v674
                  %v676 = vld [vmem:[%s482 + $0x600] sm:$0xff]
                  %677 = vst [vmem:[%s483 + $0x300] sm:$0xff] %v676
                  %v678 = vld [vmem:[%s482 + $0x610] sm:$0xff]
                  %679 = vst [vmem:[%s483 + $0x308] sm:$0xff] %v678
                  %v680 = vld [vmem:[%s482 + $0x620] sm:$0xff]
                  %681 = vst [vmem:[%s483 + $0x310] sm:$0xff] %v680
                  %v682 = vld [vmem:[%s482 + $0x630] sm:$0xff]
                  %683 = vst [vmem:[%s483 + $0x318] sm:$0xff] %v682
                  %v684 = vld [vmem:[%s482 + $0x640] sm:$0xff]
                  %685 = vst [vmem:[%s483 + $0x320] sm:$0xff] %v684
                  %v686 = vld [vmem:[%s482 + $0x650] sm:$0xff]
                  %687 = vst [vmem:[%s483 + $0x328] sm:$0xff] %v686
                  %v688 = vld [vmem:[%s482 + $0x660] sm:$0xff]
                  %689 = vst [vmem:[%s483 + $0x330] sm:$0xff] %v688
                  %v690 = vld [vmem:[%s482 + $0x670] sm:$0xff]
                  %691 = vst [vmem:[%s483 + $0x338] sm:$0xff] %v690
                  %v692 = vld [vmem:[%s482 + $0x680] sm:$0xff]
                  %693 = vst [vmem:[%s483 + $0x340] sm:$0xff] %v692
                  %v694 = vld [vmem:[%s482 + $0x690] sm:$0xff]
                  %695 = vst [vmem:[%s483 + $0x348] sm:$0xff] %v694
                  %v696 = vld [vmem:[%s482 + $0x6a0] sm:$0xff]
                  %697 = vst [vmem:[%s483 + $0x350] sm:$0xff] %v696
                  %v698 = vld [vmem:[%s482 + $0x6b0] sm:$0xff]
                  %699 = vst [vmem:[%s483 + $0x358] sm:$0xff] %v698
                  %v700 = vld [vmem:[%s482 + $0x6c0] sm:$0xff]
                  %701 = vst [vmem:[%s483 + $0x360] sm:$0xff] %v700
                  %v702 = vld [vmem:[%s482 + $0x6d0] sm:$0xff]
                  %703 = vst [vmem:[%s483 + $0x368] sm:$0xff] %v702
                  %v704 = vld [vmem:[%s482 + $0x6e0] sm:$0xff]
                  %705 = vst [vmem:[%s483 + $0x370] sm:$0xff] %v704
                  %v706 = vld [vmem:[%s482 + $0x6f0] sm:$0xff]
                  %707 = vst [vmem:[%s483 + $0x378] sm:$0xff] %v706
                  %v708 = vld [vmem:[%s482 + $0x700] sm:$0xff]
                  %709 = vst [vmem:[%s483 + $0x380] sm:$0xff] %v708
                  %v710 = vld [vmem:[%s482 + $0x710] sm:$0xff]
                  %711 = vst [vmem:[%s483 + $0x388] sm:$0xff] %v710
                  %v712 = vld [vmem:[%s482 + $0x720] sm:$0xff]
                  %713 = vst [vmem:[%s483 + $0x390] sm:$0xff] %v712
                  %v714 = vld [vmem:[%s482 + $0x730] sm:$0xff]
                  %715 = vst [vmem:[%s483 + $0x398] sm:$0xff] %v714
                  %v716 = vld [vmem:[%s482 + $0x740] sm:$0xff]
                  %717 = vst [vmem:[%s483 + $0x3a0] sm:$0xff] %v716
                  %v718 = vld [vmem:[%s482 + $0x750] sm:$0xff]
                  %719 = vst [vmem:[%s483 + $0x3a8] sm:$0xff] %v718
                  %v720 = vld [vmem:[%s482 + $0x760] sm:$0xff]
                  %721 = vst [vmem:[%s483 + $0x3b0] sm:$0xff] %v720
                  %v722 = vld [vmem:[%s482 + $0x770] sm:$0xff]
                  %723 = vst [vmem:[%s483 + $0x3b8] sm:$0xff] %v722
                  %v724 = vld [vmem:[%s482 + $0x780] sm:$0xff]
                  %725 = vst [vmem:[%s483 + $0x3c0] sm:$0xff] %v724
                  %v726 = vld [vmem:[%s482 + $0x790] sm:$0xff]
                  %727 = vst [vmem:[%s483 + $0x3c8] sm:$0xff] %v726
                  %v728 = vld [vmem:[%s482 + $0x7a0] sm:$0xff]
                  %729 = vst [vmem:[%s483 + $0x3d0] sm:$0xff] %v728
                  %v730 = vld [vmem:[%s482 + $0x7b0] sm:$0xff]
                  %731 = vst [vmem:[%s483 + $0x3d8] sm:$0xff] %v730
                  %v732 = vld [vmem:[%s482 + $0x7c0] sm:$0xff]
                  %733 = vst [vmem:[%s483 + $0x3e0] sm:$0xff] %v732
                  %v734 = vld [vmem:[%s482 + $0x7d0] sm:$0xff]
                  %735 = vst [vmem:[%s483 + $0x3e8] sm:$0xff] %v734
                  %v736 = vld [vmem:[%s482 + $0x7e0] sm:$0xff]
                  %737 = vst [vmem:[%s483 + $0x3f0] sm:$0xff] %v736
                  %v738 = vld [vmem:[%s482 + $0x7f0] sm:$0xff]
                  %739 = vst [vmem:[%s483 + $0x3f8] sm:$0xff] %v738
                $region52: #{_lambda_.11} parent=46 // loop_footer
                  %s481 = sadd.s32 1, %s477
                $region53: #{_lambda_.11} parent=46 // loop_footer_branch
                  %476 = sbr.rel target = $region49
                $region54: #{_lambda_.11} parent=46 // loop_exit
                  _
              $region47: #{_lambda_.11} parent=31 // pred_fallthru
                _
              // Predicated region
              $region55: #{_lambda_.11} parent=31 // pred_check
                _
              $region56: #{_lambda_.11} parent=31 // pred_check_branch
                %741 = sbr.rel target = $region58
              $region57: #{_lambda_.11} parent=31 // pred_region
                _
              $region58: #{_lambda_.11} parent=31 // pred_fallthru
                _
            $region32: #{_lambda_.11} parent=27 // pred_fallthru
              _
            // Predicated region
            $region33: #{_lambda_.11} parent=27 // pred_check
              _
            $region34: #{_lambda_.11} parent=27 // pred_check_branch
              %207 = sbr.rel target = $region36
            $region35: #{_lambda_.11} parent=27 // pred_region
              %s209 = ssub.s32 256, 1
              loop: start=0, step=1, limit=1
              $region37: #{_lambda_.11} parent=35 // loop_pre_header
                _
              $region38: #{_lambda_.11} parent=35 // loop_header
                %s211 = sphi 0, %s215
                %p212 = scmp.ge.s32.totalorder %s211, 1
                %s216 = sphi %s201, %s201
                %s217 = sphi %s193, %s193
              $region39: #{_lambda_.11} parent=35 // loop_header_branch
                %214 = sbr.rel (%p212) target = $region43
              $region40: #{_lambda_.11} parent=35 // loop_body
                %v218 = vld [vmem:[%s216] sm:%s209]
                %219 = vst [vmem:[%s217] sm:%s209] %v218
                %v220 = vld [vmem:[%s216 + $0x10] sm:%s209]
                %221 = vst [vmem:[%s217 + $0x8] sm:%s209] %v220
                %v222 = vld [vmem:[%s216 + $0x20] sm:%s209]
                %223 = vst [vmem:[%s217 + $0x10] sm:%s209] %v222
                %v224 = vld [vmem:[%s216 + $0x30] sm:%s209]
                %225 = vst [vmem:[%s217 + $0x18] sm:%s209] %v224
                %v226 = vld [vmem:[%s216 + $0x40] sm:%s209]
                %227 = vst [vmem:[%s217 + $0x20] sm:%s209] %v226
                %v228 = vld [vmem:[%s216 + $0x50] sm:%s209]
                %229 = vst [vmem:[%s217 + $0x28] sm:%s209] %v228
                %v230 = vld [vmem:[%s216 + $0x60] sm:%s209]
                %231 = vst [vmem:[%s217 + $0x30] sm:%s209] %v230
                %v232 = vld [vmem:[%s216 + $0x70] sm:%s209]
                %233 = vst [vmem:[%s217 + $0x38] sm:%s209] %v232
                %v234 = vld [vmem:[%s216 + $0x80] sm:%s209]
                %235 = vst [vmem:[%s217 + $0x40] sm:%s209] %v234
                %v236 = vld [vmem:[%s216 + $0x90] sm:%s209]
                %237 = vst [vmem:[%s217 + $0x48] sm:%s209] %v236
                %v238 = vld [vmem:[%s216 + $0xa0] sm:%s209]
                %239 = vst [vmem:[%s217 + $0x50] sm:%s209] %v238
                %v240 = vld [vmem:[%s216 + $0xb0] sm:%s209]
                %241 = vst [vmem:[%s217 + $0x58] sm:%s209] %v240
                %v242 = vld [vmem:[%s216 + $0xc0] sm:%s209]
                %243 = vst [vmem:[%s217 + $0x60] sm:%s209] %v242
                %v244 = vld [vmem:[%s216 + $0xd0] sm:%s209]
                %245 = vst [vmem:[%s217 + $0x68] sm:%s209] %v244
                %v246 = vld [vmem:[%s216 + $0xe0] sm:%s209]
                %247 = vst [vmem:[%s217 + $0x70] sm:%s209] %v246
                %v248 = vld [vmem:[%s216 + $0xf0] sm:%s209]
                %249 = vst [vmem:[%s217 + $0x78] sm:%s209] %v248
                %v250 = vld [vmem:[%s216 + $0x100] sm:%s209]
                %251 = vst [vmem:[%s217 + $0x80] sm:%s209] %v250
                %v252 = vld [vmem:[%s216 + $0x110] sm:%s209]
                %253 = vst [vmem:[%s217 + $0x88] sm:%s209] %v252
                %v254 = vld [vmem:[%s216 + $0x120] sm:%s209]
                %255 = vst [vmem:[%s217 + $0x90] sm:%s209] %v254
                %v256 = vld [vmem:[%s216 + $0x130] sm:%s209]
                %257 = vst [vmem:[%s217 + $0x98] sm:%s209] %v256
                %v258 = vld [vmem:[%s216 + $0x140] sm:%s209]
                %259 = vst [vmem:[%s217 + $0xa0] sm:%s209] %v258
                %v260 = vld [vmem:[%s216 + $0x150] sm:%s209]
                %261 = vst [vmem:[%s217 + $0xa8] sm:%s209] %v260
                %v262 = vld [vmem:[%s216 + $0x160] sm:%s209]
                %263 = vst [vmem:[%s217 + $0xb0] sm:%s209] %v262
                %v264 = vld [vmem:[%s216 + $0x170] sm:%s209]
                %265 = vst [vmem:[%s217 + $0xb8] sm:%s209] %v264
                %v266 = vld [vmem:[%s216 + $0x180] sm:%s209]
                %267 = vst [vmem:[%s217 + $0xc0] sm:%s209] %v266
                %v268 = vld [vmem:[%s216 + $0x190] sm:%s209]
                %269 = vst [vmem:[%s217 + $0xc8] sm:%s209] %v268
                %v270 = vld [vmem:[%s216 + $0x1a0] sm:%s209]
                %271 = vst [vmem:[%s217 + $0xd0] sm:%s209] %v270
                %v272 = vld [vmem:[%s216 + $0x1b0] sm:%s209]
                %273 = vst [vmem:[%s217 + $0xd8] sm:%s209] %v272
                %v274 = vld [vmem:[%s216 + $0x1c0] sm:%s209]
                %275 = vst [vmem:[%s217 + $0xe0] sm:%s209] %v274
                %v276 = vld [vmem:[%s216 + $0x1d0] sm:%s209]
                %277 = vst [vmem:[%s217 + $0xe8] sm:%s209] %v276
                %v278 = vld [vmem:[%s216 + $0x1e0] sm:%s209]
                %279 = vst [vmem:[%s217 + $0xf0] sm:%s209] %v278
                %v280 = vld [vmem:[%s216 + $0x1f0] sm:%s209]
                %281 = vst [vmem:[%s217 + $0xf8] sm:%s209] %v280
                %v282 = vld [vmem:[%s216 + $0x200] sm:%s209]
                %283 = vst [vmem:[%s217 + $0x100] sm:%s209] %v282
                %v284 = vld [vmem:[%s216 + $0x210] sm:%s209]
                %285 = vst [vmem:[%s217 + $0x108] sm:%s209] %v284
                %v286 = vld [vmem:[%s216 + $0x220] sm:%s209]
                %287 = vst [vmem:[%s217 + $0x110] sm:%s209] %v286
                %v288 = vld [vmem:[%s216 + $0x230] sm:%s209]
                %289 = vst [vmem:[%s217 + $0x118] sm:%s209] %v288
                %v290 = vld [vmem:[%s216 + $0x240] sm:%s209]
                %291 = vst [vmem:[%s217 + $0x120] sm:%s209] %v290
                %v292 = vld [vmem:[%s216 + $0x250] sm:%s209]
                %293 = vst [vmem:[%s217 + $0x128] sm:%s209] %v292
                %v294 = vld [vmem:[%s216 + $0x260] sm:%s209]
                %295 = vst [vmem:[%s217 + $0x130] sm:%s209] %v294
                %v296 = vld [vmem:[%s216 + $0x270] sm:%s209]
                %297 = vst [vmem:[%s217 + $0x138] sm:%s209] %v296
                %v298 = vld [vmem:[%s216 + $0x280] sm:%s209]
                %299 = vst [vmem:[%s217 + $0x140] sm:%s209] %v298
                %v300 = vld [vmem:[%s216 + $0x290] sm:%s209]
                %301 = vst [vmem:[%s217 + $0x148] sm:%s209] %v300
                %v302 = vld [vmem:[%s216 + $0x2a0] sm:%s209]
                %303 = vst [vmem:[%s217 + $0x150] sm:%s209] %v302
                %v304 = vld [vmem:[%s216 + $0x2b0] sm:%s209]
                %305 = vst [vmem:[%s217 + $0x158] sm:%s209] %v304
                %v306 = vld [vmem:[%s216 + $0x2c0] sm:%s209]
                %307 = vst [vmem:[%s217 + $0x160] sm:%s209] %v306
                %v308 = vld [vmem:[%s216 + $0x2d0] sm:%s209]
                %309 = vst [vmem:[%s217 + $0x168] sm:%s209] %v308
                %v310 = vld [vmem:[%s216 + $0x2e0] sm:%s209]
                %311 = vst [vmem:[%s217 + $0x170] sm:%s209] %v310
                %v312 = vld [vmem:[%s216 + $0x2f0] sm:%s209]
                %313 = vst [vmem:[%s217 + $0x178] sm:%s209] %v312
                %v314 = vld [vmem:[%s216 + $0x300] sm:%s209]
                %315 = vst [vmem:[%s217 + $0x180] sm:%s209] %v314
                %v316 = vld [vmem:[%s216 + $0x310] sm:%s209]
                %317 = vst [vmem:[%s217 + $0x188] sm:%s209] %v316
                %v318 = vld [vmem:[%s216 + $0x320] sm:%s209]
                %319 = vst [vmem:[%s217 + $0x190] sm:%s209] %v318
                %v320 = vld [vmem:[%s216 + $0x330] sm:%s209]
                %321 = vst [vmem:[%s217 + $0x198] sm:%s209] %v320
                %v322 = vld [vmem:[%s216 + $0x340] sm:%s209]
                %323 = vst [vmem:[%s217 + $0x1a0] sm:%s209] %v322
                %v324 = vld [vmem:[%s216 + $0x350] sm:%s209]
                %325 = vst [vmem:[%s217 + $0x1a8] sm:%s209] %v324
                %v326 = vld [vmem:[%s216 + $0x360] sm:%s209]
                %327 = vst [vmem:[%s217 + $0x1b0] sm:%s209] %v326
                %v328 = vld [vmem:[%s216 + $0x370] sm:%s209]
                %329 = vst [vmem:[%s217 + $0x1b8] sm:%s209] %v328
                %v330 = vld [vmem:[%s216 + $0x380] sm:%s209]
                %331 = vst [vmem:[%s217 + $0x1c0] sm:%s209] %v330
                %v332 = vld [vmem:[%s216 + $0x390] sm:%s209]
                %333 = vst [vmem:[%s217 + $0x1c8] sm:%s209] %v332
                %v334 = vld [vmem:[%s216 + $0x3a0] sm:%s209]
                %335 = vst [vmem:[%s217 + $0x1d0] sm:%s209] %v334
                %v336 = vld [vmem:[%s216 + $0x3b0] sm:%s209]
                %337 = vst [vmem:[%s217 + $0x1d8] sm:%s209] %v336
                %v338 = vld [vmem:[%s216 + $0x3c0] sm:%s209]
                %339 = vst [vmem:[%s217 + $0x1e0] sm:%s209] %v338
                %v340 = vld [vmem:[%s216 + $0x3d0] sm:%s209]
                %341 = vst [vmem:[%s217 + $0x1e8] sm:%s209] %v340
                %v342 = vld [vmem:[%s216 + $0x3e0] sm:%s209]
                %343 = vst [vmem:[%s217 + $0x1f0] sm:%s209] %v342
                %v344 = vld [vmem:[%s216 + $0x3f0] sm:%s209]
                %345 = vst [vmem:[%s217 + $0x1f8] sm:%s209] %v344
                %v346 = vld [vmem:[%s216 + $0x400] sm:%s209]
                %347 = vst [vmem:[%s217 + $0x200] sm:%s209] %v346
                %v348 = vld [vmem:[%s216 + $0x410] sm:%s209]
                %349 = vst [vmem:[%s217 + $0x208] sm:%s209] %v348
                %v350 = vld [vmem:[%s216 + $0x420] sm:%s209]
                %351 = vst [vmem:[%s217 + $0x210] sm:%s209] %v350
                %v352 = vld [vmem:[%s216 + $0x430] sm:%s209]
                %353 = vst [vmem:[%s217 + $0x218] sm:%s209] %v352
                %v354 = vld [vmem:[%s216 + $0x440] sm:%s209]
                %355 = vst [vmem:[%s217 + $0x220] sm:%s209] %v354
                %v356 = vld [vmem:[%s216 + $0x450] sm:%s209]
                %357 = vst [vmem:[%s217 + $0x228] sm:%s209] %v356
                %v358 = vld [vmem:[%s216 + $0x460] sm:%s209]
                %359 = vst [vmem:[%s217 + $0x230] sm:%s209] %v358
                %v360 = vld [vmem:[%s216 + $0x470] sm:%s209]
                %361 = vst [vmem:[%s217 + $0x238] sm:%s209] %v360
                %v362 = vld [vmem:[%s216 + $0x480] sm:%s209]
                %363 = vst [vmem:[%s217 + $0x240] sm:%s209] %v362
                %v364 = vld [vmem:[%s216 + $0x490] sm:%s209]
                %365 = vst [vmem:[%s217 + $0x248] sm:%s209] %v364
                %v366 = vld [vmem:[%s216 + $0x4a0] sm:%s209]
                %367 = vst [vmem:[%s217 + $0x250] sm:%s209] %v366
                %v368 = vld [vmem:[%s216 + $0x4b0] sm:%s209]
                %369 = vst [vmem:[%s217 + $0x258] sm:%s209] %v368
                %v370 = vld [vmem:[%s216 + $0x4c0] sm:%s209]
                %371 = vst [vmem:[%s217 + $0x260] sm:%s209] %v370
                %v372 = vld [vmem:[%s216 + $0x4d0] sm:%s209]
                %373 = vst [vmem:[%s217 + $0x268] sm:%s209] %v372
                %v374 = vld [vmem:[%s216 + $0x4e0] sm:%s209]
                %375 = vst [vmem:[%s217 + $0x270] sm:%s209] %v374
                %v376 = vld [vmem:[%s216 + $0x4f0] sm:%s209]
                %377 = vst [vmem:[%s217 + $0x278] sm:%s209] %v376
                %v378 = vld [vmem:[%s216 + $0x500] sm:%s209]
                %379 = vst [vmem:[%s217 + $0x280] sm:%s209] %v378
                %v380 = vld [vmem:[%s216 + $0x510] sm:%s209]
                %381 = vst [vmem:[%s217 + $0x288] sm:%s209] %v380
                %v382 = vld [vmem:[%s216 + $0x520] sm:%s209]
                %383 = vst [vmem:[%s217 + $0x290] sm:%s209] %v382
                %v384 = vld [vmem:[%s216 + $0x530] sm:%s209]
                %385 = vst [vmem:[%s217 + $0x298] sm:%s209] %v384
                %v386 = vld [vmem:[%s216 + $0x540] sm:%s209]
                %387 = vst [vmem:[%s217 + $0x2a0] sm:%s209] %v386
                %v388 = vld [vmem:[%s216 + $0x550] sm:%s209]
                %389 = vst [vmem:[%s217 + $0x2a8] sm:%s209] %v388
                %v390 = vld [vmem:[%s216 + $0x560] sm:%s209]
                %391 = vst [vmem:[%s217 + $0x2b0] sm:%s209] %v390
                %v392 = vld [vmem:[%s216 + $0x570] sm:%s209]
                %393 = vst [vmem:[%s217 + $0x2b8] sm:%s209] %v392
                %v394 = vld [vmem:[%s216 + $0x580] sm:%s209]
                %395 = vst [vmem:[%s217 + $0x2c0] sm:%s209] %v394
                %v396 = vld [vmem:[%s216 + $0x590] sm:%s209]
                %397 = vst [vmem:[%s217 + $0x2c8] sm:%s209] %v396
                %v398 = vld [vmem:[%s216 + $0x5a0] sm:%s209]
                %399 = vst [vmem:[%s217 + $0x2d0] sm:%s209] %v398
                %v400 = vld [vmem:[%s216 + $0x5b0] sm:%s209]
                %401 = vst [vmem:[%s217 + $0x2d8] sm:%s209] %v400
                %v402 = vld [vmem:[%s216 + $0x5c0] sm:%s209]
                %403 = vst [vmem:[%s217 + $0x2e0] sm:%s209] %v402
                %v404 = vld [vmem:[%s216 + $0x5d0] sm:%s209]
                %405 = vst [vmem:[%s217 + $0x2e8] sm:%s209] %v404
                %v406 = vld [vmem:[%s216 + $0x5e0] sm:%s209]
                %407 = vst [vmem:[%s217 + $0x2f0] sm:%s209] %v406
                %v408 = vld [vmem:[%s216 + $0x5f0] sm:%s209]
                %409 = vst [vmem:[%s217 + $0x2f8] sm:%s209] %v408
                %v410 = vld [vmem:[%s216 + $0x600] sm:%s209]
                %411 = vst [vmem:[%s217 + $0x300] sm:%s209] %v410
                %v412 = vld [vmem:[%s216 + $0x610] sm:%s209]
                %413 = vst [vmem:[%s217 + $0x308] sm:%s209] %v412
                %v414 = vld [vmem:[%s216 + $0x620] sm:%s209]
                %415 = vst [vmem:[%s217 + $0x310] sm:%s209] %v414
                %v416 = vld [vmem:[%s216 + $0x630] sm:%s209]
                %417 = vst [vmem:[%s217 + $0x318] sm:%s209] %v416
                %v418 = vld [vmem:[%s216 + $0x640] sm:%s209]
                %419 = vst [vmem:[%s217 + $0x320] sm:%s209] %v418
                %v420 = vld [vmem:[%s216 + $0x650] sm:%s209]
                %421 = vst [vmem:[%s217 + $0x328] sm:%s209] %v420
                %v422 = vld [vmem:[%s216 + $0x660] sm:%s209]
                %423 = vst [vmem:[%s217 + $0x330] sm:%s209] %v422
                %v424 = vld [vmem:[%s216 + $0x670] sm:%s209]
                %425 = vst [vmem:[%s217 + $0x338] sm:%s209] %v424
                %v426 = vld [vmem:[%s216 + $0x680] sm:%s209]
                %427 = vst [vmem:[%s217 + $0x340] sm:%s209] %v426
                %v428 = vld [vmem:[%s216 + $0x690] sm:%s209]
                %429 = vst [vmem:[%s217 + $0x348] sm:%s209] %v428
                %v430 = vld [vmem:[%s216 + $0x6a0] sm:%s209]
                %431 = vst [vmem:[%s217 + $0x350] sm:%s209] %v430
                %v432 = vld [vmem:[%s216 + $0x6b0] sm:%s209]
                %433 = vst [vmem:[%s217 + $0x358] sm:%s209] %v432
                %v434 = vld [vmem:[%s216 + $0x6c0] sm:%s209]
                %435 = vst [vmem:[%s217 + $0x360] sm:%s209] %v434
                %v436 = vld [vmem:[%s216 + $0x6d0] sm:%s209]
                %437 = vst [vmem:[%s217 + $0x368] sm:%s209] %v436
                %v438 = vld [vmem:[%s216 + $0x6e0] sm:%s209]
                %439 = vst [vmem:[%s217 + $0x370] sm:%s209] %v438
                %v440 = vld [vmem:[%s216 + $0x6f0] sm:%s209]
                %441 = vst [vmem:[%s217 + $0x378] sm:%s209] %v440
                %v442 = vld [vmem:[%s216 + $0x700] sm:%s209]
                %443 = vst [vmem:[%s217 + $0x380] sm:%s209] %v442
                %v444 = vld [vmem:[%s216 + $0x710] sm:%s209]
                %445 = vst [vmem:[%s217 + $0x388] sm:%s209] %v444
                %v446 = vld [vmem:[%s216 + $0x720] sm:%s209]
                %447 = vst [vmem:[%s217 + $0x390] sm:%s209] %v446
                %v448 = vld [vmem:[%s216 + $0x730] sm:%s209]
                %449 = vst [vmem:[%s217 + $0x398] sm:%s209] %v448
                %v450 = vld [vmem:[%s216 + $0x740] sm:%s209]
                %451 = vst [vmem:[%s217 + $0x3a0] sm:%s209] %v450
                %v452 = vld [vmem:[%s216 + $0x750] sm:%s209]
                %453 = vst [vmem:[%s217 + $0x3a8] sm:%s209] %v452
                %v454 = vld [vmem:[%s216 + $0x760] sm:%s209]
                %455 = vst [vmem:[%s217 + $0x3b0] sm:%s209] %v454
                %v456 = vld [vmem:[%s216 + $0x770] sm:%s209]
                %457 = vst [vmem:[%s217 + $0x3b8] sm:%s209] %v456
                %v458 = vld [vmem:[%s216 + $0x780] sm:%s209]
                %459 = vst [vmem:[%s217 + $0x3c0] sm:%s209] %v458
                %v460 = vld [vmem:[%s216 + $0x790] sm:%s209]
                %461 = vst [vmem:[%s217 + $0x3c8] sm:%s209] %v460
                %v462 = vld [vmem:[%s216 + $0x7a0] sm:%s209]
                %463 = vst [vmem:[%s217 + $0x3d0] sm:%s209] %v462
                %v464 = vld [vmem:[%s216 + $0x7b0] sm:%s209]
                %465 = vst [vmem:[%s217 + $0x3d8] sm:%s209] %v464
                %v466 = vld [vmem:[%s216 + $0x7c0] sm:%s209]
                %467 = vst [vmem:[%s217 + $0x3e0] sm:%s209] %v466
                %v468 = vld [vmem:[%s216 + $0x7d0] sm:%s209]
                %469 = vst [vmem:[%s217 + $0x3e8] sm:%s209] %v468
                %v470 = vld [vmem:[%s216 + $0x7e0] sm:%s209]
                %471 = vst [vmem:[%s217 + $0x3f0] sm:%s209] %v470
                %v472 = vld [vmem:[%s216 + $0x7f0] sm:%s209]
                %473 = vst [vmem:[%s217 + $0x3f8] sm:%s209] %v472
              $region41: #{_lambda_.11} parent=35 // loop_footer
                %s215 = sadd.s32 1, %s211
              $region42: #{_lambda_.11} parent=35 // loop_footer_branch
                %210 = sbr.rel target = $region38
              $region43: #{_lambda_.11} parent=35 // loop_exit
                _
            $region36: #{_lambda_.11} parent=27 // pred_fallthru
              _
          $region28: #{_lambda_.11} parent=23 // pred_fallthru
            _
          %742 = vnop
        $region24: #{_lambda_.11} parent=15 // pred_fallthru
          _
        // Predicated region
        $region59: #{_lambda_.11} parent=15 // pred_check
          %p743 = pneg %p115
        $region60: #{_lambda_.11} parent=15 // pred_check_branch
          %745 = sbr.rel (%p743) target = $region62
        $region61: #{_lambda_.11} parent=15 // pred_region
          %s746 = smul.u32 2, %s18
          %p747 = scmp.lt.s32.totalorder %s746, 3
          %s748 = scalar_select %p747, %s746, 3
          %s749 = scalar_lea.vmem %s2, %s748
          %s750 = smul.u32 2, %s18
        $region62: #{_lambda_.11} parent=15 // pred_fallthru
          _
      $region16: #{_lambda_.11} parent=5 // pred_fallthru
        _
      %p751 = scmp.le.s32.totalorder 1, %s9
      %p752 = scmp.lt.s32.totalorder %s9, 9
      %p753 = pnand %p751, %p752
      %p754 = pneg %p753
      // Predicated region
      $region63: #{_lambda_.11} parent=5 // pred_check
        _
      $region64: #{_lambda_.11} parent=5 // pred_check_branch
        %756 = sbr.rel (%p753) target = $region66
      $region65: #{_lambda_.11} parent=5 // pred_region
        %s757 = ssub.s32 %s9, 1
        %s758 = sand.u32 %s82, 1
        %s759 = sand.u32 %s82, 1
        %s760 = smul.addr %s759, 1024
        %s761 = scalar_lea.vmem [#allocation3], %s760
        // Predicated region
        $region67: #{_lambda_.11} parent=65 // pred_check
          %p762 = pneg %p95
        $region68: #{_lambda_.11} parent=65 // pred_check_branch
          %764 = sbr.rel (%p762) target = $region70
        $region69: #{_lambda_.11} parent=65 // pred_region
          _
        $region70: #{_lambda_.11} parent=65 // pred_fallthru
          _
        %s765 = smul.u32 8, %s23
        %p766 = scmp.lt.s32.totalorder %s20, 0
        %s767 = scalar_select %p766, %s20, 0
        %p768 = scmp.lt.s32.totalorder %s21, 0
        %s769 = scalar_select %p768, %s21, 0
        %p770 = scmp.lt.s32.totalorder %s765, 31
        %s771 = scalar_select %p770, %s765, 31
        %s772 = smul.addr %s769, 32
        %s773 = sadd.s32 %s771, %s772
        %s774 = smul.addr %s767, 32
        %s775 = sadd.s32 %s773, %s774
        %s776 = smul.addr %s775, 4
        %s777 = scalar_lea.vmem %s0, %s776
        %p778 = pneg %p65
        %p779 = pneg %p62
        %s780 = sand.u32 %s82, 1
        %s781 = sand.u32 %s82, 1
        %s782 = smul.addr %s781, 1024
        %s783 = scalar_lea.vmem [#allocation3], %s782
        %p784 = pneg %p95
        %p785 = pneg %p92
        %s786 = smul.u32 2, %s22
        %p787 = scmp.lt.s32.totalorder %s786, 3
        %s788 = scalar_select %p787, %s786, 3
        %s789 = scalar_lea.vmem %s2, %s788
        %p790 = pneg %p121
        %p791 = pneg %p118
        %p792 = pneg %p151
        %p793 = pneg %p148
        %s794 = smul.u32 2, %s22
        %p795 = scmp.lt.s32.totalorder %s20, 0
        %s796 = scalar_select %p795, %s20, 0
        %p797 = scmp.lt.s32.totalorder %s21, 0
        %s798 = scalar_select %p797, %s21, 0
        %p799 = scmp.lt.s32.totalorder %s794, 3
        %s800 = scalar_select %p799, %s794, 3
        %s801 = smul.addr %s798, 4
        %s802 = sadd.s32 %s800, %s801
        %s803 = smul.addr %s796, 4
        %s804 = sadd.s32 %s802, %s803
        %s805 = smul.addr %s804, 8
        %s806 = scalar_lea.vmem %s3, %s805
        %s807 = smul.u32 8, %s23
        %p808 = scmp.lt.s32.totalorder %s20, 0
        %s809 = scalar_select %p808, %s20, 0
        %p810 = scmp.lt.s32.totalorder %s21, 0
        %s811 = scalar_select %p810, %s21, 0
        %p812 = scmp.lt.s32.totalorder %s807, 31
        %s813 = scalar_select %p812, %s807, 31
        %s814 = smul.addr %s811, 32
        %s815 = sadd.s32 %s813, %s814
        %s816 = smul.addr %s809, 32
        %s817 = sadd.s32 %s815, %s816
        %s818 = smul.addr %s817, 4
        %s819 = scalar_lea.vmem %s0, %s818
        %s820 = smul.u32 8, %s23
        %s821 = smul.u32 128, %s23
        %s822 = smul.u32 2, %s22
        %s823 = smul.u32 2, %s22
        %p824 = scmp.lt.s32.totalorder %s823, 3
        %s825 = scalar_select %p824, %s823, 3
        %s826 = scalar_lea.vmem %s2, %s825
        %s827 = smul.u32 2, %s22
        %s828 = smul.u32 2, %s22
        %p829 = scmp.lt.s32.totalorder %s20, 0
        %s830 = scalar_select %p829, %s20, 0
        %p831 = scmp.lt.s32.totalorder %s21, 0
        %s832 = scalar_select %p831, %s21, 0
        %p833 = scmp.lt.s32.totalorder %s828, 3
        %s834 = scalar_select %p833, %s828, 3
        %s835 = smul.addr %s832, 4
        %s836 = sadd.s32 %s834, %s835
        %s837 = smul.addr %s830, 4
        %s838 = sadd.s32 %s836, %s837
        %s839 = smul.addr %s838, 8
        %s840 = scalar_lea.vmem %s3, %s839
        %s841 = smul.u32 2, %s22
        %p842 = scmp.eq.s32.totalorder %s23, 0
        // Predicated region
        $region71: #{_lambda_.11} parent=65 // pred_check
          %p843 = pneg %p842
        $region72: #{_lambda_.11} parent=65 // pred_check_branch
          %845 = sbr.rel (%p843) target = $region74
        $region73: #{_lambda_.11} parent=65 // pred_region
          %846 = vst [vmem:[#allocation2] sm:$0xff] 0.0
          %847 = vst [vmem:[#allocation2 + $0x8] sm:$0xff] 0.0
        $region74: #{_lambda_.11} parent=65 // pred_fallthru
          _
        %v848 = vld [vmem:[#allocation2] sm:$0xff]
        %v849 = vld [vmem:[#allocation2 + $0x8] sm:$0xff]
        %v850 = vld [vmem:[%s819] sm:$0xff]
        %v851 = vld [vmem:[%s819 + $0x8] sm:$0xff]
        %v852 = vld [vmem:[%s819 + $0x10] sm:$0xff]
        %v853 = vld [vmem:[%s819 + $0x18] sm:$0xff]
        %v854 = vld [vmem:[%s761] sm:$0xff]
        %v855 = vld [vmem:[%s761 + $0x8] sm:$0xff]
        %v856 = vld [vmem:[%s761 + $0x10] sm:$0xff]
        %v857 = vld [vmem:[%s761 + $0x18] sm:$0xff]
        %v858 = vld [vmem:[%s761 + $0x20] sm:$0xff]
        %v859 = vld [vmem:[%s761 + $0x28] sm:$0xff]
        %v860 = vld [vmem:[%s761 + $0x30] sm:$0xff]
        %v861 = vld [vmem:[%s761 + $0x38] sm:$0xff]
        %v862 = vld [vmem:[%s761 + $0x40] sm:$0xff]
        %v863 = vld [vmem:[%s761 + $0x48] sm:$0xff]
        %v864 = vld [vmem:[%s761 + $0x50] sm:$0xff]
        %v865 = vld [vmem:[%s761 + $0x58] sm:$0xff]
        %v866 = vld [vmem:[%s761 + $0x60] sm:$0xff]
        %v867 = vld [vmem:[%s761 + $0x68] sm:$0xff]
        %v868 = vld [vmem:[%s761 + $0x70] sm:$0xff]
        %v869 = vld [vmem:[%s761 + $0x78] sm:$0xff]
        %v870 = vld [vmem:[%s761 + $0x80] sm:$0xff]
        %v871 = vld [vmem:[%s761 + $0x88] sm:$0xff]
        %v872 = vld [vmem:[%s761 + $0x90] sm:$0xff]
        %v873 = vld [vmem:[%s761 + $0x98] sm:$0xff]
        %v874 = vld [vmem:[%s761 + $0xa0] sm:$0xff]
        %v875 = vld [vmem:[%s761 + $0xa8] sm:$0xff]
        %v876 = vld [vmem:[%s761 + $0xb0] sm:$0xff]
        %v877 = vld [vmem:[%s761 + $0xb8] sm:$0xff]
        %v878 = vld [vmem:[%s761 + $0xc0] sm:$0xff]
        %v879 = vld [vmem:[%s761 + $0xc8] sm:$0xff]
        %v880 = vld [vmem:[%s761 + $0xd0] sm:$0xff]
        %v881 = vld [vmem:[%s761 + $0xd8] sm:$0xff]
        %v882 = vld [vmem:[%s761 + $0xe0] sm:$0xff]
        %v883 = vld [vmem:[%s761 + $0xe8] sm:$0xff]
        %v884 = vld [vmem:[%s761 + $0xf0] sm:$0xff]
        %v885 = vld [vmem:[%s761 + $0xf8] sm:$0xff]
        %v886 = vld [vmem:[%s761 + $0x100] sm:$0xff]
        %v887 = vld [vmem:[%s761 + $0x108] sm:$0xff]
        %v888 = vld [vmem:[%s761 + $0x110] sm:$0xff]
        %v889 = vld [vmem:[%s761 + $0x118] sm:$0xff]
        %v890 = vld [vmem:[%s761 + $0x120] sm:$0xff]
        %v891 = vld [vmem:[%s761 + $0x128] sm:$0xff]
        %v892 = vld [vmem:[%s761 + $0x130] sm:$0xff]
        %v893 = vld [vmem:[%s761 + $0x138] sm:$0xff]
        %v894 = vld [vmem:[%s761 + $0x140] sm:$0xff]
        %v895 = vld [vmem:[%s761 + $0x148] sm:$0xff]
        %v896 = vld [vmem:[%s761 + $0x150] sm:$0xff]
        %v897 = vld [vmem:[%s761 + $0x158] sm:$0xff]
        %v898 = vld [vmem:[%s761 + $0x160] sm:$0xff]
        %v899 = vld [vmem:[%s761 + $0x168] sm:$0xff]
        %v900 = vld [vmem:[%s761 + $0x170] sm:$0xff]
        %v901 = vld [vmem:[%s761 + $0x178] sm:$0xff]
        %v902 = vld [vmem:[%s761 + $0x180] sm:$0xff]
        %v903 = vld [vmem:[%s761 + $0x188] sm:$0xff]
        %v904 = vld [vmem:[%s761 + $0x190] sm:$0xff]
        %v905 = vld [vmem:[%s761 + $0x198] sm:$0xff]
        %v906 = vld [vmem:[%s761 + $0x1a0] sm:$0xff]
        %v907 = vld [vmem:[%s761 + $0x1a8] sm:$0xff]
        %v908 = vld [vmem:[%s761 + $0x1b0] sm:$0xff]
        %v909 = vld [vmem:[%s761 + $0x1b8] sm:$0xff]
        %v910 = vld [vmem:[%s761 + $0x1c0] sm:$0xff]
        %v911 = vld [vmem:[%s761 + $0x1c8] sm:$0xff]
        %v912 = vld [vmem:[%s761 + $0x1d0] sm:$0xff]
        %v913 = vld [vmem:[%s761 + $0x1d8] sm:$0xff]
        %v914 = vld [vmem:[%s761 + $0x1e0] sm:$0xff]
        %v915 = vld [vmem:[%s761 + $0x1e8] sm:$0xff]
        %v916 = vld [vmem:[%s761 + $0x1f0] sm:$0xff]
        %v917 = vld [vmem:[%s761 + $0x1f8] sm:$0xff]
        %v918 = vld [vmem:[%s761 + $0x200] sm:$0xff]
        %v919 = vld [vmem:[%s761 + $0x208] sm:$0xff]
        %v920 = vld [vmem:[%s761 + $0x210] sm:$0xff]
        %v921 = vld [vmem:[%s761 + $0x218] sm:$0xff]
        %v922 = vld [vmem:[%s761 + $0x220] sm:$0xff]
        %v923 = vld [vmem:[%s761 + $0x228] sm:$0xff]
        %v924 = vld [vmem:[%s761 + $0x230] sm:$0xff]
        %v925 = vld [vmem:[%s761 + $0x238] sm:$0xff]
        %v926 = vld [vmem:[%s761 + $0x240] sm:$0xff]
        %v927 = vld [vmem:[%s761 + $0x248] sm:$0xff]
        %v928 = vld [vmem:[%s761 + $0x250] sm:$0xff]
        %v929 = vld [vmem:[%s761 + $0x258] sm:$0xff]
        %v930 = vld [vmem:[%s761 + $0x260] sm:$0xff]
        %v931 = vld [vmem:[%s761 + $0x268] sm:$0xff]
        %v932 = vld [vmem:[%s761 + $0x270] sm:$0xff]
        %v933 = vld [vmem:[%s761 + $0x278] sm:$0xff]
        %v934 = vld [vmem:[%s761 + $0x280] sm:$0xff]
        %v935 = vld [vmem:[%s761 + $0x288] sm:$0xff]
        %v936 = vld [vmem:[%s761 + $0x290] sm:$0xff]
        %v937 = vld [vmem:[%s761 + $0x298] sm:$0xff]
        %v938 = vld [vmem:[%s761 + $0x2a0] sm:$0xff]
        %v939 = vld [vmem:[%s761 + $0x2a8] sm:$0xff]
        %v940 = vld [vmem:[%s761 + $0x2b0] sm:$0xff]
        %v941 = vld [vmem:[%s761 + $0x2b8] sm:$0xff]
        %v942 = vld [vmem:[%s761 + $0x2c0] sm:$0xff]
        %v943 = vld [vmem:[%s761 + $0x2c8] sm:$0xff]
        %v944 = vld [vmem:[%s761 + $0x2d0] sm:$0xff]
        %v945 = vld [vmem:[%s761 + $0x2d8] sm:$0xff]
        %v946 = vld [vmem:[%s761 + $0x2e0] sm:$0xff]
        %v947 = vld [vmem:[%s761 + $0x2e8] sm:$0xff]
        %v948 = vld [vmem:[%s761 + $0x2f0] sm:$0xff]
        %v949 = vld [vmem:[%s761 + $0x2f8] sm:$0xff]
        %v950 = vld [vmem:[%s761 + $0x300] sm:$0xff]
        %v951 = vld [vmem:[%s761 + $0x308] sm:$0xff]
        %v952 = vld [vmem:[%s761 + $0x310] sm:$0xff]
        %v953 = vld [vmem:[%s761 + $0x318] sm:$0xff]
        %v954 = vld [vmem:[%s761 + $0x320] sm:$0xff]
        %v955 = vld [vmem:[%s761 + $0x328] sm:$0xff]
        %v956 = vld [vmem:[%s761 + $0x330] sm:$0xff]
        %v957 = vld [vmem:[%s761 + $0x338] sm:$0xff]
        %v958 = vld [vmem:[%s761 + $0x340] sm:$0xff]
        %v959 = vld [vmem:[%s761 + $0x348] sm:$0xff]
        %v960 = vld [vmem:[%s761 + $0x350] sm:$0xff]
        %v961 = vld [vmem:[%s761 + $0x358] sm:$0xff]
        %v962 = vld [vmem:[%s761 + $0x360] sm:$0xff]
        %v963 = vld [vmem:[%s761 + $0x368] sm:$0xff]
        %v964 = vld [vmem:[%s761 + $0x370] sm:$0xff]
        %v965 = vld [vmem:[%s761 + $0x378] sm:$0xff]
        %v966 = vld [vmem:[%s761 + $0x380] sm:$0xff]
        %v967 = vld [vmem:[%s761 + $0x388] sm:$0xff]
        %v968 = vld [vmem:[%s761 + $0x390] sm:$0xff]
        %v969 = vld [vmem:[%s761 + $0x398] sm:$0xff]
        %v970 = vld [vmem:[%s761 + $0x3a0] sm:$0xff]
        %v971 = vld [vmem:[%s761 + $0x3a8] sm:$0xff]
        %v972 = vld [vmem:[%s761 + $0x3b0] sm:$0xff]
        %v973 = vld [vmem:[%s761 + $0x3b8] sm:$0xff]
        %v974 = vld [vmem:[%s761 + $0x3c0] sm:$0xff]
        %v975 = vld [vmem:[%s761 + $0x3c8] sm:$0xff]
        %v976 = vld [vmem:[%s761 + $0x3d0] sm:$0xff]
        %v977 = vld [vmem:[%s761 + $0x3d8] sm:$0xff]
        %v978 = vld [vmem:[%s761 + $0x3e0] sm:$0xff]
        %v979 = vld [vmem:[%s761 + $0x3e8] sm:$0xff]
        %v980 = vld [vmem:[%s761 + $0x3f0] sm:$0xff]
        %v981 = vld [vmem:[%s761 + $0x3f8] sm:$0xff]
        %v986 = vunpack.c.l.b16 %v850
        %v987 = vunpack.c.h.b16 %v850
        %v988 = vunpack.c.l.b16 %v851
        %v989 = vunpack.c.h.b16 %v851
        %v990 = vunpack.c.l.b16 %v852
        %v991 = vunpack.c.h.b16 %v852
        %v992 = vunpack.c.l.b16 %v853
        %v993 = vunpack.c.h.b16 %v853
        %v994 = vpack.c.b16 %v986, %v986
        %v995 = vpack.c.b16 %v987, %v987
        %v996 = vpack.c.b16 %v988, %v988
        %v997 = vpack.c.b16 %v989, %v989
        %v998 = vpack.c.b16 %v990, %v990
        %v999 = vpack.c.b16 %v991, %v991
        %v1000 = vpack.c.b16 %v992, %v992
        %v1001 = vpack.c.b16 %v993, %v993
        %v1138 = vunpack.c.l.b16 %v854
        %v1139 = vunpack.c.h.b16 %v854
        %v1140 = vunpack.c.l.b16 %v855
        %v1141 = vunpack.c.h.b16 %v855
        %v1142 = vunpack.c.l.b16 %v856
        %v1143 = vunpack.c.h.b16 %v856
        %v1144 = vunpack.c.l.b16 %v857
        %v1145 = vunpack.c.h.b16 %v857
        %v1146 = vunpack.c.l.b16 %v858
        %v1147 = vunpack.c.h.b16 %v858
        %v1148 = vunpack.c.l.b16 %v859
        %v1149 = vunpack.c.h.b16 %v859
        %v1150 = vunpack.c.l.b16 %v860
        %v1151 = vunpack.c.h.b16 %v860
        %v1152 = vunpack.c.l.b16 %v861
        %v1153 = vunpack.c.h.b16 %v861
        %v1154 = vunpack.c.l.b16 %v862
        %v1155 = vunpack.c.h.b16 %v862
        %v1156 = vunpack.c.l.b16 %v863
        %v1157 = vunpack.c.h.b16 %v863
        %v1158 = vunpack.c.l.b16 %v864
        %v1159 = vunpack.c.h.b16 %v864
        %v1160 = vunpack.c.l.b16 %v865
        %v1161 = vunpack.c.h.b16 %v865
        %v1162 = vunpack.c.l.b16 %v866
        %v1163 = vunpack.c.h.b16 %v866
        %v1164 = vunpack.c.l.b16 %v867
        %v1165 = vunpack.c.h.b16 %v867
        %v1166 = vunpack.c.l.b16 %v868
        %v1167 = vunpack.c.h.b16 %v868
        %v1168 = vunpack.c.l.b16 %v869
        %v1169 = vunpack.c.h.b16 %v869
        %v1170 = vunpack.c.l.b16 %v870
        %v1171 = vunpack.c.h.b16 %v870
        %v1172 = vunpack.c.l.b16 %v871
        %v1173 = vunpack.c.h.b16 %v871
        %v1174 = vunpack.c.l.b16 %v872
        %v1175 = vunpack.c.h.b16 %v872
        %v1176 = vunpack.c.l.b16 %v873
        %v1177 = vunpack.c.h.b16 %v873
        %v1178 = vunpack.c.l.b16 %v874
        %v1179 = vunpack.c.h.b16 %v874
        %v1180 = vunpack.c.l.b16 %v875
        %v1181 = vunpack.c.h.b16 %v875
        %v1182 = vunpack.c.l.b16 %v876
        %v1183 = vunpack.c.h.b16 %v876
        %v1184 = vunpack.c.l.b16 %v877
        %v1185 = vunpack.c.h.b16 %v877
        %v1186 = vunpack.c.l.b16 %v878
        %v1187 = vunpack.c.h.b16 %v878
        %v1188 = vunpack.c.l.b16 %v879
        %v1189 = vunpack.c.h.b16 %v879
        %v1190 = vunpack.c.l.b16 %v880
        %v1191 = vunpack.c.h.b16 %v880
        %v1192 = vunpack.c.l.b16 %v881
        %v1193 = vunpack.c.h.b16 %v881
        %v1194 = vunpack.c.l.b16 %v882
        %v1195 = vunpack.c.h.b16 %v882
        %v1196 = vunpack.c.l.b16 %v883
        %v1197 = vunpack.c.h.b16 %v883
        %v1198 = vunpack.c.l.b16 %v884
        %v1199 = vunpack.c.h.b16 %v884
        %v1200 = vunpack.c.l.b16 %v885
        %v1201 = vunpack.c.h.b16 %v885
        %v1202 = vunpack.c.l.b16 %v886
        %v1203 = vunpack.c.h.b16 %v886
        %v1204 = vunpack.c.l.b16 %v887
        %v1205 = vunpack.c.h.b16 %v887
        %v1206 = vunpack.c.l.b16 %v888
        %v1207 = vunpack.c.h.b16 %v888
        %v1208 = vunpack.c.l.b16 %v889
        %v1209 = vunpack.c.h.b16 %v889
        %v1210 = vunpack.c.l.b16 %v890
        %v1211 = vunpack.c.h.b16 %v890
        %v1212 = vunpack.c.l.b16 %v891
        %v1213 = vunpack.c.h.b16 %v891
        %v1214 = vunpack.c.l.b16 %v892
        %v1215 = vunpack.c.h.b16 %v892
        %v1216 = vunpack.c.l.b16 %v893
        %v1217 = vunpack.c.h.b16 %v893
        %v1218 = vunpack.c.l.b16 %v894
        %v1219 = vunpack.c.h.b16 %v894
        %v1220 = vunpack.c.l.b16 %v895
        %v1221 = vunpack.c.h.b16 %v895
        %v1222 = vunpack.c.l.b16 %v896
        %v1223 = vunpack.c.h.b16 %v896
        %v1224 = vunpack.c.l.b16 %v897
        %v1225 = vunpack.c.h.b16 %v897
        %v1226 = vunpack.c.l.b16 %v898
        %v1227 = vunpack.c.h.b16 %v898
        %v1228 = vunpack.c.l.b16 %v899
        %v1229 = vunpack.c.h.b16 %v899
        %v1230 = vunpack.c.l.b16 %v900
        %v1231 = vunpack.c.h.b16 %v900
        %v1232 = vunpack.c.l.b16 %v901
        %v1233 = vunpack.c.h.b16 %v901
        %v1234 = vunpack.c.l.b16 %v902
        %v1235 = vunpack.c.h.b16 %v902
        %v1236 = vunpack.c.l.b16 %v903
        %v1237 = vunpack.c.h.b16 %v903
        %v1238 = vunpack.c.l.b16 %v904
        %v1239 = vunpack.c.h.b16 %v904
        %v1240 = vunpack.c.l.b16 %v905
        %v1241 = vunpack.c.h.b16 %v905
        %v1242 = vunpack.c.l.b16 %v906
        %v1243 = vunpack.c.h.b16 %v906
        %v1244 = vunpack.c.l.b16 %v907
        %v1245 = vunpack.c.h.b16 %v907
        %v1246 = vunpack.c.l.b16 %v908
        %v1247 = vunpack.c.h.b16 %v908
        %v1248 = vunpack.c.l.b16 %v909
        %v1249 = vunpack.c.h.b16 %v909
        %v1250 = vunpack.c.l.b16 %v910
        %v1251 = vunpack.c.h.b16 %v910
        %v1252 = vunpack.c.l.b16 %v911
        %v1253 = vunpack.c.h.b16 %v911
        %v1254 = vunpack.c.l.b16 %v912
        %v1255 = vunpack.c.h.b16 %v912
        %v1256 = vunpack.c.l.b16 %v913
        %v1257 = vunpack.c.h.b16 %v913
        %v1258 = vunpack.c.l.b16 %v914
        %v1259 = vunpack.c.h.b16 %v914
        %v1260 = vunpack.c.l.b16 %v915
        %v1261 = vunpack.c.h.b16 %v915
        %v1262 = vunpack.c.l.b16 %v916
        %v1263 = vunpack.c.h.b16 %v916
        %v1264 = vunpack.c.l.b16 %v917
        %v1265 = vunpack.c.h.b16 %v917
        %v1266 = vunpack.c.l.b16 %v918
        %v1267 = vunpack.c.h.b16 %v918
        %v1268 = vunpack.c.l.b16 %v919
        %v1269 = vunpack.c.h.b16 %v919
        %v1270 = vunpack.c.l.b16 %v920
        %v1271 = vunpack.c.h.b16 %v920
        %v1272 = vunpack.c.l.b16 %v921
        %v1273 = vunpack.c.h.b16 %v921
        %v1274 = vunpack.c.l.b16 %v922
        %v1275 = vunpack.c.h.b16 %v922
        %v1276 = vunpack.c.l.b16 %v923
        %v1277 = vunpack.c.h.b16 %v923
        %v1278 = vunpack.c.l.b16 %v924
        %v1279 = vunpack.c.h.b16 %v924
        %v1280 = vunpack.c.l.b16 %v925
        %v1281 = vunpack.c.h.b16 %v925
        %v1282 = vunpack.c.l.b16 %v926
        %v1283 = vunpack.c.h.b16 %v926
        %v1284 = vunpack.c.l.b16 %v927
        %v1285 = vunpack.c.h.b16 %v927
        %v1286 = vunpack.c.l.b16 %v928
        %v1287 = vunpack.c.h.b16 %v928
        %v1288 = vunpack.c.l.b16 %v929
        %v1289 = vunpack.c.h.b16 %v929
        %v1290 = vunpack.c.l.b16 %v930
        %v1291 = vunpack.c.h.b16 %v930
        %v1292 = vunpack.c.l.b16 %v931
        %v1293 = vunpack.c.h.b16 %v931
        %v1294 = vunpack.c.l.b16 %v932
        %v1295 = vunpack.c.h.b16 %v932
        %v1296 = vunpack.c.l.b16 %v933
        %v1297 = vunpack.c.h.b16 %v933
        %v1298 = vunpack.c.l.b16 %v934
        %v1299 = vunpack.c.h.b16 %v934
        %v1300 = vunpack.c.l.b16 %v935
        %v1301 = vunpack.c.h.b16 %v935
        %v1302 = vunpack.c.l.b16 %v936
        %v1303 = vunpack.c.h.b16 %v936
        %v1304 = vunpack.c.l.b16 %v937
        %v1305 = vunpack.c.h.b16 %v937
        %v1306 = vunpack.c.l.b16 %v938
        %v1307 = vunpack.c.h.b16 %v938
        %v1308 = vunpack.c.l.b16 %v939
        %v1309 = vunpack.c.h.b16 %v939
        %v1310 = vunpack.c.l.b16 %v940
        %v1311 = vunpack.c.h.b16 %v940
        %v1312 = vunpack.c.l.b16 %v941
        %v1313 = vunpack.c.h.b16 %v941
        %v1314 = vunpack.c.l.b16 %v942
        %v1315 = vunpack.c.h.b16 %v942
        %v1316 = vunpack.c.l.b16 %v943
        %v1317 = vunpack.c.h.b16 %v943
        %v1318 = vunpack.c.l.b16 %v944
        %v1319 = vunpack.c.h.b16 %v944
        %v1320 = vunpack.c.l.b16 %v945
        %v1321 = vunpack.c.h.b16 %v945
        %v1322 = vunpack.c.l.b16 %v946
        %v1323 = vunpack.c.h.b16 %v946
        %v1324 = vunpack.c.l.b16 %v947
        %v1325 = vunpack.c.h.b16 %v947
        %v1326 = vunpack.c.l.b16 %v948
        %v1327 = vunpack.c.h.b16 %v948
        %v1328 = vunpack.c.l.b16 %v949
        %v1329 = vunpack.c.h.b16 %v949
        %v1330 = vunpack.c.l.b16 %v950
        %v1331 = vunpack.c.h.b16 %v950
        %v1332 = vunpack.c.l.b16 %v951
        %v1333 = vunpack.c.h.b16 %v951
        %v1334 = vunpack.c.l.b16 %v952
        %v1335 = vunpack.c.h.b16 %v952
        %v1336 = vunpack.c.l.b16 %v953
        %v1337 = vunpack.c.h.b16 %v953
        %v1338 = vunpack.c.l.b16 %v954
        %v1339 = vunpack.c.h.b16 %v954
        %v1340 = vunpack.c.l.b16 %v955
        %v1341 = vunpack.c.h.b16 %v955
        %v1342 = vunpack.c.l.b16 %v956
        %v1343 = vunpack.c.h.b16 %v956
        %v1344 = vunpack.c.l.b16 %v957
        %v1345 = vunpack.c.h.b16 %v957
        %v1346 = vunpack.c.l.b16 %v958
        %v1347 = vunpack.c.h.b16 %v958
        %v1348 = vunpack.c.l.b16 %v959
        %v1349 = vunpack.c.h.b16 %v959
        %v1350 = vunpack.c.l.b16 %v960
        %v1351 = vunpack.c.h.b16 %v960
        %v1352 = vunpack.c.l.b16 %v961
        %v1353 = vunpack.c.h.b16 %v961
        %v1354 = vunpack.c.l.b16 %v962
        %v1355 = vunpack.c.h.b16 %v962
        %v1356 = vunpack.c.l.b16 %v963
        %v1357 = vunpack.c.h.b16 %v963
        %v1358 = vunpack.c.l.b16 %v964
        %v1359 = vunpack.c.h.b16 %v964
        %v1360 = vunpack.c.l.b16 %v965
        %v1361 = vunpack.c.h.b16 %v965
        %v1362 = vunpack.c.l.b16 %v966
        %v1363 = vunpack.c.h.b16 %v966
        %v1364 = vunpack.c.l.b16 %v967
        %v1365 = vunpack.c.h.b16 %v967
        %v1366 = vunpack.c.l.b16 %v968
        %v1367 = vunpack.c.h.b16 %v968
        %v1368 = vunpack.c.l.b16 %v969
        %v1369 = vunpack.c.h.b16 %v969
        %v1370 = vunpack.c.l.b16 %v970
        %v1371 = vunpack.c.h.b16 %v970
        %v1372 = vunpack.c.l.b16 %v971
        %v1373 = vunpack.c.h.b16 %v971
        %v1374 = vunpack.c.l.b16 %v972
        %v1375 = vunpack.c.h.b16 %v972
        %v1376 = vunpack.c.l.b16 %v973
        %v1377 = vunpack.c.h.b16 %v973
        %v1378 = vunpack.c.l.b16 %v974
        %v1379 = vunpack.c.h.b16 %v974
        %v1380 = vunpack.c.l.b16 %v975
        %v1381 = vunpack.c.h.b16 %v975
        %v1382 = vunpack.c.l.b16 %v976
        %v1383 = vunpack.c.h.b16 %v976
        %v1384 = vunpack.c.l.b16 %v977
        %v1385 = vunpack.c.h.b16 %v977
        %v1386 = vunpack.c.l.b16 %v978
        %v1387 = vunpack.c.h.b16 %v978
        %v1388 = vunpack.c.l.b16 %v979
        %v1389 = vunpack.c.h.b16 %v979
        %v1390 = vunpack.c.l.b16 %v980
        %v1391 = vunpack.c.h.b16 %v980
        %v1392 = vunpack.c.l.b16 %v981
        %v1393 = vunpack.c.h.b16 %v981
        %v1394 = vpack.c.b16 %v1140, %v1138
        %v1395 = vpack.c.b16 %v1141, %v1139
        %v1396 = vpack.c.b16 %v1144, %v1142
        %v1397 = vpack.c.b16 %v1145, %v1143
        %v1398 = vpack.c.b16 %v1148, %v1146
        %v1399 = vpack.c.b16 %v1149, %v1147
        %v1400 = vpack.c.b16 %v1152, %v1150
        %v1401 = vpack.c.b16 %v1153, %v1151
        %v1402 = vpack.c.b16 %v1156, %v1154
        %v1403 = vpack.c.b16 %v1157, %v1155
        %v1404 = vpack.c.b16 %v1160, %v1158
        %v1405 = vpack.c.b16 %v1161, %v1159
        %v1406 = vpack.c.b16 %v1164, %v1162
        %v1407 = vpack.c.b16 %v1165, %v1163
        %v1408 = vpack.c.b16 %v1168, %v1166
        %v1409 = vpack.c.b16 %v1169, %v1167
        %v1410 = vpack.c.b16 %v1172, %v1170
        %v1411 = vpack.c.b16 %v1173, %v1171
        %v1412 = vpack.c.b16 %v1176, %v1174
        %v1413 = vpack.c.b16 %v1177, %v1175
        %v1414 = vpack.c.b16 %v1180, %v1178
        %v1415 = vpack.c.b16 %v1181, %v1179
        %v1416 = vpack.c.b16 %v1184, %v1182
        %v1417 = vpack.c.b16 %v1185, %v1183
        %v1418 = vpack.c.b16 %v1188, %v1186
        %v1419 = vpack.c.b16 %v1189, %v1187
        %v1420 = vpack.c.b16 %v1192, %v1190
        %v1421 = vpack.c.b16 %v1193, %v1191
        %v1422 = vpack.c.b16 %v1196, %v1194
        %v1423 = vpack.c.b16 %v1197, %v1195
        %v1424 = vpack.c.b16 %v1200, %v1198
        %v1425 = vpack.c.b16 %v1201, %v1199
        %v1426 = vpack.c.b16 %v1204, %v1202
        %v1427 = vpack.c.b16 %v1205, %v1203
        %v1428 = vpack.c.b16 %v1208, %v1206
        %v1429 = vpack.c.b16 %v1209, %v1207
        %v1430 = vpack.c.b16 %v1212, %v1210
        %v1431 = vpack.c.b16 %v1213, %v1211
        %v1432 = vpack.c.b16 %v1216, %v1214
        %v1433 = vpack.c.b16 %v1217, %v1215
        %v1434 = vpack.c.b16 %v1220, %v1218
        %v1435 = vpack.c.b16 %v1221, %v1219
        %v1436 = vpack.c.b16 %v1224, %v1222
        %v1437 = vpack.c.b16 %v1225, %v1223
        %v1438 = vpack.c.b16 %v1228, %v1226
        %v1439 = vpack.c.b16 %v1229, %v1227
        %v1440 = vpack.c.b16 %v1232, %v1230
        %v1441 = vpack.c.b16 %v1233, %v1231
        %v1442 = vpack.c.b16 %v1236, %v1234
        %v1443 = vpack.c.b16 %v1237, %v1235
        %v1444 = vpack.c.b16 %v1240, %v1238
        %v1445 = vpack.c.b16 %v1241, %v1239
        %v1446 = vpack.c.b16 %v1244, %v1242
        %v1447 = vpack.c.b16 %v1245, %v1243
        %v1448 = vpack.c.b16 %v1248, %v1246
        %v1449 = vpack.c.b16 %v1249, %v1247
        %v1450 = vpack.c.b16 %v1252, %v1250
        %v1451 = vpack.c.b16 %v1253, %v1251
        %v1452 = vpack.c.b16 %v1256, %v1254
        %v1453 = vpack.c.b16 %v1257, %v1255
        %v1454 = vpack.c.b16 %v1260, %v1258
        %v1455 = vpack.c.b16 %v1261, %v1259
        %v1456 = vpack.c.b16 %v1264, %v1262
        %v1457 = vpack.c.b16 %v1265, %v1263
        %v1458 = vpack.c.b16 %v1268, %v1266
        %v1459 = vpack.c.b16 %v1269, %v1267
        %v1460 = vpack.c.b16 %v1272, %v1270
        %v1461 = vpack.c.b16 %v1273, %v1271
        %v1462 = vpack.c.b16 %v1276, %v1274
        %v1463 = vpack.c.b16 %v1277, %v1275
        %v1464 = vpack.c.b16 %v1280, %v1278
        %v1465 = vpack.c.b16 %v1281, %v1279
        %v1466 = vpack.c.b16 %v1284, %v1282
        %v1467 = vpack.c.b16 %v1285, %v1283
        %v1468 = vpack.c.b16 %v1288, %v1286
        %v1469 = vpack.c.b16 %v1289, %v1287
        %v1470 = vpack.c.b16 %v1292, %v1290
        %v1471 = vpack.c.b16 %v1293, %v1291
        %v1472 = vpack.c.b16 %v1296, %v1294
        %v1473 = vpack.c.b16 %v1297, %v1295
        %v1474 = vpack.c.b16 %v1300, %v1298
        %v1475 = vpack.c.b16 %v1301, %v1299
        %v1476 = vpack.c.b16 %v1304, %v1302
        %v1477 = vpack.c.b16 %v1305, %v1303
        %v1478 = vpack.c.b16 %v1308, %v1306
        %v1479 = vpack.c.b16 %v1309, %v1307
        %v1480 = vpack.c.b16 %v1312, %v1310
        %v1481 = vpack.c.b16 %v1313, %v1311
        %v1482 = vpack.c.b16 %v1316, %v1314
        %v1483 = vpack.c.b16 %v1317, %v1315
        %v1484 = vpack.c.b16 %v1320, %v1318
        %v1485 = vpack.c.b16 %v1321, %v1319
        %v1486 = vpack.c.b16 %v1324, %v1322
        %v1487 = vpack.c.b16 %v1325, %v1323
        %v1488 = vpack.c.b16 %v1328, %v1326
        %v1489 = vpack.c.b16 %v1329, %v1327
        %v1490 = vpack.c.b16 %v1332, %v1330
        %v1491 = vpack.c.b16 %v1333, %v1331
        %v1492 = vpack.c.b16 %v1336, %v1334
        %v1493 = vpack.c.b16 %v1337, %v1335
        %v1494 = vpack.c.b16 %v1340, %v1338
        %v1495 = vpack.c.b16 %v1341, %v1339
        %v1496 = vpack.c.b16 %v1344, %v1342
        %v1497 = vpack.c.b16 %v1345, %v1343
        %v1498 = vpack.c.b16 %v1348, %v1346
        %v1499 = vpack.c.b16 %v1349, %v1347
        %v1500 = vpack.c.b16 %v1352, %v1350
        %v1501 = vpack.c.b16 %v1353, %v1351
        %v1502 = vpack.c.b16 %v1356, %v1354
        %v1503 = vpack.c.b16 %v1357, %v1355
        %v1504 = vpack.c.b16 %v1360, %v1358
        %v1505 = vpack.c.b16 %v1361, %v1359
        %v1506 = vpack.c.b16 %v1364, %v1362
        %v1507 = vpack.c.b16 %v1365, %v1363
        %v1508 = vpack.c.b16 %v1368, %v1366
        %v1509 = vpack.c.b16 %v1369, %v1367
        %v1510 = vpack.c.b16 %v1372, %v1370
        %v1511 = vpack.c.b16 %v1373, %v1371
        %v1512 = vpack.c.b16 %v1376, %v1374
        %v1513 = vpack.c.b16 %v1377, %v1375
        %v1514 = vpack.c.b16 %v1380, %v1378
        %v1515 = vpack.c.b16 %v1381, %v1379
        %v1516 = vpack.c.b16 %v1384, %v1382
        %v1517 = vpack.c.b16 %v1385, %v1383
        %v1518 = vpack.c.b16 %v1388, %v1386
        %v1519 = vpack.c.b16 %v1389, %v1387
        %v1520 = vpack.c.b16 %v1392, %v1390
        %v1521 = vpack.c.b16 %v1393, %v1391
        %1650 = vmatpush.bf16.msra.mxu0 %v1408
        %1651 = vmatpush.bf16.msra.mxu0 %v1406
        %1652 = vmatpush.bf16.msra.mxu0 %v1404
        %1653 = vmatpush.bf16.msra.mxu0 %v1402
        %1654 = vmatpush.bf16.msra.mxu0 %v1400
        %1655 = vmatpush.bf16.msra.mxu0 %v1398
        %1656 = vmatpush.bf16.msra.mxu0 %v1396
        %1657 = vmatpush.bf16.msra.mxu0 %v1394
        %1658 = vmatmul.bf16.gmra.mxu0 %v994
        %v1659 = vpop.f32.mrf.mxu0
        %v1660 = vadd.f32 0.0, %v1659
        %v1661 = vpop.f32.mrf.mxu0
        %1662 = vdwg.mxu0
        %1663 = vmatpush.bf16.msra.mxu0 %v1424
        %1664 = vmatpush.bf16.msra.mxu0 %v1422
        %1665 = vmatpush.bf16.msra.mxu0 %v1420
        %1666 = vmatpush.bf16.msra.mxu0 %v1418
        %1667 = vmatpush.bf16.msra.mxu0 %v1416
        %1668 = vmatpush.bf16.msra.mxu0 %v1414
        %1669 = vmatpush.bf16.msra.mxu0 %v1412
        %1670 = vmatpush.bf16.msra.mxu0 %v1410
        %1671 = vmatmul.bf16.gmra.mxu0 %v995
        %v1672 = vpop.f32.mrf.mxu0
        %v1673 = vadd.f32 %v1660, %v1672
        %v1674 = vpop.f32.mrf.mxu0
        %1675 = vdwg.mxu0
        %1676 = vmatpush.bf16.msra.mxu0 %v1440
        %1677 = vmatpush.bf16.msra.mxu0 %v1438
        %1678 = vmatpush.bf16.msra.mxu0 %v1436
        %1679 = vmatpush.bf16.msra.mxu0 %v1434
        %1680 = vmatpush.bf16.msra.mxu0 %v1432
        %1681 = vmatpush.bf16.msra.mxu0 %v1430
        %1682 = vmatpush.bf16.msra.mxu0 %v1428
        %1683 = vmatpush.bf16.msra.mxu0 %v1426
        %1684 = vmatmul.bf16.gmra.mxu0 %v996
        %v1685 = vpop.f32.mrf.mxu0
        %v1686 = vadd.f32 %v1673, %v1685
        %v1687 = vpop.f32.mrf.mxu0
        %1688 = vdwg.mxu0
        %1689 = vmatpush.bf16.msra.mxu0 %v1456
        %1690 = vmatpush.bf16.msra.mxu0 %v1454
        %1691 = vmatpush.bf16.msra.mxu0 %v1452
        %1692 = vmatpush.bf16.msra.mxu0 %v1450
        %1693 = vmatpush.bf16.msra.mxu0 %v1448
        %1694 = vmatpush.bf16.msra.mxu0 %v1446
        %1695 = vmatpush.bf16.msra.mxu0 %v1444
        %1696 = vmatpush.bf16.msra.mxu0 %v1442
        %1697 = vmatmul.bf16.gmra.mxu0 %v997
        %v1698 = vpop.f32.mrf.mxu0
        %v1699 = vadd.f32 %v1686, %v1698
        %v1700 = vpop.f32.mrf.mxu0
        %1701 = vdwg.mxu0
        %1702 = vmatpush.bf16.msra.mxu0 %v1472
        %1703 = vmatpush.bf16.msra.mxu0 %v1470
        %1704 = vmatpush.bf16.msra.mxu0 %v1468
        %1705 = vmatpush.bf16.msra.mxu0 %v1466
        %1706 = vmatpush.bf16.msra.mxu0 %v1464
        %1707 = vmatpush.bf16.msra.mxu0 %v1462
        %1708 = vmatpush.bf16.msra.mxu0 %v1460
        %1709 = vmatpush.bf16.msra.mxu0 %v1458
        %1710 = vmatmul.bf16.gmra.mxu0 %v998
        %v1711 = vpop.f32.mrf.mxu0
        %v1712 = vadd.f32 %v1699, %v1711
        %v1713 = vpop.f32.mrf.mxu0
        %1714 = vdwg.mxu0
        %1715 = vmatpush.bf16.msra.mxu0 %v1488
        %1716 = vmatpush.bf16.msra.mxu0 %v1486
        %1717 = vmatpush.bf16.msra.mxu0 %v1484
        %1718 = vmatpush.bf16.msra.mxu0 %v1482
        %1719 = vmatpush.bf16.msra.mxu0 %v1480
        %1720 = vmatpush.bf16.msra.mxu0 %v1478
        %1721 = vmatpush.bf16.msra.mxu0 %v1476
        %1722 = vmatpush.bf16.msra.mxu0 %v1474
        %1723 = vmatmul.bf16.gmra.mxu0 %v999
        %v1724 = vpop.f32.mrf.mxu0
        %v1725 = vadd.f32 %v1712, %v1724
        %v1726 = vpop.f32.mrf.mxu0
        %1727 = vdwg.mxu0
        %1728 = vmatpush.bf16.msra.mxu0 %v1504
        %1729 = vmatpush.bf16.msra.mxu0 %v1502
        %1730 = vmatpush.bf16.msra.mxu0 %v1500
        %1731 = vmatpush.bf16.msra.mxu0 %v1498
        %1732 = vmatpush.bf16.msra.mxu0 %v1496
        %1733 = vmatpush.bf16.msra.mxu0 %v1494
        %1734 = vmatpush.bf16.msra.mxu0 %v1492
        %1735 = vmatpush.bf16.msra.mxu0 %v1490
        %1736 = vmatmul.bf16.gmra.mxu0 %v1000
        %v1737 = vpop.f32.mrf.mxu0
        %v1738 = vadd.f32 %v1725, %v1737
        %v1739 = vpop.f32.mrf.mxu0
        %1740 = vdwg.mxu0
        %1741 = vmatpush.bf16.msra.mxu0 %v1520
        %1742 = vmatpush.bf16.msra.mxu0 %v1518
        %1743 = vmatpush.bf16.msra.mxu0 %v1516
        %1744 = vmatpush.bf16.msra.mxu0 %v1514
        %1745 = vmatpush.bf16.msra.mxu0 %v1512
        %1746 = vmatpush.bf16.msra.mxu0 %v1510
        %1747 = vmatpush.bf16.msra.mxu0 %v1508
        %1748 = vmatpush.bf16.msra.mxu0 %v1506
        %1749 = vmatmul.bf16.gmra.mxu0 %v1001
        %v1750 = vpop.f32.mrf.mxu0
        %v1751 = vadd.f32 %v1738, %v1750
        %v1752 = vpop.f32.mrf.mxu0
        %1753 = vdwg.mxu0
        %1754 = vmatpush.bf16.msra.mxu0 %v1409
        %1755 = vmatpush.bf16.msra.mxu0 %v1407
        %1756 = vmatpush.bf16.msra.mxu0 %v1405
        %1757 = vmatpush.bf16.msra.mxu0 %v1403
        %1758 = vmatpush.bf16.msra.mxu0 %v1401
        %1759 = vmatpush.bf16.msra.mxu0 %v1399
        %1760 = vmatpush.bf16.msra.mxu0 %v1397
        %1761 = vmatpush.bf16.msra.mxu0 %v1395
        %1762 = vmatmul.bf16.gmra.mxu0 %v994
        %v1763 = vpop.f32.mrf.mxu0
        %v1764 = vadd.f32 0.0, %v1763
        %v1765 = vpop.f32.mrf.mxu0
        %1766 = vdwg.mxu0
        %1767 = vmatpush.bf16.msra.mxu0 %v1425
        %1768 = vmatpush.bf16.msra.mxu0 %v1423
        %1769 = vmatpush.bf16.msra.mxu0 %v1421
        %1770 = vmatpush.bf16.msra.mxu0 %v1419
        %1771 = vmatpush.bf16.msra.mxu0 %v1417
        %1772 = vmatpush.bf16.msra.mxu0 %v1415
        %1773 = vmatpush.bf16.msra.mxu0 %v1413
        %1774 = vmatpush.bf16.msra.mxu0 %v1411
        %1775 = vmatmul.bf16.gmra.mxu0 %v995
        %v1776 = vpop.f32.mrf.mxu0
        %v1777 = vadd.f32 %v1764, %v1776
        %v1778 = vpop.f32.mrf.mxu0
        %1779 = vdwg.mxu0
        %1780 = vmatpush.bf16.msra.mxu0 %v1441
        %1781 = vmatpush.bf16.msra.mxu0 %v1439
        %1782 = vmatpush.bf16.msra.mxu0 %v1437
        %1783 = vmatpush.bf16.msra.mxu0 %v1435
        %1784 = vmatpush.bf16.msra.mxu0 %v1433
        %1785 = vmatpush.bf16.msra.mxu0 %v1431
        %1786 = vmatpush.bf16.msra.mxu0 %v1429
        %1787 = vmatpush.bf16.msra.mxu0 %v1427
        %1788 = vmatmul.bf16.gmra.mxu0 %v996
        %v1789 = vpop.f32.mrf.mxu0
        %v1790 = vadd.f32 %v1777, %v1789
        %v1791 = vpop.f32.mrf.mxu0
        %1792 = vdwg.mxu0
        %1793 = vmatpush.bf16.msra.mxu0 %v1457
        %1794 = vmatpush.bf16.msra.mxu0 %v1455
        %1795 = vmatpush.bf16.msra.mxu0 %v1453
        %1796 = vmatpush.bf16.msra.mxu0 %v1451
        %1797 = vmatpush.bf16.msra.mxu0 %v1449
        %1798 = vmatpush.bf16.msra.mxu0 %v1447
        %1799 = vmatpush.bf16.msra.mxu0 %v1445
        %1800 = vmatpush.bf16.msra.mxu0 %v1443
        %1801 = vmatmul.bf16.gmra.mxu0 %v997
        %v1802 = vpop.f32.mrf.mxu0
        %v1803 = vadd.f32 %v1790, %v1802
        %v1804 = vpop.f32.mrf.mxu0
        %1805 = vdwg.mxu0
        %1806 = vmatpush.bf16.msra.mxu0 %v1473
        %1807 = vmatpush.bf16.msra.mxu0 %v1471
        %1808 = vmatpush.bf16.msra.mxu0 %v1469
        %1809 = vmatpush.bf16.msra.mxu0 %v1467
        %1810 = vmatpush.bf16.msra.mxu0 %v1465
        %1811 = vmatpush.bf16.msra.mxu0 %v1463
        %1812 = vmatpush.bf16.msra.mxu0 %v1461
        %1813 = vmatpush.bf16.msra.mxu0 %v1459
        %1814 = vmatmul.bf16.gmra.mxu0 %v998
        %v1815 = vpop.f32.mrf.mxu0
        %v1816 = vadd.f32 %v1803, %v1815
        %v1817 = vpop.f32.mrf.mxu0
        %1818 = vdwg.mxu0
        %1819 = vmatpush.bf16.msra.mxu0 %v1489
        %1820 = vmatpush.bf16.msra.mxu0 %v1487
        %1821 = vmatpush.bf16.msra.mxu0 %v1485
        %1822 = vmatpush.bf16.msra.mxu0 %v1483
        %1823 = vmatpush.bf16.msra.mxu0 %v1481
        %1824 = vmatpush.bf16.msra.mxu0 %v1479
        %1825 = vmatpush.bf16.msra.mxu0 %v1477
        %1826 = vmatpush.bf16.msra.mxu0 %v1475
        %1827 = vmatmul.bf16.gmra.mxu0 %v999
        %v1828 = vpop.f32.mrf.mxu0
        %v1829 = vadd.f32 %v1816, %v1828
        %v1830 = vpop.f32.mrf.mxu0
        %1831 = vdwg.mxu0
        %1832 = vmatpush.bf16.msra.mxu0 %v1505
        %1833 = vmatpush.bf16.msra.mxu0 %v1503
        %1834 = vmatpush.bf16.msra.mxu0 %v1501
        %1835 = vmatpush.bf16.msra.mxu0 %v1499
        %1836 = vmatpush.bf16.msra.mxu0 %v1497
        %1837 = vmatpush.bf16.msra.mxu0 %v1495
        %1838 = vmatpush.bf16.msra.mxu0 %v1493
        %1839 = vmatpush.bf16.msra.mxu0 %v1491
        %1840 = vmatmul.bf16.gmra.mxu0 %v1000
        %v1841 = vpop.f32.mrf.mxu0
        %v1842 = vadd.f32 %v1829, %v1841
        %v1843 = vpop.f32.mrf.mxu0
        %1844 = vdwg.mxu0
        %1845 = vmatpush.bf16.msra.mxu0 %v1521
        %1846 = vmatpush.bf16.msra.mxu0 %v1519
        %1847 = vmatpush.bf16.msra.mxu0 %v1517
        %1848 = vmatpush.bf16.msra.mxu0 %v1515
        %1849 = vmatpush.bf16.msra.mxu0 %v1513
        %1850 = vmatpush.bf16.msra.mxu0 %v1511
        %1851 = vmatpush.bf16.msra.mxu0 %v1509
        %1852 = vmatpush.bf16.msra.mxu0 %v1507
        %1853 = vmatmul.bf16.gmra.mxu0 %v1001
        %v1854 = vpop.f32.mrf.mxu0
        %v1855 = vadd.f32 %v1842, %v1854
        %v1856 = vpop.f32.mrf.mxu0
        %1857 = vdwg.mxu0
        %v1858 = vadd.f32 %v848, %v1751
        %v1859 = vadd.f32 %v849, %v1855
        %1860 = vst [vmem:[#allocation2] sm:$0xff] %v1858
        %1861 = vst [vmem:[#allocation2 + $0x8] sm:$0xff] %v1859
        %p1862 = scmp.eq.s32.totalorder %s23, 3
        // Predicated region
        $region75: #{_lambda_.11} parent=65 // pred_check
          %p1863 = pneg %p1862
        $region76: #{_lambda_.11} parent=65 // pred_check_branch
          %1865 = sbr.rel (%p1863) target = $region78
        $region77: #{_lambda_.11} parent=65 // pred_region
          %v1866 = vld [vmem:[#allocation2] sm:$0xff]
          %v1867 = vld [vmem:[#allocation2 + $0x8] sm:$0xff]
          %v1868 = vld [vmem:[%s826] sm:$0x3]
          %v1870 = vperm.slane %v1868, 0
          %v1871 = vperm.slane %v1868, 1
          %v1874 = vadd.f32 %v1866, %v1870
          %v1875 = vadd.f32 %v1867, %v1871
          %v1876 = vmax.f32 %v1874, 0.0
          %v1877 = vmax.f32 %v1875, 0.0
          %1878 = vst [vmem:[%s840] sm:$0xff] %v1876
          %1879 = vst [vmem:[%s840 + $0x8] sm:$0xff] %v1877
        $region78: #{_lambda_.11} parent=65 // pred_fallthru
          _
        %s1880 = smul.u32 2, %s22
        %p1881 = scmp.lt.s32.totalorder %s20, 0
        %s1882 = scalar_select %p1881, %s20, 0
        %p1883 = scmp.lt.s32.totalorder %s21, 0
        %s1884 = scalar_select %p1883, %s21, 0
        %p1885 = scmp.lt.s32.totalorder %s1880, 3
        %s1886 = scalar_select %p1885, %s1880, 3
        %s1887 = smul.addr %s1884, 4
        %s1888 = sadd.s32 %s1886, %s1887
        %s1889 = smul.addr %s1882, 4
        %s1890 = sadd.s32 %s1888, %s1889
        %s1891 = smul.addr %s1890, 8
        %s1892 = scalar_lea.vmem %s3, %s1891
        // Predicated region
        $region79: #{_lambda_.11} parent=65 // pred_check
          %p1893 = pneg %p148
        $region80: #{_lambda_.11} parent=65 // pred_check_branch
          %1895 = sbr.rel (%p1893) target = $region82
        $region81: #{_lambda_.11} parent=65 // pred_region
          %s1896 = smul.u32 2, %s22
        $region82: #{_lambda_.11} parent=65 // pred_fallthru
          _
      $region66: #{_lambda_.11} parent=5 // pred_fallthru
        _
      %p1897 = scmp.le.s32.totalorder 2, %s9
      // Predicated region
      $region83: #{_lambda_.11} parent=5 // pred_check
        %p1898 = pneg %p1897
      $region84: #{_lambda_.11} parent=5 // pred_check_branch
        %1900 = sbr.rel (%p1898) target = $region86
      $region85: #{_lambda_.11} parent=5 // pred_region
        %s1901 = ssub.s32 %s9, 2
        // Predicated region
        $region87: #{_lambda_.11} parent=85 // pred_check
          %p1902 = pneg %p154
        $region88: #{_lambda_.11} parent=85 // pred_check_branch
          %1904 = sbr.rel (%p1902) target = $region90
        $region89: #{_lambda_.11} parent=85 // pred_region
          %s1905 = smul.u32 2, %s26
          %p1906 = scmp.lt.s32.totalorder %s24, 0
          %s1907 = scalar_select %p1906, %s24, 0
          %p1908 = scmp.lt.s32.totalorder %s25, 0
          %s1909 = scalar_select %p1908, %s25, 0
          %p1910 = scmp.lt.s32.totalorder %s1905, 3
          %s1911 = scalar_select %p1910, %s1905, 3
          %s1912 = smul.addr %s1909, 4
          %s1913 = sadd.s32 %s1911, %s1912
          %s1914 = smul.addr %s1907, 4
          %s1915 = sadd.s32 %s1913, %s1914
          %s1916 = smul.addr %s1915, 8
          %s1917 = scalar_lea.vmem %s3, %s1916
        $region90: #{_lambda_.11} parent=85 // pred_fallthru
          _
      $region86: #{_lambda_.11} parent=5 // pred_fallthru
        _
    $region6: #{_lambda_.11} parent=1 // loop_footer
      %s13 = sadd.s32 1, %s9
    $region7: #{_lambda_.11} parent=1 // loop_footer_branch
      %8 = sbr.rel target = $region3
    $region8: #{_lambda_.11} parent=1 // loop_exit
      _

// kernel: _lambda_.10
$region0: #{_lambda_.10}
  #allocation0 [shape = 'u32[]', space=smem, size = 0x4, offset = 0x4, fixed_abs, tag = 'smem constant byte address 0x4 - core index']
  #allocation1 [shape = 'u32[72,128]{1,0:T(1,128)}', space=vmem, size = 0x9000, scoped, tag = 'internal scratch']
  #allocation2 [shape = 'f32[8,256]{1,0:T(8,128)}', space=vmem, size = 0x2000, scoped, tag = 'scratch operand']
  %s0 = inlined_call_operand.vmem [shape: bf16[1,8,2048], index: 0, kind: input, shape index: {}]
  %s1 = inlined_call_operand.hbm [shape: bf16[1,2048,256], index: 1, kind: input, shape index: {}]
  %s2 = inlined_call_operand.hbm [shape: f32[1,1,256], index: 2, kind: input, shape index: {}]
  %s3 = inlined_call_operand.vmem [shape: f32[1,8,256], index: 3, kind: output, shape index: {}]
  %s4 = sld [smem:[#allocation0]]
  $region61: #{_lambda_.10} parent=0
    _
  %s6 = ssub.s32 1, %s4
  %s7 = scalar_select 0, %s6, %s4
  $region1: #{_lambda_.10} parent=0
    #allocation3 [shape = 'u8[1048576]{0}', space=vmem, size = 0x100000, scoped, tag = 'input window, operand 1']
    #allocation4 [shape = 's32[2]{0}', space=sflag, size = 0x8, scoped, tag = 'scoped memory for _lambda_.10']
    #allocation5 [shape = 'u8[1024]{0}', space=vmem, size = 0x400, scoped, tag = 'input window, operand 2, single buffered']
    #allocation6 [shape = 's32[1]{0}', space=sflag, size = 0x4, scoped, tag = 'scoped memory for _lambda_.10']
    %8 = vsyncpa [#allocation4], 0
    %s9 = scalar_lea.sflag [#allocation4], 1
    %10 = vsyncpa %s9, 0
    %11 = vsyncpa [#allocation6], 0
    loop: start=0, step=1, limit=4
    $region2: #{_lambda_.10} parent=1 // loop_pre_header
      _
    $region3: #{_lambda_.10} parent=1 // loop_header
      %s13 = sphi 0, %s17
      %p14 = scmp.ge.s32.totalorder %s13, 4
      %s20 = sphi 0, %s46
      %s21 = sphi 0, %s42
      %s22 = sphi 0, %s38
      %s23 = sphi 0, %s34
      %s24 = sphi 0, %s20
      %s25 = sphi 0, %s21
      %s26 = sphi 0, %s22
      %s27 = sphi 0, %s23
      %s28 = sphi 0, %s24
      %s29 = sphi 0, %s25
      %s30 = sphi 0, %s26
      %s31 = sphi 0, %s27
      %s53 = sphi 0, %s55
      %s56 = sphi 0, %s53
      %s57 = sphi 0, %s56
      %s73 = sphi 0, %s57
      %s83 = sphi 0, %s85
      %s86 = sphi 0, %s83
      %s87 = sphi 0, %s86
      %s103 = sphi 0, %s87
      %s109 = sphi 0, %s111
      %s112 = sphi 0, %s109
      %s113 = sphi 0, %s112
      %s129 = sphi 0, %s113
      %s139 = sphi 0, %s141
      %s142 = sphi 0, %s139
      %s143 = sphi 0, %s142
      %s159 = sphi 0, %s143
    $region4: #{_lambda_.10} parent=1 // loop_header_branch
      %16 = sbr.rel (%p14) target = $region8
    $region5: #{_lambda_.10} parent=1 // loop_body
      %s18 = ssub.s32 %s13, 1
      %s19 = ssub.s32 %s13, 2
      %s32 = sadd.s32 1, %s23
      %p33 = scmp.ge.s32.totalorder %s32, 2
      %s34 = scalar_select %p33, 0, %s32
      %s35 = sadd.s32 1, %s22
      %s36 = scalar_select %p33, %s35, %s22
      %p37 = scmp.ge.s32.totalorder %s36, 1
      %s38 = scalar_select %p37, 0, %s36
      %s39 = sadd.s32 1, %s21
      %s40 = scalar_select %p37, %s39, %s21
      %p41 = scmp.ge.s32.totalorder %s40, 1
      %s42 = scalar_select %p41, 0, %s40
      %s43 = sadd.s32 1, %s20
      %s44 = scalar_select %p41, %s43, %s20
      %p45 = scmp.ge.s32.totalorder %s44, 1
      %s46 = scalar_select %p45, 0, %s44
      %s47 = ssub.s32 %s20, %s46
      %s48 = ssub.s32 %s21, %s42
      %s49 = sor.u32 %s47, %s48
      %s50 = ssub.s32 %s23, %s34
      %s51 = sor.u32 %s49, %s50
      %p52 = scmp.eq.s32.totalorder %s51, 0
      %s54 = sadd.s32 %s53, 1
      %s55 = scalar_select %p52, %s53, %s54
      %p58 = pneg %p52
      %p59 = scmp.eq.s32.totalorder %s13, 1
      %p60 = por %p58, %p59
      %p61 = scmp.ne.s32.totalorder %s53, %s56
      %p62 = scmp.eq.s32.totalorder %s13, 0
      %p63 = por %p61, %p62
      %p64 = scmp.ne.s32.totalorder %s53, %s56
      %p65 = scmp.eq.s32.totalorder %s18, 1
      %p66 = por %p64, %p65
      %p67 = scmp.ne.s32.totalorder %s56, %s57
      %p68 = scmp.eq.s32.totalorder %s18, 0
      %p69 = por %p67, %p68
      %p70 = scmp.ne.s32.totalorder %s56, %s57
      %p71 = scmp.eq.s32.totalorder %s19, 1
      %p72 = por %p70, %p71
      %p74 = scmp.ne.s32.totalorder %s57, %s73
      %p75 = scmp.eq.s32.totalorder %s19, 0
      %p76 = por %p74, %p75
      %s77 = ssub.s32 %s20, %s46
      %s78 = ssub.s32 %s23, %s34
      %s79 = sor.u32 %s77, %s78
      %s80 = ssub.s32 %s22, %s38
      %s81 = sor.u32 %s79, %s80
      %p82 = scmp.eq.s32.totalorder %s81, 0
      %s84 = sadd.s32 %s83, 1
      %s85 = scalar_select %p82, %s83, %s84
      %p88 = pneg %p82
      %p89 = scmp.eq.s32.totalorder %s13, 1
      %p90 = por %p88, %p89
      %p91 = scmp.ne.s32.totalorder %s83, %s86
      %p92 = scmp.eq.s32.totalorder %s13, 0
      %p93 = por %p91, %p92
      %p94 = scmp.ne.s32.totalorder %s83, %s86
      %p95 = scmp.eq.s32.totalorder %s18, 1
      %p96 = por %p94, %p95
      %p97 = scmp.ne.s32.totalorder %s86, %s87
      %p98 = scmp.eq.s32.totalorder %s18, 0
      %p99 = por %p97, %p98
      %p100 = scmp.ne.s32.totalorder %s86, %s87
      %p101 = scmp.eq.s32.totalorder %s19, 1
      %p102 = por %p100, %p101
      %p104 = scmp.ne.s32.totalorder %s87, %s103
      %p105 = scmp.eq.s32.totalorder %s19, 0
      %p106 = por %p104, %p105
      %s107 = ssub.s32 %s22, %s38
      %p108 = scmp.eq.s32.totalorder %s107, 0
      %s110 = sadd.s32 %s109, 1
      %s111 = scalar_select %p108, %s109, %s110
      %p114 = pneg %p108
      %p115 = scmp.eq.s32.totalorder %s13, 1
      %p116 = por %p114, %p115
      %p117 = scmp.ne.s32.totalorder %s109, %s112
      %p118 = scmp.eq.s32.totalorder %s13, 0
      %p119 = por %p117, %p118
      %p120 = scmp.ne.s32.totalorder %s109, %s112
      %p121 = scmp.eq.s32.totalorder %s18, 1
      %p122 = por %p120, %p121
      %p123 = scmp.ne.s32.totalorder %s112, %s113
      %p124 = scmp.eq.s32.totalorder %s18, 0
      %p125 = por %p123, %p124
      %p126 = scmp.ne.s32.totalorder %s112, %s113
      %p127 = scmp.eq.s32.totalorder %s19, 1
      %p128 = por %p126, %p127
      %p130 = scmp.ne.s32.totalorder %s113, %s129
      %p131 = scmp.eq.s32.totalorder %s19, 0
      %p132 = por %p130, %p131
      %s133 = ssub.s32 %s20, %s46
      %s134 = ssub.s32 %s21, %s42
      %s135 = sor.u32 %s133, %s134
      %s136 = ssub.s32 %s22, %s38
      %s137 = sor.u32 %s135, %s136
      %p138 = scmp.eq.s32.totalorder %s137, 0
      %s140 = sadd.s32 %s139, 1
      %s141 = scalar_select %p138, %s139, %s140
      %p144 = pneg %p138
      %p145 = scmp.eq.s32.totalorder %s13, 1
      %p146 = por %p144, %p145
      %p147 = scmp.ne.s32.totalorder %s139, %s142
      %p148 = scmp.eq.s32.totalorder %s13, 0
      %p149 = por %p147, %p148
      %p150 = scmp.ne.s32.totalorder %s139, %s142
      %p151 = scmp.eq.s32.totalorder %s18, 1
      %p152 = por %p150, %p151
      %p153 = scmp.ne.s32.totalorder %s142, %s143
      %p154 = scmp.eq.s32.totalorder %s18, 0
      %p155 = por %p153, %p154
      %p156 = scmp.ne.s32.totalorder %s142, %s143
      %p157 = scmp.eq.s32.totalorder %s19, 1
      %p158 = por %p156, %p157
      %p160 = scmp.ne.s32.totalorder %s143, %s159
      %p161 = scmp.eq.s32.totalorder %s19, 0
      %p162 = por %p160, %p161
      %p163 = scmp.le.s32.totalorder 1, %s13
      %p164 = scmp.lt.s32.totalorder %s13, 3
      %p165 = pnand %p163, %p164
      %p166 = pneg %p165
      // Predicated region
      $region9: #{_lambda_.10} parent=5 // pred_check
        _
      $region10: #{_lambda_.10} parent=5 // pred_check_branch
        %168 = sbr.rel (%p165) target = $region12
      $region11: #{_lambda_.10} parent=5 // pred_region
        %s169 = ssub.s32 %s13, 1
        // Predicated region
        $region13: #{_lambda_.10} parent=11 // pred_check
          %p170 = pneg %p125
        $region14: #{_lambda_.10} parent=11 // pred_check_branch
          %172 = sbr.rel (%p170) target = $region16
        $region15: #{_lambda_.10} parent=11 // pred_region
          %s173 = smul.u32 2, %s26
          %175 = vsyncadd [#allocation6], 0
          %s176 = scalar_lea.hbm %s2, %s173
          %s178 = sshll.u32 %s176, 4
          %s179 = int_to_ptr.hbm [resolvable:$true] %s178
          %s180 = sshll.u32 [#allocation5], 4
          %s181 = int_to_ptr.vmem [resolvable:$true] %s180
          %183 = dma.hbm_to_vmem [thread:$0]  %s179, 32, %s181, [#allocation6]
        $region16: #{_lambda_.10} parent=11 // pred_fallthru
          _
      $region12: #{_lambda_.10} parent=5 // pred_fallthru
        _
      %p184 = scmp.lt.s32.totalorder %s13, 2
      // Predicated region
      $region17: #{_lambda_.10} parent=5 // pred_check
        %p185 = pneg %p184
      $region18: #{_lambda_.10} parent=5 // pred_check_branch
        %187 = sbr.rel (%p185) target = $region20
      $region19: #{_lambda_.10} parent=5 // pred_region
        // Predicated region
        $region21: #{_lambda_.10} parent=19 // pred_check
          %p188 = pneg %p63
        $region22: #{_lambda_.10} parent=19 // pred_check_branch
          %190 = sbr.rel (%p188) target = $region24
        $region23: #{_lambda_.10} parent=19 // pred_region
          %s191 = smul.u32 8, %s23
          %p192 = scmp.lt.s32.totalorder %s20, 0
          %s193 = scalar_select %p192, %s20, 0
          %p194 = scmp.lt.s32.totalorder %s21, 0
          %s195 = scalar_select %p194, %s21, 0
          %p196 = scmp.lt.s32.totalorder %s191, 15
          %s197 = scalar_select %p196, %s191, 15
          %s198 = smul.addr %s195, 16
          %s199 = sadd.s32 %s197, %s198
          %s200 = smul.addr %s193, 16
          %s201 = sadd.s32 %s199, %s200
          %s202 = smul.addr %s201, 4
          %s203 = scalar_lea.vmem %s0, %s202
          %s204 = smul.u32 8, %s23
        $region24: #{_lambda_.10} parent=19 // pred_fallthru
          _
        // Predicated region
        $region25: #{_lambda_.10} parent=19 // pred_check
          %p205 = pneg %p93
        $region26: #{_lambda_.10} parent=19 // pred_check_branch
          %207 = sbr.rel (%p205) target = $region28
        $region27: #{_lambda_.10} parent=19 // pred_region
          %s208 = sand.u32 %s83, 1
          %s209 = scalar_lea.sflag [#allocation4], %s208
          %s210 = sand.u32 %s83, 1
          %s211 = smul.addr %s210, 1024
          %s212 = scalar_lea.vmem [#allocation3], %s211
          %s213 = smul.u32 128, %s23
          %s214 = smul.u32 2, %s22
          %216 = vsyncadd %s209, 0
          %s217 = smul.addr %s213, 2
          %s218 = sadd.s32 %s214, %s217
          %s219 = smul.addr %s20, 512
          %s220 = sadd.s32 %s218, %s219
          %s221 = smul.addr %s220, 4
          %s222 = scalar_lea.hbm %s1, %s221
          %s223 = sshll.u32 %s222, 4
          %s224 = int_to_ptr.hbm [resolvable:$true] %s223
          %s225 = sshll.u32 %s212, 4
          %s226 = int_to_ptr.vmem [resolvable:$true] %s225
          %231 = dma.hbm_to_vmem [thread:$0]  %s224, 16384, %s226, %s209, 128, 128, 8
        $region28: #{_lambda_.10} parent=19 // pred_fallthru
          _
      $region20: #{_lambda_.10} parent=5 // pred_fallthru
        _
      %p232 = scmp.le.s32.totalorder 1, %s13
      %p233 = scmp.lt.s32.totalorder %s13, 3
      %p234 = pnand %p232, %p233
      %p235 = pneg %p234
      // Predicated region
      $region29: #{_lambda_.10} parent=5 // pred_check
        _
      $region30: #{_lambda_.10} parent=5 // pred_check_branch
        %237 = sbr.rel (%p234) target = $region32
      $region31: #{_lambda_.10} parent=5 // pred_region
        %s238 = ssub.s32 %s13, 1
        %s239 = sand.u32 %s86, 1
        %s240 = scalar_lea.sflag [#allocation4], %s239
        %s241 = sand.u32 %s86, 1
        %s242 = smul.addr %s241, 1024
        %s243 = scalar_lea.vmem [#allocation3], %s242
        // Predicated region
        $region33: #{_lambda_.10} parent=31 // pred_check
          %p244 = pneg %p99
        $region34: #{_lambda_.10} parent=31 // pred_check_branch
          %246 = sbr.rel (%p244) target = $region36
        $region35: #{_lambda_.10} parent=31 // pred_region
          %248 = dma.done %s240, 16384
        $region36: #{_lambda_.10} parent=31 // pred_fallthru
          _
        // Predicated region
        $region37: #{_lambda_.10} parent=31 // pred_check
          %p249 = pneg %p125
        $region38: #{_lambda_.10} parent=31 // pred_check_branch
          %251 = sbr.rel (%p249) target = $region40
        $region39: #{_lambda_.10} parent=31 // pred_region
          %253 = dma.done [#allocation6], 32
        $region40: #{_lambda_.10} parent=31 // pred_fallthru
          _
        %s254 = smul.u32 8, %s27
        %p255 = scmp.lt.s32.totalorder %s24, 0
        %s256 = scalar_select %p255, %s24, 0
        %p257 = scmp.lt.s32.totalorder %s25, 0
        %s258 = scalar_select %p257, %s25, 0
        %p259 = scmp.lt.s32.totalorder %s254, 15
        %s260 = scalar_select %p259, %s254, 15
        %s261 = smul.addr %s258, 16
        %s262 = sadd.s32 %s260, %s261
        %s263 = smul.addr %s256, 16
        %s264 = sadd.s32 %s262, %s263
        %s265 = smul.addr %s264, 4
        %s266 = scalar_lea.vmem %s0, %s265
        %p267 = pneg %p69
        %p268 = pneg %p66
        %s269 = sand.u32 %s86, 1
        %s270 = scalar_lea.sflag [#allocation4], %s269
        %s271 = sand.u32 %s86, 1
        %s272 = smul.addr %s271, 1024
        %s273 = scalar_lea.vmem [#allocation3], %s272
        %p274 = pneg %p99
        %p275 = pneg %p96
        %p276 = pneg %p125
        %p277 = pneg %p122
        %p278 = pneg %p155
        %p279 = pneg %p152
        %s280 = smul.u32 2, %s26
        %p281 = scmp.lt.s32.totalorder %s24, 0
        %s282 = scalar_select %p281, %s24, 0
        %p283 = scmp.lt.s32.totalorder %s25, 0
        %s284 = scalar_select %p283, %s25, 0
        %p285 = scmp.lt.s32.totalorder %s280, 1
        %s286 = scalar_select %p285, %s280, 1
        %s287 = smul.addr %s284, 2
        %s288 = sadd.s32 %s286, %s287
        %s289 = smul.addr %s282, 2
        %s290 = sadd.s32 %s288, %s289
        %s291 = smul.addr %s290, 8
        %s292 = scalar_lea.vmem %s3, %s291
        %s293 = smul.u32 8, %s27
        %p294 = scmp.lt.s32.totalorder %s24, 0
        %s295 = scalar_select %p294, %s24, 0
        %p296 = scmp.lt.s32.totalorder %s25, 0
        %s297 = scalar_select %p296, %s25, 0
        %p298 = scmp.lt.s32.totalorder %s293, 15
        %s299 = scalar_select %p298, %s293, 15
        %s300 = smul.addr %s297, 16
        %s301 = sadd.s32 %s299, %s300
        %s302 = smul.addr %s295, 16
        %s303 = sadd.s32 %s301, %s302
        %s304 = smul.addr %s303, 4
        %s305 = scalar_lea.vmem %s0, %s304
        %s306 = smul.u32 8, %s27
        %s307 = smul.u32 128, %s27
        %s308 = smul.u32 2, %s26
        %s309 = smul.u32 2, %s26
        %s310 = smul.u32 2, %s26
        %p311 = scmp.lt.s32.totalorder %s24, 0
        %s312 = scalar_select %p311, %s24, 0
        %p313 = scmp.lt.s32.totalorder %s25, 0
        %s314 = scalar_select %p313, %s25, 0
        %p315 = scmp.lt.s32.totalorder %s310, 1
        %s316 = scalar_select %p315, %s310, 1
        %s317 = smul.addr %s314, 2
        %s318 = sadd.s32 %s316, %s317
        %s319 = smul.addr %s312, 2
        %s320 = sadd.s32 %s318, %s319
        %s321 = smul.addr %s320, 8
        %s322 = scalar_lea.vmem %s3, %s321
        %s323 = smul.u32 2, %s26
        %p324 = scmp.eq.s32.totalorder %s27, 0
        // Predicated region
        $region41: #{_lambda_.10} parent=31 // pred_check
          %p325 = pneg %p324
        $region42: #{_lambda_.10} parent=31 // pred_check_branch
          %327 = sbr.rel (%p325) target = $region44
        $region43: #{_lambda_.10} parent=31 // pred_region
          %328 = vst [vmem:[#allocation2] sm:$0xff] 0.0
          %329 = vst [vmem:[#allocation2 + $0x8] sm:$0xff] 0.0
        $region44: #{_lambda_.10} parent=31 // pred_fallthru
          _
        %v330 = vld [vmem:[#allocation2] sm:$0xff]
        %v331 = vld [vmem:[#allocation2 + $0x8] sm:$0xff]
        %v332 = vld [vmem:[%s305] sm:$0xff]
        %v333 = vld [vmem:[%s305 + $0x8] sm:$0xff]
        %v334 = vld [vmem:[%s305 + $0x10] sm:$0xff]
        %v335 = vld [vmem:[%s305 + $0x18] sm:$0xff]
        %v336 = vld [vmem:[%s243] sm:$0xff]
        %v337 = vld [vmem:[%s243 + $0x8] sm:$0xff]
        %v338 = vld [vmem:[%s243 + $0x10] sm:$0xff]
        %v339 = vld [vmem:[%s243 + $0x18] sm:$0xff]
        %v340 = vld [vmem:[%s243 + $0x20] sm:$0xff]
        %v341 = vld [vmem:[%s243 + $0x28] sm:$0xff]
        %v342 = vld [vmem:[%s243 + $0x30] sm:$0xff]
        %v343 = vld [vmem:[%s243 + $0x38] sm:$0xff]
        %v344 = vld [vmem:[%s243 + $0x40] sm:$0xff]
        %v345 = vld [vmem:[%s243 + $0x48] sm:$0xff]
        %v346 = vld [vmem:[%s243 + $0x50] sm:$0xff]
        %v347 = vld [vmem:[%s243 + $0x58] sm:$0xff]
        %v348 = vld [vmem:[%s243 + $0x60] sm:$0xff]
        %v349 = vld [vmem:[%s243 + $0x68] sm:$0xff]
        %v350 = vld [vmem:[%s243 + $0x70] sm:$0xff]
        %v351 = vld [vmem:[%s243 + $0x78] sm:$0xff]
        %v352 = vld [vmem:[%s243 + $0x80] sm:$0xff]
        %v353 = vld [vmem:[%s243 + $0x88] sm:$0xff]
        %v354 = vld [vmem:[%s243 + $0x90] sm:$0xff]
        %v355 = vld [vmem:[%s243 + $0x98] sm:$0xff]
        %v356 = vld [vmem:[%s243 + $0xa0] sm:$0xff]
        %v357 = vld [vmem:[%s243 + $0xa8] sm:$0xff]
        %v358 = vld [vmem:[%s243 + $0xb0] sm:$0xff]
        %v359 = vld [vmem:[%s243 + $0xb8] sm:$0xff]
        %v360 = vld [vmem:[%s243 + $0xc0] sm:$0xff]
        %v361 = vld [vmem:[%s243 + $0xc8] sm:$0xff]
        %v362 = vld [vmem:[%s243 + $0xd0] sm:$0xff]
        %v363 = vld [vmem:[%s243 + $0xd8] sm:$0xff]
        %v364 = vld [vmem:[%s243 + $0xe0] sm:$0xff]
        %v365 = vld [vmem:[%s243 + $0xe8] sm:$0xff]
        %v366 = vld [vmem:[%s243 + $0xf0] sm:$0xff]
        %v367 = vld [vmem:[%s243 + $0xf8] sm:$0xff]
        %v368 = vld [vmem:[%s243 + $0x100] sm:$0xff]
        %v369 = vld [vmem:[%s243 + $0x108] sm:$0xff]
        %v370 = vld [vmem:[%s243 + $0x110] sm:$0xff]
        %v371 = vld [vmem:[%s243 + $0x118] sm:$0xff]
        %v372 = vld [vmem:[%s243 + $0x120] sm:$0xff]
        %v373 = vld [vmem:[%s243 + $0x128] sm:$0xff]
        %v374 = vld [vmem:[%s243 + $0x130] sm:$0xff]
        %v375 = vld [vmem:[%s243 + $0x138] sm:$0xff]
        %v376 = vld [vmem:[%s243 + $0x140] sm:$0xff]
        %v377 = vld [vmem:[%s243 + $0x148] sm:$0xff]
        %v378 = vld [vmem:[%s243 + $0x150] sm:$0xff]
        %v379 = vld [vmem:[%s243 + $0x158] sm:$0xff]
        %v380 = vld [vmem:[%s243 + $0x160] sm:$0xff]
        %v381 = vld [vmem:[%s243 + $0x168] sm:$0xff]
        %v382 = vld [vmem:[%s243 + $0x170] sm:$0xff]
        %v383 = vld [vmem:[%s243 + $0x178] sm:$0xff]
        %v384 = vld [vmem:[%s243 + $0x180] sm:$0xff]
        %v385 = vld [vmem:[%s243 + $0x188] sm:$0xff]
        %v386 = vld [vmem:[%s243 + $0x190] sm:$0xff]
        %v387 = vld [vmem:[%s243 + $0x198] sm:$0xff]
        %v388 = vld [vmem:[%s243 + $0x1a0] sm:$0xff]
        %v389 = vld [vmem:[%s243 + $0x1a8] sm:$0xff]
        %v390 = vld [vmem:[%s243 + $0x1b0] sm:$0xff]
        %v391 = vld [vmem:[%s243 + $0x1b8] sm:$0xff]
        %v392 = vld [vmem:[%s243 + $0x1c0] sm:$0xff]
        %v393 = vld [vmem:[%s243 + $0x1c8] sm:$0xff]
        %v394 = vld [vmem:[%s243 + $0x1d0] sm:$0xff]
        %v395 = vld [vmem:[%s243 + $0x1d8] sm:$0xff]
        %v396 = vld [vmem:[%s243 + $0x1e0] sm:$0xff]
        %v397 = vld [vmem:[%s243 + $0x1e8] sm:$0xff]
        %v398 = vld [vmem:[%s243 + $0x1f0] sm:$0xff]
        %v399 = vld [vmem:[%s243 + $0x1f8] sm:$0xff]
        %v400 = vld [vmem:[%s243 + $0x200] sm:$0xff]
        %v401 = vld [vmem:[%s243 + $0x208] sm:$0xff]
        %v402 = vld [vmem:[%s243 + $0x210] sm:$0xff]
        %v403 = vld [vmem:[%s243 + $0x218] sm:$0xff]
        %v404 = vld [vmem:[%s243 + $0x220] sm:$0xff]
        %v405 = vld [vmem:[%s243 + $0x228] sm:$0xff]
        %v406 = vld [vmem:[%s243 + $0x230] sm:$0xff]
        %v407 = vld [vmem:[%s243 + $0x238] sm:$0xff]
        %v408 = vld [vmem:[%s243 + $0x240] sm:$0xff]
        %v409 = vld [vmem:[%s243 + $0x248] sm:$0xff]
        %v410 = vld [vmem:[%s243 + $0x250] sm:$0xff]
        %v411 = vld [vmem:[%s243 + $0x258] sm:$0xff]
        %v412 = vld [vmem:[%s243 + $0x260] sm:$0xff]
        %v413 = vld [vmem:[%s243 + $0x268] sm:$0xff]
        %v414 = vld [vmem:[%s243 + $0x270] sm:$0xff]
        %v415 = vld [vmem:[%s243 + $0x278] sm:$0xff]
        %v416 = vld [vmem:[%s243 + $0x280] sm:$0xff]
        %v417 = vld [vmem:[%s243 + $0x288] sm:$0xff]
        %v418 = vld [vmem:[%s243 + $0x290] sm:$0xff]
        %v419 = vld [vmem:[%s243 + $0x298] sm:$0xff]
        %v420 = vld [vmem:[%s243 + $0x2a0] sm:$0xff]
        %v421 = vld [vmem:[%s243 + $0x2a8] sm:$0xff]
        %v422 = vld [vmem:[%s243 + $0x2b0] sm:$0xff]
        %v423 = vld [vmem:[%s243 + $0x2b8] sm:$0xff]
        %v424 = vld [vmem:[%s243 + $0x2c0] sm:$0xff]
        %v425 = vld [vmem:[%s243 + $0x2c8] sm:$0xff]
        %v426 = vld [vmem:[%s243 + $0x2d0] sm:$0xff]
        %v427 = vld [vmem:[%s243 + $0x2d8] sm:$0xff]
        %v428 = vld [vmem:[%s243 + $0x2e0] sm:$0xff]
        %v429 = vld [vmem:[%s243 + $0x2e8] sm:$0xff]
        %v430 = vld [vmem:[%s243 + $0x2f0] sm:$0xff]
        %v431 = vld [vmem:[%s243 + $0x2f8] sm:$0xff]
        %v432 = vld [vmem:[%s243 + $0x300] sm:$0xff]
        %v433 = vld [vmem:[%s243 + $0x308] sm:$0xff]
        %v434 = vld [vmem:[%s243 + $0x310] sm:$0xff]
        %v435 = vld [vmem:[%s243 + $0x318] sm:$0xff]
        %v436 = vld [vmem:[%s243 + $0x320] sm:$0xff]
        %v437 = vld [vmem:[%s243 + $0x328] sm:$0xff]
        %v438 = vld [vmem:[%s243 + $0x330] sm:$0xff]
        %v439 = vld [vmem:[%s243 + $0x338] sm:$0xff]
        %v440 = vld [vmem:[%s243 + $0x340] sm:$0xff]
        %v441 = vld [vmem:[%s243 + $0x348] sm:$0xff]
        %v442 = vld [vmem:[%s243 + $0x350] sm:$0xff]
        %v443 = vld [vmem:[%s243 + $0x358] sm:$0xff]
        %v444 = vld [vmem:[%s243 + $0x360] sm:$0xff]
        %v445 = vld [vmem:[%s243 + $0x368] sm:$0xff]
        %v446 = vld [vmem:[%s243 + $0x370] sm:$0xff]
        %v447 = vld [vmem:[%s243 + $0x378] sm:$0xff]
        %v448 = vld [vmem:[%s243 + $0x380] sm:$0xff]
        %v449 = vld [vmem:[%s243 + $0x388] sm:$0xff]
        %v450 = vld [vmem:[%s243 + $0x390] sm:$0xff]
        %v451 = vld [vmem:[%s243 + $0x398] sm:$0xff]
        %v452 = vld [vmem:[%s243 + $0x3a0] sm:$0xff]
        %v453 = vld [vmem:[%s243 + $0x3a8] sm:$0xff]
        %v454 = vld [vmem:[%s243 + $0x3b0] sm:$0xff]
        %v455 = vld [vmem:[%s243 + $0x3b8] sm:$0xff]
        %v456 = vld [vmem:[%s243 + $0x3c0] sm:$0xff]
        %v457 = vld [vmem:[%s243 + $0x3c8] sm:$0xff]
        %v458 = vld [vmem:[%s243 + $0x3d0] sm:$0xff]
        %v459 = vld [vmem:[%s243 + $0x3d8] sm:$0xff]
        %v460 = vld [vmem:[%s243 + $0x3e0] sm:$0xff]
        %v461 = vld [vmem:[%s243 + $0x3e8] sm:$0xff]
        %v462 = vld [vmem:[%s243 + $0x3f0] sm:$0xff]
        %v463 = vld [vmem:[%s243 + $0x3f8] sm:$0xff]
        %v468 = vunpack.c.l.b16 %v332
        %v469 = vunpack.c.h.b16 %v332
        %v470 = vunpack.c.l.b16 %v333
        %v471 = vunpack.c.h.b16 %v333
        %v472 = vunpack.c.l.b16 %v334
        %v473 = vunpack.c.h.b16 %v334
        %v474 = vunpack.c.l.b16 %v335
        %v475 = vunpack.c.h.b16 %v335
        %v476 = vpack.c.b16 %v468, %v468
        %v477 = vpack.c.b16 %v469, %v469
        %v478 = vpack.c.b16 %v470, %v470
        %v479 = vpack.c.b16 %v471, %v471
        %v480 = vpack.c.b16 %v472, %v472
        %v481 = vpack.c.b16 %v473, %v473
        %v482 = vpack.c.b16 %v474, %v474
        %v483 = vpack.c.b16 %v475, %v475
        %v620 = vunpack.c.l.b16 %v336
        %v621 = vunpack.c.h.b16 %v336
        %v622 = vunpack.c.l.b16 %v337
        %v623 = vunpack.c.h.b16 %v337
        %v624 = vunpack.c.l.b16 %v338
        %v625 = vunpack.c.h.b16 %v338
        %v626 = vunpack.c.l.b16 %v339
        %v627 = vunpack.c.h.b16 %v339
        %v628 = vunpack.c.l.b16 %v340
        %v629 = vunpack.c.h.b16 %v340
        %v630 = vunpack.c.l.b16 %v341
        %v631 = vunpack.c.h.b16 %v341
        %v632 = vunpack.c.l.b16 %v342
        %v633 = vunpack.c.h.b16 %v342
        %v634 = vunpack.c.l.b16 %v343
        %v635 = vunpack.c.h.b16 %v343
        %v636 = vunpack.c.l.b16 %v344
        %v637 = vunpack.c.h.b16 %v344
        %v638 = vunpack.c.l.b16 %v345
        %v639 = vunpack.c.h.b16 %v345
        %v640 = vunpack.c.l.b16 %v346
        %v641 = vunpack.c.h.b16 %v346
        %v642 = vunpack.c.l.b16 %v347
        %v643 = vunpack.c.h.b16 %v347
        %v644 = vunpack.c.l.b16 %v348
        %v645 = vunpack.c.h.b16 %v348
        %v646 = vunpack.c.l.b16 %v349
        %v647 = vunpack.c.h.b16 %v349
        %v648 = vunpack.c.l.b16 %v350
        %v649 = vunpack.c.h.b16 %v350
        %v650 = vunpack.c.l.b16 %v351
        %v651 = vunpack.c.h.b16 %v351
        %v652 = vunpack.c.l.b16 %v352
        %v653 = vunpack.c.h.b16 %v352
        %v654 = vunpack.c.l.b16 %v353
        %v655 = vunpack.c.h.b16 %v353
        %v656 = vunpack.c.l.b16 %v354
        %v657 = vunpack.c.h.b16 %v354
        %v658 = vunpack.c.l.b16 %v355
        %v659 = vunpack.c.h.b16 %v355
        %v660 = vunpack.c.l.b16 %v356
        %v661 = vunpack.c.h.b16 %v356
        %v662 = vunpack.c.l.b16 %v357
        %v663 = vunpack.c.h.b16 %v357
        %v664 = vunpack.c.l.b16 %v358
        %v665 = vunpack.c.h.b16 %v358
        %v666 = vunpack.c.l.b16 %v359
        %v667 = vunpack.c.h.b16 %v359
        %v668 = vunpack.c.l.b16 %v360
        %v669 = vunpack.c.h.b16 %v360
        %v670 = vunpack.c.l.b16 %v361
        %v671 = vunpack.c.h.b16 %v361
        %v672 = vunpack.c.l.b16 %v362
        %v673 = vunpack.c.h.b16 %v362
        %v674 = vunpack.c.l.b16 %v363
        %v675 = vunpack.c.h.b16 %v363
        %v676 = vunpack.c.l.b16 %v364
        %v677 = vunpack.c.h.b16 %v364
        %v678 = vunpack.c.l.b16 %v365
        %v679 = vunpack.c.h.b16 %v365
        %v680 = vunpack.c.l.b16 %v366
        %v681 = vunpack.c.h.b16 %v366
        %v682 = vunpack.c.l.b16 %v367
        %v683 = vunpack.c.h.b16 %v367
        %v684 = vunpack.c.l.b16 %v368
        %v685 = vunpack.c.h.b16 %v368
        %v686 = vunpack.c.l.b16 %v369
        %v687 = vunpack.c.h.b16 %v369
        %v688 = vunpack.c.l.b16 %v370
        %v689 = vunpack.c.h.b16 %v370
        %v690 = vunpack.c.l.b16 %v371
        %v691 = vunpack.c.h.b16 %v371
        %v692 = vunpack.c.l.b16 %v372
        %v693 = vunpack.c.h.b16 %v372
        %v694 = vunpack.c.l.b16 %v373
        %v695 = vunpack.c.h.b16 %v373
        %v696 = vunpack.c.l.b16 %v374
        %v697 = vunpack.c.h.b16 %v374
        %v698 = vunpack.c.l.b16 %v375
        %v699 = vunpack.c.h.b16 %v375
        %v700 = vunpack.c.l.b16 %v376
        %v701 = vunpack.c.h.b16 %v376
        %v702 = vunpack.c.l.b16 %v377
        %v703 = vunpack.c.h.b16 %v377
        %v704 = vunpack.c.l.b16 %v378
        %v705 = vunpack.c.h.b16 %v378
        %v706 = vunpack.c.l.b16 %v379
        %v707 = vunpack.c.h.b16 %v379
        %v708 = vunpack.c.l.b16 %v380
        %v709 = vunpack.c.h.b16 %v380
        %v710 = vunpack.c.l.b16 %v381
        %v711 = vunpack.c.h.b16 %v381
        %v712 = vunpack.c.l.b16 %v382
        %v713 = vunpack.c.h.b16 %v382
        %v714 = vunpack.c.l.b16 %v383
        %v715 = vunpack.c.h.b16 %v383
        %v716 = vunpack.c.l.b16 %v384
        %v717 = vunpack.c.h.b16 %v384
        %v718 = vunpack.c.l.b16 %v385
        %v719 = vunpack.c.h.b16 %v385
        %v720 = vunpack.c.l.b16 %v386
        %v721 = vunpack.c.h.b16 %v386
        %v722 = vunpack.c.l.b16 %v387
        %v723 = vunpack.c.h.b16 %v387
        %v724 = vunpack.c.l.b16 %v388
        %v725 = vunpack.c.h.b16 %v388
        %v726 = vunpack.c.l.b16 %v389
        %v727 = vunpack.c.h.b16 %v389
        %v728 = vunpack.c.l.b16 %v390
        %v729 = vunpack.c.h.b16 %v390
        %v730 = vunpack.c.l.b16 %v391
        %v731 = vunpack.c.h.b16 %v391
        %v732 = vunpack.c.l.b16 %v392
        %v733 = vunpack.c.h.b16 %v392
        %v734 = vunpack.c.l.b16 %v393
        %v735 = vunpack.c.h.b16 %v393
        %v736 = vunpack.c.l.b16 %v394
        %v737 = vunpack.c.h.b16 %v394
        %v738 = vunpack.c.l.b16 %v395
        %v739 = vunpack.c.h.b16 %v395
        %v740 = vunpack.c.l.b16 %v396
        %v741 = vunpack.c.h.b16 %v396
        %v742 = vunpack.c.l.b16 %v397
        %v743 = vunpack.c.h.b16 %v397
        %v744 = vunpack.c.l.b16 %v398
        %v745 = vunpack.c.h.b16 %v398
        %v746 = vunpack.c.l.b16 %v399
        %v747 = vunpack.c.h.b16 %v399
        %v748 = vunpack.c.l.b16 %v400
        %v749 = vunpack.c.h.b16 %v400
        %v750 = vunpack.c.l.b16 %v401
        %v751 = vunpack.c.h.b16 %v401
        %v752 = vunpack.c.l.b16 %v402
        %v753 = vunpack.c.h.b16 %v402
        %v754 = vunpack.c.l.b16 %v403
        %v755 = vunpack.c.h.b16 %v403
        %v756 = vunpack.c.l.b16 %v404
        %v757 = vunpack.c.h.b16 %v404
        %v758 = vunpack.c.l.b16 %v405
        %v759 = vunpack.c.h.b16 %v405
        %v760 = vunpack.c.l.b16 %v406
        %v761 = vunpack.c.h.b16 %v406
        %v762 = vunpack.c.l.b16 %v407
        %v763 = vunpack.c.h.b16 %v407
        %v764 = vunpack.c.l.b16 %v408
        %v765 = vunpack.c.h.b16 %v408
        %v766 = vunpack.c.l.b16 %v409
        %v767 = vunpack.c.h.b16 %v409
        %v768 = vunpack.c.l.b16 %v410
        %v769 = vunpack.c.h.b16 %v410
        %v770 = vunpack.c.l.b16 %v411
        %v771 = vunpack.c.h.b16 %v411
        %v772 = vunpack.c.l.b16 %v412
        %v773 = vunpack.c.h.b16 %v412
        %v774 = vunpack.c.l.b16 %v413
        %v775 = vunpack.c.h.b16 %v413
        %v776 = vunpack.c.l.b16 %v414
        %v777 = vunpack.c.h.b16 %v414
        %v778 = vunpack.c.l.b16 %v415
        %v779 = vunpack.c.h.b16 %v415
        %v780 = vunpack.c.l.b16 %v416
        %v781 = vunpack.c.h.b16 %v416
        %v782 = vunpack.c.l.b16 %v417
        %v783 = vunpack.c.h.b16 %v417
        %v784 = vunpack.c.l.b16 %v418
        %v785 = vunpack.c.h.b16 %v418
        %v786 = vunpack.c.l.b16 %v419
        %v787 = vunpack.c.h.b16 %v419
        %v788 = vunpack.c.l.b16 %v420
        %v789 = vunpack.c.h.b16 %v420
        %v790 = vunpack.c.l.b16 %v421
        %v791 = vunpack.c.h.b16 %v421
        %v792 = vunpack.c.l.b16 %v422
        %v793 = vunpack.c.h.b16 %v422
        %v794 = vunpack.c.l.b16 %v423
        %v795 = vunpack.c.h.b16 %v423
        %v796 = vunpack.c.l.b16 %v424
        %v797 = vunpack.c.h.b16 %v424
        %v798 = vunpack.c.l.b16 %v425
        %v799 = vunpack.c.h.b16 %v425
        %v800 = vunpack.c.l.b16 %v426
        %v801 = vunpack.c.h.b16 %v426
        %v802 = vunpack.c.l.b16 %v427
        %v803 = vunpack.c.h.b16 %v427
        %v804 = vunpack.c.l.b16 %v428
        %v805 = vunpack.c.h.b16 %v428
        %v806 = vunpack.c.l.b16 %v429
        %v807 = vunpack.c.h.b16 %v429
        %v808 = vunpack.c.l.b16 %v430
        %v809 = vunpack.c.h.b16 %v430
        %v810 = vunpack.c.l.b16 %v431
        %v811 = vunpack.c.h.b16 %v431
        %v812 = vunpack.c.l.b16 %v432
        %v813 = vunpack.c.h.b16 %v432
        %v814 = vunpack.c.l.b16 %v433
        %v815 = vunpack.c.h.b16 %v433
        %v816 = vunpack.c.l.b16 %v434
        %v817 = vunpack.c.h.b16 %v434
        %v818 = vunpack.c.l.b16 %v435
        %v819 = vunpack.c.h.b16 %v435
        %v820 = vunpack.c.l.b16 %v436
        %v821 = vunpack.c.h.b16 %v436
        %v822 = vunpack.c.l.b16 %v437
        %v823 = vunpack.c.h.b16 %v437
        %v824 = vunpack.c.l.b16 %v438
        %v825 = vunpack.c.h.b16 %v438
        %v826 = vunpack.c.l.b16 %v439
        %v827 = vunpack.c.h.b16 %v439
        %v828 = vunpack.c.l.b16 %v440
        %v829 = vunpack.c.h.b16 %v440
        %v830 = vunpack.c.l.b16 %v441
        %v831 = vunpack.c.h.b16 %v441
        %v832 = vunpack.c.l.b16 %v442
        %v833 = vunpack.c.h.b16 %v442
        %v834 = vunpack.c.l.b16 %v443
        %v835 = vunpack.c.h.b16 %v443
        %v836 = vunpack.c.l.b16 %v444
        %v837 = vunpack.c.h.b16 %v444
        %v838 = vunpack.c.l.b16 %v445
        %v839 = vunpack.c.h.b16 %v445
        %v840 = vunpack.c.l.b16 %v446
        %v841 = vunpack.c.h.b16 %v446
        %v842 = vunpack.c.l.b16 %v447
        %v843 = vunpack.c.h.b16 %v447
        %v844 = vunpack.c.l.b16 %v448
        %v845 = vunpack.c.h.b16 %v448
        %v846 = vunpack.c.l.b16 %v449
        %v847 = vunpack.c.h.b16 %v449
        %v848 = vunpack.c.l.b16 %v450
        %v849 = vunpack.c.h.b16 %v450
        %v850 = vunpack.c.l.b16 %v451
        %v851 = vunpack.c.h.b16 %v451
        %v852 = vunpack.c.l.b16 %v452
        %v853 = vunpack.c.h.b16 %v452
        %v854 = vunpack.c.l.b16 %v453
        %v855 = vunpack.c.h.b16 %v453
        %v856 = vunpack.c.l.b16 %v454
        %v857 = vunpack.c.h.b16 %v454
        %v858 = vunpack.c.l.b16 %v455
        %v859 = vunpack.c.h.b16 %v455
        %v860 = vunpack.c.l.b16 %v456
        %v861 = vunpack.c.h.b16 %v456
        %v862 = vunpack.c.l.b16 %v457
        %v863 = vunpack.c.h.b16 %v457
        %v864 = vunpack.c.l.b16 %v458
        %v865 = vunpack.c.h.b16 %v458
        %v866 = vunpack.c.l.b16 %v459
        %v867 = vunpack.c.h.b16 %v459
        %v868 = vunpack.c.l.b16 %v460
        %v869 = vunpack.c.h.b16 %v460
        %v870 = vunpack.c.l.b16 %v461
        %v871 = vunpack.c.h.b16 %v461
        %v872 = vunpack.c.l.b16 %v462
        %v873 = vunpack.c.h.b16 %v462
        %v874 = vunpack.c.l.b16 %v463
        %v875 = vunpack.c.h.b16 %v463
        %v876 = vpack.c.b16 %v622, %v620
        %v877 = vpack.c.b16 %v623, %v621
        %v878 = vpack.c.b16 %v626, %v624
        %v879 = vpack.c.b16 %v627, %v625
        %v880 = vpack.c.b16 %v630, %v628
        %v881 = vpack.c.b16 %v631, %v629
        %v882 = vpack.c.b16 %v634, %v632
        %v883 = vpack.c.b16 %v635, %v633
        %v884 = vpack.c.b16 %v638, %v636
        %v885 = vpack.c.b16 %v639, %v637
        %v886 = vpack.c.b16 %v642, %v640
        %v887 = vpack.c.b16 %v643, %v641
        %v888 = vpack.c.b16 %v646, %v644
        %v889 = vpack.c.b16 %v647, %v645
        %v890 = vpack.c.b16 %v650, %v648
        %v891 = vpack.c.b16 %v651, %v649
        %v892 = vpack.c.b16 %v654, %v652
        %v893 = vpack.c.b16 %v655, %v653
        %v894 = vpack.c.b16 %v658, %v656
        %v895 = vpack.c.b16 %v659, %v657
        %v896 = vpack.c.b16 %v662, %v660
        %v897 = vpack.c.b16 %v663, %v661
        %v898 = vpack.c.b16 %v666, %v664
        %v899 = vpack.c.b16 %v667, %v665
        %v900 = vpack.c.b16 %v670, %v668
        %v901 = vpack.c.b16 %v671, %v669
        %v902 = vpack.c.b16 %v674, %v672
        %v903 = vpack.c.b16 %v675, %v673
        %v904 = vpack.c.b16 %v678, %v676
        %v905 = vpack.c.b16 %v679, %v677
        %v906 = vpack.c.b16 %v682, %v680
        %v907 = vpack.c.b16 %v683, %v681
        %v908 = vpack.c.b16 %v686, %v684
        %v909 = vpack.c.b16 %v687, %v685
        %v910 = vpack.c.b16 %v690, %v688
        %v911 = vpack.c.b16 %v691, %v689
        %v912 = vpack.c.b16 %v694, %v692
        %v913 = vpack.c.b16 %v695, %v693
        %v914 = vpack.c.b16 %v698, %v696
        %v915 = vpack.c.b16 %v699, %v697
        %v916 = vpack.c.b16 %v702, %v700
        %v917 = vpack.c.b16 %v703, %v701
        %v918 = vpack.c.b16 %v706, %v704
        %v919 = vpack.c.b16 %v707, %v705
        %v920 = vpack.c.b16 %v710, %v708
        %v921 = vpack.c.b16 %v711, %v709
        %v922 = vpack.c.b16 %v714, %v712
        %v923 = vpack.c.b16 %v715, %v713
        %v924 = vpack.c.b16 %v718, %v716
        %v925 = vpack.c.b16 %v719, %v717
        %v926 = vpack.c.b16 %v722, %v720
        %v927 = vpack.c.b16 %v723, %v721
        %v928 = vpack.c.b16 %v726, %v724
        %v929 = vpack.c.b16 %v727, %v725
        %v930 = vpack.c.b16 %v730, %v728
        %v931 = vpack.c.b16 %v731, %v729
        %v932 = vpack.c.b16 %v734, %v732
        %v933 = vpack.c.b16 %v735, %v733
        %v934 = vpack.c.b16 %v738, %v736
        %v935 = vpack.c.b16 %v739, %v737
        %v936 = vpack.c.b16 %v742, %v740
        %v937 = vpack.c.b16 %v743, %v741
        %v938 = vpack.c.b16 %v746, %v744
        %v939 = vpack.c.b16 %v747, %v745
        %v940 = vpack.c.b16 %v750, %v748
        %v941 = vpack.c.b16 %v751, %v749
        %v942 = vpack.c.b16 %v754, %v752
        %v943 = vpack.c.b16 %v755, %v753
        %v944 = vpack.c.b16 %v758, %v756
        %v945 = vpack.c.b16 %v759, %v757
        %v946 = vpack.c.b16 %v762, %v760
        %v947 = vpack.c.b16 %v763, %v761
        %v948 = vpack.c.b16 %v766, %v764
        %v949 = vpack.c.b16 %v767, %v765
        %v950 = vpack.c.b16 %v770, %v768
        %v951 = vpack.c.b16 %v771, %v769
        %v952 = vpack.c.b16 %v774, %v772
        %v953 = vpack.c.b16 %v775, %v773
        %v954 = vpack.c.b16 %v778, %v776
        %v955 = vpack.c.b16 %v779, %v777
        %v956 = vpack.c.b16 %v782, %v780
        %v957 = vpack.c.b16 %v783, %v781
        %v958 = vpack.c.b16 %v786, %v784
        %v959 = vpack.c.b16 %v787, %v785
        %v960 = vpack.c.b16 %v790, %v788
        %v961 = vpack.c.b16 %v791, %v789
        %v962 = vpack.c.b16 %v794, %v792
        %v963 = vpack.c.b16 %v795, %v793
        %v964 = vpack.c.b16 %v798, %v796
        %v965 = vpack.c.b16 %v799, %v797
        %v966 = vpack.c.b16 %v802, %v800
        %v967 = vpack.c.b16 %v803, %v801
        %v968 = vpack.c.b16 %v806, %v804
        %v969 = vpack.c.b16 %v807, %v805
        %v970 = vpack.c.b16 %v810, %v808
        %v971 = vpack.c.b16 %v811, %v809
        %v972 = vpack.c.b16 %v814, %v812
        %v973 = vpack.c.b16 %v815, %v813
        %v974 = vpack.c.b16 %v818, %v816
        %v975 = vpack.c.b16 %v819, %v817
        %v976 = vpack.c.b16 %v822, %v820
        %v977 = vpack.c.b16 %v823, %v821
        %v978 = vpack.c.b16 %v826, %v824
        %v979 = vpack.c.b16 %v827, %v825
        %v980 = vpack.c.b16 %v830, %v828
        %v981 = vpack.c.b16 %v831, %v829
        %v982 = vpack.c.b16 %v834, %v832
        %v983 = vpack.c.b16 %v835, %v833
        %v984 = vpack.c.b16 %v838, %v836
        %v985 = vpack.c.b16 %v839, %v837
        %v986 = vpack.c.b16 %v842, %v840
        %v987 = vpack.c.b16 %v843, %v841
        %v988 = vpack.c.b16 %v846, %v844
        %v989 = vpack.c.b16 %v847, %v845
        %v990 = vpack.c.b16 %v850, %v848
        %v991 = vpack.c.b16 %v851, %v849
        %v992 = vpack.c.b16 %v854, %v852
        %v993 = vpack.c.b16 %v855, %v853
        %v994 = vpack.c.b16 %v858, %v856
        %v995 = vpack.c.b16 %v859, %v857
        %v996 = vpack.c.b16 %v862, %v860
        %v997 = vpack.c.b16 %v863, %v861
        %v998 = vpack.c.b16 %v866, %v864
        %v999 = vpack.c.b16 %v867, %v865
        %v1000 = vpack.c.b16 %v870, %v868
        %v1001 = vpack.c.b16 %v871, %v869
        %v1002 = vpack.c.b16 %v874, %v872
        %v1003 = vpack.c.b16 %v875, %v873
        %1132 = vmatpush.bf16.msra.mxu0 %v890
        %1133 = vmatpush.bf16.msra.mxu0 %v888
        %1134 = vmatpush.bf16.msra.mxu0 %v886
        %1135 = vmatpush.bf16.msra.mxu0 %v884
        %1136 = vmatpush.bf16.msra.mxu0 %v882
        %1137 = vmatpush.bf16.msra.mxu0 %v880
        %1138 = vmatpush.bf16.msra.mxu0 %v878
        %1139 = vmatpush.bf16.msra.mxu0 %v876
        %1140 = vmatmul.bf16.gmra.mxu0 %v476
        %v1141 = vpop.f32.mrf.mxu0
        %v1142 = vadd.f32 0.0, %v1141
        %v1143 = vpop.f32.mrf.mxu0
        %1144 = vdwg.mxu0
        %1145 = vmatpush.bf16.msra.mxu0 %v906
        %1146 = vmatpush.bf16.msra.mxu0 %v904
        %1147 = vmatpush.bf16.msra.mxu0 %v902
        %1148 = vmatpush.bf16.msra.mxu0 %v900
        %1149 = vmatpush.bf16.msra.mxu0 %v898
        %1150 = vmatpush.bf16.msra.mxu0 %v896
        %1151 = vmatpush.bf16.msra.mxu0 %v894
        %1152 = vmatpush.bf16.msra.mxu0 %v892
        %1153 = vmatmul.bf16.gmra.mxu0 %v477
        %v1154 = vpop.f32.mrf.mxu0
        %v1155 = vadd.f32 %v1142, %v1154
        %v1156 = vpop.f32.mrf.mxu0
        %1157 = vdwg.mxu0
        %1158 = vmatpush.bf16.msra.mxu0 %v922
        %1159 = vmatpush.bf16.msra.mxu0 %v920
        %1160 = vmatpush.bf16.msra.mxu0 %v918
        %1161 = vmatpush.bf16.msra.mxu0 %v916
        %1162 = vmatpush.bf16.msra.mxu0 %v914
        %1163 = vmatpush.bf16.msra.mxu0 %v912
        %1164 = vmatpush.bf16.msra.mxu0 %v910
        %1165 = vmatpush.bf16.msra.mxu0 %v908
        %1166 = vmatmul.bf16.gmra.mxu0 %v478
        %v1167 = vpop.f32.mrf.mxu0
        %v1168 = vadd.f32 %v1155, %v1167
        %v1169 = vpop.f32.mrf.mxu0
        %1170 = vdwg.mxu0
        %1171 = vmatpush.bf16.msra.mxu0 %v938
        %1172 = vmatpush.bf16.msra.mxu0 %v936
        %1173 = vmatpush.bf16.msra.mxu0 %v934
        %1174 = vmatpush.bf16.msra.mxu0 %v932
        %1175 = vmatpush.bf16.msra.mxu0 %v930
        %1176 = vmatpush.bf16.msra.mxu0 %v928
        %1177 = vmatpush.bf16.msra.mxu0 %v926
        %1178 = vmatpush.bf16.msra.mxu0 %v924
        %1179 = vmatmul.bf16.gmra.mxu0 %v479
        %v1180 = vpop.f32.mrf.mxu0
        %v1181 = vadd.f32 %v1168, %v1180
        %v1182 = vpop.f32.mrf.mxu0
        %1183 = vdwg.mxu0
        %1184 = vmatpush.bf16.msra.mxu0 %v954
        %1185 = vmatpush.bf16.msra.mxu0 %v952
        %1186 = vmatpush.bf16.msra.mxu0 %v950
        %1187 = vmatpush.bf16.msra.mxu0 %v948
        %1188 = vmatpush.bf16.msra.mxu0 %v946
        %1189 = vmatpush.bf16.msra.mxu0 %v944
        %1190 = vmatpush.bf16.msra.mxu0 %v942
        %1191 = vmatpush.bf16.msra.mxu0 %v940
        %1192 = vmatmul.bf16.gmra.mxu0 %v480
        %v1193 = vpop.f32.mrf.mxu0
        %v1194 = vadd.f32 %v1181, %v1193
        %v1195 = vpop.f32.mrf.mxu0
        %1196 = vdwg.mxu0
        %1197 = vmatpush.bf16.msra.mxu0 %v970
        %1198 = vmatpush.bf16.msra.mxu0 %v968
        %1199 = vmatpush.bf16.msra.mxu0 %v966
        %1200 = vmatpush.bf16.msra.mxu0 %v964
        %1201 = vmatpush.bf16.msra.mxu0 %v962
        %1202 = vmatpush.bf16.msra.mxu0 %v960
        %1203 = vmatpush.bf16.msra.mxu0 %v958
        %1204 = vmatpush.bf16.msra.mxu0 %v956
        %1205 = vmatmul.bf16.gmra.mxu0 %v481
        %v1206 = vpop.f32.mrf.mxu0
        %v1207 = vadd.f32 %v1194, %v1206
        %v1208 = vpop.f32.mrf.mxu0
        %1209 = vdwg.mxu0
        %1210 = vmatpush.bf16.msra.mxu0 %v986
        %1211 = vmatpush.bf16.msra.mxu0 %v984
        %1212 = vmatpush.bf16.msra.mxu0 %v982
        %1213 = vmatpush.bf16.msra.mxu0 %v980
        %1214 = vmatpush.bf16.msra.mxu0 %v978
        %1215 = vmatpush.bf16.msra.mxu0 %v976
        %1216 = vmatpush.bf16.msra.mxu0 %v974
        %1217 = vmatpush.bf16.msra.mxu0 %v972
        %1218 = vmatmul.bf16.gmra.mxu0 %v482
        %v1219 = vpop.f32.mrf.mxu0
        %v1220 = vadd.f32 %v1207, %v1219
        %v1221 = vpop.f32.mrf.mxu0
        %1222 = vdwg.mxu0
        %1223 = vmatpush.bf16.msra.mxu0 %v1002
        %1224 = vmatpush.bf16.msra.mxu0 %v1000
        %1225 = vmatpush.bf16.msra.mxu0 %v998
        %1226 = vmatpush.bf16.msra.mxu0 %v996
        %1227 = vmatpush.bf16.msra.mxu0 %v994
        %1228 = vmatpush.bf16.msra.mxu0 %v992
        %1229 = vmatpush.bf16.msra.mxu0 %v990
        %1230 = vmatpush.bf16.msra.mxu0 %v988
        %1231 = vmatmul.bf16.gmra.mxu0 %v483
        %v1232 = vpop.f32.mrf.mxu0
        %v1233 = vadd.f32 %v1220, %v1232
        %v1234 = vpop.f32.mrf.mxu0
        %1235 = vdwg.mxu0
        %1236 = vmatpush.bf16.msra.mxu0 %v891
        %1237 = vmatpush.bf16.msra.mxu0 %v889
        %1238 = vmatpush.bf16.msra.mxu0 %v887
        %1239 = vmatpush.bf16.msra.mxu0 %v885
        %1240 = vmatpush.bf16.msra.mxu0 %v883
        %1241 = vmatpush.bf16.msra.mxu0 %v881
        %1242 = vmatpush.bf16.msra.mxu0 %v879
        %1243 = vmatpush.bf16.msra.mxu0 %v877
        %1244 = vmatmul.bf16.gmra.mxu0 %v476
        %v1245 = vpop.f32.mrf.mxu0
        %v1246 = vadd.f32 0.0, %v1245
        %v1247 = vpop.f32.mrf.mxu0
        %1248 = vdwg.mxu0
        %1249 = vmatpush.bf16.msra.mxu0 %v907
        %1250 = vmatpush.bf16.msra.mxu0 %v905
        %1251 = vmatpush.bf16.msra.mxu0 %v903
        %1252 = vmatpush.bf16.msra.mxu0 %v901
        %1253 = vmatpush.bf16.msra.mxu0 %v899
        %1254 = vmatpush.bf16.msra.mxu0 %v897
        %1255 = vmatpush.bf16.msra.mxu0 %v895
        %1256 = vmatpush.bf16.msra.mxu0 %v893
        %1257 = vmatmul.bf16.gmra.mxu0 %v477
        %v1258 = vpop.f32.mrf.mxu0
        %v1259 = vadd.f32 %v1246, %v1258
        %v1260 = vpop.f32.mrf.mxu0
        %1261 = vdwg.mxu0
        %1262 = vmatpush.bf16.msra.mxu0 %v923
        %1263 = vmatpush.bf16.msra.mxu0 %v921
        %1264 = vmatpush.bf16.msra.mxu0 %v919
        %1265 = vmatpush.bf16.msra.mxu0 %v917
        %1266 = vmatpush.bf16.msra.mxu0 %v915
        %1267 = vmatpush.bf16.msra.mxu0 %v913
        %1268 = vmatpush.bf16.msra.mxu0 %v911
        %1269 = vmatpush.bf16.msra.mxu0 %v909
        %1270 = vmatmul.bf16.gmra.mxu0 %v478
        %v1271 = vpop.f32.mrf.mxu0
        %v1272 = vadd.f32 %v1259, %v1271
        %v1273 = vpop.f32.mrf.mxu0
        %1274 = vdwg.mxu0
        %1275 = vmatpush.bf16.msra.mxu0 %v939
        %1276 = vmatpush.bf16.msra.mxu0 %v937
        %1277 = vmatpush.bf16.msra.mxu0 %v935
        %1278 = vmatpush.bf16.msra.mxu0 %v933
        %1279 = vmatpush.bf16.msra.mxu0 %v931
        %1280 = vmatpush.bf16.msra.mxu0 %v929
        %1281 = vmatpush.bf16.msra.mxu0 %v927
        %1282 = vmatpush.bf16.msra.mxu0 %v925
        %1283 = vmatmul.bf16.gmra.mxu0 %v479
        %v1284 = vpop.f32.mrf.mxu0
        %v1285 = vadd.f32 %v1272, %v1284
        %v1286 = vpop.f32.mrf.mxu0
        %1287 = vdwg.mxu0
        %1288 = vmatpush.bf16.msra.mxu0 %v955
        %1289 = vmatpush.bf16.msra.mxu0 %v953
        %1290 = vmatpush.bf16.msra.mxu0 %v951
        %1291 = vmatpush.bf16.msra.mxu0 %v949
        %1292 = vmatpush.bf16.msra.mxu0 %v947
        %1293 = vmatpush.bf16.msra.mxu0 %v945
        %1294 = vmatpush.bf16.msra.mxu0 %v943
        %1295 = vmatpush.bf16.msra.mxu0 %v941
        %1296 = vmatmul.bf16.gmra.mxu0 %v480
        %v1297 = vpop.f32.mrf.mxu0
        %v1298 = vadd.f32 %v1285, %v1297
        %v1299 = vpop.f32.mrf.mxu0
        %1300 = vdwg.mxu0
        %1301 = vmatpush.bf16.msra.mxu0 %v971
        %1302 = vmatpush.bf16.msra.mxu0 %v969
        %1303 = vmatpush.bf16.msra.mxu0 %v967
        %1304 = vmatpush.bf16.msra.mxu0 %v965
        %1305 = vmatpush.bf16.msra.mxu0 %v963
        %1306 = vmatpush.bf16.msra.mxu0 %v961
        %1307 = vmatpush.bf16.msra.mxu0 %v959
        %1308 = vmatpush.bf16.msra.mxu0 %v957
        %1309 = vmatmul.bf16.gmra.mxu0 %v481
        %v1310 = vpop.f32.mrf.mxu0
        %v1311 = vadd.f32 %v1298, %v1310
        %v1312 = vpop.f32.mrf.mxu0
        %1313 = vdwg.mxu0
        %1314 = vmatpush.bf16.msra.mxu0 %v987
        %1315 = vmatpush.bf16.msra.mxu0 %v985
        %1316 = vmatpush.bf16.msra.mxu0 %v983
        %1317 = vmatpush.bf16.msra.mxu0 %v981
        %1318 = vmatpush.bf16.msra.mxu0 %v979
        %1319 = vmatpush.bf16.msra.mxu0 %v977
        %1320 = vmatpush.bf16.msra.mxu0 %v975
        %1321 = vmatpush.bf16.msra.mxu0 %v973
        %1322 = vmatmul.bf16.gmra.mxu0 %v482
        %v1323 = vpop.f32.mrf.mxu0
        %v1324 = vadd.f32 %v1311, %v1323
        %v1325 = vpop.f32.mrf.mxu0
        %1326 = vdwg.mxu0
        %1327 = vmatpush.bf16.msra.mxu0 %v1003
        %1328 = vmatpush.bf16.msra.mxu0 %v1001
        %1329 = vmatpush.bf16.msra.mxu0 %v999
        %1330 = vmatpush.bf16.msra.mxu0 %v997
        %1331 = vmatpush.bf16.msra.mxu0 %v995
        %1332 = vmatpush.bf16.msra.mxu0 %v993
        %1333 = vmatpush.bf16.msra.mxu0 %v991
        %1334 = vmatpush.bf16.msra.mxu0 %v989
        %1335 = vmatmul.bf16.gmra.mxu0 %v483
        %v1336 = vpop.f32.mrf.mxu0
        %v1337 = vadd.f32 %v1324, %v1336
        %v1338 = vpop.f32.mrf.mxu0
        %1339 = vdwg.mxu0
        %v1340 = vadd.f32 %v330, %v1233
        %v1341 = vadd.f32 %v331, %v1337
        %1342 = vst [vmem:[#allocation2] sm:$0xff] %v1340
        %1343 = vst [vmem:[#allocation2 + $0x8] sm:$0xff] %v1341
        %p1344 = scmp.eq.s32.totalorder %s27, 1
        // Predicated region
        $region45: #{_lambda_.10} parent=31 // pred_check
          %p1345 = pneg %p1344
        $region46: #{_lambda_.10} parent=31 // pred_check_branch
          %1347 = sbr.rel (%p1345) target = $region48
        $region47: #{_lambda_.10} parent=31 // pred_region
          %v1348 = vld [vmem:[#allocation2] sm:$0xff]
          %v1349 = vld [vmem:[#allocation2 + $0x8] sm:$0xff]
          %v1350 = vld [vmem:[#allocation5] sm:$0x3]
          %v1352 = vperm.slane %v1350, 0
          %v1353 = vperm.slane %v1350, 1
          %v1356 = vadd.f32 %v1348, %v1352
          %v1357 = vadd.f32 %v1349, %v1353
          %v1358 = vmax.f32 %v1356, 0.0
          %v1359 = vmax.f32 %v1357, 0.0
          %1360 = vst [vmem:[%s322] sm:$0xff] %v1358
          %1361 = vst [vmem:[%s322 + $0x8] sm:$0xff] %v1359
        $region48: #{_lambda_.10} parent=31 // pred_fallthru
          _
        %s1362 = smul.u32 2, %s26
        %p1363 = scmp.lt.s32.totalorder %s24, 0
        %s1364 = scalar_select %p1363, %s24, 0
        %p1365 = scmp.lt.s32.totalorder %s25, 0
        %s1366 = scalar_select %p1365, %s25, 0
        %p1367 = scmp.lt.s32.totalorder %s1362, 1
        %s1368 = scalar_select %p1367, %s1362, 1
        %s1369 = smul.addr %s1366, 2
        %s1370 = sadd.s32 %s1368, %s1369
        %s1371 = smul.addr %s1364, 2
        %s1372 = sadd.s32 %s1370, %s1371
        %s1373 = smul.addr %s1372, 8
        %s1374 = scalar_lea.vmem %s3, %s1373
        // Predicated region
        $region49: #{_lambda_.10} parent=31 // pred_check
          %p1375 = pneg %p152
        $region50: #{_lambda_.10} parent=31 // pred_check_branch
          %1377 = sbr.rel (%p1375) target = $region52
        $region51: #{_lambda_.10} parent=31 // pred_region
          %s1378 = smul.u32 2, %s26
        $region52: #{_lambda_.10} parent=31 // pred_fallthru
          _
        // Predicated region
        $region53: #{_lambda_.10} parent=31 // pred_check
          %p1379 = pneg %p152
        $region54: #{_lambda_.10} parent=31 // pred_check_branch
          %1381 = sbr.rel (%p1379) target = $region56
        $region55: #{_lambda_.10} parent=31 // pred_region
          %s1382 = smul.u32 2, %s26
          %p1383 = scmp.lt.s32.totalorder %s24, 0
          %s1384 = scalar_select %p1383, %s24, 0
          %p1385 = scmp.lt.s32.totalorder %s25, 0
          %s1386 = scalar_select %p1385, %s25, 0
          %p1387 = scmp.lt.s32.totalorder %s1382, 1
          %s1388 = scalar_select %p1387, %s1382, 1
          %s1389 = smul.addr %s1386, 2
          %s1390 = sadd.s32 %s1388, %s1389
          %s1391 = smul.addr %s1384, 2
          %s1392 = sadd.s32 %s1390, %s1391
          %s1393 = smul.addr %s1392, 8
          %s1394 = scalar_lea.vmem %s3, %s1393
        $region56: #{_lambda_.10} parent=31 // pred_fallthru
          _
      $region32: #{_lambda_.10} parent=5 // pred_fallthru
        _
      %p1395 = scmp.le.s32.totalorder 2, %s13
      // Predicated region
      $region57: #{_lambda_.10} parent=5 // pred_check
        %p1396 = pneg %p1395
      $region58: #{_lambda_.10} parent=5 // pred_check_branch
        %1398 = sbr.rel (%p1396) target = $region60
      $region59: #{_lambda_.10} parent=5 // pred_region
        %s1399 = ssub.s32 %s13, 2
      $region60: #{_lambda_.10} parent=5 // pred_fallthru
        _
    $region6: #{_lambda_.10} parent=1 // loop_footer
      %s17 = sadd.s32 1, %s13
    $region7: #{_lambda_.10} parent=1 // loop_footer_branch
      %12 = sbr.rel target = $region3
    $region8: #{_lambda_.10} parent=1 // loop_exit
      _
    %1400 = vsyncpa [#allocation4], 1
    %s1401 = scalar_lea.sflag [#allocation4], 1
    %1402 = vsyncpa %s1401, 1
    %1403 = vsyncpa [#allocation6], 1

// kernel: _lambda_.12
$region0: #{_lambda_.12}
  #allocation0 [shape = 'u32[]', space=smem, size = 0x4, offset = 0x4, fixed_abs, tag = 'smem constant byte address 0x4 - core index']
  #allocation1 [shape = 'u32[72,128]{1,0:T(1,128)}', space=vmem, size = 0x9000, scoped, tag = 'internal scratch']
  #allocation2 [shape = 'f32[8,256]{1,0:T(8,128)}', space=vmem, size = 0x2000, scoped, tag = 'scratch operand']
  %s0 = inlined_call_operand.vmem [shape: bf16[4,8,2048], index: 0, kind: input, shape index: {}]
  %s1 = inlined_call_operand.vmem [shape: bf16[4,2048,256], index: 1, kind: input, shape index: {}]
  %s2 = inlined_call_operand.vmem [shape: f32[1,1,256], index: 2, kind: input, shape index: {}]
  %s3 = inlined_call_operand.vmem [shape: f32[4,8,256], index: 3, kind: output, shape index: {}]
  %s4 = sld [smem:[#allocation0]]
  $region53: #{_lambda_.12} parent=0
    _
  %s6 = ssub.s32 1, %s4
  %s7 = scalar_select 0, %s6, %s4
  loop: start=0, step=1, limit=10
  $region2: #{_lambda_.12} parent=0 // loop_pre_header
    _
  $region3: #{_lambda_.12} parent=0 // loop_header
    %s9 = sphi 0, %s13
    %p10 = scmp.ge.s32.totalorder %s9, 10
    %s16 = sphi 0, %s42
    %s17 = sphi 0, %s38
    %s18 = sphi 0, %s34
    %s19 = sphi 0, %s30
    %s20 = sphi 0, %s16
    %s21 = sphi 0, %s17
    %s22 = sphi 0, %s18
    %s23 = sphi 0, %s19
    %s24 = sphi 0, %s20
    %s25 = sphi 0, %s21
    %s26 = sphi 0, %s22
    %s27 = sphi 0, %s23
    %s49 = sphi 0, %s51
    %s52 = sphi 0, %s49
    %s53 = sphi 0, %s52
    %s69 = sphi 0, %s53
    %s79 = sphi 0, %s81
    %s82 = sphi 0, %s79
    %s83 = sphi 0, %s82
    %s99 = sphi 0, %s83
    %s105 = sphi 0, %s107
    %s108 = sphi 0, %s105
    %s109 = sphi 0, %s108
    %s125 = sphi 0, %s109
    %s135 = sphi 0, %s137
    %s138 = sphi 0, %s135
    %s139 = sphi 0, %s138
    %s155 = sphi 0, %s139
  $region4: #{_lambda_.12} parent=0 // loop_header_branch
    %12 = sbr.rel (%p10) target = $region8
  $region5: #{_lambda_.12} parent=0 // loop_body
    %s14 = ssub.s32 %s9, 1
    %s15 = ssub.s32 %s9, 2
    %s28 = sadd.s32 1, %s19
    %p29 = scmp.ge.s32.totalorder %s28, 2
    %s30 = scalar_select %p29, 0, %s28
    %s31 = sadd.s32 1, %s18
    %s32 = scalar_select %p29, %s31, %s18
    %p33 = scmp.ge.s32.totalorder %s32, 1
    %s34 = scalar_select %p33, 0, %s32
    %s35 = sadd.s32 1, %s17
    %s36 = scalar_select %p33, %s35, %s17
    %p37 = scmp.ge.s32.totalorder %s36, 1
    %s38 = scalar_select %p37, 0, %s36
    %s39 = sadd.s32 1, %s16
    %s40 = scalar_select %p37, %s39, %s16
    %p41 = scmp.ge.s32.totalorder %s40, 4
    %s42 = scalar_select %p41, 0, %s40
    %s43 = ssub.s32 %s16, %s42
    %s44 = ssub.s32 %s17, %s38
    %s45 = sor.u32 %s43, %s44
    %s46 = ssub.s32 %s19, %s30
    %s47 = sor.u32 %s45, %s46
    %p48 = scmp.eq.s32.totalorder %s47, 0
    %s50 = sadd.s32 %s49, 1
    %s51 = scalar_select %p48, %s49, %s50
    %p54 = pneg %p48
    %p55 = scmp.eq.s32.totalorder %s9, 7
    %p56 = por %p54, %p55
    %p57 = scmp.ne.s32.totalorder %s49, %s52
    %p58 = scmp.eq.s32.totalorder %s9, 0
    %p59 = por %p57, %p58
    %p60 = scmp.ne.s32.totalorder %s49, %s52
    %p61 = scmp.eq.s32.totalorder %s14, 7
    %p62 = por %p60, %p61
    %p63 = scmp.ne.s32.totalorder %s52, %s53
    %p64 = scmp.eq.s32.totalorder %s14, 0
    %p65 = por %p63, %p64
    %p66 = scmp.ne.s32.totalorder %s52, %s53
    %p67 = scmp.eq.s32.totalorder %s15, 7
    %p68 = por %p66, %p67
    %p70 = scmp.ne.s32.totalorder %s53, %s69
    %p71 = scmp.eq.s32.totalorder %s15, 0
    %p72 = por %p70, %p71
    %s73 = ssub.s32 %s16, %s42
    %s74 = ssub.s32 %s19, %s30
    %s75 = sor.u32 %s73, %s74
    %s76 = ssub.s32 %s18, %s34
    %s77 = sor.u32 %s75, %s76
    %p78 = scmp.eq.s32.totalorder %s77, 0
    %s80 = sadd.s32 %s79, 1
    %s81 = scalar_select %p78, %s79, %s80
    %p84 = pneg %p78
    %p85 = scmp.eq.s32.totalorder %s9, 7
    %p86 = por %p84, %p85
    %p87 = scmp.ne.s32.totalorder %s79, %s82
    %p88 = scmp.eq.s32.totalorder %s9, 0
    %p89 = por %p87, %p88
    %p90 = scmp.ne.s32.totalorder %s79, %s82
    %p91 = scmp.eq.s32.totalorder %s14, 7
    %p92 = por %p90, %p91
    %p93 = scmp.ne.s32.totalorder %s82, %s83
    %p94 = scmp.eq.s32.totalorder %s14, 0
    %p95 = por %p93, %p94
    %p96 = scmp.ne.s32.totalorder %s82, %s83
    %p97 = scmp.eq.s32.totalorder %s15, 7
    %p98 = por %p96, %p97
    %p100 = scmp.ne.s32.totalorder %s83, %s99
    %p101 = scmp.eq.s32.totalorder %s15, 0
    %p102 = por %p100, %p101
    %s103 = ssub.s32 %s18, %s34
    %p104 = scmp.eq.s32.totalorder %s103, 0
    %s106 = sadd.s32 %s105, 1
    %s107 = scalar_select %p104, %s105, %s106
    %p110 = pneg %p104
    %p111 = scmp.eq.s32.totalorder %s9, 7
    %p112 = por %p110, %p111
    %p113 = scmp.ne.s32.totalorder %s105, %s108
    %p114 = scmp.eq.s32.totalorder %s9, 0
    %p115 = por %p113, %p114
    %p116 = scmp.ne.s32.totalorder %s105, %s108
    %p117 = scmp.eq.s32.totalorder %s14, 7
    %p118 = por %p116, %p117
    %p119 = scmp.ne.s32.totalorder %s108, %s109
    %p120 = scmp.eq.s32.totalorder %s14, 0
    %p121 = por %p119, %p120
    %p122 = scmp.ne.s32.totalorder %s108, %s109
    %p123 = scmp.eq.s32.totalorder %s15, 7
    %p124 = por %p122, %p123
    %p126 = scmp.ne.s32.totalorder %s109, %s125
    %p127 = scmp.eq.s32.totalorder %s15, 0
    %p128 = por %p126, %p127
    %s129 = ssub.s32 %s16, %s42
    %s130 = ssub.s32 %s17, %s38
    %s131 = sor.u32 %s129, %s130
    %s132 = ssub.s32 %s18, %s34
    %s133 = sor.u32 %s131, %s132
    %p134 = scmp.eq.s32.totalorder %s133, 0
    %s136 = sadd.s32 %s135, 1
    %s137 = scalar_select %p134, %s135, %s136
    %p140 = pneg %p134
    %p141 = scmp.eq.s32.totalorder %s9, 7
    %p142 = por %p140, %p141
    %p143 = scmp.ne.s32.totalorder %s135, %s138
    %p144 = scmp.eq.s32.totalorder %s9, 0
    %p145 = por %p143, %p144
    %p146 = scmp.ne.s32.totalorder %s135, %s138
    %p147 = scmp.eq.s32.totalorder %s14, 7
    %p148 = por %p146, %p147
    %p149 = scmp.ne.s32.totalorder %s138, %s139
    %p150 = scmp.eq.s32.totalorder %s14, 0
    %p151 = por %p149, %p150
    %p152 = scmp.ne.s32.totalorder %s138, %s139
    %p153 = scmp.eq.s32.totalorder %s15, 7
    %p154 = por %p152, %p153
    %p156 = scmp.ne.s32.totalorder %s139, %s155
    %p157 = scmp.eq.s32.totalorder %s15, 0
    %p158 = por %p156, %p157
    %p159 = scmp.le.s32.totalorder 1, %s9
    %p160 = scmp.lt.s32.totalorder %s9, 9
    %p161 = pnand %p159, %p160
    %p162 = pneg %p161
    // Predicated region
    $region9: #{_lambda_.12} parent=5 // pred_check
      _
    $region10: #{_lambda_.12} parent=5 // pred_check_branch
      %164 = sbr.rel (%p161) target = $region12
    $region11: #{_lambda_.12} parent=5 // pred_region
      %s165 = ssub.s32 %s9, 1
      // Predicated region
      $region13: #{_lambda_.12} parent=11 // pred_check
        %p166 = pneg %p121
      $region14: #{_lambda_.12} parent=11 // pred_check_branch
        %168 = sbr.rel (%p166) target = $region16
      $region15: #{_lambda_.12} parent=11 // pred_region
        %s169 = smul.u32 2, %s22
        %p170 = scmp.lt.s32.totalorder %s169, 1
        %s171 = scalar_select %p170, %s169, 1
        %s172 = scalar_lea.vmem %s2, %s171
        %s173 = smul.u32 2, %s22
      $region16: #{_lambda_.12} parent=11 // pred_fallthru
        _
    $region12: #{_lambda_.12} parent=5 // pred_fallthru
      _
    %p174 = scmp.lt.s32.totalorder %s9, 8
    // Predicated region
    $region17: #{_lambda_.12} parent=5 // pred_check
      %p175 = pneg %p174
    $region18: #{_lambda_.12} parent=5 // pred_check_branch
      %177 = sbr.rel (%p175) target = $region20
    $region19: #{_lambda_.12} parent=5 // pred_region
      // Predicated region
      $region21: #{_lambda_.12} parent=19 // pred_check
        %p178 = pneg %p59
      $region22: #{_lambda_.12} parent=19 // pred_check_branch
        %180 = sbr.rel (%p178) target = $region24
      $region23: #{_lambda_.12} parent=19 // pred_region
        %s181 = smul.u32 8, %s19
        %p182 = scmp.lt.s32.totalorder %s16, 3
        %s183 = scalar_select %p182, %s16, 3
        %p184 = scmp.lt.s32.totalorder %s17, 0
        %s185 = scalar_select %p184, %s17, 0
        %p186 = scmp.lt.s32.totalorder %s181, 15
        %s187 = scalar_select %p186, %s181, 15
        %s188 = smul.addr %s185, 16
        %s189 = sadd.s32 %s187, %s188
        %s190 = smul.addr %s183, 16
        %s191 = sadd.s32 %s189, %s190
        %s192 = smul.addr %s191, 4
        %s193 = scalar_lea.vmem %s0, %s192
        %s194 = smul.u32 8, %s19
      $region24: #{_lambda_.12} parent=19 // pred_fallthru
        _
      // Predicated region
      $region25: #{_lambda_.12} parent=19 // pred_check
        %p195 = pneg %p89
      $region26: #{_lambda_.12} parent=19 // pred_check_branch
        %197 = sbr.rel (%p195) target = $region28
      $region27: #{_lambda_.12} parent=19 // pred_region
        %s198 = smul.u32 128, %s19
        %s199 = smul.u32 2, %s18
        %p200 = scmp.lt.s32.totalorder %s16, 3
        %s201 = scalar_select %p200, %s16, 3
        %p202 = scmp.lt.s32.totalorder %s198, 255
        %s203 = scalar_select %p202, %s198, 255
        %p204 = scmp.lt.s32.totalorder %s199, 1
        %s205 = scalar_select %p204, %s199, 1
        %s206 = smul.addr %s203, 2
        %s207 = sadd.s32 %s205, %s206
        %s208 = smul.addr %s201, 512
        %s209 = sadd.s32 %s207, %s208
        %s210 = smul.addr %s209, 4
        %s211 = scalar_lea.vmem %s1, %s210
        %s212 = smul.u32 128, %s19
        %s213 = smul.u32 2, %s18
      $region28: #{_lambda_.12} parent=19 // pred_fallthru
        _
    $region20: #{_lambda_.12} parent=5 // pred_fallthru
      _
    %p214 = scmp.le.s32.totalorder 1, %s9
    %p215 = scmp.lt.s32.totalorder %s9, 9
    %p216 = pnand %p214, %p215
    %p217 = pneg %p216
    // Predicated region
    $region29: #{_lambda_.12} parent=5 // pred_check
      _
    $region30: #{_lambda_.12} parent=5 // pred_check_branch
      %219 = sbr.rel (%p216) target = $region32
    $region31: #{_lambda_.12} parent=5 // pred_region
      %s220 = ssub.s32 %s9, 1
      %s221 = smul.u32 8, %s23
      %p222 = scmp.lt.s32.totalorder %s20, 3
      %s223 = scalar_select %p222, %s20, 3
      %p224 = scmp.lt.s32.totalorder %s21, 0
      %s225 = scalar_select %p224, %s21, 0
      %p226 = scmp.lt.s32.totalorder %s221, 15
      %s227 = scalar_select %p226, %s221, 15
      %s228 = smul.addr %s225, 16
      %s229 = sadd.s32 %s227, %s228
      %s230 = smul.addr %s223, 16
      %s231 = sadd.s32 %s229, %s230
      %s232 = smul.addr %s231, 4
      %s233 = scalar_lea.vmem %s0, %s232
      %p234 = pneg %p65
      %p235 = pneg %p62
      %s236 = smul.u32 128, %s23
      %s237 = smul.u32 2, %s22
      %p238 = scmp.lt.s32.totalorder %s20, 3
      %s239 = scalar_select %p238, %s20, 3
      %p240 = scmp.lt.s32.totalorder %s236, 255
      %s241 = scalar_select %p240, %s236, 255
      %p242 = scmp.lt.s32.totalorder %s237, 1
      %s243 = scalar_select %p242, %s237, 1
      %s244 = smul.addr %s241, 2
      %s245 = sadd.s32 %s243, %s244
      %s246 = smul.addr %s239, 512
      %s247 = sadd.s32 %s245, %s246
      %s248 = smul.addr %s247, 4
      %s249 = scalar_lea.vmem %s1, %s248
      %p250 = pneg %p95
      %p251 = pneg %p92
      %s252 = smul.u32 2, %s22
      %p253 = scmp.lt.s32.totalorder %s252, 1
      %s254 = scalar_select %p253, %s252, 1
      %s255 = scalar_lea.vmem %s2, %s254
      %p256 = pneg %p121
      %p257 = pneg %p118
      %p258 = pneg %p151
      %p259 = pneg %p148
      %s260 = smul.u32 2, %s22
      %p261 = scmp.lt.s32.totalorder %s20, 3
      %s262 = scalar_select %p261, %s20, 3
      %p263 = scmp.lt.s32.totalorder %s21, 0
      %s264 = scalar_select %p263, %s21, 0
      %p265 = scmp.lt.s32.totalorder %s260, 1
      %s266 = scalar_select %p265, %s260, 1
      %s267 = smul.addr %s264, 2
      %s268 = sadd.s32 %s266, %s267
      %s269 = smul.addr %s262, 2
      %s270 = sadd.s32 %s268, %s269
      %s271 = smul.addr %s270, 8
      %s272 = scalar_lea.vmem %s3, %s271
      %s273 = smul.u32 8, %s23
      %p274 = scmp.lt.s32.totalorder %s20, 3
      %s275 = scalar_select %p274, %s20, 3
      %p276 = scmp.lt.s32.totalorder %s21, 0
      %s277 = scalar_select %p276, %s21, 0
      %p278 = scmp.lt.s32.totalorder %s273, 15
      %s279 = scalar_select %p278, %s273, 15
      %s280 = smul.addr %s277, 16
      %s281 = sadd.s32 %s279, %s280
      %s282 = smul.addr %s275, 16
      %s283 = sadd.s32 %s281, %s282
      %s284 = smul.addr %s283, 4
      %s285 = scalar_lea.vmem %s0, %s284
      %s286 = smul.u32 8, %s23
      %s287 = smul.u32 128, %s23
      %s288 = smul.u32 2, %s22
      %p289 = scmp.lt.s32.totalorder %s20, 3
      %s290 = scalar_select %p289, %s20, 3
      %p291 = scmp.lt.s32.totalorder %s287, 255
      %s292 = scalar_select %p291, %s287, 255
      %p293 = scmp.lt.s32.totalorder %s288, 1
      %s294 = scalar_select %p293, %s288, 1
      %s295 = smul.addr %s292, 2
      %s296 = sadd.s32 %s294, %s295
      %s297 = smul.addr %s290, 512
      %s298 = sadd.s32 %s296, %s297
      %s299 = smul.addr %s298, 4
      %s300 = scalar_lea.vmem %s1, %s299
      %s301 = smul.u32 128, %s23
      %s302 = smul.u32 2, %s22
      %s303 = smul.u32 2, %s22
      %p304 = scmp.lt.s32.totalorder %s303, 1
      %s305 = scalar_select %p304, %s303, 1
      %s306 = scalar_lea.vmem %s2, %s305
      %s307 = smul.u32 2, %s22
      %s308 = smul.u32 2, %s22
      %p309 = scmp.lt.s32.totalorder %s20, 3
      %s310 = scalar_select %p309, %s20, 3
      %p311 = scmp.lt.s32.totalorder %s21, 0
      %s312 = scalar_select %p311, %s21, 0
      %p313 = scmp.lt.s32.totalorder %s308, 1
      %s314 = scalar_select %p313, %s308, 1
      %s315 = smul.addr %s312, 2
      %s316 = sadd.s32 %s314, %s315
      %s317 = smul.addr %s310, 2
      %s318 = sadd.s32 %s316, %s317
      %s319 = smul.addr %s318, 8
      %s320 = scalar_lea.vmem %s3, %s319
      %s321 = smul.u32 2, %s22
      %p322 = scmp.eq.s32.totalorder %s23, 0
      // Predicated region
      $region33: #{_lambda_.12} parent=31 // pred_check
        %p323 = pneg %p322
      $region34: #{_lambda_.12} parent=31 // pred_check_branch
        %325 = sbr.rel (%p323) target = $region36
      $region35: #{_lambda_.12} parent=31 // pred_region
        %326 = vst [vmem:[#allocation2] sm:$0xff] 0.0
        %327 = vst [vmem:[#allocation2 + $0x8] sm:$0xff] 0.0
      $region36: #{_lambda_.12} parent=31 // pred_fallthru
        _
      %v328 = vld [vmem:[#allocation2] sm:$0xff]
      %v329 = vld [vmem:[#allocation2 + $0x8] sm:$0xff]
      %v330 = vld [vmem:[%s285] sm:$0xff]
      %v331 = vld [vmem:[%s285 + $0x8] sm:$0xff]
      %v332 = vld [vmem:[%s285 + $0x10] sm:$0xff]
      %v333 = vld [vmem:[%s285 + $0x18] sm:$0xff]
      %v334 = vld [vmem:[%s300] sm:$0xff]
      %v335 = vld [vmem:[%s300 + $0x8] sm:$0xff]
      %v336 = vld [vmem:[%s300 + $0x10] sm:$0xff]
      %v337 = vld [vmem:[%s300 + $0x18] sm:$0xff]
      %v338 = vld [vmem:[%s300 + $0x20] sm:$0xff]
      %v339 = vld [vmem:[%s300 + $0x28] sm:$0xff]
      %v340 = vld [vmem:[%s300 + $0x30] sm:$0xff]
      %v341 = vld [vmem:[%s300 + $0x38] sm:$0xff]
      %v342 = vld [vmem:[%s300 + $0x40] sm:$0xff]
      %v343 = vld [vmem:[%s300 + $0x48] sm:$0xff]
      %v344 = vld [vmem:[%s300 + $0x50] sm:$0xff]
      %v345 = vld [vmem:[%s300 + $0x58] sm:$0xff]
      %v346 = vld [vmem:[%s300 + $0x60] sm:$0xff]
      %v347 = vld [vmem:[%s300 + $0x68] sm:$0xff]
      %v348 = vld [vmem:[%s300 + $0x70] sm:$0xff]
      %v349 = vld [vmem:[%s300 + $0x78] sm:$0xff]
      %v350 = vld [vmem:[%s300 + $0x80] sm:$0xff]
      %v351 = vld [vmem:[%s300 + $0x88] sm:$0xff]
      %v352 = vld [vmem:[%s300 + $0x90] sm:$0xff]
      %v353 = vld [vmem:[%s300 + $0x98] sm:$0xff]
      %v354 = vld [vmem:[%s300 + $0xa0] sm:$0xff]
      %v355 = vld [vmem:[%s300 + $0xa8] sm:$0xff]
      %v356 = vld [vmem:[%s300 + $0xb0] sm:$0xff]
      %v357 = vld [vmem:[%s300 + $0xb8] sm:$0xff]
      %v358 = vld [vmem:[%s300 + $0xc0] sm:$0xff]
      %v359 = vld [vmem:[%s300 + $0xc8] sm:$0xff]
      %v360 = vld [vmem:[%s300 + $0xd0] sm:$0xff]
      %v361 = vld [vmem:[%s300 + $0xd8] sm:$0xff]
      %v362 = vld [vmem:[%s300 + $0xe0] sm:$0xff]
      %v363 = vld [vmem:[%s300 + $0xe8] sm:$0xff]
      %v364 = vld [vmem:[%s300 + $0xf0] sm:$0xff]
      %v365 = vld [vmem:[%s300 + $0xf8] sm:$0xff]
      %v366 = vld [vmem:[%s300 + $0x100] sm:$0xff]
      %v367 = vld [vmem:[%s300 + $0x108] sm:$0xff]
      %v368 = vld [vmem:[%s300 + $0x110] sm:$0xff]
      %v369 = vld [vmem:[%s300 + $0x118] sm:$0xff]
      %v370 = vld [vmem:[%s300 + $0x120] sm:$0xff]
      %v371 = vld [vmem:[%s300 + $0x128] sm:$0xff]
      %v372 = vld [vmem:[%s300 + $0x130] sm:$0xff]
      %v373 = vld [vmem:[%s300 + $0x138] sm:$0xff]
      %v374 = vld [vmem:[%s300 + $0x140] sm:$0xff]
      %v375 = vld [vmem:[%s300 + $0x148] sm:$0xff]
      %v376 = vld [vmem:[%s300 + $0x150] sm:$0xff]
      %v377 = vld [vmem:[%s300 + $0x158] sm:$0xff]
      %v378 = vld [vmem:[%s300 + $0x160] sm:$0xff]
      %v379 = vld [vmem:[%s300 + $0x168] sm:$0xff]
      %v380 = vld [vmem:[%s300 + $0x170] sm:$0xff]
      %v381 = vld [vmem:[%s300 + $0x178] sm:$0xff]
      %v382 = vld [vmem:[%s300 + $0x180] sm:$0xff]
      %v383 = vld [vmem:[%s300 + $0x188] sm:$0xff]
      %v384 = vld [vmem:[%s300 + $0x190] sm:$0xff]
      %v385 = vld [vmem:[%s300 + $0x198] sm:$0xff]
      %v386 = vld [vmem:[%s300 + $0x1a0] sm:$0xff]
      %v387 = vld [vmem:[%s300 + $0x1a8] sm:$0xff]
      %v388 = vld [vmem:[%s300 + $0x1b0] sm:$0xff]
      %v389 = vld [vmem:[%s300 + $0x1b8] sm:$0xff]
      %v390 = vld [vmem:[%s300 + $0x1c0] sm:$0xff]
      %v391 = vld [vmem:[%s300 + $0x1c8] sm:$0xff]
      %v392 = vld [vmem:[%s300 + $0x1d0] sm:$0xff]
      %v393 = vld [vmem:[%s300 + $0x1d8] sm:$0xff]
      %v394 = vld [vmem:[%s300 + $0x1e0] sm:$0xff]
      %v395 = vld [vmem:[%s300 + $0x1e8] sm:$0xff]
      %v396 = vld [vmem:[%s300 + $0x1f0] sm:$0xff]
      %v397 = vld [vmem:[%s300 + $0x1f8] sm:$0xff]
      %v398 = vld [vmem:[%s300 + $0x200] sm:$0xff]
      %v399 = vld [vmem:[%s300 + $0x208] sm:$0xff]
      %v400 = vld [vmem:[%s300 + $0x210] sm:$0xff]
      %v401 = vld [vmem:[%s300 + $0x218] sm:$0xff]
      %v402 = vld [vmem:[%s300 + $0x220] sm:$0xff]
      %v403 = vld [vmem:[%s300 + $0x228] sm:$0xff]
      %v404 = vld [vmem:[%s300 + $0x230] sm:$0xff]
      %v405 = vld [vmem:[%s300 + $0x238] sm:$0xff]
      %v406 = vld [vmem:[%s300 + $0x240] sm:$0xff]
      %v407 = vld [vmem:[%s300 + $0x248] sm:$0xff]
      %v408 = vld [vmem:[%s300 + $0x250] sm:$0xff]
      %v409 = vld [vmem:[%s300 + $0x258] sm:$0xff]
      %v410 = vld [vmem:[%s300 + $0x260] sm:$0xff]
      %v411 = vld [vmem:[%s300 + $0x268] sm:$0xff]
      %v412 = vld [vmem:[%s300 + $0x270] sm:$0xff]
      %v413 = vld [vmem:[%s300 + $0x278] sm:$0xff]
      %v414 = vld [vmem:[%s300 + $0x280] sm:$0xff]
      %v415 = vld [vmem:[%s300 + $0x288] sm:$0xff]
      %v416 = vld [vmem:[%s300 + $0x290] sm:$0xff]
      %v417 = vld [vmem:[%s300 + $0x298] sm:$0xff]
      %v418 = vld [vmem:[%s300 + $0x2a0] sm:$0xff]
      %v419 = vld [vmem:[%s300 + $0x2a8] sm:$0xff]
      %v420 = vld [vmem:[%s300 + $0x2b0] sm:$0xff]
      %v421 = vld [vmem:[%s300 + $0x2b8] sm:$0xff]
      %v422 = vld [vmem:[%s300 + $0x2c0] sm:$0xff]
      %v423 = vld [vmem:[%s300 + $0x2c8] sm:$0xff]
      %v424 = vld [vmem:[%s300 + $0x2d0] sm:$0xff]
      %v425 = vld [vmem:[%s300 + $0x2d8] sm:$0xff]
      %v426 = vld [vmem:[%s300 + $0x2e0] sm:$0xff]
      %v427 = vld [vmem:[%s300 + $0x2e8] sm:$0xff]
      %v428 = vld [vmem:[%s300 + $0x2f0] sm:$0xff]
      %v429 = vld [vmem:[%s300 + $0x2f8] sm:$0xff]
      %v430 = vld [vmem:[%s300 + $0x300] sm:$0xff]
      %v431 = vld [vmem:[%s300 + $0x308] sm:$0xff]
      %v432 = vld [vmem:[%s300 + $0x310] sm:$0xff]
      %v433 = vld [vmem:[%s300 + $0x318] sm:$0xff]
      %v434 = vld [vmem:[%s300 + $0x320] sm:$0xff]
      %v435 = vld [vmem:[%s300 + $0x328] sm:$0xff]
      %v436 = vld [vmem:[%s300 + $0x330] sm:$0xff]
      %v437 = vld [vmem:[%s300 + $0x338] sm:$0xff]
      %v438 = vld [vmem:[%s300 + $0x340] sm:$0xff]
      %v439 = vld [vmem:[%s300 + $0x348] sm:$0xff]
      %v440 = vld [vmem:[%s300 + $0x350] sm:$0xff]
      %v441 = vld [vmem:[%s300 + $0x358] sm:$0xff]
      %v442 = vld [vmem:[%s300 + $0x360] sm:$0xff]
      %v443 = vld [vmem:[%s300 + $0x368] sm:$0xff]
      %v444 = vld [vmem:[%s300 + $0x370] sm:$0xff]
      %v445 = vld [vmem:[%s300 + $0x378] sm:$0xff]
      %v446 = vld [vmem:[%s300 + $0x380] sm:$0xff]
      %v447 = vld [vmem:[%s300 + $0x388] sm:$0xff]
      %v448 = vld [vmem:[%s300 + $0x390] sm:$0xff]
      %v449 = vld [vmem:[%s300 + $0x398] sm:$0xff]
      %v450 = vld [vmem:[%s300 + $0x3a0] sm:$0xff]
      %v451 = vld [vmem:[%s300 + $0x3a8] sm:$0xff]
      %v452 = vld [vmem:[%s300 + $0x3b0] sm:$0xff]
      %v453 = vld [vmem:[%s300 + $0x3b8] sm:$0xff]
      %v454 = vld [vmem:[%s300 + $0x3c0] sm:$0xff]
      %v455 = vld [vmem:[%s300 + $0x3c8] sm:$0xff]
      %v456 = vld [vmem:[%s300 + $0x3d0] sm:$0xff]
      %v457 = vld [vmem:[%s300 + $0x3d8] sm:$0xff]
      %v458 = vld [vmem:[%s300 + $0x3e0] sm:$0xff]
      %v459 = vld [vmem:[%s300 + $0x3e8] sm:$0xff]
      %v460 = vld [vmem:[%s300 + $0x3f0] sm:$0xff]
      %v461 = vld [vmem:[%s300 + $0x3f8] sm:$0xff]
      %v466 = vunpack.c.l.b16 %v330
      %v467 = vunpack.c.h.b16 %v330
      %v468 = vunpack.c.l.b16 %v331
      %v469 = vunpack.c.h.b16 %v331
      %v470 = vunpack.c.l.b16 %v332
      %v471 = vunpack.c.h.b16 %v332
      %v472 = vunpack.c.l.b16 %v333
      %v473 = vunpack.c.h.b16 %v333
      %v474 = vpack.c.b16 %v466, %v466
      %v475 = vpack.c.b16 %v467, %v467
      %v476 = vpack.c.b16 %v468, %v468
      %v477 = vpack.c.b16 %v469, %v469
      %v478 = vpack.c.b16 %v470, %v470
      %v479 = vpack.c.b16 %v471, %v471
      %v480 = vpack.c.b16 %v472, %v472
      %v481 = vpack.c.b16 %v473, %v473
      %v618 = vunpack.c.l.b16 %v334
      %v619 = vunpack.c.h.b16 %v334
      %v620 = vunpack.c.l.b16 %v335
      %v621 = vunpack.c.h.b16 %v335
      %v622 = vunpack.c.l.b16 %v336
      %v623 = vunpack.c.h.b16 %v336
      %v624 = vunpack.c.l.b16 %v337
      %v625 = vunpack.c.h.b16 %v337
      %v626 = vunpack.c.l.b16 %v338
      %v627 = vunpack.c.h.b16 %v338
      %v628 = vunpack.c.l.b16 %v339
      %v629 = vunpack.c.h.b16 %v339
      %v630 = vunpack.c.l.b16 %v340
      %v631 = vunpack.c.h.b16 %v340
      %v632 = vunpack.c.l.b16 %v341
      %v633 = vunpack.c.h.b16 %v341
      %v634 = vunpack.c.l.b16 %v342
      %v635 = vunpack.c.h.b16 %v342
      %v636 = vunpack.c.l.b16 %v343
      %v637 = vunpack.c.h.b16 %v343
      %v638 = vunpack.c.l.b16 %v344
      %v639 = vunpack.c.h.b16 %v344
      %v640 = vunpack.c.l.b16 %v345
      %v641 = vunpack.c.h.b16 %v345
      %v642 = vunpack.c.l.b16 %v346
      %v643 = vunpack.c.h.b16 %v346
      %v644 = vunpack.c.l.b16 %v347
      %v645 = vunpack.c.h.b16 %v347
      %v646 = vunpack.c.l.b16 %v348
      %v647 = vunpack.c.h.b16 %v348
      %v648 = vunpack.c.l.b16 %v349
      %v649 = vunpack.c.h.b16 %v349
      %v650 = vunpack.c.l.b16 %v350
      %v651 = vunpack.c.h.b16 %v350
      %v652 = vunpack.c.l.b16 %v351
      %v653 = vunpack.c.h.b16 %v351
      %v654 = vunpack.c.l.b16 %v352
      %v655 = vunpack.c.h.b16 %v352
      %v656 = vunpack.c.l.b16 %v353
      %v657 = vunpack.c.h.b16 %v353
      %v658 = vunpack.c.l.b16 %v354
      %v659 = vunpack.c.h.b16 %v354
      %v660 = vunpack.c.l.b16 %v355
      %v661 = vunpack.c.h.b16 %v355
      %v662 = vunpack.c.l.b16 %v356
      %v663 = vunpack.c.h.b16 %v356
      %v664 = vunpack.c.l.b16 %v357
      %v665 = vunpack.c.h.b16 %v357
      %v666 = vunpack.c.l.b16 %v358
      %v667 = vunpack.c.h.b16 %v358
      %v668 = vunpack.c.l.b16 %v359
      %v669 = vunpack.c.h.b16 %v359
      %v670 = vunpack.c.l.b16 %v360
      %v671 = vunpack.c.h.b16 %v360
      %v672 = vunpack.c.l.b16 %v361
      %v673 = vunpack.c.h.b16 %v361
      %v674 = vunpack.c.l.b16 %v362
      %v675 = vunpack.c.h.b16 %v362
      %v676 = vunpack.c.l.b16 %v363
      %v677 = vunpack.c.h.b16 %v363
      %v678 = vunpack.c.l.b16 %v364
      %v679 = vunpack.c.h.b16 %v364
      %v680 = vunpack.c.l.b16 %v365
      %v681 = vunpack.c.h.b16 %v365
      %v682 = vunpack.c.l.b16 %v366
      %v683 = vunpack.c.h.b16 %v366
      %v684 = vunpack.c.l.b16 %v367
      %v685 = vunpack.c.h.b16 %v367
      %v686 = vunpack.c.l.b16 %v368
      %v687 = vunpack.c.h.b16 %v368
      %v688 = vunpack.c.l.b16 %v369
      %v689 = vunpack.c.h.b16 %v369
      %v690 = vunpack.c.l.b16 %v370
      %v691 = vunpack.c.h.b16 %v370
      %v692 = vunpack.c.l.b16 %v371
      %v693 = vunpack.c.h.b16 %v371
      %v694 = vunpack.c.l.b16 %v372
      %v695 = vunpack.c.h.b16 %v372
      %v696 = vunpack.c.l.b16 %v373
      %v697 = vunpack.c.h.b16 %v373
      %v698 = vunpack.c.l.b16 %v374
      %v699 = vunpack.c.h.b16 %v374
      %v700 = vunpack.c.l.b16 %v375
      %v701 = vunpack.c.h.b16 %v375
      %v702 = vunpack.c.l.b16 %v376
      %v703 = vunpack.c.h.b16 %v376
      %v704 = vunpack.c.l.b16 %v377
      %v705 = vunpack.c.h.b16 %v377
      %v706 = vunpack.c.l.b16 %v378
      %v707 = vunpack.c.h.b16 %v378
      %v708 = vunpack.c.l.b16 %v379
      %v709 = vunpack.c.h.b16 %v379
      %v710 = vunpack.c.l.b16 %v380
      %v711 = vunpack.c.h.b16 %v380
      %v712 = vunpack.c.l.b16 %v381
      %v713 = vunpack.c.h.b16 %v381
      %v714 = vunpack.c.l.b16 %v382
      %v715 = vunpack.c.h.b16 %v382
      %v716 = vunpack.c.l.b16 %v383
      %v717 = vunpack.c.h.b16 %v383
      %v718 = vunpack.c.l.b16 %v384
      %v719 = vunpack.c.h.b16 %v384
      %v720 = vunpack.c.l.b16 %v385
      %v721 = vunpack.c.h.b16 %v385
      %v722 = vunpack.c.l.b16 %v386
      %v723 = vunpack.c.h.b16 %v386
      %v724 = vunpack.c.l.b16 %v387
      %v725 = vunpack.c.h.b16 %v387
      %v726 = vunpack.c.l.b16 %v388
      %v727 = vunpack.c.h.b16 %v388
      %v728 = vunpack.c.l.b16 %v389
      %v729 = vunpack.c.h.b16 %v389
      %v730 = vunpack.c.l.b16 %v390
      %v731 = vunpack.c.h.b16 %v390
      %v732 = vunpack.c.l.b16 %v391
      %v733 = vunpack.c.h.b16 %v391
      %v734 = vunpack.c.l.b16 %v392
      %v735 = vunpack.c.h.b16 %v392
      %v736 = vunpack.c.l.b16 %v393
      %v737 = vunpack.c.h.b16 %v393
      %v738 = vunpack.c.l.b16 %v394
      %v739 = vunpack.c.h.b16 %v394
      %v740 = vunpack.c.l.b16 %v395
      %v741 = vunpack.c.h.b16 %v395
      %v742 = vunpack.c.l.b16 %v396
      %v743 = vunpack.c.h.b16 %v396
      %v744 = vunpack.c.l.b16 %v397
      %v745 = vunpack.c.h.b16 %v397
      %v746 = vunpack.c.l.b16 %v398
      %v747 = vunpack.c.h.b16 %v398
      %v748 = vunpack.c.l.b16 %v399
      %v749 = vunpack.c.h.b16 %v399
      %v750 = vunpack.c.l.b16 %v400
      %v751 = vunpack.c.h.b16 %v400
      %v752 = vunpack.c.l.b16 %v401
      %v753 = vunpack.c.h.b16 %v401
      %v754 = vunpack.c.l.b16 %v402
      %v755 = vunpack.c.h.b16 %v402
      %v756 = vunpack.c.l.b16 %v403
      %v757 = vunpack.c.h.b16 %v403
      %v758 = vunpack.c.l.b16 %v404
      %v759 = vunpack.c.h.b16 %v404
      %v760 = vunpack.c.l.b16 %v405
      %v761 = vunpack.c.h.b16 %v405
      %v762 = vunpack.c.l.b16 %v406
      %v763 = vunpack.c.h.b16 %v406
      %v764 = vunpack.c.l.b16 %v407
      %v765 = vunpack.c.h.b16 %v407
      %v766 = vunpack.c.l.b16 %v408
      %v767 = vunpack.c.h.b16 %v408
      %v768 = vunpack.c.l.b16 %v409
      %v769 = vunpack.c.h.b16 %v409
      %v770 = vunpack.c.l.b16 %v410
      %v771 = vunpack.c.h.b16 %v410
      %v772 = vunpack.c.l.b16 %v411
      %v773 = vunpack.c.h.b16 %v411
      %v774 = vunpack.c.l.b16 %v412
      %v775 = vunpack.c.h.b16 %v412
      %v776 = vunpack.c.l.b16 %v413
      %v777 = vunpack.c.h.b16 %v413
      %v778 = vunpack.c.l.b16 %v414
      %v779 = vunpack.c.h.b16 %v414
      %v780 = vunpack.c.l.b16 %v415
      %v781 = vunpack.c.h.b16 %v415
      %v782 = vunpack.c.l.b16 %v416
      %v783 = vunpack.c.h.b16 %v416
      %v784 = vunpack.c.l.b16 %v417
      %v785 = vunpack.c.h.b16 %v417
      %v786 = vunpack.c.l.b16 %v418
      %v787 = vunpack.c.h.b16 %v418
      %v788 = vunpack.c.l.b16 %v419
      %v789 = vunpack.c.h.b16 %v419
      %v790 = vunpack.c.l.b16 %v420
      %v791 = vunpack.c.h.b16 %v420
      %v792 = vunpack.c.l.b16 %v421
      %v793 = vunpack.c.h.b16 %v421
      %v794 = vunpack.c.l.b16 %v422
      %v795 = vunpack.c.h.b16 %v422
      %v796 = vunpack.c.l.b16 %v423
      %v797 = vunpack.c.h.b16 %v423
      %v798 = vunpack.c.l.b16 %v424
      %v799 = vunpack.c.h.b16 %v424
      %v800 = vunpack.c.l.b16 %v425
      %v801 = vunpack.c.h.b16 %v425
      %v802 = vunpack.c.l.b16 %v426
      %v803 = vunpack.c.h.b16 %v426
      %v804 = vunpack.c.l.b16 %v427
      %v805 = vunpack.c.h.b16 %v427
      %v806 = vunpack.c.l.b16 %v428
      %v807 = vunpack.c.h.b16 %v428
      %v808 = vunpack.c.l.b16 %v429
      %v809 = vunpack.c.h.b16 %v429
      %v810 = vunpack.c.l.b16 %v430
      %v811 = vunpack.c.h.b16 %v430
      %v812 = vunpack.c.l.b16 %v431
      %v813 = vunpack.c.h.b16 %v431
      %v814 = vunpack.c.l.b16 %v432
      %v815 = vunpack.c.h.b16 %v432
      %v816 = vunpack.c.l.b16 %v433
      %v817 = vunpack.c.h.b16 %v433
      %v818 = vunpack.c.l.b16 %v434
      %v819 = vunpack.c.h.b16 %v434
      %v820 = vunpack.c.l.b16 %v435
      %v821 = vunpack.c.h.b16 %v435
      %v822 = vunpack.c.l.b16 %v436
      %v823 = vunpack.c.h.b16 %v436
      %v824 = vunpack.c.l.b16 %v437
      %v825 = vunpack.c.h.b16 %v437
      %v826 = vunpack.c.l.b16 %v438
      %v827 = vunpack.c.h.b16 %v438
      %v828 = vunpack.c.l.b16 %v439
      %v829 = vunpack.c.h.b16 %v439
      %v830 = vunpack.c.l.b16 %v440
      %v831 = vunpack.c.h.b16 %v440
      %v832 = vunpack.c.l.b16 %v441
      %v833 = vunpack.c.h.b16 %v441
      %v834 = vunpack.c.l.b16 %v442
      %v835 = vunpack.c.h.b16 %v442
      %v836 = vunpack.c.l.b16 %v443
      %v837 = vunpack.c.h.b16 %v443
      %v838 = vunpack.c.l.b16 %v444
      %v839 = vunpack.c.h.b16 %v444
      %v840 = vunpack.c.l.b16 %v445
      %v841 = vunpack.c.h.b16 %v445
      %v842 = vunpack.c.l.b16 %v446
      %v843 = vunpack.c.h.b16 %v446
      %v844 = vunpack.c.l.b16 %v447
      %v845 = vunpack.c.h.b16 %v447
      %v846 = vunpack.c.l.b16 %v448
      %v847 = vunpack.c.h.b16 %v448
      %v848 = vunpack.c.l.b16 %v449
      %v849 = vunpack.c.h.b16 %v449
      %v850 = vunpack.c.l.b16 %v450
      %v851 = vunpack.c.h.b16 %v450
      %v852 = vunpack.c.l.b16 %v451
      %v853 = vunpack.c.h.b16 %v451
      %v854 = vunpack.c.l.b16 %v452
      %v855 = vunpack.c.h.b16 %v452
      %v856 = vunpack.c.l.b16 %v453
      %v857 = vunpack.c.h.b16 %v453
      %v858 = vunpack.c.l.b16 %v454
      %v859 = vunpack.c.h.b16 %v454
      %v860 = vunpack.c.l.b16 %v455
      %v861 = vunpack.c.h.b16 %v455
      %v862 = vunpack.c.l.b16 %v456
      %v863 = vunpack.c.h.b16 %v456
      %v864 = vunpack.c.l.b16 %v457
      %v865 = vunpack.c.h.b16 %v457
      %v866 = vunpack.c.l.b16 %v458
      %v867 = vunpack.c.h.b16 %v458
      %v868 = vunpack.c.l.b16 %v459
      %v869 = vunpack.c.h.b16 %v459
      %v870 = vunpack.c.l.b16 %v460
      %v871 = vunpack.c.h.b16 %v460
      %v872 = vunpack.c.l.b16 %v461
      %v873 = vunpack.c.h.b16 %v461
      %v874 = vpack.c.b16 %v620, %v618
      %v875 = vpack.c.b16 %v621, %v619
      %v876 = vpack.c.b16 %v624, %v622
      %v877 = vpack.c.b16 %v625, %v623
      %v878 = vpack.c.b16 %v628, %v626
      %v879 = vpack.c.b16 %v629, %v627
      %v880 = vpack.c.b16 %v632, %v630
      %v881 = vpack.c.b16 %v633, %v631
      %v882 = vpack.c.b16 %v636, %v634
      %v883 = vpack.c.b16 %v637, %v635
      %v884 = vpack.c.b16 %v640, %v638
      %v885 = vpack.c.b16 %v641, %v639
      %v886 = vpack.c.b16 %v644, %v642
      %v887 = vpack.c.b16 %v645, %v643
      %v888 = vpack.c.b16 %v648, %v646
      %v889 = vpack.c.b16 %v649, %v647
      %v890 = vpack.c.b16 %v652, %v650
      %v891 = vpack.c.b16 %v653, %v651
      %v892 = vpack.c.b16 %v656, %v654
      %v893 = vpack.c.b16 %v657, %v655
      %v894 = vpack.c.b16 %v660, %v658
      %v895 = vpack.c.b16 %v661, %v659
      %v896 = vpack.c.b16 %v664, %v662
      %v897 = vpack.c.b16 %v665, %v663
      %v898 = vpack.c.b16 %v668, %v666
      %v899 = vpack.c.b16 %v669, %v667
      %v900 = vpack.c.b16 %v672, %v670
      %v901 = vpack.c.b16 %v673, %v671
      %v902 = vpack.c.b16 %v676, %v674
      %v903 = vpack.c.b16 %v677, %v675
      %v904 = vpack.c.b16 %v680, %v678
      %v905 = vpack.c.b16 %v681, %v679
      %v906 = vpack.c.b16 %v684, %v682
      %v907 = vpack.c.b16 %v685, %v683
      %v908 = vpack.c.b16 %v688, %v686
      %v909 = vpack.c.b16 %v689, %v687
      %v910 = vpack.c.b16 %v692, %v690
      %v911 = vpack.c.b16 %v693, %v691
      %v912 = vpack.c.b16 %v696, %v694
      %v913 = vpack.c.b16 %v697, %v695
      %v914 = vpack.c.b16 %v700, %v698
      %v915 = vpack.c.b16 %v701, %v699
      %v916 = vpack.c.b16 %v704, %v702
      %v917 = vpack.c.b16 %v705, %v703
      %v918 = vpack.c.b16 %v708, %v706
      %v919 = vpack.c.b16 %v709, %v707
      %v920 = vpack.c.b16 %v712, %v710
      %v921 = vpack.c.b16 %v713, %v711
      %v922 = vpack.c.b16 %v716, %v714
      %v923 = vpack.c.b16 %v717, %v715
      %v924 = vpack.c.b16 %v720, %v718
      %v925 = vpack.c.b16 %v721, %v719
      %v926 = vpack.c.b16 %v724, %v722
      %v927 = vpack.c.b16 %v725, %v723
      %v928 = vpack.c.b16 %v728, %v726
      %v929 = vpack.c.b16 %v729, %v727
      %v930 = vpack.c.b16 %v732, %v730
      %v931 = vpack.c.b16 %v733, %v731
      %v932 = vpack.c.b16 %v736, %v734
      %v933 = vpack.c.b16 %v737, %v735
      %v934 = vpack.c.b16 %v740, %v738
      %v935 = vpack.c.b16 %v741, %v739
      %v936 = vpack.c.b16 %v744, %v742
      %v937 = vpack.c.b16 %v745, %v743
      %v938 = vpack.c.b16 %v748, %v746
      %v939 = vpack.c.b16 %v749, %v747
      %v940 = vpack.c.b16 %v752, %v750
      %v941 = vpack.c.b16 %v753, %v751
      %v942 = vpack.c.b16 %v756, %v754
      %v943 = vpack.c.b16 %v757, %v755
      %v944 = vpack.c.b16 %v760, %v758
      %v945 = vpack.c.b16 %v761, %v759
      %v946 = vpack.c.b16 %v764, %v762
      %v947 = vpack.c.b16 %v765, %v763
      %v948 = vpack.c.b16 %v768, %v766
      %v949 = vpack.c.b16 %v769, %v767
      %v950 = vpack.c.b16 %v772, %v770
      %v951 = vpack.c.b16 %v773, %v771
      %v952 = vpack.c.b16 %v776, %v774
      %v953 = vpack.c.b16 %v777, %v775
      %v954 = vpack.c.b16 %v780, %v778
      %v955 = vpack.c.b16 %v781, %v779
      %v956 = vpack.c.b16 %v784, %v782
      %v957 = vpack.c.b16 %v785, %v783
      %v958 = vpack.c.b16 %v788, %v786
      %v959 = vpack.c.b16 %v789, %v787
      %v960 = vpack.c.b16 %v792, %v790
      %v961 = vpack.c.b16 %v793, %v791
      %v962 = vpack.c.b16 %v796, %v794
      %v963 = vpack.c.b16 %v797, %v795
      %v964 = vpack.c.b16 %v800, %v798
      %v965 = vpack.c.b16 %v801, %v799
      %v966 = vpack.c.b16 %v804, %v802
      %v967 = vpack.c.b16 %v805, %v803
      %v968 = vpack.c.b16 %v808, %v806
      %v969 = vpack.c.b16 %v809, %v807
      %v970 = vpack.c.b16 %v812, %v810
      %v971 = vpack.c.b16 %v813, %v811
      %v972 = vpack.c.b16 %v816, %v814
      %v973 = vpack.c.b16 %v817, %v815
      %v974 = vpack.c.b16 %v820, %v818
      %v975 = vpack.c.b16 %v821, %v819
      %v976 = vpack.c.b16 %v824, %v822
      %v977 = vpack.c.b16 %v825, %v823
      %v978 = vpack.c.b16 %v828, %v826
      %v979 = vpack.c.b16 %v829, %v827
      %v980 = vpack.c.b16 %v832, %v830
      %v981 = vpack.c.b16 %v833, %v831
      %v982 = vpack.c.b16 %v836, %v834
      %v983 = vpack.c.b16 %v837, %v835
      %v984 = vpack.c.b16 %v840, %v838
      %v985 = vpack.c.b16 %v841, %v839
      %v986 = vpack.c.b16 %v844, %v842
      %v987 = vpack.c.b16 %v845, %v843
      %v988 = vpack.c.b16 %v848, %v846
      %v989 = vpack.c.b16 %v849, %v847
      %v990 = vpack.c.b16 %v852, %v850
      %v991 = vpack.c.b16 %v853, %v851
      %v992 = vpack.c.b16 %v856, %v854
      %v993 = vpack.c.b16 %v857, %v855
      %v994 = vpack.c.b16 %v860, %v858
      %v995 = vpack.c.b16 %v861, %v859
      %v996 = vpack.c.b16 %v864, %v862
      %v997 = vpack.c.b16 %v865, %v863
      %v998 = vpack.c.b16 %v868, %v866
      %v999 = vpack.c.b16 %v869, %v867
      %v1000 = vpack.c.b16 %v872, %v870
      %v1001 = vpack.c.b16 %v873, %v871
      %1130 = vmatpush.bf16.msra.mxu0 %v888
      %1131 = vmatpush.bf16.msra.mxu0 %v886
      %1132 = vmatpush.bf16.msra.mxu0 %v884
      %1133 = vmatpush.bf16.msra.mxu0 %v882
      %1134 = vmatpush.bf16.msra.mxu0 %v880
      %1135 = vmatpush.bf16.msra.mxu0 %v878
      %1136 = vmatpush.bf16.msra.mxu0 %v876
      %1137 = vmatpush.bf16.msra.mxu0 %v874
      %1138 = vmatmul.bf16.gmra.mxu0 %v474
      %v1139 = vpop.f32.mrf.mxu0
      %v1140 = vadd.f32 0.0, %v1139
      %v1141 = vpop.f32.mrf.mxu0
      %1142 = vdwg.mxu0
      %1143 = vmatpush.bf16.msra.mxu0 %v904
      %1144 = vmatpush.bf16.msra.mxu0 %v902
      %1145 = vmatpush.bf16.msra.mxu0 %v900
      %1146 = vmatpush.bf16.msra.mxu0 %v898
      %1147 = vmatpush.bf16.msra.mxu0 %v896
      %1148 = vmatpush.bf16.msra.mxu0 %v894
      %1149 = vmatpush.bf16.msra.mxu0 %v892
      %1150 = vmatpush.bf16.msra.mxu0 %v890
      %1151 = vmatmul.bf16.gmra.mxu0 %v475
      %v1152 = vpop.f32.mrf.mxu0
      %v1153 = vadd.f32 %v1140, %v1152
      %v1154 = vpop.f32.mrf.mxu0
      %1155 = vdwg.mxu0
      %1156 = vmatpush.bf16.msra.mxu0 %v920
      %1157 = vmatpush.bf16.msra.mxu0 %v918
      %1158 = vmatpush.bf16.msra.mxu0 %v916
      %1159 = vmatpush.bf16.msra.mxu0 %v914
      %1160 = vmatpush.bf16.msra.mxu0 %v912
      %1161 = vmatpush.bf16.msra.mxu0 %v910
      %1162 = vmatpush.bf16.msra.mxu0 %v908
      %1163 = vmatpush.bf16.msra.mxu0 %v906
      %1164 = vmatmul.bf16.gmra.mxu0 %v476
      %v1165 = vpop.f32.mrf.mxu0
      %v1166 = vadd.f32 %v1153, %v1165
      %v1167 = vpop.f32.mrf.mxu0
      %1168 = vdwg.mxu0
      %1169 = vmatpush.bf16.msra.mxu0 %v936
      %1170 = vmatpush.bf16.msra.mxu0 %v934
      %1171 = vmatpush.bf16.msra.mxu0 %v932
      %1172 = vmatpush.bf16.msra.mxu0 %v930
      %1173 = vmatpush.bf16.msra.mxu0 %v928
      %1174 = vmatpush.bf16.msra.mxu0 %v926
      %1175 = vmatpush.bf16.msra.mxu0 %v924
      %1176 = vmatpush.bf16.msra.mxu0 %v922
      %1177 = vmatmul.bf16.gmra.mxu0 %v477
      %v1178 = vpop.f32.mrf.mxu0
      %v1179 = vadd.f32 %v1166, %v1178
      %v1180 = vpop.f32.mrf.mxu0
      %1181 = vdwg.mxu0
      %1182 = vmatpush.bf16.msra.mxu0 %v952
      %1183 = vmatpush.bf16.msra.mxu0 %v950
      %1184 = vmatpush.bf16.msra.mxu0 %v948
      %1185 = vmatpush.bf16.msra.mxu0 %v946
      %1186 = vmatpush.bf16.msra.mxu0 %v944
      %1187 = vmatpush.bf16.msra.mxu0 %v942
      %1188 = vmatpush.bf16.msra.mxu0 %v940
      %1189 = vmatpush.bf16.msra.mxu0 %v938
      %1190 = vmatmul.bf16.gmra.mxu0 %v478
      %v1191 = vpop.f32.mrf.mxu0
      %v1192 = vadd.f32 %v1179, %v1191
      %v1193 = vpop.f32.mrf.mxu0
      %1194 = vdwg.mxu0
      %1195 = vmatpush.bf16.msra.mxu0 %v968
      %1196 = vmatpush.bf16.msra.mxu0 %v966
      %1197 = vmatpush.bf16.msra.mxu0 %v964
      %1198 = vmatpush.bf16.msra.mxu0 %v962
      %1199 = vmatpush.bf16.msra.mxu0 %v960
      %1200 = vmatpush.bf16.msra.mxu0 %v958
      %1201 = vmatpush.bf16.msra.mxu0 %v956
      %1202 = vmatpush.bf16.msra.mxu0 %v954
      %1203 = vmatmul.bf16.gmra.mxu0 %v479
      %v1204 = vpop.f32.mrf.mxu0
      %v1205 = vadd.f32 %v1192, %v1204
      %v1206 = vpop.f32.mrf.mxu0
      %1207 = vdwg.mxu0
      %1208 = vmatpush.bf16.msra.mxu0 %v984
      %1209 = vmatpush.bf16.msra.mxu0 %v982
      %1210 = vmatpush.bf16.msra.mxu0 %v980
      %1211 = vmatpush.bf16.msra.mxu0 %v978
      %1212 = vmatpush.bf16.msra.mxu0 %v976
      %1213 = vmatpush.bf16.msra.mxu0 %v974
      %1214 = vmatpush.bf16.msra.mxu0 %v972
      %1215 = vmatpush.bf16.msra.mxu0 %v970
      %1216 = vmatmul.bf16.gmra.mxu0 %v480
      %v1217 = vpop.f32.mrf.mxu0
      %v1218 = vadd.f32 %v1205, %v1217
      %v1219 = vpop.f32.mrf.mxu0
      %1220 = vdwg.mxu0
      %1221 = vmatpush.bf16.msra.mxu0 %v1000
      %1222 = vmatpush.bf16.msra.mxu0 %v998
      %1223 = vmatpush.bf16.msra.mxu0 %v996
      %1224 = vmatpush.bf16.msra.mxu0 %v994
      %1225 = vmatpush.bf16.msra.mxu0 %v992
      %1226 = vmatpush.bf16.msra.mxu0 %v990
      %1227 = vmatpush.bf16.msra.mxu0 %v988
      %1228 = vmatpush.bf16.msra.mxu0 %v986
      %1229 = vmatmul.bf16.gmra.mxu0 %v481
      %v1230 = vpop.f32.mrf.mxu0
      %v1231 = vadd.f32 %v1218, %v1230
      %v1232 = vpop.f32.mrf.mxu0
      %1233 = vdwg.mxu0
      %1234 = vmatpush.bf16.msra.mxu0 %v889
      %1235 = vmatpush.bf16.msra.mxu0 %v887
      %1236 = vmatpush.bf16.msra.mxu0 %v885
      %1237 = vmatpush.bf16.msra.mxu0 %v883
      %1238 = vmatpush.bf16.msra.mxu0 %v881
      %1239 = vmatpush.bf16.msra.mxu0 %v879
      %1240 = vmatpush.bf16.msra.mxu0 %v877
      %1241 = vmatpush.bf16.msra.mxu0 %v875
      %1242 = vmatmul.bf16.gmra.mxu0 %v474
      %v1243 = vpop.f32.mrf.mxu0
      %v1244 = vadd.f32 0.0, %v1243
      %v1245 = vpop.f32.mrf.mxu0
      %1246 = vdwg.mxu0
      %1247 = vmatpush.bf16.msra.mxu0 %v905
      %1248 = vmatpush.bf16.msra.mxu0 %v903
      %1249 = vmatpush.bf16.msra.mxu0 %v901
      %1250 = vmatpush.bf16.msra.mxu0 %v899
      %1251 = vmatpush.bf16.msra.mxu0 %v897
      %1252 = vmatpush.bf16.msra.mxu0 %v895
      %1253 = vmatpush.bf16.msra.mxu0 %v893
      %1254 = vmatpush.bf16.msra.mxu0 %v891
      %1255 = vmatmul.bf16.gmra.mxu0 %v475
      %v1256 = vpop.f32.mrf.mxu0
      %v1257 = vadd.f32 %v1244, %v1256
      %v1258 = vpop.f32.mrf.mxu0
      %1259 = vdwg.mxu0
      %1260 = vmatpush.bf16.msra.mxu0 %v921
      %1261 = vmatpush.bf16.msra.mxu0 %v919
      %1262 = vmatpush.bf16.msra.mxu0 %v917
      %1263 = vmatpush.bf16.msra.mxu0 %v915
      %1264 = vmatpush.bf16.msra.mxu0 %v913
      %1265 = vmatpush.bf16.msra.mxu0 %v911
      %1266 = vmatpush.bf16.msra.mxu0 %v909
      %1267 = vmatpush.bf16.msra.mxu0 %v907
      %1268 = vmatmul.bf16.gmra.mxu0 %v476
      %v1269 = vpop.f32.mrf.mxu0
      %v1270 = vadd.f32 %v1257, %v1269
      %v1271 = vpop.f32.mrf.mxu0
      %1272 = vdwg.mxu0
      %1273 = vmatpush.bf16.msra.mxu0 %v937
      %1274 = vmatpush.bf16.msra.mxu0 %v935
      %1275 = vmatpush.bf16.msra.mxu0 %v933
      %1276 = vmatpush.bf16.msra.mxu0 %v931
      %1277 = vmatpush.bf16.msra.mxu0 %v929
      %1278 = vmatpush.bf16.msra.mxu0 %v927
      %1279 = vmatpush.bf16.msra.mxu0 %v925
      %1280 = vmatpush.bf16.msra.mxu0 %v923
      %1281 = vmatmul.bf16.gmra.mxu0 %v477
      %v1282 = vpop.f32.mrf.mxu0
      %v1283 = vadd.f32 %v1270, %v1282
      %v1284 = vpop.f32.mrf.mxu0
      %1285 = vdwg.mxu0
      %1286 = vmatpush.bf16.msra.mxu0 %v953
      %1287 = vmatpush.bf16.msra.mxu0 %v951
      %1288 = vmatpush.bf16.msra.mxu0 %v949
      %1289 = vmatpush.bf16.msra.mxu0 %v947
      %1290 = vmatpush.bf16.msra.mxu0 %v945
      %1291 = vmatpush.bf16.msra.mxu0 %v943
      %1292 = vmatpush.bf16.msra.mxu0 %v941
      %1293 = vmatpush.bf16.msra.mxu0 %v939
      %1294 = vmatmul.bf16.gmra.mxu0 %v478
      %v1295 = vpop.f32.mrf.mxu0
      %v1296 = vadd.f32 %v1283, %v1295
      %v1297 = vpop.f32.mrf.mxu0
      %1298 = vdwg.mxu0
      %1299 = vmatpush.bf16.msra.mxu0 %v969
      %1300 = vmatpush.bf16.msra.mxu0 %v967
      %1301 = vmatpush.bf16.msra.mxu0 %v965
      %1302 = vmatpush.bf16.msra.mxu0 %v963
      %1303 = vmatpush.bf16.msra.mxu0 %v961
      %1304 = vmatpush.bf16.msra.mxu0 %v959
      %1305 = vmatpush.bf16.msra.mxu0 %v957
      %1306 = vmatpush.bf16.msra.mxu0 %v955
      %1307 = vmatmul.bf16.gmra.mxu0 %v479
      %v1308 = vpop.f32.mrf.mxu0
      %v1309 = vadd.f32 %v1296, %v1308
      %v1310 = vpop.f32.mrf.mxu0
      %1311 = vdwg.mxu0
      %1312 = vmatpush.bf16.msra.mxu0 %v985
      %1313 = vmatpush.bf16.msra.mxu0 %v983
      %1314 = vmatpush.bf16.msra.mxu0 %v981
      %1315 = vmatpush.bf16.msra.mxu0 %v979
      %1316 = vmatpush.bf16.msra.mxu0 %v977
      %1317 = vmatpush.bf16.msra.mxu0 %v975
      %1318 = vmatpush.bf16.msra.mxu0 %v973
      %1319 = vmatpush.bf16.msra.mxu0 %v971
      %1320 = vmatmul.bf16.gmra.mxu0 %v480
      %v1321 = vpop.f32.mrf.mxu0
      %v1322 = vadd.f32 %v1309, %v1321
      %v1323 = vpop.f32.mrf.mxu0
      %1324 = vdwg.mxu0
      %1325 = vmatpush.bf16.msra.mxu0 %v1001
      %1326 = vmatpush.bf16.msra.mxu0 %v999
      %1327 = vmatpush.bf16.msra.mxu0 %v997
      %1328 = vmatpush.bf16.msra.mxu0 %v995
      %1329 = vmatpush.bf16.msra.mxu0 %v993
      %1330 = vmatpush.bf16.msra.mxu0 %v991
      %1331 = vmatpush.bf16.msra.mxu0 %v989
      %1332 = vmatpush.bf16.msra.mxu0 %v987
      %1333 = vmatmul.bf16.gmra.mxu0 %v481
      %v1334 = vpop.f32.mrf.mxu0
      %v1335 = vadd.f32 %v1322, %v1334
      %v1336 = vpop.f32.mrf.mxu0
      %1337 = vdwg.mxu0
      %v1338 = vadd.f32 %v328, %v1231
      %v1339 = vadd.f32 %v329, %v1335
      %1340 = vst [vmem:[#allocation2] sm:$0xff] %v1338
      %1341 = vst [vmem:[#allocation2 + $0x8] sm:$0xff] %v1339
      %p1342 = scmp.eq.s32.totalorder %s23, 1
      // Predicated region
      $region37: #{_lambda_.12} parent=31 // pred_check
        %p1343 = pneg %p1342
      $region38: #{_lambda_.12} parent=31 // pred_check_branch
        %1345 = sbr.rel (%p1343) target = $region40
      $region39: #{_lambda_.12} parent=31 // pred_region
        %v1346 = vld [vmem:[#allocation2] sm:$0xff]
        %v1347 = vld [vmem:[#allocation2 + $0x8] sm:$0xff]
        %v1348 = vld [vmem:[%s306] sm:$0x3]
        %v1350 = vperm.slane %v1348, 0
        %v1351 = vperm.slane %v1348, 1
        %v1354 = vadd.f32 %v1346, %v1350
        %v1355 = vadd.f32 %v1347, %v1351
        %v1356 = vmax.f32 %v1354, 0.0
        %v1357 = vmax.f32 %v1355, 0.0
        %1358 = vst [vmem:[%s320] sm:$0xff] %v1356
        %1359 = vst [vmem:[%s320 + $0x8] sm:$0xff] %v1357
      $region40: #{_lambda_.12} parent=31 // pred_fallthru
        _
      %s1360 = smul.u32 2, %s22
      %p1361 = scmp.lt.s32.totalorder %s20, 3
      %s1362 = scalar_select %p1361, %s20, 3
      %p1363 = scmp.lt.s32.totalorder %s21, 0
      %s1364 = scalar_select %p1363, %s21, 0
      %p1365 = scmp.lt.s32.totalorder %s1360, 1
      %s1366 = scalar_select %p1365, %s1360, 1
      %s1367 = smul.addr %s1364, 2
      %s1368 = sadd.s32 %s1366, %s1367
      %s1369 = smul.addr %s1362, 2
      %s1370 = sadd.s32 %s1368, %s1369
      %s1371 = smul.addr %s1370, 8
      %s1372 = scalar_lea.vmem %s3, %s1371
      // Predicated region
      $region41: #{_lambda_.12} parent=31 // pred_check
        %p1373 = pneg %p148
      $region42: #{_lambda_.12} parent=31 // pred_check_branch
        %1375 = sbr.rel (%p1373) target = $region44
      $region43: #{_lambda_.12} parent=31 // pred_region
        %s1376 = smul.u32 2, %s22
      $region44: #{_lambda_.12} parent=31 // pred_fallthru
        _
    $region32: #{_lambda_.12} parent=5 // pred_fallthru
      _
    %p1377 = scmp.le.s32.totalorder 2, %s9
    // Predicated region
    $region45: #{_lambda_.12} parent=5 // pred_check
      %p1378 = pneg %p1377
    $region46: #{_lambda_.12} parent=5 // pred_check_branch
      %1380 = sbr.rel (%p1378) target = $region48
    $region47: #{_lambda_.12} parent=5 // pred_region
      %s1381 = ssub.s32 %s9, 2
      // Predicated region
      $region49: #{_lambda_.12} parent=47 // pred_check
        %p1382 = pneg %p154
      $region50: #{_lambda_.12} parent=47 // pred_check_branch
        %1384 = sbr.rel (%p1382) target = $region52
      $region51: #{_lambda_.12} parent=47 // pred_region
        %s1385 = smul.u32 2, %s26
        %p1386 = scmp.lt.s32.totalorder %s24, 3
        %s1387 = scalar_select %p1386, %s24, 3
        %p1388 = scmp.lt.s32.totalorder %s25, 0
        %s1389 = scalar_select %p1388, %s25, 0
        %p1390 = scmp.lt.s32.totalorder %s1385, 1
        %s1391 = scalar_select %p1390, %s1385, 1
        %s1392 = smul.addr %s1389, 2
        %s1393 = sadd.s32 %s1391, %s1392
        %s1394 = smul.addr %s1387, 2
        %s1395 = sadd.s32 %s1393, %s1394
        %s1396 = smul.addr %s1395, 8
        %s1397 = scalar_lea.vmem %s3, %s1396
      $region52: #{_lambda_.12} parent=47 // pred_fallthru
        _
    $region48: #{_lambda_.12} parent=5 // pred_fallthru
      _
  $region6: #{_lambda_.12} parent=0 // loop_footer
    %s13 = sadd.s32 1, %s9
  $region7: #{_lambda_.12} parent=0 // loop_footer_branch
    %8 = sbr.rel target = $region3
  $region8: #{_lambda_.12} parent=0 // loop_exit
    _

// kernel: _lambda_.13
$region0: #{_lambda_.13}
  #allocation0 [shape = 'u32[]', space=smem, size = 0x4, offset = 0x4, fixed_abs, tag = 'smem constant byte address 0x4 - core index']
  #allocation1 [shape = 'u32[72,128]{1,0:T(1,128)}', space=vmem, size = 0x9000, scoped, tag = 'internal scratch']
  #allocation2 [shape = 'f32[8,128]{1,0:T(8,128)}', space=vmem, size = 0x1000, scoped, tag = 'scratch operand']
  %s0 = inlined_call_operand.vmem [shape: bf16[4,8,1024], index: 0, kind: input, shape index: {}]
  %s1 = inlined_call_operand.vmem [shape: bf16[4,1024,128], index: 1, kind: input, shape index: {}]
  %s2 = inlined_call_operand.vmem [shape: f32[1,1,128], index: 2, kind: input, shape index: {}]
  %s3 = inlined_call_operand.vmem [shape: f32[4,8,128], index: 3, kind: output, shape index: {}]
  %s4 = sld [smem:[#allocation0]]
  $region53: #{_lambda_.13} parent=0
    _
  %s6 = ssub.s32 1, %s4
  %s7 = scalar_select 0, %s6, %s4
  loop: start=0, step=1, limit=6
  $region2: #{_lambda_.13} parent=0 // loop_pre_header
    _
  $region3: #{_lambda_.13} parent=0 // loop_header
    %s9 = sphi 0, %s13
    %p10 = scmp.ge.s32.totalorder %s9, 6
    %s16 = sphi 0, %s42
    %s17 = sphi 0, %s38
    %s18 = sphi 0, %s34
    %s19 = sphi 0, %s30
    %s20 = sphi 0, %s16
    %s21 = sphi 0, %s17
    %s22 = sphi 0, %s18
    %s23 = sphi 0, %s19
    %s24 = sphi 0, %s20
    %s25 = sphi 0, %s21
    %s26 = sphi 0, %s22
    %s27 = sphi 0, %s23
    %s49 = sphi 0, %s51
    %s52 = sphi 0, %s49
    %s53 = sphi 0, %s52
    %s69 = sphi 0, %s53
    %s79 = sphi 0, %s81
    %s82 = sphi 0, %s79
    %s83 = sphi 0, %s82
    %s99 = sphi 0, %s83
    %s105 = sphi 0, %s107
    %s108 = sphi 0, %s105
    %s109 = sphi 0, %s108
    %s125 = sphi 0, %s109
    %s135 = sphi 0, %s137
    %s138 = sphi 0, %s135
    %s139 = sphi 0, %s138
    %s155 = sphi 0, %s139
  $region4: #{_lambda_.13} parent=0 // loop_header_branch
    %12 = sbr.rel (%p10) target = $region8
  $region5: #{_lambda_.13} parent=0 // loop_body
    %s14 = ssub.s32 %s9, 1
    %s15 = ssub.s32 %s9, 2
    %s28 = sadd.s32 1, %s19
    %p29 = scmp.ge.s32.totalorder %s28, 1
    %s30 = scalar_select %p29, 0, %s28
    %s31 = sadd.s32 1, %s18
    %s32 = scalar_select %p29, %s31, %s18
    %p33 = scmp.ge.s32.totalorder %s32, 1
    %s34 = scalar_select %p33, 0, %s32
    %s35 = sadd.s32 1, %s17
    %s36 = scalar_select %p33, %s35, %s17
    %p37 = scmp.ge.s32.totalorder %s36, 1
    %s38 = scalar_select %p37, 0, %s36
    %s39 = sadd.s32 1, %s16
    %s40 = scalar_select %p37, %s39, %s16
    %p41 = scmp.ge.s32.totalorder %s40, 4
    %s42 = scalar_select %p41, 0, %s40
    %s43 = ssub.s32 %s16, %s42
    %s44 = ssub.s32 %s17, %s38
    %s45 = sor.u32 %s43, %s44
    %s46 = ssub.s32 %s19, %s30
    %s47 = sor.u32 %s45, %s46
    %p48 = scmp.eq.s32.totalorder %s47, 0
    %s50 = sadd.s32 %s49, 1
    %s51 = scalar_select %p48, %s49, %s50
    %p54 = pneg %p48
    %p55 = scmp.eq.s32.totalorder %s9, 3
    %p56 = por %p54, %p55
    %p57 = scmp.ne.s32.totalorder %s49, %s52
    %p58 = scmp.eq.s32.totalorder %s9, 0
    %p59 = por %p57, %p58
    %p60 = scmp.ne.s32.totalorder %s49, %s52
    %p61 = scmp.eq.s32.totalorder %s14, 3
    %p62 = por %p60, %p61
    %p63 = scmp.ne.s32.totalorder %s52, %s53
    %p64 = scmp.eq.s32.totalorder %s14, 0
    %p65 = por %p63, %p64
    %p66 = scmp.ne.s32.totalorder %s52, %s53
    %p67 = scmp.eq.s32.totalorder %s15, 3
    %p68 = por %p66, %p67
    %p70 = scmp.ne.s32.totalorder %s53, %s69
    %p71 = scmp.eq.s32.totalorder %s15, 0
    %p72 = por %p70, %p71
    %s73 = ssub.s32 %s16, %s42
    %s74 = ssub.s32 %s19, %s30
    %s75 = sor.u32 %s73, %s74
    %s76 = ssub.s32 %s18, %s34
    %s77 = sor.u32 %s75, %s76
    %p78 = scmp.eq.s32.totalorder %s77, 0
    %s80 = sadd.s32 %s79, 1
    %s81 = scalar_select %p78, %s79, %s80
    %p84 = pneg %p78
    %p85 = scmp.eq.s32.totalorder %s9, 3
    %p86 = por %p84, %p85
    %p87 = scmp.ne.s32.totalorder %s79, %s82
    %p88 = scmp.eq.s32.totalorder %s9, 0
    %p89 = por %p87, %p88
    %p90 = scmp.ne.s32.totalorder %s79, %s82
    %p91 = scmp.eq.s32.totalorder %s14, 3
    %p92 = por %p90, %p91
    %p93 = scmp.ne.s32.totalorder %s82, %s83
    %p94 = scmp.eq.s32.totalorder %s14, 0
    %p95 = por %p93, %p94
    %p96 = scmp.ne.s32.totalorder %s82, %s83
    %p97 = scmp.eq.s32.totalorder %s15, 3
    %p98 = por %p96, %p97
    %p100 = scmp.ne.s32.totalorder %s83, %s99
    %p101 = scmp.eq.s32.totalorder %s15, 0
    %p102 = por %p100, %p101
    %s103 = ssub.s32 %s18, %s34
    %p104 = scmp.eq.s32.totalorder %s103, 0
    %s106 = sadd.s32 %s105, 1
    %s107 = scalar_select %p104, %s105, %s106
    %p110 = pneg %p104
    %p111 = scmp.eq.s32.totalorder %s9, 3
    %p112 = por %p110, %p111
    %p113 = scmp.ne.s32.totalorder %s105, %s108
    %p114 = scmp.eq.s32.totalorder %s9, 0
    %p115 = por %p113, %p114
    %p116 = scmp.ne.s32.totalorder %s105, %s108
    %p117 = scmp.eq.s32.totalorder %s14, 3
    %p118 = por %p116, %p117
    %p119 = scmp.ne.s32.totalorder %s108, %s109
    %p120 = scmp.eq.s32.totalorder %s14, 0
    %p121 = por %p119, %p120
    %p122 = scmp.ne.s32.totalorder %s108, %s109
    %p123 = scmp.eq.s32.totalorder %s15, 3
    %p124 = por %p122, %p123
    %p126 = scmp.ne.s32.totalorder %s109, %s125
    %p127 = scmp.eq.s32.totalorder %s15, 0
    %p128 = por %p126, %p127
    %s129 = ssub.s32 %s16, %s42
    %s130 = ssub.s32 %s17, %s38
    %s131 = sor.u32 %s129, %s130
    %s132 = ssub.s32 %s18, %s34
    %s133 = sor.u32 %s131, %s132
    %p134 = scmp.eq.s32.totalorder %s133, 0
    %s136 = sadd.s32 %s135, 1
    %s137 = scalar_select %p134, %s135, %s136
    %p140 = pneg %p134
    %p141 = scmp.eq.s32.totalorder %s9, 3
    %p142 = por %p140, %p141
    %p143 = scmp.ne.s32.totalorder %s135, %s138
    %p144 = scmp.eq.s32.totalorder %s9, 0
    %p145 = por %p143, %p144
    %p146 = scmp.ne.s32.totalorder %s135, %s138
    %p147 = scmp.eq.s32.totalorder %s14, 3
    %p148 = por %p146, %p147
    %p149 = scmp.ne.s32.totalorder %s138, %s139
    %p150 = scmp.eq.s32.totalorder %s14, 0
    %p151 = por %p149, %p150
    %p152 = scmp.ne.s32.totalorder %s138, %s139
    %p153 = scmp.eq.s32.totalorder %s15, 3
    %p154 = por %p152, %p153
    %p156 = scmp.ne.s32.totalorder %s139, %s155
    %p157 = scmp.eq.s32.totalorder %s15, 0
    %p158 = por %p156, %p157
    %p159 = scmp.le.s32.totalorder 1, %s9
    %p160 = scmp.lt.s32.totalorder %s9, 5
    %p161 = pnand %p159, %p160
    %p162 = pneg %p161
    // Predicated region
    $region9: #{_lambda_.13} parent=5 // pred_check
      _
    $region10: #{_lambda_.13} parent=5 // pred_check_branch
      %164 = sbr.rel (%p161) target = $region12
    $region11: #{_lambda_.13} parent=5 // pred_region
      %s165 = ssub.s32 %s9, 1
      // Predicated region
      $region13: #{_lambda_.13} parent=11 // pred_check
        %p166 = pneg %p121
      $region14: #{_lambda_.13} parent=11 // pred_check_branch
        %168 = sbr.rel (%p166) target = $region16
      $region15: #{_lambda_.13} parent=11 // pred_region
        %p169 = scmp.lt.s32.totalorder %s22, 0
        %s170 = scalar_select %p169, %s22, 0
        %s171 = scalar_lea.vmem %s2, %s170
      $region16: #{_lambda_.13} parent=11 // pred_fallthru
        _
    $region12: #{_lambda_.13} parent=5 // pred_fallthru
      _
    %p172 = scmp.lt.s32.totalorder %s9, 4
    // Predicated region
    $region17: #{_lambda_.13} parent=5 // pred_check
      %p173 = pneg %p172
    $region18: #{_lambda_.13} parent=5 // pred_check_branch
      %175 = sbr.rel (%p173) target = $region20
    $region19: #{_lambda_.13} parent=5 // pred_region
      // Predicated region
      $region21: #{_lambda_.13} parent=19 // pred_check
        %p176 = pneg %p59
      $region22: #{_lambda_.13} parent=19 // pred_check_branch
        %178 = sbr.rel (%p176) target = $region24
      $region23: #{_lambda_.13} parent=19 // pred_region
        %s179 = smul.u32 8, %s19
        %p180 = scmp.lt.s32.totalorder %s16, 3
        %s181 = scalar_select %p180, %s16, 3
        %p182 = scmp.lt.s32.totalorder %s17, 0
        %s183 = scalar_select %p182, %s17, 0
        %p184 = scmp.lt.s32.totalorder %s179, 7
        %s185 = scalar_select %p184, %s179, 7
        %s186 = smul.addr %s183, 8
        %s187 = sadd.s32 %s185, %s186
        %s188 = smul.addr %s181, 8
        %s189 = sadd.s32 %s187, %s188
        %s190 = smul.addr %s189, 4
        %s191 = scalar_lea.vmem %s0, %s190
        %s192 = smul.u32 8, %s19
      $region24: #{_lambda_.13} parent=19 // pred_fallthru
        _
      // Predicated region
      $region25: #{_lambda_.13} parent=19 // pred_check
        %p193 = pneg %p89
      $region26: #{_lambda_.13} parent=19 // pred_check_branch
        %195 = sbr.rel (%p193) target = $region28
      $region27: #{_lambda_.13} parent=19 // pred_region
        %s196 = smul.u32 128, %s19
        %p197 = scmp.lt.s32.totalorder %s16, 3
        %s198 = scalar_select %p197, %s16, 3
        %p199 = scmp.lt.s32.totalorder %s196, 127
        %s200 = scalar_select %p199, %s196, 127
        %p201 = scmp.lt.s32.totalorder %s18, 0
        %s202 = scalar_select %p201, %s18, 0
        %s203 = sadd.s32 %s202, %s200
        %s204 = smul.addr %s198, 128
        %s205 = sadd.s32 %s203, %s204
        %s206 = smul.addr %s205, 4
        %s207 = scalar_lea.vmem %s1, %s206
        %s208 = smul.u32 128, %s19
      $region28: #{_lambda_.13} parent=19 // pred_fallthru
        _
    $region20: #{_lambda_.13} parent=5 // pred_fallthru
      _
    %p209 = scmp.le.s32.totalorder 1, %s9
    %p210 = scmp.lt.s32.totalorder %s9, 5
    %p211 = pnand %p209, %p210
    %p212 = pneg %p211
    // Predicated region
    $region29: #{_lambda_.13} parent=5 // pred_check
      _
    $region30: #{_lambda_.13} parent=5 // pred_check_branch
      %214 = sbr.rel (%p211) target = $region32
    $region31: #{_lambda_.13} parent=5 // pred_region
      %s215 = ssub.s32 %s9, 1
      %s216 = smul.u32 8, %s23
      %p217 = scmp.lt.s32.totalorder %s20, 3
      %s218 = scalar_select %p217, %s20, 3
      %p219 = scmp.lt.s32.totalorder %s21, 0
      %s220 = scalar_select %p219, %s21, 0
      %p221 = scmp.lt.s32.totalorder %s216, 7
      %s222 = scalar_select %p221, %s216, 7
      %s223 = smul.addr %s220, 8
      %s224 = sadd.s32 %s222, %s223
      %s225 = smul.addr %s218, 8
      %s226 = sadd.s32 %s224, %s225
      %s227 = smul.addr %s226, 4
      %s228 = scalar_lea.vmem %s0, %s227
      %p229 = pneg %p65
      %p230 = pneg %p62
      %s231 = smul.u32 128, %s23
      %p232 = scmp.lt.s32.totalorder %s20, 3
      %s233 = scalar_select %p232, %s20, 3
      %p234 = scmp.lt.s32.totalorder %s231, 127
      %s235 = scalar_select %p234, %s231, 127
      %p236 = scmp.lt.s32.totalorder %s22, 0
      %s237 = scalar_select %p236, %s22, 0
      %s238 = sadd.s32 %s237, %s235
      %s239 = smul.addr %s233, 128
      %s240 = sadd.s32 %s238, %s239
      %s241 = smul.addr %s240, 4
      %s242 = scalar_lea.vmem %s1, %s241
      %p243 = pneg %p95
      %p244 = pneg %p92
      %p245 = scmp.lt.s32.totalorder %s22, 0
      %s246 = scalar_select %p245, %s22, 0
      %s247 = scalar_lea.vmem %s2, %s246
      %p248 = pneg %p121
      %p249 = pneg %p118
      %p250 = pneg %p151
      %p251 = pneg %p148
      %p252 = scmp.lt.s32.totalorder %s20, 3
      %s253 = scalar_select %p252, %s20, 3
      %p254 = scmp.lt.s32.totalorder %s21, 0
      %s255 = scalar_select %p254, %s21, 0
      %p256 = scmp.lt.s32.totalorder %s22, 0
      %s257 = scalar_select %p256, %s22, 0
      %s258 = sadd.s32 %s257, %s255
      %s259 = sadd.s32 %s258, %s253
      %s260 = smul.addr %s259, 8
      %s261 = scalar_lea.vmem %s3, %s260
      %s262 = smul.u32 8, %s23
      %p263 = scmp.lt.s32.totalorder %s20, 3
      %s264 = scalar_select %p263, %s20, 3
      %p265 = scmp.lt.s32.totalorder %s21, 0
      %s266 = scalar_select %p265, %s21, 0
      %p267 = scmp.lt.s32.totalorder %s262, 7
      %s268 = scalar_select %p267, %s262, 7
      %s269 = smul.addr %s266, 8
      %s270 = sadd.s32 %s268, %s269
      %s271 = smul.addr %s264, 8
      %s272 = sadd.s32 %s270, %s271
      %s273 = smul.addr %s272, 4
      %s274 = scalar_lea.vmem %s0, %s273
      %s275 = smul.u32 8, %s23
      %s276 = smul.u32 128, %s23
      %p277 = scmp.lt.s32.totalorder %s20, 3
      %s278 = scalar_select %p277, %s20, 3
      %p279 = scmp.lt.s32.totalorder %s276, 127
      %s280 = scalar_select %p279, %s276, 127
      %p281 = scmp.lt.s32.totalorder %s22, 0
      %s282 = scalar_select %p281, %s22, 0
      %s283 = sadd.s32 %s282, %s280
      %s284 = smul.addr %s278, 128
      %s285 = sadd.s32 %s283, %s284
      %s286 = smul.addr %s285, 4
      %s287 = scalar_lea.vmem %s1, %s286
      %s288 = smul.u32 128, %s23
      %p289 = scmp.lt.s32.totalorder %s22, 0
      %s290 = scalar_select %p289, %s22, 0
      %s291 = scalar_lea.vmem %s2, %s290
      %p292 = scmp.lt.s32.totalorder %s20, 3
      %s293 = scalar_select %p292, %s20, 3
      %p294 = scmp.lt.s32.totalorder %s21, 0
      %s295 = scalar_select %p294, %s21, 0
      %p296 = scmp.lt.s32.totalorder %s22, 0
      %s297 = scalar_select %p296, %s22, 0
      %s298 = sadd.s32 %s297, %s295
      %s299 = sadd.s32 %s298, %s293
      %s300 = smul.addr %s299, 8
      %s301 = scalar_lea.vmem %s3, %s300
      %p302 = scmp.eq.s32.totalorder %s23, 0
      // Predicated region
      $region33: #{_lambda_.13} parent=31 // pred_check
        %p303 = pneg %p302
      $region34: #{_lambda_.13} parent=31 // pred_check_branch
        %305 = sbr.rel (%p303) target = $region36
      $region35: #{_lambda_.13} parent=31 // pred_region
        %306 = vst [vmem:[#allocation2] sm:$0xff] 0.0
      $region36: #{_lambda_.13} parent=31 // pred_fallthru
        _
      %v307 = vld [vmem:[#allocation2] sm:$0xff]
      %v308 = vld [vmem:[%s274] sm:$0xff]
      %v309 = vld [vmem:[%s274 + $0x8] sm:$0xff]
      %v310 = vld [vmem:[%s274 + $0x10] sm:$0xff]
      %v311 = vld [vmem:[%s274 + $0x18] sm:$0xff]
      %v312 = vld [vmem:[%s287] sm:$0xf]
      %v313 = vld [vmem:[%s287 + $0x4] sm:$0xf]
      %v314 = vld [vmem:[%s287 + $0x8] sm:$0xf]
      %v315 = vld [vmem:[%s287 + $0xc] sm:$0xf]
      %v316 = vld [vmem:[%s287 + $0x10] sm:$0xf]
      %v317 = vld [vmem:[%s287 + $0x14] sm:$0xf]
      %v318 = vld [vmem:[%s287 + $0x18] sm:$0xf]
      %v319 = vld [vmem:[%s287 + $0x1c] sm:$0xf]
      %v320 = vld [vmem:[%s287 + $0x20] sm:$0xf]
      %v321 = vld [vmem:[%s287 + $0x24] sm:$0xf]
      %v322 = vld [vmem:[%s287 + $0x28] sm:$0xf]
      %v323 = vld [vmem:[%s287 + $0x2c] sm:$0xf]
      %v324 = vld [vmem:[%s287 + $0x30] sm:$0xf]
      %v325 = vld [vmem:[%s287 + $0x34] sm:$0xf]
      %v326 = vld [vmem:[%s287 + $0x38] sm:$0xf]
      %v327 = vld [vmem:[%s287 + $0x3c] sm:$0xf]
      %v328 = vld [vmem:[%s287 + $0x40] sm:$0xf]
      %v329 = vld [vmem:[%s287 + $0x44] sm:$0xf]
      %v330 = vld [vmem:[%s287 + $0x48] sm:$0xf]
      %v331 = vld [vmem:[%s287 + $0x4c] sm:$0xf]
      %v332 = vld [vmem:[%s287 + $0x50] sm:$0xf]
      %v333 = vld [vmem:[%s287 + $0x54] sm:$0xf]
      %v334 = vld [vmem:[%s287 + $0x58] sm:$0xf]
      %v335 = vld [vmem:[%s287 + $0x5c] sm:$0xf]
      %v336 = vld [vmem:[%s287 + $0x60] sm:$0xf]
      %v337 = vld [vmem:[%s287 + $0x64] sm:$0xf]
      %v338 = vld [vmem:[%s287 + $0x68] sm:$0xf]
      %v339 = vld [vmem:[%s287 + $0x6c] sm:$0xf]
      %v340 = vld [vmem:[%s287 + $0x70] sm:$0xf]
      %v341 = vld [vmem:[%s287 + $0x74] sm:$0xf]
      %v342 = vld [vmem:[%s287 + $0x78] sm:$0xf]
      %v343 = vld [vmem:[%s287 + $0x7c] sm:$0xf]
      %v344 = vld [vmem:[%s287 + $0x80] sm:$0xf]
      %v345 = vld [vmem:[%s287 + $0x84] sm:$0xf]
      %v346 = vld [vmem:[%s287 + $0x88] sm:$0xf]
      %v347 = vld [vmem:[%s287 + $0x8c] sm:$0xf]
      %v348 = vld [vmem:[%s287 + $0x90] sm:$0xf]
      %v349 = vld [vmem:[%s287 + $0x94] sm:$0xf]
      %v350 = vld [vmem:[%s287 + $0x98] sm:$0xf]
      %v351 = vld [vmem:[%s287 + $0x9c] sm:$0xf]
      %v352 = vld [vmem:[%s287 + $0xa0] sm:$0xf]
      %v353 = vld [vmem:[%s287 + $0xa4] sm:$0xf]
      %v354 = vld [vmem:[%s287 + $0xa8] sm:$0xf]
      %v355 = vld [vmem:[%s287 + $0xac] sm:$0xf]
      %v356 = vld [vmem:[%s287 + $0xb0] sm:$0xf]
      %v357 = vld [vmem:[%s287 + $0xb4] sm:$0xf]
      %v358 = vld [vmem:[%s287 + $0xb8] sm:$0xf]
      %v359 = vld [vmem:[%s287 + $0xbc] sm:$0xf]
      %v360 = vld [vmem:[%s287 + $0xc0] sm:$0xf]
      %v361 = vld [vmem:[%s287 + $0xc4] sm:$0xf]
      %v362 = vld [vmem:[%s287 + $0xc8] sm:$0xf]
      %v363 = vld [vmem:[%s287 + $0xcc] sm:$0xf]
      %v364 = vld [vmem:[%s287 + $0xd0] sm:$0xf]
      %v365 = vld [vmem:[%s287 + $0xd4] sm:$0xf]
      %v366 = vld [vmem:[%s287 + $0xd8] sm:$0xf]
      %v367 = vld [vmem:[%s287 + $0xdc] sm:$0xf]
      %v368 = vld [vmem:[%s287 + $0xe0] sm:$0xf]
      %v369 = vld [vmem:[%s287 + $0xe4] sm:$0xf]
      %v370 = vld [vmem:[%s287 + $0xe8] sm:$0xf]
      %v371 = vld [vmem:[%s287 + $0xec] sm:$0xf]
      %v372 = vld [vmem:[%s287 + $0xf0] sm:$0xf]
      %v373 = vld [vmem:[%s287 + $0xf4] sm:$0xf]
      %v374 = vld [vmem:[%s287 + $0xf8] sm:$0xf]
      %v375 = vld [vmem:[%s287 + $0xfc] sm:$0xf]
      %v376 = vld [vmem:[%s287 + $0x100] sm:$0xf]
      %v377 = vld [vmem:[%s287 + $0x104] sm:$0xf]
      %v378 = vld [vmem:[%s287 + $0x108] sm:$0xf]
      %v379 = vld [vmem:[%s287 + $0x10c] sm:$0xf]
      %v380 = vld [vmem:[%s287 + $0x110] sm:$0xf]
      %v381 = vld [vmem:[%s287 + $0x114] sm:$0xf]
      %v382 = vld [vmem:[%s287 + $0x118] sm:$0xf]
      %v383 = vld [vmem:[%s287 + $0x11c] sm:$0xf]
      %v384 = vld [vmem:[%s287 + $0x120] sm:$0xf]
      %v385 = vld [vmem:[%s287 + $0x124] sm:$0xf]
      %v386 = vld [vmem:[%s287 + $0x128] sm:$0xf]
      %v387 = vld [vmem:[%s287 + $0x12c] sm:$0xf]
      %v388 = vld [vmem:[%s287 + $0x130] sm:$0xf]
      %v389 = vld [vmem:[%s287 + $0x134] sm:$0xf]
      %v390 = vld [vmem:[%s287 + $0x138] sm:$0xf]
      %v391 = vld [vmem:[%s287 + $0x13c] sm:$0xf]
      %v392 = vld [vmem:[%s287 + $0x140] sm:$0xf]
      %v393 = vld [vmem:[%s287 + $0x144] sm:$0xf]
      %v394 = vld [vmem:[%s287 + $0x148] sm:$0xf]
      %v395 = vld [vmem:[%s287 + $0x14c] sm:$0xf]
      %v396 = vld [vmem:[%s287 + $0x150] sm:$0xf]
      %v397 = vld [vmem:[%s287 + $0x154] sm:$0xf]
      %v398 = vld [vmem:[%s287 + $0x158] sm:$0xf]
      %v399 = vld [vmem:[%s287 + $0x15c] sm:$0xf]
      %v400 = vld [vmem:[%s287 + $0x160] sm:$0xf]
      %v401 = vld [vmem:[%s287 + $0x164] sm:$0xf]
      %v402 = vld [vmem:[%s287 + $0x168] sm:$0xf]
      %v403 = vld [vmem:[%s287 + $0x16c] sm:$0xf]
      %v404 = vld [vmem:[%s287 + $0x170] sm:$0xf]
      %v405 = vld [vmem:[%s287 + $0x174] sm:$0xf]
      %v406 = vld [vmem:[%s287 + $0x178] sm:$0xf]
      %v407 = vld [vmem:[%s287 + $0x17c] sm:$0xf]
      %v408 = vld [vmem:[%s287 + $0x180] sm:$0xf]
      %v409 = vld [vmem:[%s287 + $0x184] sm:$0xf]
      %v410 = vld [vmem:[%s287 + $0x188] sm:$0xf]
      %v411 = vld [vmem:[%s287 + $0x18c] sm:$0xf]
      %v412 = vld [vmem:[%s287 + $0x190] sm:$0xf]
      %v413 = vld [vmem:[%s287 + $0x194] sm:$0xf]
      %v414 = vld [vmem:[%s287 + $0x198] sm:$0xf]
      %v415 = vld [vmem:[%s287 + $0x19c] sm:$0xf]
      %v416 = vld [vmem:[%s287 + $0x1a0] sm:$0xf]
      %v417 = vld [vmem:[%s287 + $0x1a4] sm:$0xf]
      %v418 = vld [vmem:[%s287 + $0x1a8] sm:$0xf]
      %v419 = vld [vmem:[%s287 + $0x1ac] sm:$0xf]
      %v420 = vld [vmem:[%s287 + $0x1b0] sm:$0xf]
      %v421 = vld [vmem:[%s287 + $0x1b4] sm:$0xf]
      %v422 = vld [vmem:[%s287 + $0x1b8] sm:$0xf]
      %v423 = vld [vmem:[%s287 + $0x1bc] sm:$0xf]
      %v424 = vld [vmem:[%s287 + $0x1c0] sm:$0xf]
      %v425 = vld [vmem:[%s287 + $0x1c4] sm:$0xf]
      %v426 = vld [vmem:[%s287 + $0x1c8] sm:$0xf]
      %v427 = vld [vmem:[%s287 + $0x1cc] sm:$0xf]
      %v428 = vld [vmem:[%s287 + $0x1d0] sm:$0xf]
      %v429 = vld [vmem:[%s287 + $0x1d4] sm:$0xf]
      %v430 = vld [vmem:[%s287 + $0x1d8] sm:$0xf]
      %v431 = vld [vmem:[%s287 + $0x1dc] sm:$0xf]
      %v432 = vld [vmem:[%s287 + $0x1e0] sm:$0xf]
      %v433 = vld [vmem:[%s287 + $0x1e4] sm:$0xf]
      %v434 = vld [vmem:[%s287 + $0x1e8] sm:$0xf]
      %v435 = vld [vmem:[%s287 + $0x1ec] sm:$0xf]
      %v436 = vld [vmem:[%s287 + $0x1f0] sm:$0xf]
      %v437 = vld [vmem:[%s287 + $0x1f4] sm:$0xf]
      %v438 = vld [vmem:[%s287 + $0x1f8] sm:$0xf]
      %v439 = vld [vmem:[%s287 + $0x1fc] sm:$0xf]
      %v444 = vunpack.c.l.b16 %v308
      %v445 = vunpack.c.h.b16 %v308
      %v446 = vunpack.c.l.b16 %v309
      %v447 = vunpack.c.h.b16 %v309
      %v448 = vunpack.c.l.b16 %v310
      %v449 = vunpack.c.h.b16 %v310
      %v450 = vunpack.c.l.b16 %v311
      %v451 = vunpack.c.h.b16 %v311
      %v452 = vpack.c.b16 %v444, %v444
      %v453 = vpack.c.b16 %v445, %v445
      %v454 = vpack.c.b16 %v446, %v446
      %v455 = vpack.c.b16 %v447, %v447
      %v456 = vpack.c.b16 %v448, %v448
      %v457 = vpack.c.b16 %v449, %v449
      %v458 = vpack.c.b16 %v450, %v450
      %v459 = vpack.c.b16 %v451, %v451
      %v596 = vunpack.c.l.b16 %v312
      %v597 = vunpack.c.l.b16 %v313
      %v598 = vunpack.c.l.b16 %v314
      %v599 = vunpack.c.l.b16 %v315
      %v600 = vunpack.c.l.b16 %v316
      %v601 = vunpack.c.l.b16 %v317
      %v602 = vunpack.c.l.b16 %v318
      %v603 = vunpack.c.l.b16 %v319
      %v604 = vunpack.c.l.b16 %v320
      %v605 = vunpack.c.l.b16 %v321
      %v606 = vunpack.c.l.b16 %v322
      %v607 = vunpack.c.l.b16 %v323
      %v608 = vunpack.c.l.b16 %v324
      %v609 = vunpack.c.l.b16 %v325
      %v610 = vunpack.c.l.b16 %v326
      %v611 = vunpack.c.l.b16 %v327
      %v612 = vunpack.c.l.b16 %v328
      %v613 = vunpack.c.l.b16 %v329
      %v614 = vunpack.c.l.b16 %v330
      %v615 = vunpack.c.l.b16 %v331
      %v616 = vunpack.c.l.b16 %v332
      %v617 = vunpack.c.l.b16 %v333
      %v618 = vunpack.c.l.b16 %v334
      %v619 = vunpack.c.l.b16 %v335
      %v620 = vunpack.c.l.b16 %v336
      %v621 = vunpack.c.l.b16 %v337
      %v622 = vunpack.c.l.b16 %v338
      %v623 = vunpack.c.l.b16 %v339
      %v624 = vunpack.c.l.b16 %v340
      %v625 = vunpack.c.l.b16 %v341
      %v626 = vunpack.c.l.b16 %v342
      %v627 = vunpack.c.l.b16 %v343
      %v628 = vunpack.c.l.b16 %v344
      %v629 = vunpack.c.l.b16 %v345
      %v630 = vunpack.c.l.b16 %v346
      %v631 = vunpack.c.l.b16 %v347
      %v632 = vunpack.c.l.b16 %v348
      %v633 = vunpack.c.l.b16 %v349
      %v634 = vunpack.c.l.b16 %v350
      %v635 = vunpack.c.l.b16 %v351
      %v636 = vunpack.c.l.b16 %v352
      %v637 = vunpack.c.l.b16 %v353
      %v638 = vunpack.c.l.b16 %v354
      %v639 = vunpack.c.l.b16 %v355
      %v640 = vunpack.c.l.b16 %v356
      %v641 = vunpack.c.l.b16 %v357
      %v642 = vunpack.c.l.b16 %v358
      %v643 = vunpack.c.l.b16 %v359
      %v644 = vunpack.c.l.b16 %v360
      %v645 = vunpack.c.l.b16 %v361
      %v646 = vunpack.c.l.b16 %v362
      %v647 = vunpack.c.l.b16 %v363
      %v648 = vunpack.c.l.b16 %v364
      %v649 = vunpack.c.l.b16 %v365
      %v650 = vunpack.c.l.b16 %v366
      %v651 = vunpack.c.l.b16 %v367
      %v652 = vunpack.c.l.b16 %v368
      %v653 = vunpack.c.l.b16 %v369
      %v654 = vunpack.c.l.b16 %v370
      %v655 = vunpack.c.l.b16 %v371
      %v656 = vunpack.c.l.b16 %v372
      %v657 = vunpack.c.l.b16 %v373
      %v658 = vunpack.c.l.b16 %v374
      %v659 = vunpack.c.l.b16 %v375
      %v660 = vunpack.c.l.b16 %v376
      %v661 = vunpack.c.l.b16 %v377
      %v662 = vunpack.c.l.b16 %v378
      %v663 = vunpack.c.l.b16 %v379
      %v664 = vunpack.c.l.b16 %v380
      %v665 = vunpack.c.l.b16 %v381
      %v666 = vunpack.c.l.b16 %v382
      %v667 = vunpack.c.l.b16 %v383
      %v668 = vunpack.c.l.b16 %v384
      %v669 = vunpack.c.l.b16 %v385
      %v670 = vunpack.c.l.b16 %v386
      %v671 = vunpack.c.l.b16 %v387
      %v672 = vunpack.c.l.b16 %v388
      %v673 = vunpack.c.l.b16 %v389
      %v674 = vunpack.c.l.b16 %v390
      %v675 = vunpack.c.l.b16 %v391
      %v676 = vunpack.c.l.b16 %v392
      %v677 = vunpack.c.l.b16 %v393
      %v678 = vunpack.c.l.b16 %v394
      %v679 = vunpack.c.l.b16 %v395
      %v680 = vunpack.c.l.b16 %v396
      %v681 = vunpack.c.l.b16 %v397
      %v682 = vunpack.c.l.b16 %v398
      %v683 = vunpack.c.l.b16 %v399
      %v684 = vunpack.c.l.b16 %v400
      %v685 = vunpack.c.l.b16 %v401
      %v686 = vunpack.c.l.b16 %v402
      %v687 = vunpack.c.l.b16 %v403
      %v688 = vunpack.c.l.b16 %v404
      %v689 = vunpack.c.l.b16 %v405
      %v690 = vunpack.c.l.b16 %v406
      %v691 = vunpack.c.l.b16 %v407
      %v692 = vunpack.c.l.b16 %v408
      %v693 = vunpack.c.l.b16 %v409
      %v694 = vunpack.c.l.b16 %v410
      %v695 = vunpack.c.l.b16 %v411
      %v696 = vunpack.c.l.b16 %v412
      %v697 = vunpack.c.l.b16 %v413
      %v698 = vunpack.c.l.b16 %v414
      %v699 = vunpack.c.l.b16 %v415
      %v700 = vunpack.c.l.b16 %v416
      %v701 = vunpack.c.l.b16 %v417
      %v702 = vunpack.c.l.b16 %v418
      %v703 = vunpack.c.l.b16 %v419
      %v704 = vunpack.c.l.b16 %v420
      %v705 = vunpack.c.l.b16 %v421
      %v706 = vunpack.c.l.b16 %v422
      %v707 = vunpack.c.l.b16 %v423
      %v708 = vunpack.c.l.b16 %v424
      %v709 = vunpack.c.l.b16 %v425
      %v710 = vunpack.c.l.b16 %v426
      %v711 = vunpack.c.l.b16 %v427
      %v712 = vunpack.c.l.b16 %v428
      %v713 = vunpack.c.l.b16 %v429
      %v714 = vunpack.c.l.b16 %v430
      %v715 = vunpack.c.l.b16 %v431
      %v716 = vunpack.c.l.b16 %v432
      %v717 = vunpack.c.l.b16 %v433
      %v718 = vunpack.c.l.b16 %v434
      %v719 = vunpack.c.l.b16 %v435
      %v720 = vunpack.c.l.b16 %v436
      %v721 = vunpack.c.l.b16 %v437
      %v722 = vunpack.c.l.b16 %v438
      %v723 = vunpack.c.l.b16 %v439
      %v724 = vpack.c.b16 %v597, %v596
      %v725 = vpack.c.b16 %v599, %v598
      %v726 = vpack.c.b16 %v601, %v600
      %v727 = vpack.c.b16 %v603, %v602
      %v728 = vpack.c.b16 %v605, %v604
      %v729 = vpack.c.b16 %v607, %v606
      %v730 = vpack.c.b16 %v609, %v608
      %v731 = vpack.c.b16 %v611, %v610
      %v732 = vpack.c.b16 %v613, %v612
      %v733 = vpack.c.b16 %v615, %v614
      %v734 = vpack.c.b16 %v617, %v616
      %v735 = vpack.c.b16 %v619, %v618
      %v736 = vpack.c.b16 %v621, %v620
      %v737 = vpack.c.b16 %v623, %v622
      %v738 = vpack.c.b16 %v625, %v624
      %v739 = vpack.c.b16 %v627, %v626
      %v740 = vpack.c.b16 %v629, %v628
      %v741 = vpack.c.b16 %v631, %v630
      %v742 = vpack.c.b16 %v633, %v632
      %v743 = vpack.c.b16 %v635, %v634
      %v744 = vpack.c.b16 %v637, %v636
      %v745 = vpack.c.b16 %v639, %v638
      %v746 = vpack.c.b16 %v641, %v640
      %v747 = vpack.c.b16 %v643, %v642
      %v748 = vpack.c.b16 %v645, %v644
      %v749 = vpack.c.b16 %v647, %v646
      %v750 = vpack.c.b16 %v649, %v648
      %v751 = vpack.c.b16 %v651, %v650
      %v752 = vpack.c.b16 %v653, %v652
      %v753 = vpack.c.b16 %v655, %v654
      %v754 = vpack.c.b16 %v657, %v656
      %v755 = vpack.c.b16 %v659, %v658
      %v756 = vpack.c.b16 %v661, %v660
      %v757 = vpack.c.b16 %v663, %v662
      %v758 = vpack.c.b16 %v665, %v664
      %v759 = vpack.c.b16 %v667, %v666
      %v760 = vpack.c.b16 %v669, %v668
      %v761 = vpack.c.b16 %v671, %v670
      %v762 = vpack.c.b16 %v673, %v672
      %v763 = vpack.c.b16 %v675, %v674
      %v764 = vpack.c.b16 %v677, %v676
      %v765 = vpack.c.b16 %v679, %v678
      %v766 = vpack.c.b16 %v681, %v680
      %v767 = vpack.c.b16 %v683, %v682
      %v768 = vpack.c.b16 %v685, %v684
      %v769 = vpack.c.b16 %v687, %v686
      %v770 = vpack.c.b16 %v689, %v688
      %v771 = vpack.c.b16 %v691, %v690
      %v772 = vpack.c.b16 %v693, %v692
      %v773 = vpack.c.b16 %v695, %v694
      %v774 = vpack.c.b16 %v697, %v696
      %v775 = vpack.c.b16 %v699, %v698
      %v776 = vpack.c.b16 %v701, %v700
      %v777 = vpack.c.b16 %v703, %v702
      %v778 = vpack.c.b16 %v705, %v704
      %v779 = vpack.c.b16 %v707, %v706
      %v780 = vpack.c.b16 %v709, %v708
      %v781 = vpack.c.b16 %v711, %v710
      %v782 = vpack.c.b16 %v713, %v712
      %v783 = vpack.c.b16 %v715, %v714
      %v784 = vpack.c.b16 %v717, %v716
      %v785 = vpack.c.b16 %v719, %v718
      %v786 = vpack.c.b16 %v721, %v720
      %v787 = vpack.c.b16 %v723, %v722
      %852 = vmatpush.bf16.msra.mxu0 %v731
      %853 = vmatpush.bf16.msra.mxu0 %v730
      %854 = vmatpush.bf16.msra.mxu0 %v729
      %855 = vmatpush.bf16.msra.mxu0 %v728
      %856 = vmatpush.bf16.msra.mxu0 %v727
      %857 = vmatpush.bf16.msra.mxu0 %v726
      %858 = vmatpush.bf16.msra.mxu0 %v725
      %859 = vmatpush.bf16.msra.mxu0 %v724
      %860 = vmatmul.bf16.gmra.mxu0 %v452
      %v861 = vpop.f32.mrf.mxu0
      %v862 = vadd.f32 0.0, %v861
      %v863 = vpop.f32.mrf.mxu0
      %864 = vdwg.mxu0
      %865 = vmatpush.bf16.msra.mxu0 %v739
      %866 = vmatpush.bf16.msra.mxu0 %v738
      %867 = vmatpush.bf16.msra.mxu0 %v737
      %868 = vmatpush.bf16.msra.mxu0 %v736
      %869 = vmatpush.bf16.msra.mxu0 %v735
      %870 = vmatpush.bf16.msra.mxu0 %v734
      %871 = vmatpush.bf16.msra.mxu0 %v733
      %872 = vmatpush.bf16.msra.mxu0 %v732
      %873 = vmatmul.bf16.gmra.mxu0 %v453
      %v874 = vpop.f32.mrf.mxu0
      %v875 = vadd.f32 %v862, %v874
      %v876 = vpop.f32.mrf.mxu0
      %877 = vdwg.mxu0
      %878 = vmatpush.bf16.msra.mxu0 %v747
      %879 = vmatpush.bf16.msra.mxu0 %v746
      %880 = vmatpush.bf16.msra.mxu0 %v745
      %881 = vmatpush.bf16.msra.mxu0 %v744
      %882 = vmatpush.bf16.msra.mxu0 %v743
      %883 = vmatpush.bf16.msra.mxu0 %v742
      %884 = vmatpush.bf16.msra.mxu0 %v741
      %885 = vmatpush.bf16.msra.mxu0 %v740
      %886 = vmatmul.bf16.gmra.mxu0 %v454
      %v887 = vpop.f32.mrf.mxu0
      %v888 = vadd.f32 %v875, %v887
      %v889 = vpop.f32.mrf.mxu0
      %890 = vdwg.mxu0
      %891 = vmatpush.bf16.msra.mxu0 %v755
      %892 = vmatpush.bf16.msra.mxu0 %v754
      %893 = vmatpush.bf16.msra.mxu0 %v753
      %894 = vmatpush.bf16.msra.mxu0 %v752
      %895 = vmatpush.bf16.msra.mxu0 %v751
      %896 = vmatpush.bf16.msra.mxu0 %v750
      %897 = vmatpush.bf16.msra.mxu0 %v749
      %898 = vmatpush.bf16.msra.mxu0 %v748
      %899 = vmatmul.bf16.gmra.mxu0 %v455
      %v900 = vpop.f32.mrf.mxu0
      %v901 = vadd.f32 %v888, %v900
      %v902 = vpop.f32.mrf.mxu0
      %903 = vdwg.mxu0
      %904 = vmatpush.bf16.msra.mxu0 %v763
      %905 = vmatpush.bf16.msra.mxu0 %v762
      %906 = vmatpush.bf16.msra.mxu0 %v761
      %907 = vmatpush.bf16.msra.mxu0 %v760
      %908 = vmatpush.bf16.msra.mxu0 %v759
      %909 = vmatpush.bf16.msra.mxu0 %v758
      %910 = vmatpush.bf16.msra.mxu0 %v757
      %911 = vmatpush.bf16.msra.mxu0 %v756
      %912 = vmatmul.bf16.gmra.mxu0 %v456
      %v913 = vpop.f32.mrf.mxu0
      %v914 = vadd.f32 %v901, %v913
      %v915 = vpop.f32.mrf.mxu0
      %916 = vdwg.mxu0
      %917 = vmatpush.bf16.msra.mxu0 %v771
      %918 = vmatpush.bf16.msra.mxu0 %v770
      %919 = vmatpush.bf16.msra.mxu0 %v769
      %920 = vmatpush.bf16.msra.mxu0 %v768
      %921 = vmatpush.bf16.msra.mxu0 %v767
      %922 = vmatpush.bf16.msra.mxu0 %v766
      %923 = vmatpush.bf16.msra.mxu0 %v765
      %924 = vmatpush.bf16.msra.mxu0 %v764
      %925 = vmatmul.bf16.gmra.mxu0 %v457
      %v926 = vpop.f32.mrf.mxu0
      %v927 = vadd.f32 %v914, %v926
      %v928 = vpop.f32.mrf.mxu0
      %929 = vdwg.mxu0
      %930 = vmatpush.bf16.msra.mxu0 %v779
      %931 = vmatpush.bf16.msra.mxu0 %v778
      %932 = vmatpush.bf16.msra.mxu0 %v777
      %933 = vmatpush.bf16.msra.mxu0 %v776
      %934 = vmatpush.bf16.msra.mxu0 %v775
      %935 = vmatpush.bf16.msra.mxu0 %v774
      %936 = vmatpush.bf16.msra.mxu0 %v773
      %937 = vmatpush.bf16.msra.mxu0 %v772
      %938 = vmatmul.bf16.gmra.mxu0 %v458
      %v939 = vpop.f32.mrf.mxu0
      %v940 = vadd.f32 %v927, %v939
      %v941 = vpop.f32.mrf.mxu0
      %942 = vdwg.mxu0
      %943 = vmatpush.bf16.msra.mxu0 %v787
      %944 = vmatpush.bf16.msra.mxu0 %v786
      %945 = vmatpush.bf16.msra.mxu0 %v785
      %946 = vmatpush.bf16.msra.mxu0 %v784
      %947 = vmatpush.bf16.msra.mxu0 %v783
      %948 = vmatpush.bf16.msra.mxu0 %v782
      %949 = vmatpush.bf16.msra.mxu0 %v781
      %950 = vmatpush.bf16.msra.mxu0 %v780
      %951 = vmatmul.bf16.gmra.mxu0 %v459
      %v952 = vpop.f32.mrf.mxu0
      %v953 = vadd.f32 %v940, %v952
      %v954 = vpop.f32.mrf.mxu0
      %955 = vdwg.mxu0
      %v956 = vadd.f32 %v307, %v953
      %957 = vst [vmem:[#allocation2] sm:$0xff] %v956
      // Predicated region
      $region37: #{_lambda_.13} parent=31 // pred_check
        %p958 = pneg %p302
      $region38: #{_lambda_.13} parent=31 // pred_check_branch
        %960 = sbr.rel (%p958) target = $region40
      $region39: #{_lambda_.13} parent=31 // pred_region
        %v961 = vld [vmem:[#allocation2] sm:$0xff]
        %v962 = vld [vmem:[%s291] sm:$0x1]
        %v964 = vperm.slane %v962, 0
        %v966 = vadd.f32 %v961, %v964
        %v967 = vmax.f32 %v966, 0.0
        %968 = vst [vmem:[%s301] sm:$0xff] %v967
      $region40: #{_lambda_.13} parent=31 // pred_fallthru
        _
      %p969 = scmp.lt.s32.totalorder %s20, 3
      %s970 = scalar_select %p969, %s20, 3
      %p971 = scmp.lt.s32.totalorder %s21, 0
      %s972 = scalar_select %p971, %s21, 0
      %p973 = scmp.lt.s32.totalorder %s22, 0
      %s974 = scalar_select %p973, %s22, 0
      %s975 = sadd.s32 %s974, %s972
      %s976 = sadd.s32 %s975, %s970
      %s977 = smul.addr %s976, 8
      %s978 = scalar_lea.vmem %s3, %s977
      // Predicated region
      $region41: #{_lambda_.13} parent=31 // pred_check
        %p979 = pneg %p148
      $region42: #{_lambda_.13} parent=31 // pred_check_branch
        %981 = sbr.rel (%p979) target = $region44
      $region43: #{_lambda_.13} parent=31 // pred_region
        _
      $region44: #{_lambda_.13} parent=31 // pred_fallthru
        _
    $region32: #{_lambda_.13} parent=5 // pred_fallthru
      _
    %p982 = scmp.le.s32.totalorder 2, %s9
    // Predicated region
    $region45: #{_lambda_.13} parent=5 // pred_check
      %p983 = pneg %p982
    $region46: #{_lambda_.13} parent=5 // pred_check_branch
      %985 = sbr.rel (%p983) target = $region48
    $region47: #{_lambda_.13} parent=5 // pred_region
      %s986 = ssub.s32 %s9, 2
      // Predicated region
      $region49: #{_lambda_.13} parent=47 // pred_check
        %p987 = pneg %p154
      $region50: #{_lambda_.13} parent=47 // pred_check_branch
        %989 = sbr.rel (%p987) target = $region52
      $region51: #{_lambda_.13} parent=47 // pred_region
        %p990 = scmp.lt.s32.totalorder %s24, 3
        %s991 = scalar_select %p990, %s24, 3
        %p992 = scmp.lt.s32.totalorder %s25, 0
        %s993 = scalar_select %p992, %s25, 0
        %p994 = scmp.lt.s32.totalorder %s26, 0
        %s995 = scalar_select %p994, %s26, 0
        %s996 = sadd.s32 %s995, %s993
        %s997 = sadd.s32 %s996, %s991
        %s998 = smul.addr %s997, 8
        %s999 = scalar_lea.vmem %s3, %s998
      $region52: #{_lambda_.13} parent=47 // pred_fallthru
        _
    $region48: #{_lambda_.13} parent=5 // pred_fallthru
      _
  $region6: #{_lambda_.13} parent=0 // loop_footer
    %s13 = sadd.s32 1, %s9
  $region7: #{_lambda_.13} parent=0 // loop_footer_branch
    %8 = sbr.rel target = $region3
  $region8: #{_lambda_.13} parent=0 // loop_exit
    _

// kernel: _lambda_.14
$region0: #{_lambda_.14}
  #allocation0 [shape = 'u32[]', space=smem, size = 0x4, offset = 0x4, fixed_abs, tag = 'smem constant byte address 0x4 - core index']
  #allocation1 [shape = 'u32[72,128]{1,0:T(1,128)}', space=vmem, size = 0x9000, scoped, tag = 'internal scratch']
  #allocation2 [shape = 'f32[32,128]{1,0:T(8,128)}', space=vmem, size = 0x4000, scoped, tag = 'scratch operand']
  %s0 = inlined_call_operand.vmem [shape: bf16[4,32,512], index: 0, kind: input, shape index: {}]
  %s1 = inlined_call_operand.vmem [shape: bf16[4,512,128], index: 1, kind: input, shape index: {}]
  %s2 = inlined_call_operand.vmem [shape: f32[1,1,128], index: 2, kind: input, shape index: {}]
  %s3 = inlined_call_operand.vmem [shape: f32[4,32,128], index: 3, kind: output, shape index: {}]
  %s4 = sld [smem:[#allocation0]]
  $region53: #{_lambda_.14} parent=0
    _
  %s6 = ssub.s32 1, %s4
  %s7 = scalar_select 0, %s6, %s4
  loop: start=0, step=1, limit=6
  $region2: #{_lambda_.14} parent=0 // loop_pre_header
    _
  $region3: #{_lambda_.14} parent=0 // loop_header
    %s9 = sphi 0, %s13
    %p10 = scmp.ge.s32.totalorder %s9, 6
    %s16 = sphi 0, %s42
    %s17 = sphi 0, %s38
    %s18 = sphi 0, %s34
    %s19 = sphi 0, %s30
    %s20 = sphi 0, %s16
    %s21 = sphi 0, %s17
    %s22 = sphi 0, %s18
    %s23 = sphi 0, %s19
    %s24 = sphi 0, %s20
    %s25 = sphi 0, %s21
    %s26 = sphi 0, %s22
    %s27 = sphi 0, %s23
    %s49 = sphi 0, %s51
    %s52 = sphi 0, %s49
    %s53 = sphi 0, %s52
    %s69 = sphi 0, %s53
    %s79 = sphi 0, %s81
    %s82 = sphi 0, %s79
    %s83 = sphi 0, %s82
    %s99 = sphi 0, %s83
    %s105 = sphi 0, %s107
    %s108 = sphi 0, %s105
    %s109 = sphi 0, %s108
    %s125 = sphi 0, %s109
    %s135 = sphi 0, %s137
    %s138 = sphi 0, %s135
    %s139 = sphi 0, %s138
    %s155 = sphi 0, %s139
  $region4: #{_lambda_.14} parent=0 // loop_header_branch
    %12 = sbr.rel (%p10) target = $region8
  $region5: #{_lambda_.14} parent=0 // loop_body
    %s14 = ssub.s32 %s9, 1
    %s15 = ssub.s32 %s9, 2
    %s28 = sadd.s32 1, %s19
    %p29 = scmp.ge.s32.totalorder %s28, 1
    %s30 = scalar_select %p29, 0, %s28
    %s31 = sadd.s32 1, %s18
    %s32 = scalar_select %p29, %s31, %s18
    %p33 = scmp.ge.s32.totalorder %s32, 1
    %s34 = scalar_select %p33, 0, %s32
    %s35 = sadd.s32 1, %s17
    %s36 = scalar_select %p33, %s35, %s17
    %p37 = scmp.ge.s32.totalorder %s36, 1
    %s38 = scalar_select %p37, 0, %s36
    %s39 = sadd.s32 1, %s16
    %s40 = scalar_select %p37, %s39, %s16
    %p41 = scmp.ge.s32.totalorder %s40, 4
    %s42 = scalar_select %p41, 0, %s40
    %s43 = ssub.s32 %s16, %s42
    %s44 = ssub.s32 %s17, %s38
    %s45 = sor.u32 %s43, %s44
    %s46 = ssub.s32 %s19, %s30
    %s47 = sor.u32 %s45, %s46
    %p48 = scmp.eq.s32.totalorder %s47, 0
    %s50 = sadd.s32 %s49, 1
    %s51 = scalar_select %p48, %s49, %s50
    %p54 = pneg %p48
    %p55 = scmp.eq.s32.totalorder %s9, 3
    %p56 = por %p54, %p55
    %p57 = scmp.ne.s32.totalorder %s49, %s52
    %p58 = scmp.eq.s32.totalorder %s9, 0
    %p59 = por %p57, %p58
    %p60 = scmp.ne.s32.totalorder %s49, %s52
    %p61 = scmp.eq.s32.totalorder %s14, 3
    %p62 = por %p60, %p61
    %p63 = scmp.ne.s32.totalorder %s52, %s53
    %p64 = scmp.eq.s32.totalorder %s14, 0
    %p65 = por %p63, %p64
    %p66 = scmp.ne.s32.totalorder %s52, %s53
    %p67 = scmp.eq.s32.totalorder %s15, 3
    %p68 = por %p66, %p67
    %p70 = scmp.ne.s32.totalorder %s53, %s69
    %p71 = scmp.eq.s32.totalorder %s15, 0
    %p72 = por %p70, %p71
    %s73 = ssub.s32 %s16, %s42
    %s74 = ssub.s32 %s19, %s30
    %s75 = sor.u32 %s73, %s74
    %s76 = ssub.s32 %s18, %s34
    %s77 = sor.u32 %s75, %s76
    %p78 = scmp.eq.s32.totalorder %s77, 0
    %s80 = sadd.s32 %s79, 1
    %s81 = scalar_select %p78, %s79, %s80
    %p84 = pneg %p78
    %p85 = scmp.eq.s32.totalorder %s9, 3
    %p86 = por %p84, %p85
    %p87 = scmp.ne.s32.totalorder %s79, %s82
    %p88 = scmp.eq.s32.totalorder %s9, 0
    %p89 = por %p87, %p88
    %p90 = scmp.ne.s32.totalorder %s79, %s82
    %p91 = scmp.eq.s32.totalorder %s14, 3
    %p92 = por %p90, %p91
    %p93 = scmp.ne.s32.totalorder %s82, %s83
    %p94 = scmp.eq.s32.totalorder %s14, 0
    %p95 = por %p93, %p94
    %p96 = scmp.ne.s32.totalorder %s82, %s83
    %p97 = scmp.eq.s32.totalorder %s15, 3
    %p98 = por %p96, %p97
    %p100 = scmp.ne.s32.totalorder %s83, %s99
    %p101 = scmp.eq.s32.totalorder %s15, 0
    %p102 = por %p100, %p101
    %s103 = ssub.s32 %s18, %s34
    %p104 = scmp.eq.s32.totalorder %s103, 0
    %s106 = sadd.s32 %s105, 1
    %s107 = scalar_select %p104, %s105, %s106
    %p110 = pneg %p104
    %p111 = scmp.eq.s32.totalorder %s9, 3
    %p112 = por %p110, %p111
    %p113 = scmp.ne.s32.totalorder %s105, %s108
    %p114 = scmp.eq.s32.totalorder %s9, 0
    %p115 = por %p113, %p114
    %p116 = scmp.ne.s32.totalorder %s105, %s108
    %p117 = scmp.eq.s32.totalorder %s14, 3
    %p118 = por %p116, %p117
    %p119 = scmp.ne.s32.totalorder %s108, %s109
    %p120 = scmp.eq.s32.totalorder %s14, 0
    %p121 = por %p119, %p120
    %p122 = scmp.ne.s32.totalorder %s108, %s109
    %p123 = scmp.eq.s32.totalorder %s15, 3
    %p124 = por %p122, %p123
    %p126 = scmp.ne.s32.totalorder %s109, %s125
    %p127 = scmp.eq.s32.totalorder %s15, 0
    %p128 = por %p126, %p127
    %s129 = ssub.s32 %s16, %s42
    %s130 = ssub.s32 %s17, %s38
    %s131 = sor.u32 %s129, %s130
    %s132 = ssub.s32 %s18, %s34
    %s133 = sor.u32 %s131, %s132
    %p134 = scmp.eq.s32.totalorder %s133, 0
    %s136 = sadd.s32 %s135, 1
    %s137 = scalar_select %p134, %s135, %s136
    %p140 = pneg %p134
    %p141 = scmp.eq.s32.totalorder %s9, 3
    %p142 = por %p140, %p141
    %p143 = scmp.ne.s32.totalorder %s135, %s138
    %p144 = scmp.eq.s32.totalorder %s9, 0
    %p145 = por %p143, %p144
    %p146 = scmp.ne.s32.totalorder %s135, %s138
    %p147 = scmp.eq.s32.totalorder %s14, 3
    %p148 = por %p146, %p147
    %p149 = scmp.ne.s32.totalorder %s138, %s139
    %p150 = scmp.eq.s32.totalorder %s14, 0
    %p151 = por %p149, %p150
    %p152 = scmp.ne.s32.totalorder %s138, %s139
    %p153 = scmp.eq.s32.totalorder %s15, 3
    %p154 = por %p152, %p153
    %p156 = scmp.ne.s32.totalorder %s139, %s155
    %p157 = scmp.eq.s32.totalorder %s15, 0
    %p158 = por %p156, %p157
    %p159 = scmp.le.s32.totalorder 1, %s9
    %p160 = scmp.lt.s32.totalorder %s9, 5
    %p161 = pnand %p159, %p160
    %p162 = pneg %p161
    // Predicated region
    $region9: #{_lambda_.14} parent=5 // pred_check
      _
    $region10: #{_lambda_.14} parent=5 // pred_check_branch
      %164 = sbr.rel (%p161) target = $region12
    $region11: #{_lambda_.14} parent=5 // pred_region
      %s165 = ssub.s32 %s9, 1
      // Predicated region
      $region13: #{_lambda_.14} parent=11 // pred_check
        %p166 = pneg %p121
      $region14: #{_lambda_.14} parent=11 // pred_check_branch
        %168 = sbr.rel (%p166) target = $region16
      $region15: #{_lambda_.14} parent=11 // pred_region
        %p169 = scmp.lt.s32.totalorder %s22, 0
        %s170 = scalar_select %p169, %s22, 0
        %s171 = scalar_lea.vmem %s2, %s170
      $region16: #{_lambda_.14} parent=11 // pred_fallthru
        _
    $region12: #{_lambda_.14} parent=5 // pred_fallthru
      _
    %p172 = scmp.lt.s32.totalorder %s9, 4
    // Predicated region
    $region17: #{_lambda_.14} parent=5 // pred_check
      %p173 = pneg %p172
    $region18: #{_lambda_.14} parent=5 // pred_check_branch
      %175 = sbr.rel (%p173) target = $region20
    $region19: #{_lambda_.14} parent=5 // pred_region
      // Predicated region
      $region21: #{_lambda_.14} parent=19 // pred_check
        %p176 = pneg %p59
      $region22: #{_lambda_.14} parent=19 // pred_check_branch
        %178 = sbr.rel (%p176) target = $region24
      $region23: #{_lambda_.14} parent=19 // pred_region
        %s179 = smul.u32 4, %s17
        %s180 = smul.u32 4, %s19
        %p181 = scmp.lt.s32.totalorder %s16, 3
        %s182 = scalar_select %p181, %s16, 3
        %p183 = scmp.lt.s32.totalorder %s179, 3
        %s184 = scalar_select %p183, %s179, 3
        %p185 = scmp.lt.s32.totalorder %s180, 3
        %s186 = scalar_select %p185, %s180, 3
        %s187 = smul.addr %s184, 4
        %s188 = sadd.s32 %s186, %s187
        %s189 = smul.addr %s182, 16
        %s190 = sadd.s32 %s188, %s189
        %s191 = smul.addr %s190, 4
        %s192 = scalar_lea.vmem %s0, %s191
        %s193 = smul.u32 4, %s17
        %s194 = smul.u32 4, %s19
      $region24: #{_lambda_.14} parent=19 // pred_fallthru
        _
      // Predicated region
      $region25: #{_lambda_.14} parent=19 // pred_check
        %p195 = pneg %p89
      $region26: #{_lambda_.14} parent=19 // pred_check_branch
        %197 = sbr.rel (%p195) target = $region28
      $region27: #{_lambda_.14} parent=19 // pred_region
        %s198 = smul.u32 64, %s19
        %p199 = scmp.lt.s32.totalorder %s16, 3
        %s200 = scalar_select %p199, %s16, 3
        %p201 = scmp.lt.s32.totalorder %s198, 63
        %s202 = scalar_select %p201, %s198, 63
        %p203 = scmp.lt.s32.totalorder %s18, 0
        %s204 = scalar_select %p203, %s18, 0
        %s205 = sadd.s32 %s204, %s202
        %s206 = smul.addr %s200, 64
        %s207 = sadd.s32 %s205, %s206
        %s208 = smul.addr %s207, 4
        %s209 = scalar_lea.vmem %s1, %s208
        %s210 = smul.u32 64, %s19
      $region28: #{_lambda_.14} parent=19 // pred_fallthru
        _
    $region20: #{_lambda_.14} parent=5 // pred_fallthru
      _
    %p211 = scmp.le.s32.totalorder 1, %s9
    %p212 = scmp.lt.s32.totalorder %s9, 5
    %p213 = pnand %p211, %p212
    %p214 = pneg %p213
    // Predicated region
    $region29: #{_lambda_.14} parent=5 // pred_check
      _
    $region30: #{_lambda_.14} parent=5 // pred_check_branch
      %216 = sbr.rel (%p213) target = $region32
    $region31: #{_lambda_.14} parent=5 // pred_region
      %s217 = ssub.s32 %s9, 1
      %s218 = smul.u32 4, %s21
      %s219 = smul.u32 4, %s23
      %p220 = scmp.lt.s32.totalorder %s20, 3
      %s221 = scalar_select %p220, %s20, 3
      %p222 = scmp.lt.s32.totalorder %s218, 3
      %s223 = scalar_select %p222, %s218, 3
      %p224 = scmp.lt.s32.totalorder %s219, 3
      %s225 = scalar_select %p224, %s219, 3
      %s226 = smul.addr %s223, 4
      %s227 = sadd.s32 %s225, %s226
      %s228 = smul.addr %s221, 16
      %s229 = sadd.s32 %s227, %s228
      %s230 = smul.addr %s229, 4
      %s231 = scalar_lea.vmem %s0, %s230
      %p232 = pneg %p65
      %p233 = pneg %p62
      %s234 = smul.u32 64, %s23
      %p235 = scmp.lt.s32.totalorder %s20, 3
      %s236 = scalar_select %p235, %s20, 3
      %p237 = scmp.lt.s32.totalorder %s234, 63
      %s238 = scalar_select %p237, %s234, 63
      %p239 = scmp.lt.s32.totalorder %s22, 0
      %s240 = scalar_select %p239, %s22, 0
      %s241 = sadd.s32 %s240, %s238
      %s242 = smul.addr %s236, 64
      %s243 = sadd.s32 %s241, %s242
      %s244 = smul.addr %s243, 4
      %s245 = scalar_lea.vmem %s1, %s244
      %p246 = pneg %p95
      %p247 = pneg %p92
      %p248 = scmp.lt.s32.totalorder %s22, 0
      %s249 = scalar_select %p248, %s22, 0
      %s250 = scalar_lea.vmem %s2, %s249
      %p251 = pneg %p121
      %p252 = pneg %p118
      %p253 = pneg %p151
      %p254 = pneg %p148
      %s255 = smul.u32 4, %s21
      %p256 = scmp.lt.s32.totalorder %s20, 3
      %s257 = scalar_select %p256, %s20, 3
      %p258 = scmp.lt.s32.totalorder %s255, 3
      %s259 = scalar_select %p258, %s255, 3
      %p260 = scmp.lt.s32.totalorder %s22, 0
      %s261 = scalar_select %p260, %s22, 0
      %s262 = sadd.s32 %s261, %s259
      %s263 = smul.addr %s257, 4
      %s264 = sadd.s32 %s262, %s263
      %s265 = smul.addr %s264, 8
      %s266 = scalar_lea.vmem %s3, %s265
      %s267 = smul.u32 4, %s21
      %s268 = smul.u32 4, %s23
      %p269 = scmp.lt.s32.totalorder %s20, 3
      %s270 = scalar_select %p269, %s20, 3
      %p271 = scmp.lt.s32.totalorder %s267, 3
      %s272 = scalar_select %p271, %s267, 3
      %p273 = scmp.lt.s32.totalorder %s268, 3
      %s274 = scalar_select %p273, %s268, 3
      %s275 = smul.addr %s272, 4
      %s276 = sadd.s32 %s274, %s275
      %s277 = smul.addr %s270, 16
      %s278 = sadd.s32 %s276, %s277
      %s279 = smul.addr %s278, 4
      %s280 = scalar_lea.vmem %s0, %s279
      %s281 = smul.u32 4, %s21
      %s282 = smul.u32 4, %s23
      %s283 = smul.u32 64, %s23
      %p284 = scmp.lt.s32.totalorder %s20, 3
      %s285 = scalar_select %p284, %s20, 3
      %p286 = scmp.lt.s32.totalorder %s283, 63
      %s287 = scalar_select %p286, %s283, 63
      %p288 = scmp.lt.s32.totalorder %s22, 0
      %s289 = scalar_select %p288, %s22, 0
      %s290 = sadd.s32 %s289, %s287
      %s291 = smul.addr %s285, 64
      %s292 = sadd.s32 %s290, %s291
      %s293 = smul.addr %s292, 4
      %s294 = scalar_lea.vmem %s1, %s293
      %s295 = smul.u32 64, %s23
      %p296 = scmp.lt.s32.totalorder %s22, 0
      %s297 = scalar_select %p296, %s22, 0
      %s298 = scalar_lea.vmem %s2, %s297
      %s299 = smul.u32 4, %s21
      %p300 = scmp.lt.s32.totalorder %s20, 3
      %s301 = scalar_select %p300, %s20, 3
      %p302 = scmp.lt.s32.totalorder %s299, 3
      %s303 = scalar_select %p302, %s299, 3
      %p304 = scmp.lt.s32.totalorder %s22, 0
      %s305 = scalar_select %p304, %s22, 0
      %s306 = sadd.s32 %s305, %s303
      %s307 = smul.addr %s301, 4
      %s308 = sadd.s32 %s306, %s307
      %s309 = smul.addr %s308, 8
      %s310 = scalar_lea.vmem %s3, %s309
      %s311 = smul.u32 4, %s21
      %p312 = scmp.eq.s32.totalorder %s23, 0
      // Predicated region
      $region33: #{_lambda_.14} parent=31 // pred_check
        %p313 = pneg %p312
      $region34: #{_lambda_.14} parent=31 // pred_check_branch
        %315 = sbr.rel (%p313) target = $region36
      $region35: #{_lambda_.14} parent=31 // pred_region
        %316 = vst [vmem:[#allocation2] sm:$0xff] 0.0
        %317 = vst [vmem:[#allocation2 + $0x8] sm:$0xff] 0.0
        %318 = vst [vmem:[#allocation2 + $0x10] sm:$0xff] 0.0
        %319 = vst [vmem:[#allocation2 + $0x18] sm:$0xff] 0.0
      $region36: #{_lambda_.14} parent=31 // pred_fallthru
        _
      %v320 = vld [vmem:[#allocation2] sm:$0xff]
      %v321 = vld [vmem:[#allocation2 + $0x8] sm:$0xff]
      %v322 = vld [vmem:[#allocation2 + $0x10] sm:$0xff]
      %v323 = vld [vmem:[#allocation2 + $0x18] sm:$0xff]
      %v324 = vld [vmem:[%s280] sm:$0xff]
      %v325 = vld [vmem:[%s280 + $0x8] sm:$0xff]
      %v326 = vld [vmem:[%s280 + $0x10] sm:$0xff]
      %v327 = vld [vmem:[%s280 + $0x18] sm:$0xff]
      %v328 = vld [vmem:[%s280 + $0x20] sm:$0xff]
      %v329 = vld [vmem:[%s280 + $0x28] sm:$0xff]
      %v330 = vld [vmem:[%s280 + $0x30] sm:$0xff]
      %v331 = vld [vmem:[%s280 + $0x38] sm:$0xff]
      %v332 = vld [vmem:[%s294] sm:$0xf]
      %v333 = vld [vmem:[%s294 + $0x4] sm:$0xf]
      %v334 = vld [vmem:[%s294 + $0x8] sm:$0xf]
      %v335 = vld [vmem:[%s294 + $0xc] sm:$0xf]
      %v336 = vld [vmem:[%s294 + $0x10] sm:$0xf]
      %v337 = vld [vmem:[%s294 + $0x14] sm:$0xf]
      %v338 = vld [vmem:[%s294 + $0x18] sm:$0xf]
      %v339 = vld [vmem:[%s294 + $0x1c] sm:$0xf]
      %v340 = vld [vmem:[%s294 + $0x20] sm:$0xf]
      %v341 = vld [vmem:[%s294 + $0x24] sm:$0xf]
      %v342 = vld [vmem:[%s294 + $0x28] sm:$0xf]
      %v343 = vld [vmem:[%s294 + $0x2c] sm:$0xf]
      %v344 = vld [vmem:[%s294 + $0x30] sm:$0xf]
      %v345 = vld [vmem:[%s294 + $0x34] sm:$0xf]
      %v346 = vld [vmem:[%s294 + $0x38] sm:$0xf]
      %v347 = vld [vmem:[%s294 + $0x3c] sm:$0xf]
      %v348 = vld [vmem:[%s294 + $0x40] sm:$0xf]
      %v349 = vld [vmem:[%s294 + $0x44] sm:$0xf]
      %v350 = vld [vmem:[%s294 + $0x48] sm:$0xf]
      %v351 = vld [vmem:[%s294 + $0x4c] sm:$0xf]
      %v352 = vld [vmem:[%s294 + $0x50] sm:$0xf]
      %v353 = vld [vmem:[%s294 + $0x54] sm:$0xf]
      %v354 = vld [vmem:[%s294 + $0x58] sm:$0xf]
      %v355 = vld [vmem:[%s294 + $0x5c] sm:$0xf]
      %v356 = vld [vmem:[%s294 + $0x60] sm:$0xf]
      %v357 = vld [vmem:[%s294 + $0x64] sm:$0xf]
      %v358 = vld [vmem:[%s294 + $0x68] sm:$0xf]
      %v359 = vld [vmem:[%s294 + $0x6c] sm:$0xf]
      %v360 = vld [vmem:[%s294 + $0x70] sm:$0xf]
      %v361 = vld [vmem:[%s294 + $0x74] sm:$0xf]
      %v362 = vld [vmem:[%s294 + $0x78] sm:$0xf]
      %v363 = vld [vmem:[%s294 + $0x7c] sm:$0xf]
      %v364 = vld [vmem:[%s294 + $0x80] sm:$0xf]
      %v365 = vld [vmem:[%s294 + $0x84] sm:$0xf]
      %v366 = vld [vmem:[%s294 + $0x88] sm:$0xf]
      %v367 = vld [vmem:[%s294 + $0x8c] sm:$0xf]
      %v368 = vld [vmem:[%s294 + $0x90] sm:$0xf]
      %v369 = vld [vmem:[%s294 + $0x94] sm:$0xf]
      %v370 = vld [vmem:[%s294 + $0x98] sm:$0xf]
      %v371 = vld [vmem:[%s294 + $0x9c] sm:$0xf]
      %v372 = vld [vmem:[%s294 + $0xa0] sm:$0xf]
      %v373 = vld [vmem:[%s294 + $0xa4] sm:$0xf]
      %v374 = vld [vmem:[%s294 + $0xa8] sm:$0xf]
      %v375 = vld [vmem:[%s294 + $0xac] sm:$0xf]
      %v376 = vld [vmem:[%s294 + $0xb0] sm:$0xf]
      %v377 = vld [vmem:[%s294 + $0xb4] sm:$0xf]
      %v378 = vld [vmem:[%s294 + $0xb8] sm:$0xf]
      %v379 = vld [vmem:[%s294 + $0xbc] sm:$0xf]
      %v380 = vld [vmem:[%s294 + $0xc0] sm:$0xf]
      %v381 = vld [vmem:[%s294 + $0xc4] sm:$0xf]
      %v382 = vld [vmem:[%s294 + $0xc8] sm:$0xf]
      %v383 = vld [vmem:[%s294 + $0xcc] sm:$0xf]
      %v384 = vld [vmem:[%s294 + $0xd0] sm:$0xf]
      %v385 = vld [vmem:[%s294 + $0xd4] sm:$0xf]
      %v386 = vld [vmem:[%s294 + $0xd8] sm:$0xf]
      %v387 = vld [vmem:[%s294 + $0xdc] sm:$0xf]
      %v388 = vld [vmem:[%s294 + $0xe0] sm:$0xf]
      %v389 = vld [vmem:[%s294 + $0xe4] sm:$0xf]
      %v390 = vld [vmem:[%s294 + $0xe8] sm:$0xf]
      %v391 = vld [vmem:[%s294 + $0xec] sm:$0xf]
      %v392 = vld [vmem:[%s294 + $0xf0] sm:$0xf]
      %v393 = vld [vmem:[%s294 + $0xf4] sm:$0xf]
      %v394 = vld [vmem:[%s294 + $0xf8] sm:$0xf]
      %v395 = vld [vmem:[%s294 + $0xfc] sm:$0xf]
      %v404 = vunpack.c.l.b16 %v324
      %v405 = vunpack.c.h.b16 %v324
      %v406 = vunpack.c.l.b16 %v325
      %v407 = vunpack.c.h.b16 %v325
      %v408 = vunpack.c.l.b16 %v326
      %v409 = vunpack.c.h.b16 %v326
      %v410 = vunpack.c.l.b16 %v327
      %v411 = vunpack.c.h.b16 %v327
      %v412 = vunpack.c.l.b16 %v328
      %v413 = vunpack.c.h.b16 %v328
      %v414 = vunpack.c.l.b16 %v329
      %v415 = vunpack.c.h.b16 %v329
      %v416 = vunpack.c.l.b16 %v330
      %v417 = vunpack.c.h.b16 %v330
      %v418 = vunpack.c.l.b16 %v331
      %v419 = vunpack.c.h.b16 %v331
      %v420 = vpack.c.b16 %v408, %v404
      %v421 = vpack.c.b16 %v409, %v405
      %v422 = vpack.c.b16 %v410, %v406
      %v423 = vpack.c.b16 %v411, %v407
      %v424 = vpack.c.b16 %v416, %v412
      %v425 = vpack.c.b16 %v417, %v413
      %v426 = vpack.c.b16 %v418, %v414
      %v427 = vpack.c.b16 %v419, %v415
      %v500 = vunpack.c.l.b16 %v332
      %v501 = vunpack.c.l.b16 %v333
      %v502 = vunpack.c.l.b16 %v334
      %v503 = vunpack.c.l.b16 %v335
      %v504 = vunpack.c.l.b16 %v336
      %v505 = vunpack.c.l.b16 %v337
      %v506 = vunpack.c.l.b16 %v338
      %v507 = vunpack.c.l.b16 %v339
      %v508 = vunpack.c.l.b16 %v340
      %v509 = vunpack.c.l.b16 %v341
      %v510 = vunpack.c.l.b16 %v342
      %v511 = vunpack.c.l.b16 %v343
      %v512 = vunpack.c.l.b16 %v344
      %v513 = vunpack.c.l.b16 %v345
      %v514 = vunpack.c.l.b16 %v346
      %v515 = vunpack.c.l.b16 %v347
      %v516 = vunpack.c.l.b16 %v348
      %v517 = vunpack.c.l.b16 %v349
      %v518 = vunpack.c.l.b16 %v350
      %v519 = vunpack.c.l.b16 %v351
      %v520 = vunpack.c.l.b16 %v352
      %v521 = vunpack.c.l.b16 %v353
      %v522 = vunpack.c.l.b16 %v354
      %v523 = vunpack.c.l.b16 %v355
      %v524 = vunpack.c.l.b16 %v356
      %v525 = vunpack.c.l.b16 %v357
      %v526 = vunpack.c.l.b16 %v358
      %v527 = vunpack.c.l.b16 %v359
      %v528 = vunpack.c.l.b16 %v360
      %v529 = vunpack.c.l.b16 %v361
      %v530 = vunpack.c.l.b16 %v362
      %v531 = vunpack.c.l.b16 %v363
      %v532 = vunpack.c.l.b16 %v364
      %v533 = vunpack.c.l.b16 %v365
      %v534 = vunpack.c.l.b16 %v366
      %v535 = vunpack.c.l.b16 %v367
      %v536 = vunpack.c.l.b16 %v368
      %v537 = vunpack.c.l.b16 %v369
      %v538 = vunpack.c.l.b16 %v370
      %v539 = vunpack.c.l.b16 %v371
      %v540 = vunpack.c.l.b16 %v372
      %v541 = vunpack.c.l.b16 %v373
      %v542 = vunpack.c.l.b16 %v374
      %v543 = vunpack.c.l.b16 %v375
      %v544 = vunpack.c.l.b16 %v376
      %v545 = vunpack.c.l.b16 %v377
      %v546 = vunpack.c.l.b16 %v378
      %v547 = vunpack.c.l.b16 %v379
      %v548 = vunpack.c.l.b16 %v380
      %v549 = vunpack.c.l.b16 %v381
      %v550 = vunpack.c.l.b16 %v382
      %v551 = vunpack.c.l.b16 %v383
      %v552 = vunpack.c.l.b16 %v384
      %v553 = vunpack.c.l.b16 %v385
      %v554 = vunpack.c.l.b16 %v386
      %v555 = vunpack.c.l.b16 %v387
      %v556 = vunpack.c.l.b16 %v388
      %v557 = vunpack.c.l.b16 %v389
      %v558 = vunpack.c.l.b16 %v390
      %v559 = vunpack.c.l.b16 %v391
      %v560 = vunpack.c.l.b16 %v392
      %v561 = vunpack.c.l.b16 %v393
      %v562 = vunpack.c.l.b16 %v394
      %v563 = vunpack.c.l.b16 %v395
      %v564 = vpack.c.b16 %v501, %v500
      %v565 = vpack.c.b16 %v503, %v502
      %v566 = vpack.c.b16 %v505, %v504
      %v567 = vpack.c.b16 %v507, %v506
      %v568 = vpack.c.b16 %v509, %v508
      %v569 = vpack.c.b16 %v511, %v510
      %v570 = vpack.c.b16 %v513, %v512
      %v571 = vpack.c.b16 %v515, %v514
      %v572 = vpack.c.b16 %v517, %v516
      %v573 = vpack.c.b16 %v519, %v518
      %v574 = vpack.c.b16 %v521, %v520
      %v575 = vpack.c.b16 %v523, %v522
      %v576 = vpack.c.b16 %v525, %v524
      %v577 = vpack.c.b16 %v527, %v526
      %v578 = vpack.c.b16 %v529, %v528
      %v579 = vpack.c.b16 %v531, %v530
      %v580 = vpack.c.b16 %v533, %v532
      %v581 = vpack.c.b16 %v535, %v534
      %v582 = vpack.c.b16 %v537, %v536
      %v583 = vpack.c.b16 %v539, %v538
      %v584 = vpack.c.b16 %v541, %v540
      %v585 = vpack.c.b16 %v543, %v542
      %v586 = vpack.c.b16 %v545, %v544
      %v587 = vpack.c.b16 %v547, %v546
      %v588 = vpack.c.b16 %v549, %v548
      %v589 = vpack.c.b16 %v551, %v550
      %v590 = vpack.c.b16 %v553, %v552
      %v591 = vpack.c.b16 %v555, %v554
      %v592 = vpack.c.b16 %v557, %v556
      %v593 = vpack.c.b16 %v559, %v558
      %v594 = vpack.c.b16 %v561, %v560
      %v595 = vpack.c.b16 %v563, %v562
      %628 = vmatpush.bf16.msra.mxu0 %v571
      %629 = vmatpush.bf16.msra.mxu0 %v570
      %630 = vmatpush.bf16.msra.mxu0 %v569
      %631 = vmatpush.bf16.msra.mxu0 %v568
      %632 = vmatpush.bf16.msra.mxu0 %v567
      %633 = vmatpush.bf16.msra.mxu0 %v566
      %634 = vmatpush.bf16.msra.mxu0 %v565
      %635 = vmatpush.bf16.msra.mxu0 %v564
      %636 = vmatmul.bf16.gmra.mxu0 %v420
      %v637 = vpop.f32.mrf.mxu0
      %v638 = vadd.f32 0.0, %v637
      %v639 = vpop.f32.mrf.mxu0
      %v640 = vadd.f32 0.0, %v639
      %641 = vmatmul.bf16.gmra.mxu0 %v424
      %v642 = vpop.f32.mrf.mxu0
      %v643 = vadd.f32 0.0, %v642
      %v644 = vpop.f32.mrf.mxu0
      %v645 = vadd.f32 0.0, %v644
      %646 = vdwg.mxu0
      %647 = vmatpush.bf16.msra.mxu0 %v579
      %648 = vmatpush.bf16.msra.mxu0 %v578
      %649 = vmatpush.bf16.msra.mxu0 %v577
      %650 = vmatpush.bf16.msra.mxu0 %v576
      %651 = vmatpush.bf16.msra.mxu0 %v575
      %652 = vmatpush.bf16.msra.mxu0 %v574
      %653 = vmatpush.bf16.msra.mxu0 %v573
      %654 = vmatpush.bf16.msra.mxu0 %v572
      %655 = vmatmul.bf16.gmra.mxu0 %v421
      %v656 = vpop.f32.mrf.mxu0
      %v657 = vadd.f32 %v638, %v656
      %v658 = vpop.f32.mrf.mxu0
      %v659 = vadd.f32 %v640, %v658
      %660 = vmatmul.bf16.gmra.mxu0 %v425
      %v661 = vpop.f32.mrf.mxu0
      %v662 = vadd.f32 %v643, %v661
      %v663 = vpop.f32.mrf.mxu0
      %v664 = vadd.f32 %v645, %v663
      %665 = vdwg.mxu0
      %666 = vmatpush.bf16.msra.mxu0 %v587
      %667 = vmatpush.bf16.msra.mxu0 %v586
      %668 = vmatpush.bf16.msra.mxu0 %v585
      %669 = vmatpush.bf16.msra.mxu0 %v584
      %670 = vmatpush.bf16.msra.mxu0 %v583
      %671 = vmatpush.bf16.msra.mxu0 %v582
      %672 = vmatpush.bf16.msra.mxu0 %v581
      %673 = vmatpush.bf16.msra.mxu0 %v580
      %674 = vmatmul.bf16.gmra.mxu0 %v422
      %v675 = vpop.f32.mrf.mxu0
      %v676 = vadd.f32 %v657, %v675
      %v677 = vpop.f32.mrf.mxu0
      %v678 = vadd.f32 %v659, %v677
      %679 = vmatmul.bf16.gmra.mxu0 %v426
      %v680 = vpop.f32.mrf.mxu0
      %v681 = vadd.f32 %v662, %v680
      %v682 = vpop.f32.mrf.mxu0
      %v683 = vadd.f32 %v664, %v682
      %684 = vdwg.mxu0
      %685 = vmatpush.bf16.msra.mxu0 %v595
      %686 = vmatpush.bf16.msra.mxu0 %v594
      %687 = vmatpush.bf16.msra.mxu0 %v593
      %688 = vmatpush.bf16.msra.mxu0 %v592
      %689 = vmatpush.bf16.msra.mxu0 %v591
      %690 = vmatpush.bf16.msra.mxu0 %v590
      %691 = vmatpush.bf16.msra.mxu0 %v589
      %692 = vmatpush.bf16.msra.mxu0 %v588
      %693 = vmatmul.bf16.gmra.mxu0 %v423
      %v694 = vpop.f32.mrf.mxu0
      %v695 = vadd.f32 %v676, %v694
      %v696 = vpop.f32.mrf.mxu0
      %v697 = vadd.f32 %v678, %v696
      %698 = vmatmul.bf16.gmra.mxu0 %v427
      %v699 = vpop.f32.mrf.mxu0
      %v700 = vadd.f32 %v681, %v699
      %v701 = vpop.f32.mrf.mxu0
      %v702 = vadd.f32 %v683, %v701
      %703 = vdwg.mxu0
      %v704 = vadd.f32 %v320, %v695
      %v705 = vadd.f32 %v321, %v697
      %v706 = vadd.f32 %v322, %v700
      %v707 = vadd.f32 %v323, %v702
      %708 = vst [vmem:[#allocation2] sm:$0xff] %v704
      %709 = vst [vmem:[#allocation2 + $0x8] sm:$0xff] %v705
      %710 = vst [vmem:[#allocation2 + $0x10] sm:$0xff] %v706
      %711 = vst [vmem:[#allocation2 + $0x18] sm:$0xff] %v707
      // Predicated region
      $region37: #{_lambda_.14} parent=31 // pred_check
        %p712 = pneg %p312
      $region38: #{_lambda_.14} parent=31 // pred_check_branch
        %714 = sbr.rel (%p712) target = $region40
      $region39: #{_lambda_.14} parent=31 // pred_region
        %v715 = vld [vmem:[#allocation2] sm:$0xff]
        %v716 = vld [vmem:[#allocation2 + $0x8] sm:$0xff]
        %v717 = vld [vmem:[#allocation2 + $0x10] sm:$0xff]
        %v718 = vld [vmem:[#allocation2 + $0x18] sm:$0xff]
        %v719 = vld [vmem:[%s298] sm:$0x1]
        %v721 = vperm.slane %v719, 0
        %v723 = vadd.f32 %v715, %v721
        %v724 = vadd.f32 %v716, %v721
        %v725 = vadd.f32 %v717, %v721
        %v726 = vadd.f32 %v718, %v721
        %v727 = vmax.f32 %v723, 0.0
        %v728 = vmax.f32 %v724, 0.0
        %v729 = vmax.f32 %v725, 0.0
        %v730 = vmax.f32 %v726, 0.0
        %731 = vst [vmem:[%s310] sm:$0xff] %v727
        %732 = vst [vmem:[%s310 + $0x8] sm:$0xff] %v728
        %733 = vst [vmem:[%s310 + $0x10] sm:$0xff] %v729
        %734 = vst [vmem:[%s310 + $0x18] sm:$0xff] %v730
      $region40: #{_lambda_.14} parent=31 // pred_fallthru
        _
      %s735 = smul.u32 4, %s21
      %p736 = scmp.lt.s32.totalorder %s20, 3
      %s737 = scalar_select %p736, %s20, 3
      %p738 = scmp.lt.s32.totalorder %s735, 3
      %s739 = scalar_select %p738, %s735, 3
      %p740 = scmp.lt.s32.totalorder %s22, 0
      %s741 = scalar_select %p740, %s22, 0
      %s742 = sadd.s32 %s741, %s739
      %s743 = smul.addr %s737, 4
      %s744 = sadd.s32 %s742, %s743
      %s745 = smul.addr %s744, 8
      %s746 = scalar_lea.vmem %s3, %s745
      // Predicated region
      $region41: #{_lambda_.14} parent=31 // pred_check
        %p747 = pneg %p148
      $region42: #{_lambda_.14} parent=31 // pred_check_branch
        %749 = sbr.rel (%p747) target = $region44
      $region43: #{_lambda_.14} parent=31 // pred_region
        %s750 = smul.u32 4, %s21
      $region44: #{_lambda_.14} parent=31 // pred_fallthru
        _
    $region32: #{_lambda_.14} parent=5 // pred_fallthru
      _
    %p751 = scmp.le.s32.totalorder 2, %s9
    // Predicated region
    $region45: #{_lambda_.14} parent=5 // pred_check
      %p752 = pneg %p751
    $region46: #{_lambda_.14} parent=5 // pred_check_branch
      %754 = sbr.rel (%p752) target = $region48
    $region47: #{_lambda_.14} parent=5 // pred_region
      %s755 = ssub.s32 %s9, 2
      // Predicated region
      $region49: #{_lambda_.14} parent=47 // pred_check
        %p756 = pneg %p154
      $region50: #{_lambda_.14} parent=47 // pred_check_branch
        %758 = sbr.rel (%p756) target = $region52
      $region51: #{_lambda_.14} parent=47 // pred_region
        %s759 = smul.u32 4, %s25
        %p760 = scmp.lt.s32.totalorder %s24, 3
        %s761 = scalar_select %p760, %s24, 3
        %p762 = scmp.lt.s32.totalorder %s759, 3
        %s763 = scalar_select %p762, %s759, 3
        %p764 = scmp.lt.s32.totalorder %s26, 0
        %s765 = scalar_select %p764, %s26, 0
        %s766 = sadd.s32 %s765, %s763
        %s767 = smul.addr %s761, 4
        %s768 = sadd.s32 %s766, %s767
        %s769 = smul.addr %s768, 8
        %s770 = scalar_lea.vmem %s3, %s769
      $region52: #{_lambda_.14} parent=47 // pred_fallthru
        _
    $region48: #{_lambda_.14} parent=5 // pred_fallthru
      _
  $region6: #{_lambda_.14} parent=0 // loop_footer
    %s13 = sadd.s32 1, %s9
  $region7: #{_lambda_.14} parent=0 // loop_footer_branch
    %8 = sbr.rel target = $region3
  $region8: #{_lambda_.14} parent=0 // loop_exit
    _

// kernel: _lambda_.15
$region0: #{_lambda_.15}
  #allocation0 [shape = 'u32[]', space=smem, size = 0x4, offset = 0x4, fixed_abs, tag = 'smem constant byte address 0x4 - core index']
  #allocation1 [shape = 'u32[72,128]{1,0:T(1,128)}', space=vmem, size = 0x9000, scoped, tag = 'internal scratch']
  #allocation2 [shape = 'f32[128,128]{1,0:T(8,128)}', space=vmem, size = 0x10000, scoped, tag = 'scratch operand']
  %s0 = inlined_call_operand.vmem [shape: bf16[4,128,256], index: 0, kind: input, shape index: {}]
  %s1 = inlined_call_operand.vmem [shape: bf16[4,256,128], index: 1, kind: input, shape index: {}]
  %s2 = inlined_call_operand.vmem [shape: f32[1,1,128], index: 2, kind: input, shape index: {}]
  %s3 = inlined_call_operand.vmem [shape: f32[4,128,128], index: 3, kind: output, shape index: {}]
  %s4 = sld [smem:[#allocation0]]
  $region53: #{_lambda_.15} parent=0
    _
  %s6 = ssub.s32 1, %s4
  %s7 = scalar_select 0, %s6, %s4
  loop: start=0, step=1, limit=6
  $region2: #{_lambda_.15} parent=0 // loop_pre_header
    _
  $region3: #{_lambda_.15} parent=0 // loop_header
    %s9 = sphi 0, %s13
    %p10 = scmp.ge.s32.totalorder %s9, 6
    %s16 = sphi 0, %s42
    %s17 = sphi 0, %s38
    %s18 = sphi 0, %s34
    %s19 = sphi 0, %s30
    %s20 = sphi 0, %s16
    %s21 = sphi 0, %s17
    %s22 = sphi 0, %s18
    %s23 = sphi 0, %s19
    %s24 = sphi 0, %s20
    %s25 = sphi 0, %s21
    %s26 = sphi 0, %s22
    %s27 = sphi 0, %s23
    %s49 = sphi 0, %s51
    %s52 = sphi 0, %s49
    %s53 = sphi 0, %s52
    %s69 = sphi 0, %s53
    %s79 = sphi 0, %s81
    %s82 = sphi 0, %s79
    %s83 = sphi 0, %s82
    %s99 = sphi 0, %s83
    %s105 = sphi 0, %s107
    %s108 = sphi 0, %s105
    %s109 = sphi 0, %s108
    %s125 = sphi 0, %s109
    %s135 = sphi 0, %s137
    %s138 = sphi 0, %s135
    %s139 = sphi 0, %s138
    %s155 = sphi 0, %s139
  $region4: #{_lambda_.15} parent=0 // loop_header_branch
    %12 = sbr.rel (%p10) target = $region8
  $region5: #{_lambda_.15} parent=0 // loop_body
    %s14 = ssub.s32 %s9, 1
    %s15 = ssub.s32 %s9, 2
    %s28 = sadd.s32 1, %s19
    %p29 = scmp.ge.s32.totalorder %s28, 1
    %s30 = scalar_select %p29, 0, %s28
    %s31 = sadd.s32 1, %s18
    %s32 = scalar_select %p29, %s31, %s18
    %p33 = scmp.ge.s32.totalorder %s32, 1
    %s34 = scalar_select %p33, 0, %s32
    %s35 = sadd.s32 1, %s17
    %s36 = scalar_select %p33, %s35, %s17
    %p37 = scmp.ge.s32.totalorder %s36, 1
    %s38 = scalar_select %p37, 0, %s36
    %s39 = sadd.s32 1, %s16
    %s40 = scalar_select %p37, %s39, %s16
    %p41 = scmp.ge.s32.totalorder %s40, 4
    %s42 = scalar_select %p41, 0, %s40
    %s43 = ssub.s32 %s16, %s42
    %s44 = ssub.s32 %s17, %s38
    %s45 = sor.u32 %s43, %s44
    %s46 = ssub.s32 %s19, %s30
    %s47 = sor.u32 %s45, %s46
    %p48 = scmp.eq.s32.totalorder %s47, 0
    %s50 = sadd.s32 %s49, 1
    %s51 = scalar_select %p48, %s49, %s50
    %p54 = pneg %p48
    %p55 = scmp.eq.s32.totalorder %s9, 3
    %p56 = por %p54, %p55
    %p57 = scmp.ne.s32.totalorder %s49, %s52
    %p58 = scmp.eq.s32.totalorder %s9, 0
    %p59 = por %p57, %p58
    %p60 = scmp.ne.s32.totalorder %s49, %s52
    %p61 = scmp.eq.s32.totalorder %s14, 3
    %p62 = por %p60, %p61
    %p63 = scmp.ne.s32.totalorder %s52, %s53
    %p64 = scmp.eq.s32.totalorder %s14, 0
    %p65 = por %p63, %p64
    %p66 = scmp.ne.s32.totalorder %s52, %s53
    %p67 = scmp.eq.s32.totalorder %s15, 3
    %p68 = por %p66, %p67
    %p70 = scmp.ne.s32.totalorder %s53, %s69
    %p71 = scmp.eq.s32.totalorder %s15, 0
    %p72 = por %p70, %p71
    %s73 = ssub.s32 %s16, %s42
    %s74 = ssub.s32 %s19, %s30
    %s75 = sor.u32 %s73, %s74
    %s76 = ssub.s32 %s18, %s34
    %s77 = sor.u32 %s75, %s76
    %p78 = scmp.eq.s32.totalorder %s77, 0
    %s80 = sadd.s32 %s79, 1
    %s81 = scalar_select %p78, %s79, %s80
    %p84 = pneg %p78
    %p85 = scmp.eq.s32.totalorder %s9, 3
    %p86 = por %p84, %p85
    %p87 = scmp.ne.s32.totalorder %s79, %s82
    %p88 = scmp.eq.s32.totalorder %s9, 0
    %p89 = por %p87, %p88
    %p90 = scmp.ne.s32.totalorder %s79, %s82
    %p91 = scmp.eq.s32.totalorder %s14, 3
    %p92 = por %p90, %p91
    %p93 = scmp.ne.s32.totalorder %s82, %s83
    %p94 = scmp.eq.s32.totalorder %s14, 0
    %p95 = por %p93, %p94
    %p96 = scmp.ne.s32.totalorder %s82, %s83
    %p97 = scmp.eq.s32.totalorder %s15, 3
    %p98 = por %p96, %p97
    %p100 = scmp.ne.s32.totalorder %s83, %s99
    %p101 = scmp.eq.s32.totalorder %s15, 0
    %p102 = por %p100, %p101
    %s103 = ssub.s32 %s18, %s34
    %p104 = scmp.eq.s32.totalorder %s103, 0
    %s106 = sadd.s32 %s105, 1
    %s107 = scalar_select %p104, %s105, %s106
    %p110 = pneg %p104
    %p111 = scmp.eq.s32.totalorder %s9, 3
    %p112 = por %p110, %p111
    %p113 = scmp.ne.s32.totalorder %s105, %s108
    %p114 = scmp.eq.s32.totalorder %s9, 0
    %p115 = por %p113, %p114
    %p116 = scmp.ne.s32.totalorder %s105, %s108
    %p117 = scmp.eq.s32.totalorder %s14, 3
    %p118 = por %p116, %p117
    %p119 = scmp.ne.s32.totalorder %s108, %s109
    %p120 = scmp.eq.s32.totalorder %s14, 0
    %p121 = por %p119, %p120
    %p122 = scmp.ne.s32.totalorder %s108, %s109
    %p123 = scmp.eq.s32.totalorder %s15, 3
    %p124 = por %p122, %p123
    %p126 = scmp.ne.s32.totalorder %s109, %s125
    %p127 = scmp.eq.s32.totalorder %s15, 0
    %p128 = por %p126, %p127
    %s129 = ssub.s32 %s16, %s42
    %s130 = ssub.s32 %s17, %s38
    %s131 = sor.u32 %s129, %s130
    %s132 = ssub.s32 %s18, %s34
    %s133 = sor.u32 %s131, %s132
    %p134 = scmp.eq.s32.totalorder %s133, 0
    %s136 = sadd.s32 %s135, 1
    %s137 = scalar_select %p134, %s135, %s136
    %p140 = pneg %p134
    %p141 = scmp.eq.s32.totalorder %s9, 3
    %p142 = por %p140, %p141
    %p143 = scmp.ne.s32.totalorder %s135, %s138
    %p144 = scmp.eq.s32.totalorder %s9, 0
    %p145 = por %p143, %p144
    %p146 = scmp.ne.s32.totalorder %s135, %s138
    %p147 = scmp.eq.s32.totalorder %s14, 3
    %p148 = por %p146, %p147
    %p149 = scmp.ne.s32.totalorder %s138, %s139
    %p150 = scmp.eq.s32.totalorder %s14, 0
    %p151 = por %p149, %p150
    %p152 = scmp.ne.s32.totalorder %s138, %s139
    %p153 = scmp.eq.s32.totalorder %s15, 3
    %p154 = por %p152, %p153
    %p156 = scmp.ne.s32.totalorder %s139, %s155
    %p157 = scmp.eq.s32.totalorder %s15, 0
    %p158 = por %p156, %p157
    %p159 = scmp.le.s32.totalorder 1, %s9
    %p160 = scmp.lt.s32.totalorder %s9, 5
    %p161 = pnand %p159, %p160
    %p162 = pneg %p161
    // Predicated region
    $region9: #{_lambda_.15} parent=5 // pred_check
      _
    $region10: #{_lambda_.15} parent=5 // pred_check_branch
      %164 = sbr.rel (%p161) target = $region12
    $region11: #{_lambda_.15} parent=5 // pred_region
      %s165 = ssub.s32 %s9, 1
      // Predicated region
      $region13: #{_lambda_.15} parent=11 // pred_check
        %p166 = pneg %p121
      $region14: #{_lambda_.15} parent=11 // pred_check_branch
        %168 = sbr.rel (%p166) target = $region16
      $region15: #{_lambda_.15} parent=11 // pred_region
        %p169 = scmp.lt.s32.totalorder %s22, 0
        %s170 = scalar_select %p169, %s22, 0
        %s171 = scalar_lea.vmem %s2, %s170
      $region16: #{_lambda_.15} parent=11 // pred_fallthru
        _
    $region12: #{_lambda_.15} parent=5 // pred_fallthru
      _
    %p172 = scmp.lt.s32.totalorder %s9, 4
    // Predicated region
    $region17: #{_lambda_.15} parent=5 // pred_check
      %p173 = pneg %p172
    $region18: #{_lambda_.15} parent=5 // pred_check_branch
      %175 = sbr.rel (%p173) target = $region20
    $region19: #{_lambda_.15} parent=5 // pred_region
      // Predicated region
      $region21: #{_lambda_.15} parent=19 // pred_check
        %p176 = pneg %p59
      $region22: #{_lambda_.15} parent=19 // pred_check_branch
        %178 = sbr.rel (%p176) target = $region24
      $region23: #{_lambda_.15} parent=19 // pred_region
        %s179 = smul.u32 16, %s17
        %s180 = smul.u32 2, %s19
        %p181 = scmp.lt.s32.totalorder %s16, 3
        %s182 = scalar_select %p181, %s16, 3
        %p183 = scmp.lt.s32.totalorder %s179, 15
        %s184 = scalar_select %p183, %s179, 15
        %p185 = scmp.lt.s32.totalorder %s180, 1
        %s186 = scalar_select %p185, %s180, 1
        %s187 = smul.addr %s184, 2
        %s188 = sadd.s32 %s186, %s187
        %s189 = smul.addr %s182, 32
        %s190 = sadd.s32 %s188, %s189
        %s191 = smul.addr %s190, 4
        %s192 = scalar_lea.vmem %s0, %s191
        %s193 = smul.u32 16, %s17
        %s194 = smul.u32 2, %s19
      $region24: #{_lambda_.15} parent=19 // pred_fallthru
        _
      // Predicated region
      $region25: #{_lambda_.15} parent=19 // pred_check
        %p195 = pneg %p89
      $region26: #{_lambda_.15} parent=19 // pred_check_branch
        %197 = sbr.rel (%p195) target = $region28
      $region27: #{_lambda_.15} parent=19 // pred_region
        %s198 = smul.u32 32, %s19
        %p199 = scmp.lt.s32.totalorder %s16, 3
        %s200 = scalar_select %p199, %s16, 3
        %p201 = scmp.lt.s32.totalorder %s198, 31
        %s202 = scalar_select %p201, %s198, 31
        %p203 = scmp.lt.s32.totalorder %s18, 0
        %s204 = scalar_select %p203, %s18, 0
        %s205 = sadd.s32 %s204, %s202
        %s206 = smul.addr %s200, 32
        %s207 = sadd.s32 %s205, %s206
        %s208 = smul.addr %s207, 4
        %s209 = scalar_lea.vmem %s1, %s208
        %s210 = smul.u32 32, %s19
      $region28: #{_lambda_.15} parent=19 // pred_fallthru
        _
    $region20: #{_lambda_.15} parent=5 // pred_fallthru
      _
    %p211 = scmp.le.s32.totalorder 1, %s9
    %p212 = scmp.lt.s32.totalorder %s9, 5
    %p213 = pnand %p211, %p212
    %p214 = pneg %p213
    // Predicated region
    $region29: #{_lambda_.15} parent=5 // pred_check
      _
    $region30: #{_lambda_.15} parent=5 // pred_check_branch
      %216 = sbr.rel (%p213) target = $region32
    $region31: #{_lambda_.15} parent=5 // pred_region
      %s217 = ssub.s32 %s9, 1
      %s218 = smul.u32 16, %s21
      %s219 = smul.u32 2, %s23
      %p220 = scmp.lt.s32.totalorder %s20, 3
      %s221 = scalar_select %p220, %s20, 3
      %p222 = scmp.lt.s32.totalorder %s218, 15
      %s223 = scalar_select %p222, %s218, 15
      %p224 = scmp.lt.s32.totalorder %s219, 1
      %s225 = scalar_select %p224, %s219, 1
      %s226 = smul.addr %s223, 2
      %s227 = sadd.s32 %s225, %s226
      %s228 = smul.addr %s221, 32
      %s229 = sadd.s32 %s227, %s228
      %s230 = smul.addr %s229, 4
      %s231 = scalar_lea.vmem %s0, %s230
      %p232 = pneg %p65
      %p233 = pneg %p62
      %s234 = smul.u32 32, %s23
      %p235 = scmp.lt.s32.totalorder %s20, 3
      %s236 = scalar_select %p235, %s20, 3
      %p237 = scmp.lt.s32.totalorder %s234, 31
      %s238 = scalar_select %p237, %s234, 31
      %p239 = scmp.lt.s32.totalorder %s22, 0
      %s240 = scalar_select %p239, %s22, 0
      %s241 = sadd.s32 %s240, %s238
      %s242 = smul.addr %s236, 32
      %s243 = sadd.s32 %s241, %s242
      %s244 = smul.addr %s243, 4
      %s245 = scalar_lea.vmem %s1, %s244
      %p246 = pneg %p95
      %p247 = pneg %p92
      %p248 = scmp.lt.s32.totalorder %s22, 0
      %s249 = scalar_select %p248, %s22, 0
      %s250 = scalar_lea.vmem %s2, %s249
      %p251 = pneg %p121
      %p252 = pneg %p118
      %p253 = pneg %p151
      %p254 = pneg %p148
      %s255 = smul.u32 16, %s21
      %p256 = scmp.lt.s32.totalorder %s20, 3
      %s257 = scalar_select %p256, %s20, 3
      %p258 = scmp.lt.s32.totalorder %s255, 15
      %s259 = scalar_select %p258, %s255, 15
      %p260 = scmp.lt.s32.totalorder %s22, 0
      %s261 = scalar_select %p260, %s22, 0
      %s262 = sadd.s32 %s261, %s259
      %s263 = smul.addr %s257, 16
      %s264 = sadd.s32 %s262, %s263
      %s265 = smul.addr %s264, 8
      %s266 = scalar_lea.vmem %s3, %s265
      %s267 = smul.u32 16, %s21
      %s268 = smul.u32 2, %s23
      %p269 = scmp.lt.s32.totalorder %s20, 3
      %s270 = scalar_select %p269, %s20, 3
      %p271 = scmp.lt.s32.totalorder %s267, 15
      %s272 = scalar_select %p271, %s267, 15
      %p273 = scmp.lt.s32.totalorder %s268, 1
      %s274 = scalar_select %p273, %s268, 1
      %s275 = smul.addr %s272, 2
      %s276 = sadd.s32 %s274, %s275
      %s277 = smul.addr %s270, 32
      %s278 = sadd.s32 %s276, %s277
      %s279 = smul.addr %s278, 4
      %s280 = scalar_lea.vmem %s0, %s279
      %s281 = smul.u32 16, %s21
      %s282 = smul.u32 2, %s23
      %s283 = smul.u32 32, %s23
      %p284 = scmp.lt.s32.totalorder %s20, 3
      %s285 = scalar_select %p284, %s20, 3
      %p286 = scmp.lt.s32.totalorder %s283, 31
      %s287 = scalar_select %p286, %s283, 31
      %p288 = scmp.lt.s32.totalorder %s22, 0
      %s289 = scalar_select %p288, %s22, 0
      %s290 = sadd.s32 %s289, %s287
      %s291 = smul.addr %s285, 32
      %s292 = sadd.s32 %s290, %s291
      %s293 = smul.addr %s292, 4
      %s294 = scalar_lea.vmem %s1, %s293
      %s295 = smul.u32 32, %s23
      %p296 = scmp.lt.s32.totalorder %s22, 0
      %s297 = scalar_select %p296, %s22, 0
      %s298 = scalar_lea.vmem %s2, %s297
      %s299 = smul.u32 16, %s21
      %p300 = scmp.lt.s32.totalorder %s20, 3
      %s301 = scalar_select %p300, %s20, 3
      %p302 = scmp.lt.s32.totalorder %s299, 15
      %s303 = scalar_select %p302, %s299, 15
      %p304 = scmp.lt.s32.totalorder %s22, 0
      %s305 = scalar_select %p304, %s22, 0
      %s306 = sadd.s32 %s305, %s303
      %s307 = smul.addr %s301, 16
      %s308 = sadd.s32 %s306, %s307
      %s309 = smul.addr %s308, 8
      %s310 = scalar_lea.vmem %s3, %s309
      %s311 = smul.u32 16, %s21
      %p312 = scmp.eq.s32.totalorder %s23, 0
      // Predicated region
      $region33: #{_lambda_.15} parent=31 // pred_check
        %p313 = pneg %p312
      $region34: #{_lambda_.15} parent=31 // pred_check_branch
        %315 = sbr.rel (%p313) target = $region36
      $region35: #{_lambda_.15} parent=31 // pred_region
        %316 = vst [vmem:[#allocation2] sm:$0xff] 0.0
        %317 = vst [vmem:[#allocation2 + $0x8] sm:$0xff] 0.0
        %318 = vst [vmem:[#allocation2 + $0x10] sm:$0xff] 0.0
        %319 = vst [vmem:[#allocation2 + $0x18] sm:$0xff] 0.0
        %320 = vst [vmem:[#allocation2 + $0x20] sm:$0xff] 0.0
        %321 = vst [vmem:[#allocation2 + $0x28] sm:$0xff] 0.0
        %322 = vst [vmem:[#allocation2 + $0x30] sm:$0xff] 0.0
        %323 = vst [vmem:[#allocation2 + $0x38] sm:$0xff] 0.0
        %324 = vst [vmem:[#allocation2 + $0x40] sm:$0xff] 0.0
        %325 = vst [vmem:[#allocation2 + $0x48] sm:$0xff] 0.0
        %326 = vst [vmem:[#allocation2 + $0x50] sm:$0xff] 0.0
        %327 = vst [vmem:[#allocation2 + $0x58] sm:$0xff] 0.0
        %328 = vst [vmem:[#allocation2 + $0x60] sm:$0xff] 0.0
        %329 = vst [vmem:[#allocation2 + $0x68] sm:$0xff] 0.0
        %330 = vst [vmem:[#allocation2 + $0x70] sm:$0xff] 0.0
        %331 = vst [vmem:[#allocation2 + $0x78] sm:$0xff] 0.0
      $region36: #{_lambda_.15} parent=31 // pred_fallthru
        _
      %v332 = vld [vmem:[#allocation2] sm:$0xff]
      %v333 = vld [vmem:[#allocation2 + $0x8] sm:$0xff]
      %v334 = vld [vmem:[#allocation2 + $0x10] sm:$0xff]
      %v335 = vld [vmem:[#allocation2 + $0x18] sm:$0xff]
      %v336 = vld [vmem:[#allocation2 + $0x20] sm:$0xff]
      %v337 = vld [vmem:[#allocation2 + $0x28] sm:$0xff]
      %v338 = vld [vmem:[#allocation2 + $0x30] sm:$0xff]
      %v339 = vld [vmem:[#allocation2 + $0x38] sm:$0xff]
      %v340 = vld [vmem:[#allocation2 + $0x40] sm:$0xff]
      %v341 = vld [vmem:[#allocation2 + $0x48] sm:$0xff]
      %v342 = vld [vmem:[#allocation2 + $0x50] sm:$0xff]
      %v343 = vld [vmem:[#allocation2 + $0x58] sm:$0xff]
      %v344 = vld [vmem:[#allocation2 + $0x60] sm:$0xff]
      %v345 = vld [vmem:[#allocation2 + $0x68] sm:$0xff]
      %v346 = vld [vmem:[#allocation2 + $0x70] sm:$0xff]
      %v347 = vld [vmem:[#allocation2 + $0x78] sm:$0xff]
      %v348 = vld [vmem:[%s280] sm:$0xff]
      %v349 = vld [vmem:[%s280 + $0x8] sm:$0xff]
      %v350 = vld [vmem:[%s280 + $0x10] sm:$0xff]
      %v351 = vld [vmem:[%s280 + $0x18] sm:$0xff]
      %v352 = vld [vmem:[%s280 + $0x20] sm:$0xff]
      %v353 = vld [vmem:[%s280 + $0x28] sm:$0xff]
      %v354 = vld [vmem:[%s280 + $0x30] sm:$0xff]
      %v355 = vld [vmem:[%s280 + $0x38] sm:$0xff]
      %v356 = vld [vmem:[%s280 + $0x40] sm:$0xff]
      %v357 = vld [vmem:[%s280 + $0x48] sm:$0xff]
      %v358 = vld [vmem:[%s280 + $0x50] sm:$0xff]
      %v359 = vld [vmem:[%s280 + $0x58] sm:$0xff]
      %v360 = vld [vmem:[%s280 + $0x60] sm:$0xff]
      %v361 = vld [vmem:[%s280 + $0x68] sm:$0xff]
      %v362 = vld [vmem:[%s280 + $0x70] sm:$0xff]
      %v363 = vld [vmem:[%s280 + $0x78] sm:$0xff]
      %v364 = vld [vmem:[%s294] sm:$0xf]
      %v365 = vld [vmem:[%s294 + $0x4] sm:$0xf]
      %v366 = vld [vmem:[%s294 + $0x8] sm:$0xf]
      %v367 = vld [vmem:[%s294 + $0xc] sm:$0xf]
      %v368 = vld [vmem:[%s294 + $0x10] sm:$0xf]
      %v369 = vld [vmem:[%s294 + $0x14] sm:$0xf]
      %v370 = vld [vmem:[%s294 + $0x18] sm:$0xf]
      %v371 = vld [vmem:[%s294 + $0x1c] sm:$0xf]
      %v372 = vld [vmem:[%s294 + $0x20] sm:$0xf]
      %v373 = vld [vmem:[%s294 + $0x24] sm:$0xf]
      %v374 = vld [vmem:[%s294 + $0x28] sm:$0xf]
      %v375 = vld [vmem:[%s294 + $0x2c] sm:$0xf]
      %v376 = vld [vmem:[%s294 + $0x30] sm:$0xf]
      %v377 = vld [vmem:[%s294 + $0x34] sm:$0xf]
      %v378 = vld [vmem:[%s294 + $0x38] sm:$0xf]
      %v379 = vld [vmem:[%s294 + $0x3c] sm:$0xf]
      %v380 = vld [vmem:[%s294 + $0x40] sm:$0xf]
      %v381 = vld [vmem:[%s294 + $0x44] sm:$0xf]
      %v382 = vld [vmem:[%s294 + $0x48] sm:$0xf]
      %v383 = vld [vmem:[%s294 + $0x4c] sm:$0xf]
      %v384 = vld [vmem:[%s294 + $0x50] sm:$0xf]
      %v385 = vld [vmem:[%s294 + $0x54] sm:$0xf]
      %v386 = vld [vmem:[%s294 + $0x58] sm:$0xf]
      %v387 = vld [vmem:[%s294 + $0x5c] sm:$0xf]
      %v388 = vld [vmem:[%s294 + $0x60] sm:$0xf]
      %v389 = vld [vmem:[%s294 + $0x64] sm:$0xf]
      %v390 = vld [vmem:[%s294 + $0x68] sm:$0xf]
      %v391 = vld [vmem:[%s294 + $0x6c] sm:$0xf]
      %v392 = vld [vmem:[%s294 + $0x70] sm:$0xf]
      %v393 = vld [vmem:[%s294 + $0x74] sm:$0xf]
      %v394 = vld [vmem:[%s294 + $0x78] sm:$0xf]
      %v395 = vld [vmem:[%s294 + $0x7c] sm:$0xf]
      %v412 = vunpack.c.l.b16 %v348
      %v413 = vunpack.c.h.b16 %v348
      %v414 = vunpack.c.l.b16 %v349
      %v415 = vunpack.c.h.b16 %v349
      %v416 = vunpack.c.l.b16 %v350
      %v417 = vunpack.c.h.b16 %v350
      %v418 = vunpack.c.l.b16 %v351
      %v419 = vunpack.c.h.b16 %v351
      %v420 = vunpack.c.l.b16 %v352
      %v421 = vunpack.c.h.b16 %v352
      %v422 = vunpack.c.l.b16 %v353
      %v423 = vunpack.c.h.b16 %v353
      %v424 = vunpack.c.l.b16 %v354
      %v425 = vunpack.c.h.b16 %v354
      %v426 = vunpack.c.l.b16 %v355
      %v427 = vunpack.c.h.b16 %v355
      %v428 = vunpack.c.l.b16 %v356
      %v429 = vunpack.c.h.b16 %v356
      %v430 = vunpack.c.l.b16 %v357
      %v431 = vunpack.c.h.b16 %v357
      %v432 = vunpack.c.l.b16 %v358
      %v433 = vunpack.c.h.b16 %v358
      %v434 = vunpack.c.l.b16 %v359
      %v435 = vunpack.c.h.b16 %v359
      %v436 = vunpack.c.l.b16 %v360
      %v437 = vunpack.c.h.b16 %v360
      %v438 = vunpack.c.l.b16 %v361
      %v439 = vunpack.c.h.b16 %v361
      %v440 = vunpack.c.l.b16 %v362
      %v441 = vunpack.c.h.b16 %v362
      %v442 = vunpack.c.l.b16 %v363
      %v443 = vunpack.c.h.b16 %v363
      %v444 = vpack.c.b16 %v414, %v412
      %v445 = vpack.c.b16 %v415, %v413
      %v446 = vpack.c.b16 %v418, %v416
      %v447 = vpack.c.b16 %v419, %v417
      %v448 = vpack.c.b16 %v422, %v420
      %v449 = vpack.c.b16 %v423, %v421
      %v450 = vpack.c.b16 %v426, %v424
      %v451 = vpack.c.b16 %v427, %v425
      %v452 = vpack.c.b16 %v430, %v428
      %v453 = vpack.c.b16 %v431, %v429
      %v454 = vpack.c.b16 %v434, %v432
      %v455 = vpack.c.b16 %v435, %v433
      %v456 = vpack.c.b16 %v438, %v436
      %v457 = vpack.c.b16 %v439, %v437
      %v458 = vpack.c.b16 %v442, %v440
      %v459 = vpack.c.b16 %v443, %v441
      %v508 = vunpack.c.l.b16 %v364
      %v509 = vunpack.c.l.b16 %v365
      %v510 = vunpack.c.l.b16 %v366
      %v511 = vunpack.c.l.b16 %v367
      %v512 = vunpack.c.l.b16 %v368
      %v513 = vunpack.c.l.b16 %v369
      %v514 = vunpack.c.l.b16 %v370
      %v515 = vunpack.c.l.b16 %v371
      %v516 = vunpack.c.l.b16 %v372
      %v517 = vunpack.c.l.b16 %v373
      %v518 = vunpack.c.l.b16 %v374
      %v519 = vunpack.c.l.b16 %v375
      %v520 = vunpack.c.l.b16 %v376
      %v521 = vunpack.c.l.b16 %v377
      %v522 = vunpack.c.l.b16 %v378
      %v523 = vunpack.c.l.b16 %v379
      %v524 = vunpack.c.l.b16 %v380
      %v525 = vunpack.c.l.b16 %v381
      %v526 = vunpack.c.l.b16 %v382
      %v527 = vunpack.c.l.b16 %v383
      %v528 = vunpack.c.l.b16 %v384
      %v529 = vunpack.c.l.b16 %v385
      %v530 = vunpack.c.l.b16 %v386
      %v531 = vunpack.c.l.b16 %v387
      %v532 = vunpack.c.l.b16 %v388
      %v533 = vunpack.c.l.b16 %v389
      %v534 = vunpack.c.l.b16 %v390
      %v535 = vunpack.c.l.b16 %v391
      %v536 = vunpack.c.l.b16 %v392
      %v537 = vunpack.c.l.b16 %v393
      %v538 = vunpack.c.l.b16 %v394
      %v539 = vunpack.c.l.b16 %v395
      %v540 = vpack.c.b16 %v509, %v508
      %v541 = vpack.c.b16 %v511, %v510
      %v542 = vpack.c.b16 %v513, %v512
      %v543 = vpack.c.b16 %v515, %v514
      %v544 = vpack.c.b16 %v517, %v516
      %v545 = vpack.c.b16 %v519, %v518
      %v546 = vpack.c.b16 %v521, %v520
      %v547 = vpack.c.b16 %v523, %v522
      %v548 = vpack.c.b16 %v525, %v524
      %v549 = vpack.c.b16 %v527, %v526
      %v550 = vpack.c.b16 %v529, %v528
      %v551 = vpack.c.b16 %v531, %v530
      %v552 = vpack.c.b16 %v533, %v532
      %v553 = vpack.c.b16 %v535, %v534
      %v554 = vpack.c.b16 %v537, %v536
      %v555 = vpack.c.b16 %v539, %v538
      %572 = vmatpush.bf16.msra.mxu0 %v547
      %573 = vmatpush.bf16.msra.mxu0 %v546
      %574 = vmatpush.bf16.msra.mxu0 %v545
      %575 = vmatpush.bf16.msra.mxu0 %v544
      %576 = vmatpush.bf16.msra.mxu0 %v543
      %577 = vmatpush.bf16.msra.mxu0 %v542
      %578 = vmatpush.bf16.msra.mxu0 %v541
      %579 = vmatpush.bf16.msra.mxu0 %v540
      %580 = vmatmul.bf16.gmra.mxu0 %v444
      %v581 = vpop.f32.mrf.mxu0
      %v582 = vadd.f32 0.0, %v581
      %v583 = vpop.f32.mrf.mxu0
      %v584 = vadd.f32 0.0, %v583
      %585 = vmatmul.bf16.gmra.mxu0 %v446
      %v586 = vpop.f32.mrf.mxu0
      %v587 = vadd.f32 0.0, %v586
      %v588 = vpop.f32.mrf.mxu0
      %v589 = vadd.f32 0.0, %v588
      %590 = vmatmul.bf16.gmra.mxu0 %v448
      %v591 = vpop.f32.mrf.mxu0
      %v592 = vadd.f32 0.0, %v591
      %v593 = vpop.f32.mrf.mxu0
      %v594 = vadd.f32 0.0, %v593
      %595 = vmatmul.bf16.gmra.mxu0 %v450
      %v596 = vpop.f32.mrf.mxu0
      %v597 = vadd.f32 0.0, %v596
      %v598 = vpop.f32.mrf.mxu0
      %v599 = vadd.f32 0.0, %v598
      %600 = vmatmul.bf16.gmra.mxu0 %v452
      %v601 = vpop.f32.mrf.mxu0
      %v602 = vadd.f32 0.0, %v601
      %v603 = vpop.f32.mrf.mxu0
      %v604 = vadd.f32 0.0, %v603
      %605 = vmatmul.bf16.gmra.mxu0 %v454
      %v606 = vpop.f32.mrf.mxu0
      %v607 = vadd.f32 0.0, %v606
      %v608 = vpop.f32.mrf.mxu0
      %v609 = vadd.f32 0.0, %v608
      %610 = vmatmul.bf16.gmra.mxu0 %v456
      %v611 = vpop.f32.mrf.mxu0
      %v612 = vadd.f32 0.0, %v611
      %v613 = vpop.f32.mrf.mxu0
      %v614 = vadd.f32 0.0, %v613
      %615 = vmatmul.bf16.gmra.mxu0 %v458
      %v616 = vpop.f32.mrf.mxu0
      %v617 = vadd.f32 0.0, %v616
      %v618 = vpop.f32.mrf.mxu0
      %v619 = vadd.f32 0.0, %v618
      %620 = vdwg.mxu0
      %621 = vmatpush.bf16.msra.mxu0 %v555
      %622 = vmatpush.bf16.msra.mxu0 %v554
      %623 = vmatpush.bf16.msra.mxu0 %v553
      %624 = vmatpush.bf16.msra.mxu0 %v552
      %625 = vmatpush.bf16.msra.mxu0 %v551
      %626 = vmatpush.bf16.msra.mxu0 %v550
      %627 = vmatpush.bf16.msra.mxu0 %v549
      %628 = vmatpush.bf16.msra.mxu0 %v548
      %629 = vmatmul.bf16.gmra.mxu0 %v445
      %v630 = vpop.f32.mrf.mxu0
      %v631 = vadd.f32 %v582, %v630
      %v632 = vpop.f32.mrf.mxu0
      %v633 = vadd.f32 %v584, %v632
      %634 = vmatmul.bf16.gmra.mxu0 %v447
      %v635 = vpop.f32.mrf.mxu0
      %v636 = vadd.f32 %v587, %v635
      %v637 = vpop.f32.mrf.mxu0
      %v638 = vadd.f32 %v589, %v637
      %639 = vmatmul.bf16.gmra.mxu0 %v449
      %v640 = vpop.f32.mrf.mxu0
      %v641 = vadd.f32 %v592, %v640
      %v642 = vpop.f32.mrf.mxu0
      %v643 = vadd.f32 %v594, %v642
      %644 = vmatmul.bf16.gmra.mxu0 %v451
      %v645 = vpop.f32.mrf.mxu0
      %v646 = vadd.f32 %v597, %v645
      %v647 = vpop.f32.mrf.mxu0
      %v648 = vadd.f32 %v599, %v647
      %649 = vmatmul.bf16.gmra.mxu0 %v453
      %v650 = vpop.f32.mrf.mxu0
      %v651 = vadd.f32 %v602, %v650
      %v652 = vpop.f32.mrf.mxu0
      %v653 = vadd.f32 %v604, %v652
      %654 = vmatmul.bf16.gmra.mxu0 %v455
      %v655 = vpop.f32.mrf.mxu0
      %v656 = vadd.f32 %v607, %v655
      %v657 = vpop.f32.mrf.mxu0
      %v658 = vadd.f32 %v609, %v657
      %659 = vmatmul.bf16.gmra.mxu0 %v457
      %v660 = vpop.f32.mrf.mxu0
      %v661 = vadd.f32 %v612, %v660
      %v662 = vpop.f32.mrf.mxu0
      %v663 = vadd.f32 %v614, %v662
      %664 = vmatmul.bf16.gmra.mxu0 %v459
      %v665 = vpop.f32.mrf.mxu0
      %v666 = vadd.f32 %v617, %v665
      %v667 = vpop.f32.mrf.mxu0
      %v668 = vadd.f32 %v619, %v667
      %669 = vdwg.mxu0
      %v670 = vadd.f32 %v332, %v631
      %v671 = vadd.f32 %v333, %v633
      %v672 = vadd.f32 %v334, %v636
      %v673 = vadd.f32 %v335, %v638
      %v674 = vadd.f32 %v336, %v641
      %v675 = vadd.f32 %v337, %v643
      %v676 = vadd.f32 %v338, %v646
      %v677 = vadd.f32 %v339, %v648
      %v678 = vadd.f32 %v340, %v651
      %v679 = vadd.f32 %v341, %v653
      %v680 = vadd.f32 %v342, %v656
      %v681 = vadd.f32 %v343, %v658
      %v682 = vadd.f32 %v344, %v661
      %v683 = vadd.f32 %v345, %v663
      %v684 = vadd.f32 %v346, %v666
      %v685 = vadd.f32 %v347, %v668
      %686 = vst [vmem:[#allocation2] sm:$0xff] %v670
      %687 = vst [vmem:[#allocation2 + $0x8] sm:$0xff] %v671
      %688 = vst [vmem:[#allocation2 + $0x10] sm:$0xff] %v672
      %689 = vst [vmem:[#allocation2 + $0x18] sm:$0xff] %v673
      %690 = vst [vmem:[#allocation2 + $0x20] sm:$0xff] %v674
      %691 = vst [vmem:[#allocation2 + $0x28] sm:$0xff] %v675
      %692 = vst [vmem:[#allocation2 + $0x30] sm:$0xff] %v676
      %693 = vst [vmem:[#allocation2 + $0x38] sm:$0xff] %v677
      %694 = vst [vmem:[#allocation2 + $0x40] sm:$0xff] %v678
      %695 = vst [vmem:[#allocation2 + $0x48] sm:$0xff] %v679
      %696 = vst [vmem:[#allocation2 + $0x50] sm:$0xff] %v680
      %697 = vst [vmem:[#allocation2 + $0x58] sm:$0xff] %v681
      %698 = vst [vmem:[#allocation2 + $0x60] sm:$0xff] %v682
      %699 = vst [vmem:[#allocation2 + $0x68] sm:$0xff] %v683
      %700 = vst [vmem:[#allocation2 + $0x70] sm:$0xff] %v684
      %701 = vst [vmem:[#allocation2 + $0x78] sm:$0xff] %v685
      // Predicated region
      $region37: #{_lambda_.15} parent=31 // pred_check
        %p702 = pneg %p312
      $region38: #{_lambda_.15} parent=31 // pred_check_branch
        %704 = sbr.rel (%p702) target = $region40
      $region39: #{_lambda_.15} parent=31 // pred_region
        %v705 = vld [vmem:[#allocation2] sm:$0xff]
        %v706 = vld [vmem:[#allocation2 + $0x8] sm:$0xff]
        %v707 = vld [vmem:[#allocation2 + $0x10] sm:$0xff]
        %v708 = vld [vmem:[#allocation2 + $0x18] sm:$0xff]
        %v709 = vld [vmem:[#allocation2 + $0x20] sm:$0xff]
        %v710 = vld [vmem:[#allocation2 + $0x28] sm:$0xff]
        %v711 = vld [vmem:[#allocation2 + $0x30] sm:$0xff]
        %v712 = vld [vmem:[#allocation2 + $0x38] sm:$0xff]
        %v713 = vld [vmem:[#allocation2 + $0x40] sm:$0xff]
        %v714 = vld [vmem:[#allocation2 + $0x48] sm:$0xff]
        %v715 = vld [vmem:[#allocation2 + $0x50] sm:$0xff]
        %v716 = vld [vmem:[#allocation2 + $0x58] sm:$0xff]
        %v717 = vld [vmem:[#allocation2 + $0x60] sm:$0xff]
        %v718 = vld [vmem:[#allocation2 + $0x68] sm:$0xff]
        %v719 = vld [vmem:[#allocation2 + $0x70] sm:$0xff]
        %v720 = vld [vmem:[#allocation2 + $0x78] sm:$0xff]
        %v721 = vld [vmem:[%s298] sm:$0x1]
        %v723 = vperm.slane %v721, 0
        %v725 = vadd.f32 %v705, %v723
        %v726 = vadd.f32 %v706, %v723
        %v727 = vadd.f32 %v707, %v723
        %v728 = vadd.f32 %v708, %v723
        %v729 = vadd.f32 %v709, %v723
        %v730 = vadd.f32 %v710, %v723
        %v731 = vadd.f32 %v711, %v723
        %v732 = vadd.f32 %v712, %v723
        %v733 = vadd.f32 %v713, %v723
        %v734 = vadd.f32 %v714, %v723
        %v735 = vadd.f32 %v715, %v723
        %v736 = vadd.f32 %v716, %v723
        %v737 = vadd.f32 %v717, %v723
        %v738 = vadd.f32 %v718, %v723
        %v739 = vadd.f32 %v719, %v723
        %v740 = vadd.f32 %v720, %v723
        %v741 = vsub.f32 0.0, %v725
        %v742 = vsub.f32 0.0, %v726
        %v743 = vsub.f32 0.0, %v727
        %v744 = vsub.f32 0.0, %v728
        %v745 = vsub.f32 0.0, %v729
        %v746 = vsub.f32 0.0, %v730
        %v747 = vsub.f32 0.0, %v731
        %v748 = vsub.f32 0.0, %v732
        %v749 = vsub.f32 0.0, %v733
        %v750 = vsub.f32 0.0, %v734
        %v751 = vsub.f32 0.0, %v735
        %v752 = vsub.f32 0.0, %v736
        %v753 = vsub.f32 0.0, %v737
        %v754 = vsub.f32 0.0, %v738
        %v755 = vsub.f32 0.0, %v739
        %v756 = vsub.f32 0.0, %v740
        %v757 = vmul.f32 %v741, 1.442695
        %v758 = vpow.pop %v757
        %v759 = vmul.f32 %v742, 1.442695
        %v760 = vpow.pop %v759
        %v761 = vmul.f32 %v743, 1.442695
        %v762 = vpow.pop %v761
        %v763 = vmul.f32 %v744, 1.442695
        %v764 = vpow.pop %v763
        %v765 = vmul.f32 %v745, 1.442695
        %v766 = vpow.pop %v765
        %v767 = vmul.f32 %v746, 1.442695
        %v768 = vpow.pop %v767
        %v769 = vmul.f32 %v747, 1.442695
        %v770 = vpow.pop %v769
        %v771 = vmul.f32 %v748, 1.442695
        %v772 = vpow.pop %v771
        %v773 = vmul.f32 %v749, 1.442695
        %v774 = vpow.pop %v773
        %v775 = vmul.f32 %v750, 1.442695
        %v776 = vpow.pop %v775
        %v777 = vmul.f32 %v751, 1.442695
        %v778 = vpow.pop %v777
        %v779 = vmul.f32 %v752, 1.442695
        %v780 = vpow.pop %v779
        %v781 = vmul.f32 %v753, 1.442695
        %v782 = vpow.pop %v781
        %v783 = vmul.f32 %v754, 1.442695
        %v784 = vpow.pop %v783
        %v785 = vmul.f32 %v755, 1.442695
        %v786 = vpow.pop %v785
        %v787 = vmul.f32 %v756, 1.442695
        %v788 = vpow.pop %v787
        %v789 = vadd.f32 %v758, 1.0
        %v790 = vadd.f32 %v760, 1.0
        %v791 = vadd.f32 %v762, 1.0
        %v792 = vadd.f32 %v764, 1.0
        %v793 = vadd.f32 %v766, 1.0
        %v794 = vadd.f32 %v768, 1.0
        %v795 = vadd.f32 %v770, 1.0
        %v796 = vadd.f32 %v772, 1.0
        %v797 = vadd.f32 %v774, 1.0
        %v798 = vadd.f32 %v776, 1.0
        %v799 = vadd.f32 %v778, 1.0
        %v800 = vadd.f32 %v780, 1.0
        %v801 = vadd.f32 %v782, 1.0
        %v802 = vadd.f32 %v784, 1.0
        %v803 = vadd.f32 %v786, 1.0
        %v804 = vadd.f32 %v788, 1.0
        %v805 = vrcp.pop %v789
        %v806 = vrcp.pop %v790
        %v807 = vrcp.pop %v791
        %v808 = vrcp.pop %v792
        %v809 = vrcp.pop %v793
        %v810 = vrcp.pop %v794
        %v811 = vrcp.pop %v795
        %v812 = vrcp.pop %v796
        %v813 = vrcp.pop %v797
        %v814 = vrcp.pop %v798
        %v815 = vrcp.pop %v799
        %v816 = vrcp.pop %v800
        %v817 = vrcp.pop %v801
        %v818 = vrcp.pop %v802
        %v819 = vrcp.pop %v803
        %v820 = vrcp.pop %v804
        %v821 = vmax.f32 %v805, 0.0
        %v822 = vmax.f32 %v806, 0.0
        %v823 = vmax.f32 %v807, 0.0
        %v824 = vmax.f32 %v808, 0.0
        %v825 = vmax.f32 %v809, 0.0
        %v826 = vmax.f32 %v810, 0.0
        %v827 = vmax.f32 %v811, 0.0
        %v828 = vmax.f32 %v812, 0.0
        %v829 = vmax.f32 %v813, 0.0
        %v830 = vmax.f32 %v814, 0.0
        %v831 = vmax.f32 %v815, 0.0
        %v832 = vmax.f32 %v816, 0.0
        %v833 = vmax.f32 %v817, 0.0
        %v834 = vmax.f32 %v818, 0.0
        %v835 = vmax.f32 %v819, 0.0
        %v836 = vmax.f32 %v820, 0.0
        %v837 = vmin.f32 %v821, 1.0
        %v838 = vmin.f32 %v822, 1.0
        %v839 = vmin.f32 %v823, 1.0
        %v840 = vmin.f32 %v824, 1.0
        %v841 = vmin.f32 %v825, 1.0
        %v842 = vmin.f32 %v826, 1.0
        %v843 = vmin.f32 %v827, 1.0
        %v844 = vmin.f32 %v828, 1.0
        %v845 = vmin.f32 %v829, 1.0
        %v846 = vmin.f32 %v830, 1.0
        %v847 = vmin.f32 %v831, 1.0
        %v848 = vmin.f32 %v832, 1.0
        %v849 = vmin.f32 %v833, 1.0
        %v850 = vmin.f32 %v834, 1.0
        %v851 = vmin.f32 %v835, 1.0
        %v852 = vmin.f32 %v836, 1.0
        %853 = vst [vmem:[%s310] sm:$0xff] %v837
        %854 = vst [vmem:[%s310 + $0x8] sm:$0xff] %v838
        %855 = vst [vmem:[%s310 + $0x10] sm:$0xff] %v839
        %856 = vst [vmem:[%s310 + $0x18] sm:$0xff] %v840
        %857 = vst [vmem:[%s310 + $0x20] sm:$0xff] %v841
        %858 = vst [vmem:[%s310 + $0x28] sm:$0xff] %v842
        %859 = vst [vmem:[%s310 + $0x30] sm:$0xff] %v843
        %860 = vst [vmem:[%s310 + $0x38] sm:$0xff] %v844
        %861 = vst [vmem:[%s310 + $0x40] sm:$0xff] %v845
        %862 = vst [vmem:[%s310 + $0x48] sm:$0xff] %v846
        %863 = vst [vmem:[%s310 + $0x50] sm:$0xff] %v847
        %864 = vst [vmem:[%s310 + $0x58] sm:$0xff] %v848
        %865 = vst [vmem:[%s310 + $0x60] sm:$0xff] %v849
        %866 = vst [vmem:[%s310 + $0x68] sm:$0xff] %v850
        %867 = vst [vmem:[%s310 + $0x70] sm:$0xff] %v851
        %868 = vst [vmem:[%s310 + $0x78] sm:$0xff] %v852
      $region40: #{_lambda_.15} parent=31 // pred_fallthru
        _
      %s869 = smul.u32 16, %s21
      %p870 = scmp.lt.s32.totalorder %s20, 3
      %s871 = scalar_select %p870, %s20, 3
      %p872 = scmp.lt.s32.totalorder %s869, 15
      %s873 = scalar_select %p872, %s869, 15
      %p874 = scmp.lt.s32.totalorder %s22, 0
      %s875 = scalar_select %p874, %s22, 0
      %s876 = sadd.s32 %s875, %s873
      %s877 = smul.addr %s871, 16
      %s878 = sadd.s32 %s876, %s877
      %s879 = smul.addr %s878, 8
      %s880 = scalar_lea.vmem %s3, %s879
      // Predicated region
      $region41: #{_lambda_.15} parent=31 // pred_check
        %p881 = pneg %p148
      $region42: #{_lambda_.15} parent=31 // pred_check_branch
        %883 = sbr.rel (%p881) target = $region44
      $region43: #{_lambda_.15} parent=31 // pred_region
        %s884 = smul.u32 16, %s21
      $region44: #{_lambda_.15} parent=31 // pred_fallthru
        _
    $region32: #{_lambda_.15} parent=5 // pred_fallthru
      _
    %p885 = scmp.le.s32.totalorder 2, %s9
    // Predicated region
    $region45: #{_lambda_.15} parent=5 // pred_check
      %p886 = pneg %p885
    $region46: #{_lambda_.15} parent=5 // pred_check_branch
      %888 = sbr.rel (%p886) target = $region48
    $region47: #{_lambda_.15} parent=5 // pred_region
      %s889 = ssub.s32 %s9, 2
      // Predicated region
      $region49: #{_lambda_.15} parent=47 // pred_check
        %p890 = pneg %p154
      $region50: #{_lambda_.15} parent=47 // pred_check_branch
        %892 = sbr.rel (%p890) target = $region52
      $region51: #{_lambda_.15} parent=47 // pred_region
        %s893 = smul.u32 16, %s25
        %p894 = scmp.lt.s32.totalorder %s24, 3
        %s895 = scalar_select %p894, %s24, 3
        %p896 = scmp.lt.s32.totalorder %s893, 15
        %s897 = scalar_select %p896, %s893, 15
        %p898 = scmp.lt.s32.totalorder %s26, 0
        %s899 = scalar_select %p898, %s26, 0
        %s900 = sadd.s32 %s899, %s897
        %s901 = smul.addr %s895, 16
        %s902 = sadd.s32 %s900, %s901
        %s903 = smul.addr %s902, 8
        %s904 = scalar_lea.vmem %s3, %s903
      $region52: #{_lambda_.15} parent=47 // pred_fallthru
        _
    $region48: #{_lambda_.15} parent=5 // pred_fallthru
      _
  $region6: #{_lambda_.15} parent=0 // loop_footer
    %s13 = sadd.s32 1, %s9
  $region7: #{_lambda_.15} parent=0 // loop_footer_branch
    %8 = sbr.rel target = $region3
  $region8: #{_lambda_.15} parent=0 // loop_exit
    _

</llo_original>
